<compile_context>
chip_gen: v6e
topology: v6e:2x2x1
jax: 0.10.0
libtpu: 0.0.40
codegen_flags: <defaults>
</compile_context>

<pallas_src>
import collections
import functools

import jax
import jax.numpy as jnp
from jax.experimental import pallas as pl
from jax.experimental.pallas import tpu as pltpu

HM_CHANNELS = 3
STRIDE = 1
BN_EPS = 1e-5
LANE = 128


def required_kernel_size(this_size, target_size):
    return this_size - (target_size - 1) * STRIDE


def _round_up(x, m):
    return ((x + m - 1) // m) * m


LayerMeta = collections.namedtuple(
    "LayerMeta", ["kh", "kw", "ih", "iw", "oh", "ow", "cin_p", "cout_p", "act"])


# ----------------------------- Pallas kernel ------------------------------- #

def _generator_kernel(*refs, metas, B):
    """Fully fused generator forward.

    refs layout:
      refs[0]                      noise (B, cin_p0) f32
      refs[1+3i], refs[2+3i], refs[3+3i]   layer i: w (kH*kW*Cin_p, Cout_p) bf16,
                                            gamma (1, Cout_p), beta (1, Cout_p)
      refs[1+3n]                   output (B, OH_last, OW_last, Cout_p_last) f32
      refs[2+3n:]                  per-layer padded-input VMEM scratch buffers
    """
    n = len(metas)
    o_ref = refs[1 + 3 * n]
    pad_refs = refs[2 + 3 * n:]

    # Layer-0 input: noise as a 1x1 spatial map (channels already lane-padded).
    x = refs[0][...].reshape(B, 1, 1, metas[0].cin_p)

    for i, m in enumerate(metas):
        w_ref = refs[1 + 3 * i]
        g_ref = refs[2 + 3 * i]
        b_ref = refs[3 + 3 * i]
        pad = pad_refs[i]

        # In-kernel zero-padding by (k-1) on each side (transposed conv ==
        # full correlation with the flipped kernel on the padded input).
        pad[...] = jnp.zeros_like(pad)
        pad[:, m.kh - 1:m.kh - 1 + m.ih, m.kw - 1:m.kw - 1 + m.iw, :] = x
        xp = pad[...]

        # im2col: one lane-dense patch matrix -> ONE matmul per layer.
        patches = jnp.concatenate(
            [xp[:, ky:ky + m.oh, kx:kx + m.ow, :]
             for ky in range(m.kh) for kx in range(m.kw)],
            axis=-1)                                   # (B, OH, OW, kH*kW*Cin_p)
        patches = patches.reshape(B * m.oh * m.ow, m.kh * m.kw * m.cin_p)
        patches = patches.astype(jnp.bfloat16)

        acc = jnp.dot(patches, w_ref[...],
                      preferred_element_type=jnp.float32)   # (R, Cout_p) f32

        # BatchNorm2d (training-mode biased batch stats over N*H*W), two-pass var.
        mean = jnp.mean(acc, axis=0, keepdims=True)
        d = acc - mean
        var = jnp.mean(d * d, axis=0, keepdims=True)
        y = d * jax.lax.rsqrt(var + BN_EPS) * g_ref[...] + b_ref[...]

        y = jnp.maximum(y, 0.0) if m.act == "relu" else jnp.tanh(y)

        x = y.reshape(B, m.oh, m.ow, m.cout_p)

    o_ref[...] = x


def _full_spec(shape):
    nd = len(shape)
    return pl.BlockSpec(shape, lambda *idx, _nd=nd: (0,) * _nd)


def _generator_forward(key, flat_params, *, metas, noise_size, batchsize):
    B = batchsize
    cin_p0 = metas[0].cin_p

    # PyTorch: torch.randn(batchsize, noise_size, 1, 1); extra lane-pad channels
    # are zero and hit zero weight rows, so they never affect real channels.
    noise = jax.random.normal(key, (B, noise_size), jnp.float32)
    noise_p = jnp.zeros((B, cin_p0), jnp.float32).at[:, :noise_size].set(noise)

    last = metas[-1]
    out_shape = (B, last.oh, last.ow, last.cout_p)

    in_specs = [_full_spec(noise_p.shape)]
    for p in flat_params:
        in_specs.append(_full_spec(p.shape))

    scratch_shapes = [
        pltpu.VMEM((B, m.ih + 2 * (m.kh - 1), m.iw + 2 * (m.kw - 1), m.cin_p),
                   jnp.float32)
        for m in metas
    ]

    kernel = functools.partial(_generator_kernel, metas=metas, B=B)

    out = pl.pallas_call(
        kernel,
        grid=(1,),
        in_specs=in_specs,
        out_specs=_full_spec(out_shape),
        out_shape=jax.ShapeDtypeStruct(out_shape, jnp.float32),
        scratch_shapes=scratch_shapes,
        compiler_params=pltpu.CompilerParams(dimension_semantics=("arbitrary",)),
    )(noise_p, *flat_params)

    img = out[..., :HM_CHANNELS]            # drop lane-padding channels
    return jnp.transpose(img, (0, 3, 1, 2))  # NHWC -> NCHW = (B, 3, width, height)


# ------------------------------ Generator ---------------------------------- #

class Generator:
    def __init__(self, noise_size, layers, filters, width, height, key):
        self.noise_size = noise_size

        in_ch = [noise_size] + list(filters)
        out_ch = list(filters) + [HM_CHANNELS]

        k_sizes, spatial = [], []
        prev = 1
        for L in layers:
            k = required_kernel_size(L, prev)
            k_sizes.append((k, k))
            spatial.append((prev, prev, L, L))
            prev = L
        k_sizes.append((required_kernel_size(width, layers[-1]),
                        required_kernel_size(height, layers[-1])))
        spatial.append((layers[-1], layers[-1], width, height))

        metas, flat_params = [], []
        keys = jax.random.split(key, len(k_sizes))
        for i, ((kh, kw), (ih, iw, oh, ow)) in enumerate(zip(k_sizes, spatial)):
            cin, cout = in_ch[i], out_ch[i]
            cin_p = _round_up(cin, LANE)
            cout_p = _round_up(cout, LANE)
            act = "tanh" if i == len(k_sizes) - 1 else "relu"

            # ConvTranspose2d weight (Cin, Cout, kH, kW): flip spatially,
            # move to (kH, kW, Cin, Cout), zero-pad channels to 128 multiples,
            # flatten for im2col, cast to bf16 (MXU-native).
            w = 0.1 * jax.random.normal(keys[i], (cin, cout, kh, kw), jnp.float32)
            w_flip = jnp.transpose(w[:, :, ::-1, ::-1], (2, 3, 0, 1))
            w_pad = jnp.zeros((kh, kw, cin_p, cout_p), jnp.float32)
            w_pad = w_pad.at[:, :, :cin, :cout].set(w_flip)
            w_flat = w_pad.reshape(kh * kw * cin_p, cout_p).astype(jnp.bfloat16)

            gamma = jnp.ones((1, cout_p), jnp.float32)   # PyTorch BN defaults
            beta = jnp.zeros((1, cout_p), jnp.float32)

            metas.append(LayerMeta(kh, kw, ih, iw, oh, ow, cin_p, cout_p, act))
            flat_params.extend([w_flat, gamma, beta])

        self.metas = tuple(metas)
        self.flat_params = flat_params
        self._jit_cache = {}

    def forward(self, batchsize, key):
        fn = self._jit_cache.get(batchsize)
        if fn is None:
            fn = jax.jit(functools.partial(
                _generator_forward, metas=self.metas,
                noise_size=self.noise_size, batchsize=batchsize))
            self._jit_cache[batchsize] = fn
        return fn(key, self.flat_params)


# TODO(synk): BatchNorm running-stat updates (a training-mode side effect) are
# not tracked; they do not affect the forward output in train mode.

if __name__ == "__main__":
    key = jax.random.PRNGKey(0)
    k_params, k_noise = jax.random.split(key)

    noise_size = 8
    layers = [2, 3, 4, 5, 6, 7]
    filters = [16, 16, 16, 16, 16, 16]
    width = height = 8
    batchsize = 2

    gen = Generator(noise_size, layers, filters, width, height, k_params)
    out = gen.forward(batchsize=batchsize, key=k_noise)
    out = jax.block_until_ready(out)

    assert out.shape == (batchsize, HM_CHANNELS, width, height), out.shape
    assert bool(jnp.all(jnp.isfinite(out)))
    assert bool(jnp.all(jnp.abs(out) <= 1.0 + 1e-6))  # tanh output range
    print("KERNEL_OK")
</pallas_src>

<mosaic_0001>
module attributes {stable_mosaic.version = 11 : i64} {
  func.func @_generator_kernel(%arg0: i32, %arg1: memref<2x128xf32, #tpu.memory_space<vmem>>, %arg2: memref<512x128xbf16, #tpu.memory_space<vmem>>, %arg3: memref<1x128xf32, #tpu.memory_space<vmem>>, %arg4: memref<1x128xf32, #tpu.memory_space<vmem>>, %arg5: memref<512x128xbf16, #tpu.memory_space<vmem>>, %arg6: memref<1x128xf32, #tpu.memory_space<vmem>>, %arg7: memref<1x128xf32, #tpu.memory_space<vmem>>, %arg8: memref<512x128xbf16, #tpu.memory_space<vmem>>, %arg9: memref<1x128xf32, #tpu.memory_space<vmem>>, %arg10: memref<1x128xf32, #tpu.memory_space<vmem>>, %arg11: memref<512x128xbf16, #tpu.memory_space<vmem>>, %arg12: memref<1x128xf32, #tpu.memory_space<vmem>>, %arg13: memref<1x128xf32, #tpu.memory_space<vmem>>, %arg14: memref<512x128xbf16, #tpu.memory_space<vmem>>, %arg15: memref<1x128xf32, #tpu.memory_space<vmem>>, %arg16: memref<1x128xf32, #tpu.memory_space<vmem>>, %arg17: memref<512x128xbf16, #tpu.memory_space<vmem>>, %arg18: memref<1x128xf32, #tpu.memory_space<vmem>>, %arg19: memref<1x128xf32, #tpu.memory_space<vmem>>, %arg20: memref<512x128xbf16, #tpu.memory_space<vmem>>, %arg21: memref<1x128xf32, #tpu.memory_space<vmem>>, %arg22: memref<1x128xf32, #tpu.memory_space<vmem>>, %arg23: memref<2x8x8x128xf32, #tpu.memory_space<vmem>>, %arg24: memref<2x3x3x128xf32, #tpu.memory_space<vmem>>, %arg25: memref<2x4x4x128xf32, #tpu.memory_space<vmem>>, %arg26: memref<2x5x5x128xf32, #tpu.memory_space<vmem>>, %arg27: memref<2x6x6x128xf32, #tpu.memory_space<vmem>>, %arg28: memref<2x7x7x128xf32, #tpu.memory_space<vmem>>, %arg29: memref<2x8x8x128xf32, #tpu.memory_space<vmem>>, %arg30: memref<2x9x9x128xf32, #tpu.memory_space<vmem>>) attributes {dimension_semantics = [#tpu.dimension_semantics<arbitrary>], iteration_bounds = array<i64: 1>, scalar_prefetch = 0 : i64, scratch_operands = 7 : i64, tpu.core_type = #tpu.core_type<tc>, window_params = [{pipeline_mode = #tpu.pipeline_mode<synchronous>, transform_indices = @transform_0, window_bounds = array<i64: 2, 128>}, {pipeline_mode = #tpu.pipeline_mode<synchronous>, transform_indices = @transform_1, window_bounds = array<i64: 512, 128>}, {pipeline_mode = #tpu.pipeline_mode<synchronous>, transform_indices = @transform_2, window_bounds = array<i64: 1, 128>}, {pipeline_mode = #tpu.pipeline_mode<synchronous>, transform_indices = @transform_3, window_bounds = array<i64: 1, 128>}, {pipeline_mode = #tpu.pipeline_mode<synchronous>, transform_indices = @transform_4, window_bounds = array<i64: 512, 128>}, {pipeline_mode = #tpu.pipeline_mode<synchronous>, transform_indices = @transform_5, window_bounds = array<i64: 1, 128>}, {pipeline_mode = #tpu.pipeline_mode<synchronous>, transform_indices = @transform_6, window_bounds = array<i64: 1, 128>}, {pipeline_mode = #tpu.pipeline_mode<synchronous>, transform_indices = @transform_7, window_bounds = array<i64: 512, 128>}, {pipeline_mode = #tpu.pipeline_mode<synchronous>, transform_indices = @transform_8, window_bounds = array<i64: 1, 128>}, {pipeline_mode = #tpu.pipeline_mode<synchronous>, transform_indices = @transform_9, window_bounds = array<i64: 1, 128>}, {pipeline_mode = #tpu.pipeline_mode<synchronous>, transform_indices = @transform_10, window_bounds = array<i64: 512, 128>}, {pipeline_mode = #tpu.pipeline_mode<synchronous>, transform_indices = @transform_11, window_bounds = array<i64: 1, 128>}, {pipeline_mode = #tpu.pipeline_mode<synchronous>, transform_indices = @transform_12, window_bounds = array<i64: 1, 128>}, {pipeline_mode = #tpu.pipeline_mode<synchronous>, transform_indices = @transform_13, window_bounds = array<i64: 512, 128>}, {pipeline_mode = #tpu.pipeline_mode<synchronous>, transform_indices = @transform_14, window_bounds = array<i64: 1, 128>}, {pipeline_mode = #tpu.pipeline_mode<synchronous>, transform_indices = @transform_15, window_bounds = array<i64: 1, 128>}, {pipeline_mode = #tpu.pipeline_mode<synchronous>, transform_indices = @transform_16, window_bounds = array<i64: 512, 128>}, {pipeline_mode = #tpu.pipeline_mode<synchronous>, transform_indices = @transform_17, window_bounds = array<i64: 1, 128>}, {pipeline_mode = #tpu.pipeline_mode<synchronous>, transform_indices = @transform_18, window_bounds = array<i64: 1, 128>}, {pipeline_mode = #tpu.pipeline_mode<synchronous>, transform_indices = @transform_19, window_bounds = array<i64: 512, 128>}, {pipeline_mode = #tpu.pipeline_mode<synchronous>, transform_indices = @transform_20, window_bounds = array<i64: 1, 128>}, {pipeline_mode = #tpu.pipeline_mode<synchronous>, transform_indices = @transform_21, window_bounds = array<i64: 1, 128>}, {pipeline_mode = #tpu.pipeline_mode<synchronous>, transform_indices = @transform_22, window_bounds = array<i64: 2, 8, 8, 128>}]} {
    %c0 = arith.constant 0 : index
    %c0_0 = arith.constant 0 : index
    %0 = vector.load %arg1[%c0, %c0_0] : memref<2x128xf32, #tpu.memory_space<vmem>>, vector<2x128xf32>
    %1 = vector.shape_cast %0 : vector<2x128xf32> to vector<2x1x1x128xf32>
    %cst = arith.constant 0.000000e+00 : f32
    %2 = vector.broadcast %cst : f32 to vector<2x3x3x128xf32>
    %c0_1 = arith.constant 0 : index
    %c0_2 = arith.constant 0 : index
    %c0_3 = arith.constant 0 : index
    %c0_4 = arith.constant 0 : index
    %3 = vector.load %arg24[%c0_1, %c0_2, %c0_3, %c0_4] : memref<2x3x3x128xf32, #tpu.memory_space<vmem>>, vector<2x3x3x128xf32>
    tpu.vector_store %arg24[%c0_1, %c0_2, %c0_3, %c0_4], %2 {strides = array<i32>} : memref<2x3x3x128xf32, #tpu.memory_space<vmem>>, vector<2x3x3x128xf32>,
    %c0_5 = arith.constant 0 : index
    %c1 = arith.constant 1 : index
    %c1_6 = arith.constant 1 : index
    %c0_7 = arith.constant 0 : index
    %4 = vector.load %arg24[%c0_5, %c1, %c1_6, %c0_7] : memref<2x3x3x128xf32, #tpu.memory_space<vmem>>, vector<2x1x1x128xf32>
    tpu.vector_store %arg24[%c0_5, %c1, %c1_6, %c0_7], %1 {strides = array<i32>} : memref<2x3x3x128xf32, #tpu.memory_space<vmem>>, vector<2x1x1x128xf32>,
    %c0_8 = arith.constant 0 : index
    %c0_9 = arith.constant 0 : index
    %c0_10 = arith.constant 0 : index
    %c0_11 = arith.constant 0 : index
    %5 = vector.load %arg24[%c0_8, %c0_9, %c0_10, %c0_11] : memref<2x3x3x128xf32, #tpu.memory_space<vmem>>, vector<2x3x3x128xf32>
    %6 = vector.extract_strided_slice %5 {offsets = [0, 0, 0, 0], sizes = [2, 2, 2, 128], strides = [1, 1, 1, 1]} : vector<2x3x3x128xf32> to vector<2x2x2x128xf32>
    %7 = vector.extract_strided_slice %5 {offsets = [0, 0, 1, 0], sizes = [2, 2, 2, 128], strides = [1, 1, 1, 1]} : vector<2x3x3x128xf32> to vector<2x2x2x128xf32>
    %8 = vector.extract_strided_slice %5 {offsets = [0, 1, 0, 0], sizes = [2, 2, 2, 128], strides = [1, 1, 1, 1]} : vector<2x3x3x128xf32> to vector<2x2x2x128xf32>
    %9 = vector.extract_strided_slice %5 {offsets = [0, 1, 1, 0], sizes = [2, 2, 2, 128], strides = [1, 1, 1, 1]} : vector<2x3x3x128xf32> to vector<2x2x2x128xf32>
    %10 = tpu.concatenate %6, %7, %8, %9 in 3 : vector<2x2x2x128xf32>, vector<2x2x2x128xf32>, vector<2x2x2x128xf32>, vector<2x2x2x128xf32> -> vector<2x2x2x512xf32>
    %11 = vector.shape_cast %10 : vector<2x2x2x512xf32> to vector<8x512xf32>
    %12 = arith.truncf %11 : vector<8x512xf32> to vector<8x512xbf16>
    %c0_12 = arith.constant 0 : index
    %c0_13 = arith.constant 0 : index
    %13 = vector.load %arg2[%c0_12, %c0_13] : memref<512x128xbf16, #tpu.memory_space<vmem>>, vector<512x128xbf16>
    %cst_14 = arith.constant dense<0.000000e+00> : vector<8x128xf32>
    %14 = tpu.matmul %12, %13, %cst_14 {dimension_numbers = #tpu.dot_dimension_numbers<[1], [0], [0], [1], [0, 0, 1, 1], [], []>} : vector<8x512xbf16>, vector<512x128xbf16>, vector<8x128xf32> -> vector<8x128xf32>
    %cst_15 = arith.constant dense<0.000000e+00> : vector<128xf32>
    %15 = vector.multi_reduction <add>, %14, %cst_15 [0] : vector<8x128xf32> to vector<128xf32>
    %16 = vector.shape_cast %15 : vector<128xf32> to vector<1x128xf32>
    %cst_16 = arith.constant 8.000000e+00 : f32
    %17 = vector.broadcast %cst_16 : f32 to vector<1x128xf32>
    %18 = arith.divf %16, %17 : vector<1x128xf32>
    %19 = vector.broadcast %18 : vector<1x128xf32> to vector<8x128xf32>
    %20 = arith.subf %14, %19 : vector<8x128xf32>
    %21 = arith.mulf %20, %20 : vector<8x128xf32>
    %cst_17 = arith.constant dense<0.000000e+00> : vector<128xf32>
    %22 = vector.multi_reduction <add>, %21, %cst_17 [0] : vector<8x128xf32> to vector<128xf32>
    %23 = vector.shape_cast %22 : vector<128xf32> to vector<1x128xf32>
    %cst_18 = arith.constant 8.000000e+00 : f32
    %24 = vector.broadcast %cst_18 : f32 to vector<1x128xf32>
    %25 = arith.divf %23, %24 : vector<1x128xf32>
    %cst_19 = arith.constant 9.99999974E-6 : f32
    %26 = vector.broadcast %cst_19 : f32 to vector<1x128xf32>
    %27 = arith.addf %25, %26 : vector<1x128xf32>
    %28 = math.rsqrt %27 : vector<1x128xf32>
    %29 = vector.broadcast %28 : vector<1x128xf32> to vector<8x128xf32>
    %30 = arith.mulf %20, %29 : vector<8x128xf32>
    %c0_20 = arith.constant 0 : index
    %c0_21 = arith.constant 0 : index
    %31 = vector.load %arg3[%c0_20, %c0_21] : memref<1x128xf32, #tpu.memory_space<vmem>>, vector<1x128xf32>
    %32 = vector.broadcast %31 : vector<1x128xf32> to vector<8x128xf32>
    %33 = arith.mulf %30, %32 : vector<8x128xf32>
    %c0_22 = arith.constant 0 : index
    %c0_23 = arith.constant 0 : index
    %34 = vector.load %arg4[%c0_22, %c0_23] : memref<1x128xf32, #tpu.memory_space<vmem>>, vector<1x128xf32>
    %35 = vector.broadcast %34 : vector<1x128xf32> to vector<8x128xf32>
    %36 = arith.addf %33, %35 : vector<8x128xf32>
    %cst_24 = arith.constant 0.000000e+00 : f32
    %37 = vector.broadcast %cst_24 : f32 to vector<8x128xf32>
    %38 = arith.maximumf %36, %37 : vector<8x128xf32>
    %39 = vector.shape_cast %38 : vector<8x128xf32> to vector<2x2x2x128xf32>
    %cst_25 = arith.constant 0.000000e+00 : f32
    %40 = vector.broadcast %cst_25 : f32 to vector<2x4x4x128xf32>
    %c0_26 = arith.constant 0 : index
    %c0_27 = arith.constant 0 : index
    %c0_28 = arith.constant 0 : index
    %c0_29 = arith.constant 0 : index
    %41 = vector.load %arg25[%c0_26, %c0_27, %c0_28, %c0_29] : memref<2x4x4x128xf32, #tpu.memory_space<vmem>>, vector<2x4x4x128xf32>
    tpu.vector_store %arg25[%c0_26, %c0_27, %c0_28, %c0_29], %40 {strides = array<i32>} : memref<2x4x4x128xf32, #tpu.memory_space<vmem>>, vector<2x4x4x128xf32>,
    %c0_30 = arith.constant 0 : index
    %c1_31 = arith.constant 1 : index
    %c1_32 = arith.constant 1 : index
    %c0_33 = arith.constant 0 : index
    %42 = vector.load %arg25[%c0_30, %c1_31, %c1_32, %c0_33] : memref<2x4x4x128xf32, #tpu.memory_space<vmem>>, vector<2x2x2x128xf32>
    tpu.vector_store %arg25[%c0_30, %c1_31, %c1_32, %c0_33], %39 {strides = array<i32>} : memref<2x4x4x128xf32, #tpu.memory_space<vmem>>, vector<2x2x2x128xf32>,
    %c0_34 = arith.constant 0 : index
    %c0_35 = arith.constant 0 : index
    %c0_36 = arith.constant 0 : index
    %c0_37 = arith.constant 0 : index
    %43 = vector.load %arg25[%c0_34, %c0_35, %c0_36, %c0_37] : memref<2x4x4x128xf32, #tpu.memory_space<vmem>>, vector<2x4x4x128xf32>
    %44 = vector.extract_strided_slice %43 {offsets = [0, 0, 0, 0], sizes = [2, 3, 3, 128], strides = [1, 1, 1, 1]} : vector<2x4x4x128xf32> to vector<2x3x3x128xf32>
    %45 = vector.extract_strided_slice %43 {offsets = [0, 0, 1, 0], sizes = [2, 3, 3, 128], strides = [1, 1, 1, 1]} : vector<2x4x4x128xf32> to vector<2x3x3x128xf32>
    %46 = vector.extract_strided_slice %43 {offsets = [0, 1, 0, 0], sizes = [2, 3, 3, 128], strides = [1, 1, 1, 1]} : vector<2x4x4x128xf32> to vector<2x3x3x128xf32>
    %47 = vector.extract_strided_slice %43 {offsets = [0, 1, 1, 0], sizes = [2, 3, 3, 128], strides = [1, 1, 1, 1]} : vector<2x4x4x128xf32> to vector<2x3x3x128xf32>
    %48 = tpu.concatenate %44, %45, %46, %47 in 3 : vector<2x3x3x128xf32>, vector<2x3x3x128xf32>, vector<2x3x3x128xf32>, vector<2x3x3x128xf32> -> vector<2x3x3x512xf32>
    %49 = vector.shape_cast %48 : vector<2x3x3x512xf32> to vector<18x512xf32>
    %50 = arith.truncf %49 : vector<18x512xf32> to vector<18x512xbf16>
    %c0_38 = arith.constant 0 : index
    %c0_39 = arith.constant 0 : index
    %51 = vector.load %arg5[%c0_38, %c0_39] : memref<512x128xbf16, #tpu.memory_space<vmem>>, vector<512x128xbf16>
    %cst_40 = arith.constant dense<0.000000e+00> : vector<18x128xf32>
    %52 = tpu.matmul %50, %51, %cst_40 {dimension_numbers = #tpu.dot_dimension_numbers<[1], [0], [0], [1], [0, 0, 1, 1], [], []>} : vector<18x512xbf16>, vector<512x128xbf16>, vector<18x128xf32> -> vector<18x128xf32>
    %cst_41 = arith.constant dense<0.000000e+00> : vector<128xf32>
    %53 = vector.multi_reduction <add>, %52, %cst_41 [0] : vector<18x128xf32> to vector<128xf32>
    %54 = vector.shape_cast %53 : vector<128xf32> to vector<1x128xf32>
    %cst_42 = arith.constant 1.800000e+01 : f32
    %55 = vector.broadcast %cst_42 : f32 to vector<1x128xf32>
    %56 = arith.divf %54, %55 : vector<1x128xf32>
    %57 = vector.broadcast %56 : vector<1x128xf32> to vector<18x128xf32>
    %58 = arith.subf %52, %57 : vector<18x128xf32>
    %59 = arith.mulf %58, %58 : vector<18x128xf32>
    %cst_43 = arith.constant dense<0.000000e+00> : vector<128xf32>
    %60 = vector.multi_reduction <add>, %59, %cst_43 [0] : vector<18x128xf32> to vector<128xf32>
    %61 = vector.shape_cast %60 : vector<128xf32> to vector<1x128xf32>
    %cst_44 = arith.constant 1.800000e+01 : f32
    %62 = vector.broadcast %cst_44 : f32 to vector<1x128xf32>
    %63 = arith.divf %61, %62 : vector<1x128xf32>
    %cst_45 = arith.constant 9.99999974E-6 : f32
    %64 = vector.broadcast %cst_45 : f32 to vector<1x128xf32>
    %65 = arith.addf %63, %64 : vector<1x128xf32>
    %66 = math.rsqrt %65 : vector<1x128xf32>
    %67 = vector.broadcast %66 : vector<1x128xf32> to vector<18x128xf32>
    %68 = arith.mulf %58, %67 : vector<18x128xf32>
    %c0_46 = arith.constant 0 : index
    %c0_47 = arith.constant 0 : index
    %69 = vector.load %arg6[%c0_46, %c0_47] : memref<1x128xf32, #tpu.memory_space<vmem>>, vector<1x128xf32>
    %70 = vector.broadcast %69 : vector<1x128xf32> to vector<18x128xf32>
    %71 = arith.mulf %68, %70 : vector<18x128xf32>
    %c0_48 = arith.constant 0 : index
    %c0_49 = arith.constant 0 : index
    %72 = vector.load %arg7[%c0_48, %c0_49] : memref<1x128xf32, #tpu.memory_space<vmem>>, vector<1x128xf32>
    %73 = vector.broadcast %72 : vector<1x128xf32> to vector<18x128xf32>
    %74 = arith.addf %71, %73 : vector<18x128xf32>
    %cst_50 = arith.constant 0.000000e+00 : f32
    %75 = vector.broadcast %cst_50 : f32 to vector<18x128xf32>
    %76 = arith.maximumf %74, %75 : vector<18x128xf32>
    %77 = vector.shape_cast %76 : vector<18x128xf32> to vector<2x3x3x128xf32>
    %cst_51 = arith.constant 0.000000e+00 : f32
    %78 = vector.broadcast %cst_51 : f32 to vector<2x5x5x128xf32>
    %c0_52 = arith.constant 0 : index
    %c0_53 = arith.constant 0 : index
    %c0_54 = arith.constant 0 : index
    %c0_55 = arith.constant 0 : index
    %79 = vector.load %arg26[%c0_52, %c0_53, %c0_54, %c0_55] : memref<2x5x5x128xf32, #tpu.memory_space<vmem>>, vector<2x5x5x128xf32>
    tpu.vector_store %arg26[%c0_52, %c0_53, %c0_54, %c0_55], %78 {strides = array<i32>} : memref<2x5x5x128xf32, #tpu.memory_space<vmem>>, vector<2x5x5x128xf32>,
    %c0_56 = arith.constant 0 : index
    %c1_57 = arith.constant 1 : index
    %c1_58 = arith.constant 1 : index
    %c0_59 = arith.constant 0 : index
    %80 = vector.load %arg26[%c0_56, %c1_57, %c1_58, %c0_59] : memref<2x5x5x128xf32, #tpu.memory_space<vmem>>, vector<2x3x3x128xf32>
    tpu.vector_store %arg26[%c0_56, %c1_57, %c1_58, %c0_59], %77 {strides = array<i32>} : memref<2x5x5x128xf32, #tpu.memory_space<vmem>>, vector<2x3x3x128xf32>,
    %c0_60 = arith.constant 0 : index
    %c0_61 = arith.constant 0 : index
    %c0_62 = arith.constant 0 : index
    %c0_63 = arith.constant 0 : index
    %81 = vector.load %arg26[%c0_60, %c0_61, %c0_62, %c0_63] : memref<2x5x5x128xf32, #tpu.memory_space<vmem>>, vector<2x5x5x128xf32>
    %82 = vector.extract_strided_slice %81 {offsets = [0, 0, 0, 0], sizes = [2, 4, 4, 128], strides = [1, 1, 1, 1]} : vector<2x5x5x128xf32> to vector<2x4x4x128xf32>
    %83 = vector.extract_strided_slice %81 {offsets = [0, 0, 1, 0], sizes = [2, 4, 4, 128], strides = [1, 1, 1, 1]} : vector<2x5x5x128xf32> to vector<2x4x4x128xf32>
    %84 = vector.extract_strided_slice %81 {offsets = [0, 1, 0, 0], sizes = [2, 4, 4, 128], strides = [1, 1, 1, 1]} : vector<2x5x5x128xf32> to vector<2x4x4x128xf32>
    %85 = vector.extract_strided_slice %81 {offsets = [0, 1, 1, 0], sizes = [2, 4, 4, 128], strides = [1, 1, 1, 1]} : vector<2x5x5x128xf32> to vector<2x4x4x128xf32>
    %86 = tpu.concatenate %82, %83, %84, %85 in 3 : vector<2x4x4x128xf32>, vector<2x4x4x128xf32>, vector<2x4x4x128xf32>, vector<2x4x4x128xf32> -> vector<2x4x4x512xf32>
    %87 = vector.shape_cast %86 : vector<2x4x4x512xf32> to vector<32x512xf32>
    %88 = arith.truncf %87 : vector<32x512xf32> to vector<32x512xbf16>
    %c0_64 = arith.constant 0 : index
    %c0_65 = arith.constant 0 : index
    %89 = vector.load %arg8[%c0_64, %c0_65] : memref<512x128xbf16, #tpu.memory_space<vmem>>, vector<512x128xbf16>
    %cst_66 = arith.constant dense<0.000000e+00> : vector<32x128xf32>
    %90 = tpu.matmul %88, %89, %cst_66 {dimension_numbers = #tpu.dot_dimension_numbers<[1], [0], [0], [1], [0, 0, 1, 1], [], []>} : vector<32x512xbf16>, vector<512x128xbf16>, vector<32x128xf32> -> vector<32x128xf32>
    %cst_67 = arith.constant dense<0.000000e+00> : vector<128xf32>
    %91 = vector.multi_reduction <add>, %90, %cst_67 [0] : vector<32x128xf32> to vector<128xf32>
    %92 = vector.shape_cast %91 : vector<128xf32> to vector<1x128xf32>
    %cst_68 = arith.constant 3.200000e+01 : f32
    %93 = vector.broadcast %cst_68 : f32 to vector<1x128xf32>
    %94 = arith.divf %92, %93 : vector<1x128xf32>
    %95 = vector.broadcast %94 : vector<1x128xf32> to vector<32x128xf32>
    %96 = arith.subf %90, %95 : vector<32x128xf32>
    %97 = arith.mulf %96, %96 : vector<32x128xf32>
    %cst_69 = arith.constant dense<0.000000e+00> : vector<128xf32>
    %98 = vector.multi_reduction <add>, %97, %cst_69 [0] : vector<32x128xf32> to vector<128xf32>
    %99 = vector.shape_cast %98 : vector<128xf32> to vector<1x128xf32>
    %cst_70 = arith.constant 3.200000e+01 : f32
    %100 = vector.broadcast %cst_70 : f32 to vector<1x128xf32>
    %101 = arith.divf %99, %100 : vector<1x128xf32>
    %cst_71 = arith.constant 9.99999974E-6 : f32
    %102 = vector.broadcast %cst_71 : f32 to vector<1x128xf32>
    %103 = arith.addf %101, %102 : vector<1x128xf32>
    %104 = math.rsqrt %103 : vector<1x128xf32>
    %105 = vector.broadcast %104 : vector<1x128xf32> to vector<32x128xf32>
    %106 = arith.mulf %96, %105 : vector<32x128xf32>
    %c0_72 = arith.constant 0 : index
    %c0_73 = arith.constant 0 : index
    %107 = vector.load %arg9[%c0_72, %c0_73] : memref<1x128xf32, #tpu.memory_space<vmem>>, vector<1x128xf32>
    %108 = vector.broadcast %107 : vector<1x128xf32> to vector<32x128xf32>
    %109 = arith.mulf %106, %108 : vector<32x128xf32>
    %c0_74 = arith.constant 0 : index
    %c0_75 = arith.constant 0 : index
    %110 = vector.load %arg10[%c0_74, %c0_75] : memref<1x128xf32, #tpu.memory_space<vmem>>, vector<1x128xf32>
    %111 = vector.broadcast %110 : vector<1x128xf32> to vector<32x128xf32>
    %112 = arith.addf %109, %111 : vector<32x128xf32>
    %cst_76 = arith.constant 0.000000e+00 : f32
    %113 = vector.broadcast %cst_76 : f32 to vector<32x128xf32>
    %114 = arith.maximumf %112, %113 : vector<32x128xf32>
    %115 = vector.shape_cast %114 : vector<32x128xf32> to vector<2x4x4x128xf32>
    %cst_77 = arith.constant 0.000000e+00 : f32
    %116 = vector.broadcast %cst_77 : f32 to vector<2x6x6x128xf32>
    %c0_78 = arith.constant 0 : index
    %c0_79 = arith.constant 0 : index
    %c0_80 = arith.constant 0 : index
    %c0_81 = arith.constant 0 : index
    %117 = vector.load %arg27[%c0_78, %c0_79, %c0_80, %c0_81] : memref<2x6x6x128xf32, #tpu.memory_space<vmem>>, vector<2x6x6x128xf32>
    tpu.vector_store %arg27[%c0_78, %c0_79, %c0_80, %c0_81], %116 {strides = array<i32>} : memref<2x6x6x128xf32, #tpu.memory_space<vmem>>, vector<2x6x6x128xf32>,
    %c0_82 = arith.constant 0 : index
    %c1_83 = arith.constant 1 : index
    %c1_84 = arith.constant 1 : index
    %c0_85 = arith.constant 0 : index
    %118 = vector.load %arg27[%c0_82, %c1_83, %c1_84, %c0_85] : memref<2x6x6x128xf32, #tpu.memory_space<vmem>>, vector<2x4x4x128xf32>
    tpu.vector_store %arg27[%c0_82, %c1_83, %c1_84, %c0_85], %115 {strides = array<i32>} : memref<2x6x6x128xf32, #tpu.memory_space<vmem>>, vector<2x4x4x128xf32>,
    %c0_86 = arith.constant 0 : index
    %c0_87 = arith.constant 0 : index
    %c0_88 = arith.constant 0 : index
    %c0_89 = arith.constant 0 : index
    %119 = vector.load %arg27[%c0_86, %c0_87, %c0_88, %c0_89] : memref<2x6x6x128xf32, #tpu.memory_space<vmem>>, vector<2x6x6x128xf32>
    %120 = vector.extract_strided_slice %119 {offsets = [0, 0, 0, 0], sizes = [2, 5, 5, 128], strides = [1, 1, 1, 1]} : vector<2x6x6x128xf32> to vector<2x5x5x128xf32>
    %121 = vector.extract_strided_slice %119 {offsets = [0, 0, 1, 0], sizes = [2, 5, 5, 128], strides = [1, 1, 1, 1]} : vector<2x6x6x128xf32> to vector<2x5x5x128xf32>
    %122 = vector.extract_strided_slice %119 {offsets = [0, 1, 0, 0], sizes = [2, 5, 5, 128], strides = [1, 1, 1, 1]} : vector<2x6x6x128xf32> to vector<2x5x5x128xf32>
    %123 = vector.extract_strided_slice %119 {offsets = [0, 1, 1, 0], sizes = [2, 5, 5, 128], strides = [1, 1, 1, 1]} : vector<2x6x6x128xf32> to vector<2x5x5x128xf32>
    %124 = tpu.concatenate %120, %121, %122, %123 in 3 : vector<2x5x5x128xf32>, vector<2x5x5x128xf32>, vector<2x5x5x128xf32>, vector<2x5x5x128xf32> -> vector<2x5x5x512xf32>
    %125 = vector.shape_cast %124 : vector<2x5x5x512xf32> to vector<50x512xf32>
    %126 = arith.truncf %125 : vector<50x512xf32> to vector<50x512xbf16>
    %c0_90 = arith.constant 0 : index
    %c0_91 = arith.constant 0 : index
    %127 = vector.load %arg11[%c0_90, %c0_91] : memref<512x128xbf16, #tpu.memory_space<vmem>>, vector<512x128xbf16>
    %cst_92 = arith.constant dense<0.000000e+00> : vector<50x128xf32>
    %128 = tpu.matmul %126, %127, %cst_92 {dimension_numbers = #tpu.dot_dimension_numbers<[1], [0], [0], [1], [0, 0, 1, 1], [], []>} : vector<50x512xbf16>, vector<512x128xbf16>, vector<50x128xf32> -> vector<50x128xf32>
    %cst_93 = arith.constant dense<0.000000e+00> : vector<128xf32>
    %129 = vector.multi_reduction <add>, %128, %cst_93 [0] : vector<50x128xf32> to vector<128xf32>
    %130 = vector.shape_cast %129 : vector<128xf32> to vector<1x128xf32>
    %cst_94 = arith.constant 5.000000e+01 : f32
    %131 = vector.broadcast %cst_94 : f32 to vector<1x128xf32>
    %132 = arith.divf %130, %131 : vector<1x128xf32>
    %133 = vector.broadcast %132 : vector<1x128xf32> to vector<50x128xf32>
    %134 = arith.subf %128, %133 : vector<50x128xf32>
    %135 = arith.mulf %134, %134 : vector<50x128xf32>
    %cst_95 = arith.constant dense<0.000000e+00> : vector<128xf32>
    %136 = vector.multi_reduction <add>, %135, %cst_95 [0] : vector<50x128xf32> to vector<128xf32>
    %137 = vector.shape_cast %136 : vector<128xf32> to vector<1x128xf32>
    %cst_96 = arith.constant 5.000000e+01 : f32
    %138 = vector.broadcast %cst_96 : f32 to vector<1x128xf32>
    %139 = arith.divf %137, %138 : vector<1x128xf32>
    %cst_97 = arith.constant 9.99999974E-6 : f32
    %140 = vector.broadcast %cst_97 : f32 to vector<1x128xf32>
    %141 = arith.addf %139, %140 : vector<1x128xf32>
    %142 = math.rsqrt %141 : vector<1x128xf32>
    %143 = vector.broadcast %142 : vector<1x128xf32> to vector<50x128xf32>
    %144 = arith.mulf %134, %143 : vector<50x128xf32>
    %c0_98 = arith.constant 0 : index
    %c0_99 = arith.constant 0 : index
    %145 = vector.load %arg12[%c0_98, %c0_99] : memref<1x128xf32, #tpu.memory_space<vmem>>, vector<1x128xf32>
    %146 = vector.broadcast %145 : vector<1x128xf32> to vector<50x128xf32>
    %147 = arith.mulf %144, %146 : vector<50x128xf32>
    %c0_100 = arith.constant 0 : index
    %c0_101 = arith.constant 0 : index
    %148 = vector.load %arg13[%c0_100, %c0_101] : memref<1x128xf32, #tpu.memory_space<vmem>>, vector<1x128xf32>
    %149 = vector.broadcast %148 : vector<1x128xf32> to vector<50x128xf32>
    %150 = arith.addf %147, %149 : vector<50x128xf32>
    %cst_102 = arith.constant 0.000000e+00 : f32
    %151 = vector.broadcast %cst_102 : f32 to vector<50x128xf32>
    %152 = arith.maximumf %150, %151 : vector<50x128xf32>
    %153 = vector.shape_cast %152 : vector<50x128xf32> to vector<2x5x5x128xf32>
    %cst_103 = arith.constant 0.000000e+00 : f32
    %154 = vector.broadcast %cst_103 : f32 to vector<2x7x7x128xf32>
    %c0_104 = arith.constant 0 : index
    %c0_105 = arith.constant 0 : index
    %c0_106 = arith.constant 0 : index
    %c0_107 = arith.constant 0 : index
    %155 = vector.load %arg28[%c0_104, %c0_105, %c0_106, %c0_107] : memref<2x7x7x128xf32, #tpu.memory_space<vmem>>, vector<2x7x7x128xf32>
    tpu.vector_store %arg28[%c0_104, %c0_105, %c0_106, %c0_107], %154 {strides = array<i32>} : memref<2x7x7x128xf32, #tpu.memory_space<vmem>>, vector<2x7x7x128xf32>,
    %c0_108 = arith.constant 0 : index
    %c1_109 = arith.constant 1 : index
    %c1_110 = arith.constant 1 : index
    %c0_111 = arith.constant 0 : index
    %156 = vector.load %arg28[%c0_108, %c1_109, %c1_110, %c0_111] : memref<2x7x7x128xf32, #tpu.memory_space<vmem>>, vector<2x5x5x128xf32>
    tpu.vector_store %arg28[%c0_108, %c1_109, %c1_110, %c0_111], %153 {strides = array<i32>} : memref<2x7x7x128xf32, #tpu.memory_space<vmem>>, vector<2x5x5x128xf32>,
    %c0_112 = arith.constant 0 : index
    %c0_113 = arith.constant 0 : index
    %c0_114 = arith.constant 0 : index
    %c0_115 = arith.constant 0 : index
    %157 = vector.load %arg28[%c0_112, %c0_113, %c0_114, %c0_115] : memref<2x7x7x128xf32, #tpu.memory_space<vmem>>, vector<2x7x7x128xf32>
    %158 = vector.extract_strided_slice %157 {offsets = [0, 0, 0, 0], sizes = [2, 6, 6, 128], strides = [1, 1, 1, 1]} : vector<2x7x7x128xf32> to vector<2x6x6x128xf32>
    %159 = vector.extract_strided_slice %157 {offsets = [0, 0, 1, 0], sizes = [2, 6, 6, 128], strides = [1, 1, 1, 1]} : vector<2x7x7x128xf32> to vector<2x6x6x128xf32>
    %160 = vector.extract_strided_slice %157 {offsets = [0, 1, 0, 0], sizes = [2, 6, 6, 128], strides = [1, 1, 1, 1]} : vector<2x7x7x128xf32> to vector<2x6x6x128xf32>
    %161 = vector.extract_strided_slice %157 {offsets = [0, 1, 1, 0], sizes = [2, 6, 6, 128], strides = [1, 1, 1, 1]} : vector<2x7x7x128xf32> to vector<2x6x6x128xf32>
    %162 = tpu.concatenate %158, %159, %160, %161 in 3 : vector<2x6x6x128xf32>, vector<2x6x6x128xf32>, vector<2x6x6x128xf32>, vector<2x6x6x128xf32> -> vector<2x6x6x512xf32>
    %163 = vector.shape_cast %162 : vector<2x6x6x512xf32> to vector<72x512xf32>
    %164 = arith.truncf %163 : vector<72x512xf32> to vector<72x512xbf16>
    %c0_116 = arith.constant 0 : index
    %c0_117 = arith.constant 0 : index
    %165 = vector.load %arg14[%c0_116, %c0_117] : memref<512x128xbf16, #tpu.memory_space<vmem>>, vector<512x128xbf16>
    %cst_118 = arith.constant dense<0.000000e+00> : vector<72x128xf32>
    %166 = tpu.matmul %164, %165, %cst_118 {dimension_numbers = #tpu.dot_dimension_numbers<[1], [0], [0], [1], [0, 0, 1, 1], [], []>} : vector<72x512xbf16>, vector<512x128xbf16>, vector<72x128xf32> -> vector<72x128xf32>
    %cst_119 = arith.constant dense<0.000000e+00> : vector<128xf32>
    %167 = vector.multi_reduction <add>, %166, %cst_119 [0] : vector<72x128xf32> to vector<128xf32>
    %168 = vector.shape_cast %167 : vector<128xf32> to vector<1x128xf32>
    %cst_120 = arith.constant 7.200000e+01 : f32
    %169 = vector.broadcast %cst_120 : f32 to vector<1x128xf32>
    %170 = arith.divf %168, %169 : vector<1x128xf32>
    %171 = vector.broadcast %170 : vector<1x128xf32> to vector<72x128xf32>
    %172 = arith.subf %166, %171 : vector<72x128xf32>
    %173 = arith.mulf %172, %172 : vector<72x128xf32>
    %cst_121 = arith.constant dense<0.000000e+00> : vector<128xf32>
    %174 = vector.multi_reduction <add>, %173, %cst_121 [0] : vector<72x128xf32> to vector<128xf32>
    %175 = vector.shape_cast %174 : vector<128xf32> to vector<1x128xf32>
    %cst_122 = arith.constant 7.200000e+01 : f32
    %176 = vector.broadcast %cst_122 : f32 to vector<1x128xf32>
    %177 = arith.divf %175, %176 : vector<1x128xf32>
    %cst_123 = arith.constant 9.99999974E-6 : f32
    %178 = vector.broadcast %cst_123 : f32 to vector<1x128xf32>
    %179 = arith.addf %177, %178 : vector<1x128xf32>
    %180 = math.rsqrt %179 : vector<1x128xf32>
    %181 = vector.broadcast %180 : vector<1x128xf32> to vector<72x128xf32>
    %182 = arith.mulf %172, %181 : vector<72x128xf32>
    %c0_124 = arith.constant 0 : index
    %c0_125 = arith.constant 0 : index
    %183 = vector.load %arg15[%c0_124, %c0_125] : memref<1x128xf32, #tpu.memory_space<vmem>>, vector<1x128xf32>
    %184 = vector.broadcast %183 : vector<1x128xf32> to vector<72x128xf32>
    %185 = arith.mulf %182, %184 : vector<72x128xf32>
    %c0_126 = arith.constant 0 : index
    %c0_127 = arith.constant 0 : index
    %186 = vector.load %arg16[%c0_126, %c0_127] : memref<1x128xf32, #tpu.memory_space<vmem>>, vector<1x128xf32>
    %187 = vector.broadcast %186 : vector<1x128xf32> to vector<72x128xf32>
    %188 = arith.addf %185, %187 : vector<72x128xf32>
    %cst_128 = arith.constant 0.000000e+00 : f32
    %189 = vector.broadcast %cst_128 : f32 to vector<72x128xf32>
    %190 = arith.maximumf %188, %189 : vector<72x128xf32>
    %191 = vector.shape_cast %190 : vector<72x128xf32> to vector<2x6x6x128xf32>
    %cst_129 = arith.constant 0.000000e+00 : f32
    %192 = vector.broadcast %cst_129 : f32 to vector<2x8x8x128xf32>
    %c0_130 = arith.constant 0 : index
    %c0_131 = arith.constant 0 : index
    %c0_132 = arith.constant 0 : index
    %c0_133 = arith.constant 0 : index
    %193 = vector.load %arg29[%c0_130, %c0_131, %c0_132, %c0_133] : memref<2x8x8x128xf32, #tpu.memory_space<vmem>>, vector<2x8x8x128xf32>
    tpu.vector_store %arg29[%c0_130, %c0_131, %c0_132, %c0_133], %192 {strides = array<i32>} : memref<2x8x8x128xf32, #tpu.memory_space<vmem>>, vector<2x8x8x128xf32>,
    %c0_134 = arith.constant 0 : index
    %c1_135 = arith.constant 1 : index
    %c1_136 = arith.constant 1 : index
    %c0_137 = arith.constant 0 : index
    %194 = vector.load %arg29[%c0_134, %c1_135, %c1_136, %c0_137] : memref<2x8x8x128xf32, #tpu.memory_space<vmem>>, vector<2x6x6x128xf32>
    tpu.vector_store %arg29[%c0_134, %c1_135, %c1_136, %c0_137], %191 {strides = array<i32>} : memref<2x8x8x128xf32, #tpu.memory_space<vmem>>, vector<2x6x6x128xf32>,
    %c0_138 = arith.constant 0 : index
    %c0_139 = arith.constant 0 : index
    %c0_140 = arith.constant 0 : index
    %c0_141 = arith.constant 0 : index
    %195 = vector.load %arg29[%c0_138, %c0_139, %c0_140, %c0_141] : memref<2x8x8x128xf32, #tpu.memory_space<vmem>>, vector<2x8x8x128xf32>
    %196 = vector.extract_strided_slice %195 {offsets = [0, 0, 0, 0], sizes = [2, 7, 7, 128], strides = [1, 1, 1, 1]} : vector<2x8x8x128xf32> to vector<2x7x7x128xf32>
    %197 = vector.extract_strided_slice %195 {offsets = [0, 0, 1, 0], sizes = [2, 7, 7, 128], strides = [1, 1, 1, 1]} : vector<2x8x8x128xf32> to vector<2x7x7x128xf32>
    %198 = vector.extract_strided_slice %195 {offsets = [0, 1, 0, 0], sizes = [2, 7, 7, 128], strides = [1, 1, 1, 1]} : vector<2x8x8x128xf32> to vector<2x7x7x128xf32>
    %199 = vector.extract_strided_slice %195 {offsets = [0, 1, 1, 0], sizes = [2, 7, 7, 128], strides = [1, 1, 1, 1]} : vector<2x8x8x128xf32> to vector<2x7x7x128xf32>
    %200 = tpu.concatenate %196, %197, %198, %199 in 3 : vector<2x7x7x128xf32>, vector<2x7x7x128xf32>, vector<2x7x7x128xf32>, vector<2x7x7x128xf32> -> vector<2x7x7x512xf32>
    %201 = vector.shape_cast %200 : vector<2x7x7x512xf32> to vector<98x512xf32>
    %202 = arith.truncf %201 : vector<98x512xf32> to vector<98x512xbf16>
    %c0_142 = arith.constant 0 : index
    %c0_143 = arith.constant 0 : index
    %203 = vector.load %arg17[%c0_142, %c0_143] : memref<512x128xbf16, #tpu.memory_space<vmem>>, vector<512x128xbf16>
    %cst_144 = arith.constant dense<0.000000e+00> : vector<98x128xf32>
    %204 = tpu.matmul %202, %203, %cst_144 {dimension_numbers = #tpu.dot_dimension_numbers<[1], [0], [0], [1], [0, 0, 1, 1], [], []>} : vector<98x512xbf16>, vector<512x128xbf16>, vector<98x128xf32> -> vector<98x128xf32>
    %cst_145 = arith.constant dense<0.000000e+00> : vector<128xf32>
    %205 = vector.multi_reduction <add>, %204, %cst_145 [0] : vector<98x128xf32> to vector<128xf32>
    %206 = vector.shape_cast %205 : vector<128xf32> to vector<1x128xf32>
    %cst_146 = arith.constant 9.800000e+01 : f32
    %207 = vector.broadcast %cst_146 : f32 to vector<1x128xf32>
    %208 = arith.divf %206, %207 : vector<1x128xf32>
    %209 = vector.broadcast %208 : vector<1x128xf32> to vector<98x128xf32>
    %210 = arith.subf %204, %209 : vector<98x128xf32>
    %211 = arith.mulf %210, %210 : vector<98x128xf32>
    %cst_147 = arith.constant dense<0.000000e+00> : vector<128xf32>
    %212 = vector.multi_reduction <add>, %211, %cst_147 [0] : vector<98x128xf32> to vector<128xf32>
    %213 = vector.shape_cast %212 : vector<128xf32> to vector<1x128xf32>
    %cst_148 = arith.constant 9.800000e+01 : f32
    %214 = vector.broadcast %cst_148 : f32 to vector<1x128xf32>
    %215 = arith.divf %213, %214 : vector<1x128xf32>
    %cst_149 = arith.constant 9.99999974E-6 : f32
    %216 = vector.broadcast %cst_149 : f32 to vector<1x128xf32>
    %217 = arith.addf %215, %216 : vector<1x128xf32>
    %218 = math.rsqrt %217 : vector<1x128xf32>
    %219 = vector.broadcast %218 : vector<1x128xf32> to vector<98x128xf32>
    %220 = arith.mulf %210, %219 : vector<98x128xf32>
    %c0_150 = arith.constant 0 : index
    %c0_151 = arith.constant 0 : index
    %221 = vector.load %arg18[%c0_150, %c0_151] : memref<1x128xf32, #tpu.memory_space<vmem>>, vector<1x128xf32>
    %222 = vector.broadcast %221 : vector<1x128xf32> to vector<98x128xf32>
    %223 = arith.mulf %220, %222 : vector<98x128xf32>
    %c0_152 = arith.constant 0 : index
    %c0_153 = arith.constant 0 : index
    %224 = vector.load %arg19[%c0_152, %c0_153] : memref<1x128xf32, #tpu.memory_space<vmem>>, vector<1x128xf32>
    %225 = vector.broadcast %224 : vector<1x128xf32> to vector<98x128xf32>
    %226 = arith.addf %223, %225 : vector<98x128xf32>
    %cst_154 = arith.constant 0.000000e+00 : f32
    %227 = vector.broadcast %cst_154 : f32 to vector<98x128xf32>
    %228 = arith.maximumf %226, %227 : vector<98x128xf32>
    %229 = vector.shape_cast %228 : vector<98x128xf32> to vector<2x7x7x128xf32>
    %cst_155 = arith.constant 0.000000e+00 : f32
    %230 = vector.broadcast %cst_155 : f32 to vector<2x9x9x128xf32>
    %c0_156 = arith.constant 0 : index
    %c0_157 = arith.constant 0 : index
    %c0_158 = arith.constant 0 : index
    %c0_159 = arith.constant 0 : index
    %231 = vector.load %arg30[%c0_156, %c0_157, %c0_158, %c0_159] : memref<2x9x9x128xf32, #tpu.memory_space<vmem>>, vector<2x9x9x128xf32>
    tpu.vector_store %arg30[%c0_156, %c0_157, %c0_158, %c0_159], %230 {strides = array<i32>} : memref<2x9x9x128xf32, #tpu.memory_space<vmem>>, vector<2x9x9x128xf32>,
    %c0_160 = arith.constant 0 : index
    %c1_161 = arith.constant 1 : index
    %c1_162 = arith.constant 1 : index
    %c0_163 = arith.constant 0 : index
    %232 = vector.load %arg30[%c0_160, %c1_161, %c1_162, %c0_163] : memref<2x9x9x128xf32, #tpu.memory_space<vmem>>, vector<2x7x7x128xf32>
    tpu.vector_store %arg30[%c0_160, %c1_161, %c1_162, %c0_163], %229 {strides = array<i32>} : memref<2x9x9x128xf32, #tpu.memory_space<vmem>>, vector<2x7x7x128xf32>,
    %c0_164 = arith.constant 0 : index
    %c0_165 = arith.constant 0 : index
    %c0_166 = arith.constant 0 : index
    %c0_167 = arith.constant 0 : index
    %233 = vector.load %arg30[%c0_164, %c0_165, %c0_166, %c0_167] : memref<2x9x9x128xf32, #tpu.memory_space<vmem>>, vector<2x9x9x128xf32>
    %234 = vector.extract_strided_slice %233 {offsets = [0, 0, 0, 0], sizes = [2, 8, 8, 128], strides = [1, 1, 1, 1]} : vector<2x9x9x128xf32> to vector<2x8x8x128xf32>
    %235 = vector.extract_strided_slice %233 {offsets = [0, 0, 1, 0], sizes = [2, 8, 8, 128], strides = [1, 1, 1, 1]} : vector<2x9x9x128xf32> to vector<2x8x8x128xf32>
    %236 = vector.extract_strided_slice %233 {offsets = [0, 1, 0, 0], sizes = [2, 8, 8, 128], strides = [1, 1, 1, 1]} : vector<2x9x9x128xf32> to vector<2x8x8x128xf32>
    %237 = vector.extract_strided_slice %233 {offsets = [0, 1, 1, 0], sizes = [2, 8, 8, 128], strides = [1, 1, 1, 1]} : vector<2x9x9x128xf32> to vector<2x8x8x128xf32>
    %238 = tpu.concatenate %234, %235, %236, %237 in 3 : vector<2x8x8x128xf32>, vector<2x8x8x128xf32>, vector<2x8x8x128xf32>, vector<2x8x8x128xf32> -> vector<2x8x8x512xf32>
    %239 = vector.shape_cast %238 : vector<2x8x8x512xf32> to vector<128x512xf32>
    %240 = arith.truncf %239 : vector<128x512xf32> to vector<128x512xbf16>
    %c0_168 = arith.constant 0 : index
    %c0_169 = arith.constant 0 : index
    %241 = vector.load %arg20[%c0_168, %c0_169] : memref<512x128xbf16, #tpu.memory_space<vmem>>, vector<512x128xbf16>
    %cst_170 = arith.constant dense<0.000000e+00> : vector<128x128xf32>
    %242 = tpu.matmul %240, %241, %cst_170 {dimension_numbers = #tpu.dot_dimension_numbers<[1], [0], [0], [1], [0, 0, 1, 1], [], []>} : vector<128x512xbf16>, vector<512x128xbf16>, vector<128x128xf32> -> vector<128x128xf32>
    %cst_171 = arith.constant dense<0.000000e+00> : vector<128xf32>
    %243 = vector.multi_reduction <add>, %242, %cst_171 [0] : vector<128x128xf32> to vector<128xf32>
    %244 = vector.shape_cast %243 : vector<128xf32> to vector<1x128xf32>
    %cst_172 = arith.constant 1.280000e+02 : f32
    %245 = vector.broadcast %cst_172 : f32 to vector<1x128xf32>
    %246 = arith.divf %244, %245 : vector<1x128xf32>
    %247 = vector.broadcast %246 : vector<1x128xf32> to vector<128x128xf32>
    %248 = arith.subf %242, %247 : vector<128x128xf32>
    %249 = arith.mulf %248, %248 : vector<128x128xf32>
    %cst_173 = arith.constant dense<0.000000e+00> : vector<128xf32>
    %250 = vector.multi_reduction <add>, %249, %cst_173 [0] : vector<128x128xf32> to vector<128xf32>
    %251 = vector.shape_cast %250 : vector<128xf32> to vector<1x128xf32>
    %cst_174 = arith.constant 1.280000e+02 : f32
    %252 = vector.broadcast %cst_174 : f32 to vector<1x128xf32>
    %253 = arith.divf %251, %252 : vector<1x128xf32>
    %cst_175 = arith.constant 9.99999974E-6 : f32
    %254 = vector.broadcast %cst_175 : f32 to vector<1x128xf32>
    %255 = arith.addf %253, %254 : vector<1x128xf32>
    %256 = math.rsqrt %255 : vector<1x128xf32>
    %257 = vector.broadcast %256 : vector<1x128xf32> to vector<128x128xf32>
    %258 = arith.mulf %248, %257 : vector<128x128xf32>
    %c0_176 = arith.constant 0 : index
    %c0_177 = arith.constant 0 : index
    %259 = vector.load %arg21[%c0_176, %c0_177] : memref<1x128xf32, #tpu.memory_space<vmem>>, vector<1x128xf32>
    %260 = vector.broadcast %259 : vector<1x128xf32> to vector<128x128xf32>
    %261 = arith.mulf %258, %260 : vector<128x128xf32>
    %c0_178 = arith.constant 0 : index
    %c0_179 = arith.constant 0 : index
    %262 = vector.load %arg22[%c0_178, %c0_179] : memref<1x128xf32, #tpu.memory_space<vmem>>, vector<1x128xf32>
    %263 = vector.broadcast %262 : vector<1x128xf32> to vector<128x128xf32>
    %264 = arith.addf %261, %263 : vector<128x128xf32>
    %265 = math.tanh %264 : vector<128x128xf32>
    %266 = vector.shape_cast %265 : vector<128x128xf32> to vector<2x8x8x128xf32>
    %c0_180 = arith.constant 0 : index
    %c0_181 = arith.constant 0 : index
    %c0_182 = arith.constant 0 : index
    %c0_183 = arith.constant 0 : index
    %267 = vector.load %arg23[%c0_180, %c0_181, %c0_182, %c0_183] : memref<2x8x8x128xf32, #tpu.memory_space<vmem>>, vector<2x8x8x128xf32>
    tpu.vector_store %arg23[%c0_180, %c0_181, %c0_182, %c0_183], %266 {strides = array<i32>} : memref<2x8x8x128xf32, #tpu.memory_space<vmem>>, vector<2x8x8x128xf32>,
    return
  }
  func.func @transform_0(%arg0: i32) -> (i32, i32) {
    %c0_i32 = arith.constant 0 : i32
    %c0_i32_0 = arith.constant 0 : i32
    %c0_i32_1 = arith.constant 0 : i32
    return %c0_i32, %c0_i32_0 : i32, i32
  }
  func.func @transform_1(%arg0: i32) -> (i32, i32) {
    %c0_i32 = arith.constant 0 : i32
    %c0_i32_0 = arith.constant 0 : i32
    %c0_i32_1 = arith.constant 0 : i32
    return %c0_i32, %c0_i32_0 : i32, i32
  }
  func.func @transform_2(%arg0: i32) -> (i32, i32) {
    %c0_i32 = arith.constant 0 : i32
    %c0_i32_0 = arith.constant 0 : i32
    %c0_i32_1 = arith.constant 0 : i32
    return %c0_i32, %c0_i32_0 : i32, i32
  }
  func.func @transform_3(%arg0: i32) -> (i32, i32) {
    %c0_i32 = arith.constant 0 : i32
    %c0_i32_0 = arith.constant 0 : i32
    %c0_i32_1 = arith.constant 0 : i32
    return %c0_i32, %c0_i32_0 : i32, i32
  }
  func.func @transform_4(%arg0: i32) -> (i32, i32) {
    %c0_i32 = arith.constant 0 : i32
    %c0_i32_0 = arith.constant 0 : i32
    %c0_i32_1 = arith.constant 0 : i32
    return %c0_i32, %c0_i32_0 : i32, i32
  }
  func.func @transform_5(%arg0: i32) -> (i32, i32) {
    %c0_i32 = arith.constant 0 : i32
    %c0_i32_0 = arith.constant 0 : i32
    %c0_i32_1 = arith.constant 0 : i32
    return %c0_i32, %c0_i32_0 : i32, i32
  }
  func.func @transform_6(%arg0: i32) -> (i32, i32) {
    %c0_i32 = arith.constant 0 : i32
    %c0_i32_0 = arith.constant 0 : i32
    %c0_i32_1 = arith.constant 0 : i32
    return %c0_i32, %c0_i32_0 : i32, i32
  }
  func.func @transform_7(%arg0: i32) -> (i32, i32) {
    %c0_i32 = arith.constant 0 : i32
    %c0_i32_0 = arith.constant 0 : i32
    %c0_i32_1 = arith.constant 0 : i32
    return %c0_i32, %c0_i32_0 : i32, i32
  }
  func.func @transform_8(%arg0: i32) -> (i32, i32) {
    %c0_i32 = arith.constant 0 : i32
    %c0_i32_0 = arith.constant 0 : i32
    %c0_i32_1 = arith.constant 0 : i32
    return %c0_i32, %c0_i32_0 : i32, i32
  }
  func.func @transform_9(%arg0: i32) -> (i32, i32) {
    %c0_i32 = arith.constant 0 : i32
    %c0_i32_0 = arith.constant 0 : i32
    %c0_i32_1 = arith.constant 0 : i32
    return %c0_i32, %c0_i32_0 : i32, i32
  }
  func.func @transform_10(%arg0: i32) -> (i32, i32) {
    %c0_i32 = arith.constant 0 : i32
    %c0_i32_0 = arith.constant 0 : i32
    %c0_i32_1 = arith.constant 0 : i32
    return %c0_i32, %c0_i32_0 : i32, i32
  }
  func.func @transform_11(%arg0: i32) -> (i32, i32) {
    %c0_i32 = arith.constant 0 : i32
    %c0_i32_0 = arith.constant 0 : i32
    %c0_i32_1 = arith.constant 0 : i32
    return %c0_i32, %c0_i32_0 : i32, i32
  }
  func.func @transform_12(%arg0: i32) -> (i32, i32) {
    %c0_i32 = arith.constant 0 : i32
    %c0_i32_0 = arith.constant 0 : i32
    %c0_i32_1 = arith.constant 0 : i32
    return %c0_i32, %c0_i32_0 : i32, i32
  }
  func.func @transform_13(%arg0: i32) -> (i32, i32) {
    %c0_i32 = arith.constant 0 : i32
    %c0_i32_0 = arith.constant 0 : i32
    %c0_i32_1 = arith.constant 0 : i32
    return %c0_i32, %c0_i32_0 : i32, i32
  }
  func.func @transform_14(%arg0: i32) -> (i32, i32) {
    %c0_i32 = arith.constant 0 : i32
    %c0_i32_0 = arith.constant 0 : i32
    %c0_i32_1 = arith.constant 0 : i32
    return %c0_i32, %c0_i32_0 : i32, i32
  }
  func.func @transform_15(%arg0: i32) -> (i32, i32) {
    %c0_i32 = arith.constant 0 : i32
    %c0_i32_0 = arith.constant 0 : i32
    %c0_i32_1 = arith.constant 0 : i32
    return %c0_i32, %c0_i32_0 : i32, i32
  }
  func.func @transform_16(%arg0: i32) -> (i32, i32) {
    %c0_i32 = arith.constant 0 : i32
    %c0_i32_0 = arith.constant 0 : i32
    %c0_i32_1 = arith.constant 0 : i32
    return %c0_i32, %c0_i32_0 : i32, i32
  }
  func.func @transform_17(%arg0: i32) -> (i32, i32) {
    %c0_i32 = arith.constant 0 : i32
    %c0_i32_0 = arith.constant 0 : i32
    %c0_i32_1 = arith.constant 0 : i32
    return %c0_i32, %c0_i32_0 : i32, i32
  }
  func.func @transform_18(%arg0: i32) -> (i32, i32) {
    %c0_i32 = arith.constant 0 : i32
    %c0_i32_0 = arith.constant 0 : i32
    %c0_i32_1 = arith.constant 0 : i32
    return %c0_i32, %c0_i32_0 : i32, i32
  }
  func.func @transform_19(%arg0: i32) -> (i32, i32) {
    %c0_i32 = arith.constant 0 : i32
    %c0_i32_0 = arith.constant 0 : i32
    %c0_i32_1 = arith.constant 0 : i32
    return %c0_i32, %c0_i32_0 : i32, i32
  }
  func.func @transform_20(%arg0: i32) -> (i32, i32) {
    %c0_i32 = arith.constant 0 : i32
    %c0_i32_0 = arith.constant 0 : i32
    %c0_i32_1 = arith.constant 0 : i32
    return %c0_i32, %c0_i32_0 : i32, i32
  }
  func.func @transform_21(%arg0: i32) -> (i32, i32) {
    %c0_i32 = arith.constant 0 : i32
    %c0_i32_0 = arith.constant 0 : i32
    %c0_i32_1 = arith.constant 0 : i32
    return %c0_i32, %c0_i32_0 : i32, i32
  }
  func.func @transform_22(%arg0: i32) -> (i32, i32, i32, i32) {
    %c0_i32 = arith.constant 0 : i32
    %c0_i32_0 = arith.constant 0 : i32
    %c0_i32_1 = arith.constant 0 : i32
    %c0_i32_2 = arith.constant 0 : i32
    %c0_i32_3 = arith.constant 0 : i32
    return %c0_i32, %c0_i32_0, %c0_i32_1, %c0_i32_2 : i32, i32, i32, i32
  }
}

</mosaic_0001>

<llo_original>
// kernel: _generator_forward.1
$region0: #{_generator_forward.1}
  #allocation0 [shape = 'u32[]', space=smem, size = 0x4, offset = 0x4, fixed_abs, tag = 'smem constant byte address 0x4 - core index']
  #allocation1 [shape = 'u32[144,128]{1,0:T(1,128)}', space=vmem, size = 0x12000, scoped, tag = 'internal scratch']
  #allocation2 [shape = 'f32[2,3,3,128]{3,2,1,0:T(4,128)}', space=vmem, size = 0x3000, scoped, tag = 'scratch operand']
  #allocation3 [shape = 'f32[2,4,4,128]{3,2,1,0:T(4,128)}', space=vmem, size = 0x4000, scoped, tag = 'scratch operand']
  #allocation4 [shape = 'f32[2,5,5,128]{3,2,1,0:T(8,128)}', space=vmem, size = 0xa000, scoped, tag = 'scratch operand']
  #allocation5 [shape = 'f32[2,6,6,128]{3,2,1,0:T(8,128)}', space=vmem, size = 0xc000, scoped, tag = 'scratch operand']
  #allocation6 [shape = 'f32[2,7,7,128]{3,2,1,0:T(8,128)}', space=vmem, size = 0xe000, scoped, tag = 'scratch operand']
  #allocation7 [shape = 'f32[2,8,8,128]{3,2,1,0:T(8,128)}', space=vmem, size = 0x10000, scoped, tag = 'scratch operand']
  #allocation8 [shape = 'f32[2,9,9,128]{3,2,1,0:T(8,128)}', space=vmem, size = 0x24000, scoped, tag = 'scratch operand']
  %s0 = inlined_call_operand.vmem [shape: f32[2,128], index: 0, kind: input, shape index: {}]
  %s1 = inlined_call_operand.hbm [shape: bf16[512,128], index: 1, kind: input, shape index: {}]
  %s2 = inlined_call_operand.vmem [shape: f32[1,128], index: 2, kind: input, shape index: {}]
  %s3 = inlined_call_operand.vmem [shape: f32[1,128], index: 3, kind: input, shape index: {}]
  %s4 = inlined_call_operand.hbm [shape: bf16[512,128], index: 4, kind: input, shape index: {}]
  %s5 = inlined_call_operand.vmem [shape: f32[1,128], index: 5, kind: input, shape index: {}]
  %s6 = inlined_call_operand.vmem [shape: f32[1,128], index: 6, kind: input, shape index: {}]
  %s7 = inlined_call_operand.hbm [shape: bf16[512,128], index: 7, kind: input, shape index: {}]
  %s8 = inlined_call_operand.vmem [shape: f32[1,128], index: 8, kind: input, shape index: {}]
  %s9 = inlined_call_operand.vmem [shape: f32[1,128], index: 9, kind: input, shape index: {}]
  %s10 = inlined_call_operand.hbm [shape: bf16[512,128], index: 10, kind: input, shape index: {}]
  %s11 = inlined_call_operand.vmem [shape: f32[1,128], index: 11, kind: input, shape index: {}]
  %s12 = inlined_call_operand.vmem [shape: f32[1,128], index: 12, kind: input, shape index: {}]
  %s13 = inlined_call_operand.hbm [shape: bf16[512,128], index: 13, kind: input, shape index: {}]
  %s14 = inlined_call_operand.vmem [shape: f32[1,128], index: 14, kind: input, shape index: {}]
  %s15 = inlined_call_operand.vmem [shape: f32[1,128], index: 15, kind: input, shape index: {}]
  %s16 = inlined_call_operand.hbm [shape: bf16[512,128], index: 16, kind: input, shape index: {}]
  %s17 = inlined_call_operand.vmem [shape: f32[1,128], index: 17, kind: input, shape index: {}]
  %s18 = inlined_call_operand.vmem [shape: f32[1,128], index: 18, kind: input, shape index: {}]
  %s19 = inlined_call_operand.hbm [shape: bf16[512,128], index: 19, kind: input, shape index: {}]
  %s20 = inlined_call_operand.vmem [shape: f32[1,128], index: 20, kind: input, shape index: {}]
  %s21 = inlined_call_operand.vmem [shape: f32[1,128], index: 21, kind: input, shape index: {}]
  %s22 = inlined_call_operand.vmem [shape: f32[2,8,8,128], index: 22, kind: output, shape index: {}]
  %s23 = sld [smem:[#allocation0]]
  $region126: #{_generator_forward.1} parent=0
    _
  %s25 = ssub.s32 1, %s23
  %s26 = scalar_select 0, %s25, %s23
  $region1: #{_generator_forward.1} parent=0
    #allocation9 [shape = 'u8[131072]{0}', space=vmem, size = 0x20000, scoped, tag = 'input window, operand 1, single buffered']
    #allocation10 [shape = 's32[1]{0}', space=sflag, size = 0x4, scoped, tag = 'scoped memory for _generator_forward.1']
    #allocation11 [shape = 'u8[131072]{0}', space=vmem, size = 0x20000, scoped, tag = 'input window, operand 4, single buffered']
    #allocation12 [shape = 's32[1]{0}', space=sflag, size = 0x4, scoped, tag = 'scoped memory for _generator_forward.1']
    #allocation13 [shape = 'u8[131072]{0}', space=vmem, size = 0x20000, scoped, tag = 'input window, operand 7, single buffered']
    #allocation14 [shape = 'u8[131072]{0}', space=vmem, size = 0x20000, scoped, tag = 'input window, operand 10, single buffered']
    #allocation15 [shape = 's32[1]{0}', space=sflag, size = 0x4, scoped, tag = 'scoped memory for _generator_forward.1']
    #allocation16 [shape = 'u8[131072]{0}', space=vmem, size = 0x20000, scoped, tag = 'input window, operand 13, single buffered']
    #allocation17 [shape = 'u8[131072]{0}', space=vmem, size = 0x20000, scoped, tag = 'input window, operand 16, single buffered']
    #allocation18 [shape = 's32[1]{0}', space=sflag, size = 0x4, scoped, tag = 'scoped memory for _generator_forward.1']
    #allocation19 [shape = 'u8[131072]{0}', space=vmem, size = 0x20000, scoped, tag = 'input window, operand 19, single buffered']
    %27 = vsyncpa [#allocation10], 0
    %28 = vsyncpa [#allocation12], 0
    %29 = vsyncpa [#allocation15], 0
    %30 = vsyncpa [#allocation18], 0
    // Predicated region
    $region2: #{_generator_forward.1} parent=1 // pred_check
      _
    $region3: #{_generator_forward.1} parent=1 // pred_check_branch
      %32 = sbr.rel (0) target = $region5
    $region4: #{_generator_forward.1} parent=1 // pred_region
      _
    $region5: #{_generator_forward.1} parent=1 // pred_fallthru
      _
    // Predicated region
    $region6: #{_generator_forward.1} parent=1 // pred_check
      _
    $region7: #{_generator_forward.1} parent=1 // pred_check_branch
      %34 = sbr.rel (0) target = $region9
    $region8: #{_generator_forward.1} parent=1 // pred_region
      %s36 = ssub.s32 4096, 4096
      %37 = vsyncadd [#allocation10], %s36
      %s38 = sshll.u32 [#allocation9], 4
      %s39 = int_to_ptr.vmem [resolvable:$true] %s38
      %44 = dma.hbm_to_vmem [thread:$0]  %s1, 4096, %s39, [#allocation10], 64, 64, 4
    $region9: #{_generator_forward.1} parent=1 // pred_fallthru
      _
    // Predicated region
    $region10: #{_generator_forward.1} parent=1 // pred_check
      _
    $region11: #{_generator_forward.1} parent=1 // pred_check_branch
      %46 = sbr.rel (0) target = $region13
    $region12: #{_generator_forward.1} parent=1 // pred_region
      _
    $region13: #{_generator_forward.1} parent=1 // pred_fallthru
      _
    // Predicated region
    $region14: #{_generator_forward.1} parent=1 // pred_check
      _
    $region15: #{_generator_forward.1} parent=1 // pred_check_branch
      %48 = sbr.rel (0) target = $region17
    $region16: #{_generator_forward.1} parent=1 // pred_region
      _
    $region17: #{_generator_forward.1} parent=1 // pred_fallthru
      _
    // Predicated region
    $region18: #{_generator_forward.1} parent=1 // pred_check
      _
    $region19: #{_generator_forward.1} parent=1 // pred_check_branch
      %50 = sbr.rel (0) target = $region21
    $region20: #{_generator_forward.1} parent=1 // pred_region
      %s52 = ssub.s32 4096, 4096
      %53 = vsyncadd [#allocation12], %s52
      %s54 = sshll.u32 [#allocation11], 4
      %s55 = int_to_ptr.vmem [resolvable:$true] %s54
      %60 = dma.hbm_to_vmem [thread:$0]  %s4, 4096, %s55, [#allocation12], 64, 64, 4
    $region21: #{_generator_forward.1} parent=1 // pred_fallthru
      _
    // Predicated region
    $region22: #{_generator_forward.1} parent=1 // pred_check
      _
    $region23: #{_generator_forward.1} parent=1 // pred_check_branch
      %62 = sbr.rel (0) target = $region25
    $region24: #{_generator_forward.1} parent=1 // pred_region
      _
    $region25: #{_generator_forward.1} parent=1 // pred_fallthru
      _
    // Predicated region
    $region26: #{_generator_forward.1} parent=1 // pred_check
      _
    $region27: #{_generator_forward.1} parent=1 // pred_check_branch
      %64 = sbr.rel (0) target = $region29
    $region28: #{_generator_forward.1} parent=1 // pred_region
      _
    $region29: #{_generator_forward.1} parent=1 // pred_fallthru
      _
    // Predicated region
    $region30: #{_generator_forward.1} parent=1 // pred_check
      _
    $region31: #{_generator_forward.1} parent=1 // pred_check_branch
      %66 = sbr.rel (0) target = $region33
    $region32: #{_generator_forward.1} parent=1 // pred_region
      %s68 = ssub.s32 4096, 4096
      %69 = vsyncadd [#allocation12], %s68
      %s70 = sshll.u32 [#allocation13], 4
      %s71 = int_to_ptr.vmem [resolvable:$true] %s70
      %76 = dma.hbm_to_vmem [thread:$0]  %s7, 4096, %s71, [#allocation12], 64, 64, 4
    $region33: #{_generator_forward.1} parent=1 // pred_fallthru
      _
    // Predicated region
    $region34: #{_generator_forward.1} parent=1 // pred_check
      _
    $region35: #{_generator_forward.1} parent=1 // pred_check_branch
      %78 = sbr.rel (0) target = $region37
    $region36: #{_generator_forward.1} parent=1 // pred_region
      _
    $region37: #{_generator_forward.1} parent=1 // pred_fallthru
      _
    // Predicated region
    $region38: #{_generator_forward.1} parent=1 // pred_check
      _
    $region39: #{_generator_forward.1} parent=1 // pred_check_branch
      %80 = sbr.rel (0) target = $region41
    $region40: #{_generator_forward.1} parent=1 // pred_region
      _
    $region41: #{_generator_forward.1} parent=1 // pred_fallthru
      _
    // Predicated region
    $region42: #{_generator_forward.1} parent=1 // pred_check
      _
    $region43: #{_generator_forward.1} parent=1 // pred_check_branch
      %82 = sbr.rel (0) target = $region45
    $region44: #{_generator_forward.1} parent=1 // pred_region
      %s84 = ssub.s32 4096, 4096
      %85 = vsyncadd [#allocation15], %s84
      %s86 = sshll.u32 [#allocation14], 4
      %s87 = int_to_ptr.vmem [resolvable:$true] %s86
      %92 = dma.hbm_to_vmem [thread:$0]  %s10, 4096, %s87, [#allocation15], 64, 64, 4
    $region45: #{_generator_forward.1} parent=1 // pred_fallthru
      _
    // Predicated region
    $region46: #{_generator_forward.1} parent=1 // pred_check
      _
    $region47: #{_generator_forward.1} parent=1 // pred_check_branch
      %94 = sbr.rel (0) target = $region49
    $region48: #{_generator_forward.1} parent=1 // pred_region
      _
    $region49: #{_generator_forward.1} parent=1 // pred_fallthru
      _
    // Predicated region
    $region50: #{_generator_forward.1} parent=1 // pred_check
      _
    $region51: #{_generator_forward.1} parent=1 // pred_check_branch
      %96 = sbr.rel (0) target = $region53
    $region52: #{_generator_forward.1} parent=1 // pred_region
      _
    $region53: #{_generator_forward.1} parent=1 // pred_fallthru
      _
    // Predicated region
    $region54: #{_generator_forward.1} parent=1 // pred_check
      _
    $region55: #{_generator_forward.1} parent=1 // pred_check_branch
      %98 = sbr.rel (0) target = $region57
    $region56: #{_generator_forward.1} parent=1 // pred_region
      %s100 = ssub.s32 4096, 4096
      %101 = vsyncadd [#allocation15], %s100
      %s102 = sshll.u32 [#allocation16], 4
      %s103 = int_to_ptr.vmem [resolvable:$true] %s102
      %108 = dma.hbm_to_vmem [thread:$0]  %s13, 4096, %s103, [#allocation15], 64, 64, 4
    $region57: #{_generator_forward.1} parent=1 // pred_fallthru
      _
    // Predicated region
    $region58: #{_generator_forward.1} parent=1 // pred_check
      _
    $region59: #{_generator_forward.1} parent=1 // pred_check_branch
      %110 = sbr.rel (0) target = $region61
    $region60: #{_generator_forward.1} parent=1 // pred_region
      _
    $region61: #{_generator_forward.1} parent=1 // pred_fallthru
      _
    // Predicated region
    $region62: #{_generator_forward.1} parent=1 // pred_check
      _
    $region63: #{_generator_forward.1} parent=1 // pred_check_branch
      %112 = sbr.rel (0) target = $region65
    $region64: #{_generator_forward.1} parent=1 // pred_region
      _
    $region65: #{_generator_forward.1} parent=1 // pred_fallthru
      _
    // Predicated region
    $region66: #{_generator_forward.1} parent=1 // pred_check
      _
    $region67: #{_generator_forward.1} parent=1 // pred_check_branch
      %114 = sbr.rel (0) target = $region69
    $region68: #{_generator_forward.1} parent=1 // pred_region
      %s116 = ssub.s32 4096, 4096
      %117 = vsyncadd [#allocation18], %s116
      %s118 = sshll.u32 [#allocation17], 4
      %s119 = int_to_ptr.vmem [resolvable:$true] %s118
      %124 = dma.hbm_to_vmem [thread:$0]  %s16, 4096, %s119, [#allocation18], 64, 64, 4
    $region69: #{_generator_forward.1} parent=1 // pred_fallthru
      _
    // Predicated region
    $region70: #{_generator_forward.1} parent=1 // pred_check
      _
    $region71: #{_generator_forward.1} parent=1 // pred_check_branch
      %126 = sbr.rel (0) target = $region73
    $region72: #{_generator_forward.1} parent=1 // pred_region
      _
    $region73: #{_generator_forward.1} parent=1 // pred_fallthru
      _
    // Predicated region
    $region74: #{_generator_forward.1} parent=1 // pred_check
      _
    $region75: #{_generator_forward.1} parent=1 // pred_check_branch
      %128 = sbr.rel (0) target = $region77
    $region76: #{_generator_forward.1} parent=1 // pred_region
      _
    $region77: #{_generator_forward.1} parent=1 // pred_fallthru
      _
    // Predicated region
    $region78: #{_generator_forward.1} parent=1 // pred_check
      _
    $region79: #{_generator_forward.1} parent=1 // pred_check_branch
      %130 = sbr.rel (0) target = $region81
    $region80: #{_generator_forward.1} parent=1 // pred_region
      %s132 = ssub.s32 4096, 4096
      %133 = vsyncadd [#allocation18], %s132
      %s134 = sshll.u32 [#allocation19], 4
      %s135 = int_to_ptr.vmem [resolvable:$true] %s134
      %140 = dma.hbm_to_vmem [thread:$0]  %s19, 4096, %s135, [#allocation18], 64, 64, 4
    $region81: #{_generator_forward.1} parent=1 // pred_fallthru
      _
    // Predicated region
    $region82: #{_generator_forward.1} parent=1 // pred_check
      _
    $region83: #{_generator_forward.1} parent=1 // pred_check_branch
      %142 = sbr.rel (0) target = $region85
    $region84: #{_generator_forward.1} parent=1 // pred_region
      _
    $region85: #{_generator_forward.1} parent=1 // pred_fallthru
      _
    // Predicated region
    $region86: #{_generator_forward.1} parent=1 // pred_check
      _
    $region87: #{_generator_forward.1} parent=1 // pred_check_branch
      %144 = sbr.rel (0) target = $region89
    $region88: #{_generator_forward.1} parent=1 // pred_region
      _
    $region89: #{_generator_forward.1} parent=1 // pred_fallthru
      _
    // Predicated region
    $region90: #{_generator_forward.1} parent=1 // pred_check
      _
    $region91: #{_generator_forward.1} parent=1 // pred_check_branch
      %146 = sbr.rel (0) target = $region93
    $region92: #{_generator_forward.1} parent=1 // pred_region
      %147 = dma.done [#allocation10], 4096
    $region93: #{_generator_forward.1} parent=1 // pred_fallthru
      _
    // Predicated region
    $region94: #{_generator_forward.1} parent=1 // pred_check
      _
    $region95: #{_generator_forward.1} parent=1 // pred_check_branch
      %149 = sbr.rel (0) target = $region97
    $region96: #{_generator_forward.1} parent=1 // pred_region
      %150 = dma.done [#allocation12], 4096
    $region97: #{_generator_forward.1} parent=1 // pred_fallthru
      _
    // Predicated region
    $region98: #{_generator_forward.1} parent=1 // pred_check
      _
    $region99: #{_generator_forward.1} parent=1 // pred_check_branch
      %152 = sbr.rel (0) target = $region101
    $region100: #{_generator_forward.1} parent=1 // pred_region
      %153 = dma.done [#allocation12], 4096
    $region101: #{_generator_forward.1} parent=1 // pred_fallthru
      _
    // Predicated region
    $region102: #{_generator_forward.1} parent=1 // pred_check
      _
    $region103: #{_generator_forward.1} parent=1 // pred_check_branch
      %155 = sbr.rel (0) target = $region105
    $region104: #{_generator_forward.1} parent=1 // pred_region
      %156 = dma.done [#allocation15], 4096
    $region105: #{_generator_forward.1} parent=1 // pred_fallthru
      _
    // Predicated region
    $region106: #{_generator_forward.1} parent=1 // pred_check
      _
    $region107: #{_generator_forward.1} parent=1 // pred_check_branch
      %158 = sbr.rel (0) target = $region109
    $region108: #{_generator_forward.1} parent=1 // pred_region
      %159 = dma.done [#allocation15], 4096
    $region109: #{_generator_forward.1} parent=1 // pred_fallthru
      _
    // Predicated region
    $region110: #{_generator_forward.1} parent=1 // pred_check
      _
    $region111: #{_generator_forward.1} parent=1 // pred_check_branch
      %161 = sbr.rel (0) target = $region113
    $region112: #{_generator_forward.1} parent=1 // pred_region
      %162 = dma.done [#allocation18], 4096
    $region113: #{_generator_forward.1} parent=1 // pred_fallthru
      _
    // Predicated region
    $region114: #{_generator_forward.1} parent=1 // pred_check
      _
    $region115: #{_generator_forward.1} parent=1 // pred_check_branch
      %164 = sbr.rel (0) target = $region117
    $region116: #{_generator_forward.1} parent=1 // pred_region
      %165 = dma.done [#allocation18], 4096
    $region117: #{_generator_forward.1} parent=1 // pred_fallthru
      _
    %v167 = vld [vmem:[%s0] sm:$0x3]
    %v170 = vunpack.c.l.s4 1966171168
    %v171 = vunpack.c.0.s8 %v170
    %v172 = vlaneseq
    %v173 = vshrl.u32 %v172, 7
    %v174 = vsub.s32 %v171, %v173
    %v175 = vrot.slane %v167, %v174
    %v176 = vcombine.high %v175, %v175
    %v178 = vunpack.c.l.s4 1966171168
    %v179 = vunpack.c.0.s8 %v178
    %v180 = vlaneseq
    %v181 = vshrl.u32 %v180, 7
    %v182 = vsub.s32 %v179, %v181
    %v183 = vrot.slane %v175, %v182
    %v185 = vunpack.c.l.s4 1966171168
    %v186 = vunpack.c.0.s8 %v185
    %v187 = vlaneseq
    %v188 = vshrl.u32 %v187, 7
    %v189 = vsub.s32 %v186, %v188
    %v190 = vrot.slane %v176, %v189
    %193 = vst [vmem:[#allocation2] sm:$0x7] 0.0
    %194 = vst [vmem:[#allocation2 + $0x4] sm:$0x7] 0.0
    %195 = vst [vmem:[#allocation2 + $0x8] sm:$0x7] 0.0
    %196 = vst [vmem:[#allocation2 + $0xc] sm:$0x7] 0.0
    %197 = vst [vmem:[#allocation2 + $0x10] sm:$0x7] 0.0
    %198 = vst [vmem:[#allocation2 + $0x14] sm:$0x7] 0.0
    %s199 = scalar_lea.vmem [#allocation2], 4
    %200 = vst [vmem:[%s199 + $0x1] sm:$0x1] %v183
    %201 = vst [vmem:[%s199 + $0xd] sm:$0x1] %v190
    %v202 = vld [vmem:[#allocation2] sm:$0x7]
    %v203 = vld [vmem:[#allocation2 + $0x4] sm:$0x7]
    %v204 = vld [vmem:[#allocation2 + $0x8] sm:$0x7]
    %v205 = vld [vmem:[#allocation2 + $0xc] sm:$0x7]
    %v206 = vld [vmem:[#allocation2 + $0x10] sm:$0x7]
    %v207 = vld [vmem:[#allocation2 + $0x14] sm:$0x7]
    %v212 = vrot.slane %v202, 1
    %v213 = vrot.slane %v203, 1
    %v214 = vrot.slane %v205, 1
    %v215 = vrot.slane %v206, 1
    %v218 = vrot.slane %v204, 1
    %v219 = vrot.slane %v207, 1
    %v220 = vcombine.low %v202, %v212
    %v221 = vcombine.low %v203, %v213
    %v223 = vunpack.c.l.s4 1983009808
    %v224 = vunpack.c.0.s8 %v223
    %v225 = vlaneseq
    %v226 = vshrl.u32 %v225, 7
    %v227 = vsub.s32 %v224, %v226
    %v228 = vrot.slane %v220, %v227
    %v230 = vunpack.c.l.s4 1983009808
    %v231 = vunpack.c.0.s8 %v230
    %v232 = vlaneseq
    %v233 = vshrl.u32 %v232, 7
    %v234 = vsub.s32 %v231, %v233
    %v235 = vrot.slane %v221, %v234
    %v236 = vcombine.low %v228, %v235
    %v237 = vcombine.low %v204, %v218
    %v239 = vunpack.c.l.s4 1983009808
    %v240 = vunpack.c.0.s8 %v239
    %v241 = vlaneseq
    %v242 = vshrl.u32 %v241, 7
    %v243 = vsub.s32 %v240, %v242
    %v244 = vrot.slane %v237, %v243
    %v245 = vcombine.low %v235, %v244
    %v246 = vcombine.low %v205, %v214
    %v247 = vcombine.low %v206, %v215
    %v249 = vunpack.c.l.s4 1983009808
    %v250 = vunpack.c.0.s8 %v249
    %v251 = vlaneseq
    %v252 = vshrl.u32 %v251, 7
    %v253 = vsub.s32 %v250, %v252
    %v254 = vrot.slane %v246, %v253
    %v256 = vunpack.c.l.s4 1983009808
    %v257 = vunpack.c.0.s8 %v256
    %v258 = vlaneseq
    %v259 = vshrl.u32 %v258, 7
    %v260 = vsub.s32 %v257, %v259
    %v261 = vrot.slane %v247, %v260
    %v262 = vcombine.low %v254, %v261
    %v263 = vcombine.low %v207, %v219
    %v265 = vunpack.c.l.s4 1983009808
    %v266 = vunpack.c.0.s8 %v265
    %v267 = vlaneseq
    %v268 = vshrl.u32 %v267, 7
    %v269 = vsub.s32 %v266, %v268
    %v270 = vrot.slane %v263, %v269
    %v271 = vcombine.low %v261, %v270
    %v272 = vcombine.low %v236, %v245
    %v273 = vcombine.high %v236, %v245
    %v274 = vcombine.low %v262, %v271
    %v275 = vcombine.high %v262, %v271
    %v277 = vunpack.c.l.s4 1983009808
    %v278 = vunpack.c.0.s8 %v277
    %v279 = vlaneseq
    %v280 = vshrl.u32 %v279, 7
    %v281 = vsub.s32 %v278, %v280
    %v282 = vrot.slane %v272, %v281
    %v284 = vunpack.c.l.s4 1983009808
    %v285 = vunpack.c.0.s8 %v284
    %v286 = vlaneseq
    %v287 = vshrl.u32 %v286, 7
    %v288 = vsub.s32 %v285, %v287
    %v289 = vrot.slane %v273, %v288
    %v291 = vunpack.c.l.s4 1983009808
    %v292 = vunpack.c.0.s8 %v291
    %v293 = vlaneseq
    %v294 = vshrl.u32 %v293, 7
    %v295 = vsub.s32 %v292, %v294
    %v296 = vrot.slane %v274, %v295
    %v298 = vunpack.c.l.s4 1983009808
    %v299 = vunpack.c.0.s8 %v298
    %v300 = vlaneseq
    %v301 = vshrl.u32 %v300, 7
    %v302 = vsub.s32 %v299, %v301
    %v303 = vrot.slane %v275, %v302
    %v304 = vcombine.low %v282, %v296
    %v305 = vcombine.high %v282, %v296
    %v306 = vcombine.low %v289, %v303
    %v307 = vcombine.high %v289, %v303
    %v312 = vpack.c.bf16 %v304, %v304
    %v313 = vpack.c.bf16 %v305, %v305
    %v314 = vpack.c.bf16 %v306, %v306
    %v315 = vpack.c.bf16 %v307, %v307
    %v316 = vld [vmem:[#allocation9] sm:$0xf]
    %v317 = vld [vmem:[#allocation9 + $0x4] sm:$0xf]
    %v318 = vld [vmem:[#allocation9 + $0x8] sm:$0xf]
    %v319 = vld [vmem:[#allocation9 + $0xc] sm:$0xf]
    %v320 = vld [vmem:[#allocation9 + $0x10] sm:$0xf]
    %v321 = vld [vmem:[#allocation9 + $0x14] sm:$0xf]
    %v322 = vld [vmem:[#allocation9 + $0x18] sm:$0xf]
    %v323 = vld [vmem:[#allocation9 + $0x1c] sm:$0xf]
    %v324 = vld [vmem:[#allocation9 + $0x20] sm:$0xf]
    %v325 = vld [vmem:[#allocation9 + $0x24] sm:$0xf]
    %v326 = vld [vmem:[#allocation9 + $0x28] sm:$0xf]
    %v327 = vld [vmem:[#allocation9 + $0x2c] sm:$0xf]
    %v328 = vld [vmem:[#allocation9 + $0x30] sm:$0xf]
    %v329 = vld [vmem:[#allocation9 + $0x34] sm:$0xf]
    %v330 = vld [vmem:[#allocation9 + $0x38] sm:$0xf]
    %v331 = vld [vmem:[#allocation9 + $0x3c] sm:$0xf]
    %v332 = vld [vmem:[#allocation9 + $0x40] sm:$0xf]
    %v333 = vld [vmem:[#allocation9 + $0x44] sm:$0xf]
    %v334 = vld [vmem:[#allocation9 + $0x48] sm:$0xf]
    %v335 = vld [vmem:[#allocation9 + $0x4c] sm:$0xf]
    %v336 = vld [vmem:[#allocation9 + $0x50] sm:$0xf]
    %v337 = vld [vmem:[#allocation9 + $0x54] sm:$0xf]
    %v338 = vld [vmem:[#allocation9 + $0x58] sm:$0xf]
    %v339 = vld [vmem:[#allocation9 + $0x5c] sm:$0xf]
    %v340 = vld [vmem:[#allocation9 + $0x60] sm:$0xf]
    %v341 = vld [vmem:[#allocation9 + $0x64] sm:$0xf]
    %v342 = vld [vmem:[#allocation9 + $0x68] sm:$0xf]
    %v343 = vld [vmem:[#allocation9 + $0x6c] sm:$0xf]
    %v344 = vld [vmem:[#allocation9 + $0x70] sm:$0xf]
    %v345 = vld [vmem:[#allocation9 + $0x74] sm:$0xf]
    %v346 = vld [vmem:[#allocation9 + $0x78] sm:$0xf]
    %v347 = vld [vmem:[#allocation9 + $0x7c] sm:$0xf]
    %v348 = vld [vmem:[#allocation9 + $0x80] sm:$0xf]
    %v349 = vld [vmem:[#allocation9 + $0x84] sm:$0xf]
    %v350 = vld [vmem:[#allocation9 + $0x88] sm:$0xf]
    %v351 = vld [vmem:[#allocation9 + $0x8c] sm:$0xf]
    %v352 = vld [vmem:[#allocation9 + $0x90] sm:$0xf]
    %v353 = vld [vmem:[#allocation9 + $0x94] sm:$0xf]
    %v354 = vld [vmem:[#allocation9 + $0x98] sm:$0xf]
    %v355 = vld [vmem:[#allocation9 + $0x9c] sm:$0xf]
    %v356 = vld [vmem:[#allocation9 + $0xa0] sm:$0xf]
    %v357 = vld [vmem:[#allocation9 + $0xa4] sm:$0xf]
    %v358 = vld [vmem:[#allocation9 + $0xa8] sm:$0xf]
    %v359 = vld [vmem:[#allocation9 + $0xac] sm:$0xf]
    %v360 = vld [vmem:[#allocation9 + $0xb0] sm:$0xf]
    %v361 = vld [vmem:[#allocation9 + $0xb4] sm:$0xf]
    %v362 = vld [vmem:[#allocation9 + $0xb8] sm:$0xf]
    %v363 = vld [vmem:[#allocation9 + $0xbc] sm:$0xf]
    %v364 = vld [vmem:[#allocation9 + $0xc0] sm:$0xf]
    %v365 = vld [vmem:[#allocation9 + $0xc4] sm:$0xf]
    %v366 = vld [vmem:[#allocation9 + $0xc8] sm:$0xf]
    %v367 = vld [vmem:[#allocation9 + $0xcc] sm:$0xf]
    %v368 = vld [vmem:[#allocation9 + $0xd0] sm:$0xf]
    %v369 = vld [vmem:[#allocation9 + $0xd4] sm:$0xf]
    %v370 = vld [vmem:[#allocation9 + $0xd8] sm:$0xf]
    %v371 = vld [vmem:[#allocation9 + $0xdc] sm:$0xf]
    %v372 = vld [vmem:[#allocation9 + $0xe0] sm:$0xf]
    %v373 = vld [vmem:[#allocation9 + $0xe4] sm:$0xf]
    %v374 = vld [vmem:[#allocation9 + $0xe8] sm:$0xf]
    %v375 = vld [vmem:[#allocation9 + $0xec] sm:$0xf]
    %v376 = vld [vmem:[#allocation9 + $0xf0] sm:$0xf]
    %v377 = vld [vmem:[#allocation9 + $0xf4] sm:$0xf]
    %v378 = vld [vmem:[#allocation9 + $0xf8] sm:$0xf]
    %v379 = vld [vmem:[#allocation9 + $0xfc] sm:$0xf]
    %v444 = vunpack.c.l.b16 %v316
    %v445 = vunpack.c.l.b16 %v317
    %v446 = vunpack.c.l.b16 %v318
    %v447 = vunpack.c.l.b16 %v319
    %v448 = vunpack.c.l.b16 %v320
    %v449 = vunpack.c.l.b16 %v321
    %v450 = vunpack.c.l.b16 %v322
    %v451 = vunpack.c.l.b16 %v323
    %v452 = vunpack.c.l.b16 %v324
    %v453 = vunpack.c.l.b16 %v325
    %v454 = vunpack.c.l.b16 %v326
    %v455 = vunpack.c.l.b16 %v327
    %v456 = vunpack.c.l.b16 %v328
    %v457 = vunpack.c.l.b16 %v329
    %v458 = vunpack.c.l.b16 %v330
    %v459 = vunpack.c.l.b16 %v331
    %v460 = vunpack.c.l.b16 %v332
    %v461 = vunpack.c.l.b16 %v333
    %v462 = vunpack.c.l.b16 %v334
    %v463 = vunpack.c.l.b16 %v335
    %v464 = vunpack.c.l.b16 %v336
    %v465 = vunpack.c.l.b16 %v337
    %v466 = vunpack.c.l.b16 %v338
    %v467 = vunpack.c.l.b16 %v339
    %v468 = vunpack.c.l.b16 %v340
    %v469 = vunpack.c.l.b16 %v341
    %v470 = vunpack.c.l.b16 %v342
    %v471 = vunpack.c.l.b16 %v343
    %v472 = vunpack.c.l.b16 %v344
    %v473 = vunpack.c.l.b16 %v345
    %v474 = vunpack.c.l.b16 %v346
    %v475 = vunpack.c.l.b16 %v347
    %v476 = vunpack.c.l.b16 %v348
    %v477 = vunpack.c.l.b16 %v349
    %v478 = vunpack.c.l.b16 %v350
    %v479 = vunpack.c.l.b16 %v351
    %v480 = vunpack.c.l.b16 %v352
    %v481 = vunpack.c.l.b16 %v353
    %v482 = vunpack.c.l.b16 %v354
    %v483 = vunpack.c.l.b16 %v355
    %v484 = vunpack.c.l.b16 %v356
    %v485 = vunpack.c.l.b16 %v357
    %v486 = vunpack.c.l.b16 %v358
    %v487 = vunpack.c.l.b16 %v359
    %v488 = vunpack.c.l.b16 %v360
    %v489 = vunpack.c.l.b16 %v361
    %v490 = vunpack.c.l.b16 %v362
    %v491 = vunpack.c.l.b16 %v363
    %v492 = vunpack.c.l.b16 %v364
    %v493 = vunpack.c.l.b16 %v365
    %v494 = vunpack.c.l.b16 %v366
    %v495 = vunpack.c.l.b16 %v367
    %v496 = vunpack.c.l.b16 %v368
    %v497 = vunpack.c.l.b16 %v369
    %v498 = vunpack.c.l.b16 %v370
    %v499 = vunpack.c.l.b16 %v371
    %v500 = vunpack.c.l.b16 %v372
    %v501 = vunpack.c.l.b16 %v373
    %v502 = vunpack.c.l.b16 %v374
    %v503 = vunpack.c.l.b16 %v375
    %v504 = vunpack.c.l.b16 %v376
    %v505 = vunpack.c.l.b16 %v377
    %v506 = vunpack.c.l.b16 %v378
    %v507 = vunpack.c.l.b16 %v379
    %v508 = vpack.c.b16 %v445, %v444
    %v509 = vpack.c.b16 %v447, %v446
    %v510 = vpack.c.b16 %v449, %v448
    %v511 = vpack.c.b16 %v451, %v450
    %v512 = vpack.c.b16 %v453, %v452
    %v513 = vpack.c.b16 %v455, %v454
    %v514 = vpack.c.b16 %v457, %v456
    %v515 = vpack.c.b16 %v459, %v458
    %v516 = vpack.c.b16 %v461, %v460
    %v517 = vpack.c.b16 %v463, %v462
    %v518 = vpack.c.b16 %v465, %v464
    %v519 = vpack.c.b16 %v467, %v466
    %v520 = vpack.c.b16 %v469, %v468
    %v521 = vpack.c.b16 %v471, %v470
    %v522 = vpack.c.b16 %v473, %v472
    %v523 = vpack.c.b16 %v475, %v474
    %v524 = vpack.c.b16 %v477, %v476
    %v525 = vpack.c.b16 %v479, %v478
    %v526 = vpack.c.b16 %v481, %v480
    %v527 = vpack.c.b16 %v483, %v482
    %v528 = vpack.c.b16 %v485, %v484
    %v529 = vpack.c.b16 %v487, %v486
    %v530 = vpack.c.b16 %v489, %v488
    %v531 = vpack.c.b16 %v491, %v490
    %v532 = vpack.c.b16 %v493, %v492
    %v533 = vpack.c.b16 %v495, %v494
    %v534 = vpack.c.b16 %v497, %v496
    %v535 = vpack.c.b16 %v499, %v498
    %v536 = vpack.c.b16 %v501, %v500
    %v537 = vpack.c.b16 %v503, %v502
    %v538 = vpack.c.b16 %v505, %v504
    %v539 = vpack.c.b16 %v507, %v506
    %572 = vmatprep.subr.bf16.mxu0 0
    %573 = vmatpush1.bf16.msra.mxu0 %v515
    %574 = vmatprep.subr.bf16.mxu0 0
    %575 = vmatpush1.bf16.msra.mxu0 %v514
    %576 = vmatprep.subr.bf16.mxu0 0
    %577 = vmatpush1.bf16.msra.mxu0 %v513
    %578 = vmatprep.subr.bf16.mxu0 0
    %579 = vmatpush1.bf16.msra.mxu0 %v512
    %580 = vmatprep.subr.bf16.mxu0 0
    %581 = vmatpush1.bf16.msra.mxu0 %v511
    %582 = vmatprep.subr.bf16.mxu0 0
    %583 = vmatpush1.bf16.msra.mxu0 %v510
    %584 = vmatprep.subr.bf16.mxu0 0
    %585 = vmatpush1.bf16.msra.mxu0 %v509
    %586 = vmatprep.subr.bf16.mxu0 0
    %587 = vmatpush1.bf16.msra.mxu0 %v508
    %588 = vmatprep.subr.bf16.mxu0 0
    %589 = vmatpush2.bf16.msra.mxu0 %v523
    %590 = vmatprep.subr.bf16.mxu0 0
    %591 = vmatpush2.bf16.msra.mxu0 %v522
    %592 = vmatprep.subr.bf16.mxu0 0
    %593 = vmatpush2.bf16.msra.mxu0 %v521
    %594 = vmatprep.subr.bf16.mxu0 0
    %595 = vmatpush2.bf16.msra.mxu0 %v520
    %596 = vmatprep.subr.bf16.mxu0 0
    %597 = vmatpush2.bf16.msra.mxu0 %v519
    %598 = vmatprep.subr.bf16.mxu0 0
    %599 = vmatpush2.bf16.msra.mxu0 %v518
    %600 = vmatprep.subr.bf16.mxu0 0
    %601 = vmatpush2.bf16.msra.mxu0 %v517
    %602 = vmatprep.subr.bf16.mxu0 0
    %603 = vmatpush2.bf16.msra.mxu0 %v516
    %604 = vmatprep.mubr.bf16.mxu0 %v313
    %605 = vmatmul.mubr.bf16.gmra.mxu0 %v312
    %v606 = vpop.f32.mrf.mxu0
    %v607 = vadd.f32 0.0, %v606
    %v608 = vpop.f32.mrf.mxu0
    %v609 = vpop.f32.mrf.mxu0
    %v610 = vpop.f32.mrf.mxu0
    %611 = vdwg.mxu0
    %612 = vmatprep.subr.bf16.mxu0 0
    %613 = vmatpush1.bf16.msra.mxu0 %v531
    %614 = vmatprep.subr.bf16.mxu0 0
    %615 = vmatpush1.bf16.msra.mxu0 %v530
    %616 = vmatprep.subr.bf16.mxu0 0
    %617 = vmatpush1.bf16.msra.mxu0 %v529
    %618 = vmatprep.subr.bf16.mxu0 0
    %619 = vmatpush1.bf16.msra.mxu0 %v528
    %620 = vmatprep.subr.bf16.mxu0 0
    %621 = vmatpush1.bf16.msra.mxu0 %v527
    %622 = vmatprep.subr.bf16.mxu0 0
    %623 = vmatpush1.bf16.msra.mxu0 %v526
    %624 = vmatprep.subr.bf16.mxu0 0
    %625 = vmatpush1.bf16.msra.mxu0 %v525
    %626 = vmatprep.subr.bf16.mxu0 0
    %627 = vmatpush1.bf16.msra.mxu0 %v524
    %628 = vmatprep.subr.bf16.mxu0 0
    %629 = vmatpush2.bf16.msra.mxu0 %v539
    %630 = vmatprep.subr.bf16.mxu0 0
    %631 = vmatpush2.bf16.msra.mxu0 %v538
    %632 = vmatprep.subr.bf16.mxu0 0
    %633 = vmatpush2.bf16.msra.mxu0 %v537
    %634 = vmatprep.subr.bf16.mxu0 0
    %635 = vmatpush2.bf16.msra.mxu0 %v536
    %636 = vmatprep.subr.bf16.mxu0 0
    %637 = vmatpush2.bf16.msra.mxu0 %v535
    %638 = vmatprep.subr.bf16.mxu0 0
    %639 = vmatpush2.bf16.msra.mxu0 %v534
    %640 = vmatprep.subr.bf16.mxu0 0
    %641 = vmatpush2.bf16.msra.mxu0 %v533
    %642 = vmatprep.subr.bf16.mxu0 0
    %643 = vmatpush2.bf16.msra.mxu0 %v532
    %644 = vmatprep.mubr.bf16.mxu0 %v315
    %645 = vmatmul.mubr.bf16.gmra.mxu0 %v314
    %v646 = vpop.f32.mrf.mxu0
    %v647 = vadd.f32 %v607, %v646
    %v648 = vpop.f32.mrf.mxu0
    %v649 = vpop.f32.mrf.mxu0
    %v650 = vpop.f32.mrf.mxu0
    %651 = vdwg.mxu0
    %v652 = vrot.slane %v647, 4
    %v653 = vadd.f32 %v647, %v652
    %v654 = vrot.slane %v653, 2
    %v655 = vadd.f32 %v653, %v654
    %v656 = vrot.slane %v655, 1
    %v657 = vadd.f32 %v655, %v656
    %v658 = vrcp.pop 8.0
    %v659 = vmul.f32 %v657, %v658
    %v660 = vsub.f32 %v647, %v659
    %v661 = vmul.f32 %v660, %v660
    %v662 = vrot.slane %v661, 4
    %v663 = vadd.f32 %v661, %v662
    %v664 = vrot.slane %v663, 2
    %v665 = vadd.f32 %v663, %v664
    %v666 = vrot.slane %v665, 1
    %v667 = vadd.f32 %v665, %v666
    %v668 = vmul.f32 %v667, %v658
    %v669 = vadd.f32 %v668, 1e-05
    %v670 = vrsqrt.pop %v669
    %v671 = vmul.f32 %v660, %v670
    %v672 = vld [vmem:[%s2] sm:$0x1]
    %v674 = vlaneseq
    %v675 = vshrl.u32 %v674, 7
    %v676 = vsub.s32 0, %v675
    %v677 = vrot.slane %v672, %v676
    %v679 = vmul.f32 %v671, %v677
    %v680 = vld [vmem:[%s3] sm:$0x1]
    %v682 = vlaneseq
    %v683 = vshrl.u32 %v682, 7
    %v684 = vsub.s32 0, %v683
    %v685 = vrot.slane %v680, %v684
    %v687 = vadd.f32 %v679, %v685
    %v688 = vmax.f32 %v687, 0.0
    %v690 = vcombine.high %v688, %v688
    %v692 = vunpack.c.l.s4 1983009808
    %v693 = vunpack.c.0.s8 %v692
    %v694 = vlaneseq
    %v695 = vshrl.u32 %v694, 7
    %v696 = vsub.s32 %v693, %v695
    %v697 = vrot.slane %v688, %v696
    %v699 = vunpack.c.l.s4 1983009808
    %v700 = vunpack.c.0.s8 %v699
    %v701 = vlaneseq
    %v702 = vshrl.u32 %v701, 7
    %v703 = vsub.s32 %v700, %v702
    %v704 = vrot.slane %v690, %v703
    %v705 = vcombine.high %v697, %v697
    %v706 = vcombine.high %v704, %v704
    %711 = vst [vmem:[#allocation3] sm:$0xf] 0.0
    %712 = vst [vmem:[#allocation3 + $0x4] sm:$0xf] 0.0
    %713 = vst [vmem:[#allocation3 + $0x8] sm:$0xf] 0.0
    %714 = vst [vmem:[#allocation3 + $0xc] sm:$0xf] 0.0
    %715 = vst [vmem:[#allocation3 + $0x10] sm:$0xf] 0.0
    %716 = vst [vmem:[#allocation3 + $0x14] sm:$0xf] 0.0
    %717 = vst [vmem:[#allocation3 + $0x18] sm:$0xf] 0.0
    %718 = vst [vmem:[#allocation3 + $0x1c] sm:$0xf] 0.0
    %s719 = scalar_lea.vmem [#allocation3], 4
    %720 = vst [vmem:[%s719 + $0x1] sm:$0x3] %v697
    %721 = vst [vmem:[%s719 + $0x5] sm:$0x3] %v705
    %722 = vst [vmem:[%s719 + $0x11] sm:$0x3] %v704
    %723 = vst [vmem:[%s719 + $0x15] sm:$0x3] %v706
    %v724 = vld [vmem:[#allocation3] sm:$0xf]
    %v725 = vld [vmem:[#allocation3 + $0x4] sm:$0xf]
    %v726 = vld [vmem:[#allocation3 + $0x8] sm:$0xf]
    %v727 = vld [vmem:[#allocation3 + $0xc] sm:$0xf]
    %v728 = vld [vmem:[#allocation3 + $0x10] sm:$0xf]
    %v729 = vld [vmem:[#allocation3 + $0x14] sm:$0xf]
    %v730 = vld [vmem:[#allocation3 + $0x18] sm:$0xf]
    %v731 = vld [vmem:[#allocation3 + $0x1c] sm:$0xf]
    %v738 = vrot.slane %v724, 1
    %v739 = vrot.slane %v725, 1
    %v740 = vrot.slane %v726, 1
    %v741 = vrot.slane %v728, 1
    %v742 = vrot.slane %v729, 1
    %v743 = vrot.slane %v730, 1
    %v746 = vrot.slane %v727, 1
    %v747 = vrot.slane %v731, 1
    %v748 = vcombine.low %v724, %v738
    %v749 = vcombine.low %v725, %v739
    %v751 = vunpack.c.l.s4 1966171168
    %v752 = vunpack.c.0.s8 %v751
    %v753 = vlaneseq
    %v754 = vshrl.u32 %v753, 7
    %v755 = vsub.s32 %v752, %v754
    %v756 = vrot.slane %v748, %v755
    %v758 = vunpack.c.l.s4 1966171168
    %v759 = vunpack.c.0.s8 %v758
    %v760 = vlaneseq
    %v761 = vshrl.u32 %v760, 7
    %v762 = vsub.s32 %v759, %v761
    %v763 = vrot.slane %v749, %v762
    %v764 = vcombine.low %v756, %v763
    %v765 = vcombine.high %v756, %v763
    %v767 = vunpack.c.l.s4 1966171168
    %v768 = vunpack.c.0.s8 %v767
    %v769 = vlaneseq
    %v770 = vshrl.u32 %v769, 7
    %v771 = vsub.s32 %v768, %v770
    %v772 = vrot.slane %v764, %v771
    %v774 = vunpack.c.l.s4 1966171168
    %v775 = vunpack.c.0.s8 %v774
    %v776 = vlaneseq
    %v777 = vshrl.u32 %v776, 7
    %v778 = vsub.s32 %v775, %v777
    %v779 = vrot.slane %v765, %v778
    %v780 = vcombine.high %v772, %v772
    %v781 = vcombine.low %v726, %v740
    %v783 = vunpack.c.l.s4 1966171168
    %v784 = vunpack.c.0.s8 %v783
    %v785 = vlaneseq
    %v786 = vshrl.u32 %v785, 7
    %v787 = vsub.s32 %v784, %v786
    %v788 = vrot.slane %v781, %v787
    %v789 = vcombine.low %v763, %v788
    %v790 = vcombine.high %v763, %v788
    %v792 = vunpack.c.l.s4 1966171168
    %v793 = vunpack.c.0.s8 %v792
    %v794 = vlaneseq
    %v795 = vshrl.u32 %v794, 7
    %v796 = vsub.s32 %v793, %v795
    %v797 = vrot.slane %v789, %v796
    %v799 = vunpack.c.l.s4 1966171168
    %v800 = vunpack.c.0.s8 %v799
    %v801 = vlaneseq
    %v802 = vshrl.u32 %v801, 7
    %v803 = vsub.s32 %v800, %v802
    %v804 = vrot.slane %v790, %v803
    %v805 = vcombine.high %v797, %v797
    %v806 = vcombine.low %v727, %v746
    %v808 = vunpack.c.l.s4 1966171168
    %v809 = vunpack.c.0.s8 %v808
    %v810 = vlaneseq
    %v811 = vshrl.u32 %v810, 7
    %v812 = vsub.s32 %v809, %v811
    %v813 = vrot.slane %v806, %v812
    %v814 = vcombine.low %v788, %v813
    %v815 = vcombine.high %v788, %v813
    %v817 = vunpack.c.l.s4 1966171168
    %v818 = vunpack.c.0.s8 %v817
    %v819 = vlaneseq
    %v820 = vshrl.u32 %v819, 7
    %v821 = vsub.s32 %v818, %v820
    %v822 = vrot.slane %v814, %v821
    %v824 = vunpack.c.l.s4 1966171168
    %v825 = vunpack.c.0.s8 %v824
    %v826 = vlaneseq
    %v827 = vshrl.u32 %v826, 7
    %v828 = vsub.s32 %v825, %v827
    %v829 = vrot.slane %v815, %v828
    %v830 = vcombine.high %v822, %v822
    %v831 = vcombine.low %v728, %v741
    %v832 = vcombine.low %v729, %v742
    %v834 = vunpack.c.l.s4 1966171168
    %v835 = vunpack.c.0.s8 %v834
    %v836 = vlaneseq
    %v837 = vshrl.u32 %v836, 7
    %v838 = vsub.s32 %v835, %v837
    %v839 = vrot.slane %v831, %v838
    %v841 = vunpack.c.l.s4 1966171168
    %v842 = vunpack.c.0.s8 %v841
    %v843 = vlaneseq
    %v844 = vshrl.u32 %v843, 7
    %v845 = vsub.s32 %v842, %v844
    %v846 = vrot.slane %v832, %v845
    %v847 = vcombine.low %v839, %v846
    %v848 = vcombine.high %v839, %v846
    %v850 = vunpack.c.l.s4 1966171168
    %v851 = vunpack.c.0.s8 %v850
    %v852 = vlaneseq
    %v853 = vshrl.u32 %v852, 7
    %v854 = vsub.s32 %v851, %v853
    %v855 = vrot.slane %v847, %v854
    %v857 = vunpack.c.l.s4 1966171168
    %v858 = vunpack.c.0.s8 %v857
    %v859 = vlaneseq
    %v860 = vshrl.u32 %v859, 7
    %v861 = vsub.s32 %v858, %v860
    %v862 = vrot.slane %v848, %v861
    %v863 = vcombine.high %v855, %v855
    %v864 = vcombine.low %v730, %v743
    %v866 = vunpack.c.l.s4 1966171168
    %v867 = vunpack.c.0.s8 %v866
    %v868 = vlaneseq
    %v869 = vshrl.u32 %v868, 7
    %v870 = vsub.s32 %v867, %v869
    %v871 = vrot.slane %v864, %v870
    %v872 = vcombine.low %v846, %v871
    %v873 = vcombine.high %v846, %v871
    %v875 = vunpack.c.l.s4 1966171168
    %v876 = vunpack.c.0.s8 %v875
    %v877 = vlaneseq
    %v878 = vshrl.u32 %v877, 7
    %v879 = vsub.s32 %v876, %v878
    %v880 = vrot.slane %v872, %v879
    %v882 = vunpack.c.l.s4 1966171168
    %v883 = vunpack.c.0.s8 %v882
    %v884 = vlaneseq
    %v885 = vshrl.u32 %v884, 7
    %v886 = vsub.s32 %v883, %v885
    %v887 = vrot.slane %v873, %v886
    %v888 = vcombine.high %v880, %v880
    %v889 = vcombine.low %v731, %v747
    %v891 = vunpack.c.l.s4 1966171168
    %v892 = vunpack.c.0.s8 %v891
    %v893 = vlaneseq
    %v894 = vshrl.u32 %v893, 7
    %v895 = vsub.s32 %v892, %v894
    %v896 = vrot.slane %v889, %v895
    %v897 = vcombine.low %v871, %v896
    %v898 = vcombine.high %v871, %v896
    %v900 = vunpack.c.l.s4 1966171168
    %v901 = vunpack.c.0.s8 %v900
    %v902 = vlaneseq
    %v903 = vshrl.u32 %v902, 7
    %v904 = vsub.s32 %v901, %v903
    %v905 = vrot.slane %v897, %v904
    %v907 = vunpack.c.l.s4 1966171168
    %v908 = vunpack.c.0.s8 %v907
    %v909 = vlaneseq
    %v910 = vshrl.u32 %v909, 7
    %v911 = vsub.s32 %v908, %v910
    %v912 = vrot.slane %v898, %v911
    %v913 = vcombine.high %v905, %v905
    %v914 = vcombine.low %v772, %v779
    %v915 = vcombine.low %v780, %v797
    %v916 = vcombine.low %v804, %v805
    %v917 = vcombine.low %v822, %v829
    %v919 = vunpack.c.l.s4 1966171168
    %v920 = vunpack.c.0.s8 %v919
    %v921 = vlaneseq
    %v922 = vshrl.u32 %v921, 7
    %v923 = vsub.s32 %v920, %v922
    %v924 = vrot.slane %v914, %v923
    %v926 = vunpack.c.l.s4 1966171168
    %v927 = vunpack.c.0.s8 %v926
    %v928 = vlaneseq
    %v929 = vshrl.u32 %v928, 7
    %v930 = vsub.s32 %v927, %v929
    %v931 = vrot.slane %v915, %v930
    %v933 = vunpack.c.l.s4 1966171168
    %v934 = vunpack.c.0.s8 %v933
    %v935 = vlaneseq
    %v936 = vshrl.u32 %v935, 7
    %v937 = vsub.s32 %v934, %v936
    %v938 = vrot.slane %v916, %v937
    %v940 = vunpack.c.l.s4 1966171168
    %v941 = vunpack.c.0.s8 %v940
    %v942 = vlaneseq
    %v943 = vshrl.u32 %v942, 7
    %v944 = vsub.s32 %v941, %v943
    %v945 = vrot.slane %v917, %v944
    %v946 = vcombine.low %v924, %v931
    %v947 = vcombine.high %v924, %v931
    %v948 = vcombine.low %v938, %v945
    %v949 = vcombine.high %v938, %v945
    %v951 = vunpack.c.l.s4 1966171168
    %v952 = vunpack.c.0.s8 %v951
    %v953 = vlaneseq
    %v954 = vshrl.u32 %v953, 7
    %v955 = vsub.s32 %v952, %v954
    %v956 = vrot.slane %v946, %v955
    %v958 = vunpack.c.l.s4 1966171168
    %v959 = vunpack.c.0.s8 %v958
    %v960 = vlaneseq
    %v961 = vshrl.u32 %v960, 7
    %v962 = vsub.s32 %v959, %v961
    %v963 = vrot.slane %v947, %v962
    %v965 = vunpack.c.l.s4 1966171168
    %v966 = vunpack.c.0.s8 %v965
    %v967 = vlaneseq
    %v968 = vshrl.u32 %v967, 7
    %v969 = vsub.s32 %v966, %v968
    %v970 = vrot.slane %v948, %v969
    %v972 = vunpack.c.l.s4 1966171168
    %v973 = vunpack.c.0.s8 %v972
    %v974 = vlaneseq
    %v975 = vshrl.u32 %v974, 7
    %v976 = vsub.s32 %v973, %v975
    %v977 = vrot.slane %v949, %v976
    %v978 = vcombine.low %v956, %v970
    %v979 = vcombine.high %v956, %v970
    %v980 = vcombine.low %v963, %v977
    %v981 = vcombine.high %v963, %v977
    %v982 = vcombine.low %v830, %v855
    %v983 = vcombine.low %v862, %v863
    %v984 = vcombine.low %v880, %v887
    %v985 = vcombine.low %v888, %v905
    %v987 = vunpack.c.l.s4 1966171168
    %v988 = vunpack.c.0.s8 %v987
    %v989 = vlaneseq
    %v990 = vshrl.u32 %v989, 7
    %v991 = vsub.s32 %v988, %v990
    %v992 = vrot.slane %v982, %v991
    %v994 = vunpack.c.l.s4 1966171168
    %v995 = vunpack.c.0.s8 %v994
    %v996 = vlaneseq
    %v997 = vshrl.u32 %v996, 7
    %v998 = vsub.s32 %v995, %v997
    %v999 = vrot.slane %v983, %v998
    %v1001 = vunpack.c.l.s4 1966171168
    %v1002 = vunpack.c.0.s8 %v1001
    %v1003 = vlaneseq
    %v1004 = vshrl.u32 %v1003, 7
    %v1005 = vsub.s32 %v1002, %v1004
    %v1006 = vrot.slane %v984, %v1005
    %v1008 = vunpack.c.l.s4 1966171168
    %v1009 = vunpack.c.0.s8 %v1008
    %v1010 = vlaneseq
    %v1011 = vshrl.u32 %v1010, 7
    %v1012 = vsub.s32 %v1009, %v1011
    %v1013 = vrot.slane %v985, %v1012
    %v1014 = vcombine.low %v992, %v999
    %v1015 = vcombine.high %v992, %v999
    %v1016 = vcombine.low %v1006, %v1013
    %v1017 = vcombine.high %v1006, %v1013
    %v1019 = vunpack.c.l.s4 1966171168
    %v1020 = vunpack.c.0.s8 %v1019
    %v1021 = vlaneseq
    %v1022 = vshrl.u32 %v1021, 7
    %v1023 = vsub.s32 %v1020, %v1022
    %v1024 = vrot.slane %v1014, %v1023
    %v1026 = vunpack.c.l.s4 1966171168
    %v1027 = vunpack.c.0.s8 %v1026
    %v1028 = vlaneseq
    %v1029 = vshrl.u32 %v1028, 7
    %v1030 = vsub.s32 %v1027, %v1029
    %v1031 = vrot.slane %v1015, %v1030
    %v1033 = vunpack.c.l.s4 1966171168
    %v1034 = vunpack.c.0.s8 %v1033
    %v1035 = vlaneseq
    %v1036 = vshrl.u32 %v1035, 7
    %v1037 = vsub.s32 %v1034, %v1036
    %v1038 = vrot.slane %v1016, %v1037
    %v1040 = vunpack.c.l.s4 1966171168
    %v1041 = vunpack.c.0.s8 %v1040
    %v1042 = vlaneseq
    %v1043 = vshrl.u32 %v1042, 7
    %v1044 = vsub.s32 %v1041, %v1043
    %v1045 = vrot.slane %v1017, %v1044
    %v1046 = vcombine.low %v1024, %v1038
    %v1047 = vcombine.high %v1024, %v1038
    %v1048 = vcombine.low %v1031, %v1045
    %v1049 = vcombine.high %v1031, %v1045
    %v1050 = vcombine.low %v912, %v913
    %v1052 = vunpack.c.l.s4 1966171168
    %v1053 = vunpack.c.0.s8 %v1052
    %v1054 = vlaneseq
    %v1055 = vshrl.u32 %v1054, 7
    %v1056 = vsub.s32 %v1053, %v1055
    %v1057 = vrot.slane %v1050, %v1056
    %v1058 = vcombine.high %v1057, %v1057
    %v1060 = vunpack.c.l.s4 1966171168
    %v1061 = vunpack.c.0.s8 %v1060
    %v1062 = vlaneseq
    %v1063 = vshrl.u32 %v1062, 7
    %v1064 = vsub.s32 %v1061, %v1063
    %v1065 = vrot.slane %v1057, %v1064
    %v1067 = vunpack.c.l.s4 1966171168
    %v1068 = vunpack.c.0.s8 %v1067
    %v1069 = vlaneseq
    %v1070 = vshrl.u32 %v1069, 7
    %v1071 = vsub.s32 %v1068, %v1070
    %v1072 = vrot.slane %v1058, %v1071
    %v1073 = vcombine.high %v1065, %v1065
    %v1074 = vcombine.high %v1072, %v1072
    %v1087 = vpack.c.bf16 %v1046, %v978
    %v1088 = vpack.c.bf16 %v1048, %v980
    %v1089 = vpack.c.bf16 %v1047, %v979
    %v1090 = vpack.c.bf16 %v1049, %v981
    %v1091 = vpack.c.bf16 %v1065, %v1065
    %v1092 = vpack.c.bf16 %v1072, %v1072
    %v1093 = vpack.c.bf16 %v1073, %v1073
    %v1094 = vpack.c.bf16 %v1074, %v1074
    %v1095 = vld [vmem:[#allocation11] sm:$0xf]
    %v1096 = vld [vmem:[#allocation11 + $0x4] sm:$0xf]
    %v1097 = vld [vmem:[#allocation11 + $0x8] sm:$0xf]
    %v1098 = vld [vmem:[#allocation11 + $0xc] sm:$0xf]
    %v1099 = vld [vmem:[#allocation11 + $0x10] sm:$0xf]
    %v1100 = vld [vmem:[#allocation11 + $0x14] sm:$0xf]
    %v1101 = vld [vmem:[#allocation11 + $0x18] sm:$0xf]
    %v1102 = vld [vmem:[#allocation11 + $0x1c] sm:$0xf]
    %v1103 = vld [vmem:[#allocation11 + $0x20] sm:$0xf]
    %v1104 = vld [vmem:[#allocation11 + $0x24] sm:$0xf]
    %v1105 = vld [vmem:[#allocation11 + $0x28] sm:$0xf]
    %v1106 = vld [vmem:[#allocation11 + $0x2c] sm:$0xf]
    %v1107 = vld [vmem:[#allocation11 + $0x30] sm:$0xf]
    %v1108 = vld [vmem:[#allocation11 + $0x34] sm:$0xf]
    %v1109 = vld [vmem:[#allocation11 + $0x38] sm:$0xf]
    %v1110 = vld [vmem:[#allocation11 + $0x3c] sm:$0xf]
    %v1111 = vld [vmem:[#allocation11 + $0x40] sm:$0xf]
    %v1112 = vld [vmem:[#allocation11 + $0x44] sm:$0xf]
    %v1113 = vld [vmem:[#allocation11 + $0x48] sm:$0xf]
    %v1114 = vld [vmem:[#allocation11 + $0x4c] sm:$0xf]
    %v1115 = vld [vmem:[#allocation11 + $0x50] sm:$0xf]
    %v1116 = vld [vmem:[#allocation11 + $0x54] sm:$0xf]
    %v1117 = vld [vmem:[#allocation11 + $0x58] sm:$0xf]
    %v1118 = vld [vmem:[#allocation11 + $0x5c] sm:$0xf]
    %v1119 = vld [vmem:[#allocation11 + $0x60] sm:$0xf]
    %v1120 = vld [vmem:[#allocation11 + $0x64] sm:$0xf]
    %v1121 = vld [vmem:[#allocation11 + $0x68] sm:$0xf]
    %v1122 = vld [vmem:[#allocation11 + $0x6c] sm:$0xf]
    %v1123 = vld [vmem:[#allocation11 + $0x70] sm:$0xf]
    %v1124 = vld [vmem:[#allocation11 + $0x74] sm:$0xf]
    %v1125 = vld [vmem:[#allocation11 + $0x78] sm:$0xf]
    %v1126 = vld [vmem:[#allocation11 + $0x7c] sm:$0xf]
    %v1127 = vld [vmem:[#allocation11 + $0x80] sm:$0xf]
    %v1128 = vld [vmem:[#allocation11 + $0x84] sm:$0xf]
    %v1129 = vld [vmem:[#allocation11 + $0x88] sm:$0xf]
    %v1130 = vld [vmem:[#allocation11 + $0x8c] sm:$0xf]
    %v1131 = vld [vmem:[#allocation11 + $0x90] sm:$0xf]
    %v1132 = vld [vmem:[#allocation11 + $0x94] sm:$0xf]
    %v1133 = vld [vmem:[#allocation11 + $0x98] sm:$0xf]
    %v1134 = vld [vmem:[#allocation11 + $0x9c] sm:$0xf]
    %v1135 = vld [vmem:[#allocation11 + $0xa0] sm:$0xf]
    %v1136 = vld [vmem:[#allocation11 + $0xa4] sm:$0xf]
    %v1137 = vld [vmem:[#allocation11 + $0xa8] sm:$0xf]
    %v1138 = vld [vmem:[#allocation11 + $0xac] sm:$0xf]
    %v1139 = vld [vmem:[#allocation11 + $0xb0] sm:$0xf]
    %v1140 = vld [vmem:[#allocation11 + $0xb4] sm:$0xf]
    %v1141 = vld [vmem:[#allocation11 + $0xb8] sm:$0xf]
    %v1142 = vld [vmem:[#allocation11 + $0xbc] sm:$0xf]
    %v1143 = vld [vmem:[#allocation11 + $0xc0] sm:$0xf]
    %v1144 = vld [vmem:[#allocation11 + $0xc4] sm:$0xf]
    %v1145 = vld [vmem:[#allocation11 + $0xc8] sm:$0xf]
    %v1146 = vld [vmem:[#allocation11 + $0xcc] sm:$0xf]
    %v1147 = vld [vmem:[#allocation11 + $0xd0] sm:$0xf]
    %v1148 = vld [vmem:[#allocation11 + $0xd4] sm:$0xf]
    %v1149 = vld [vmem:[#allocation11 + $0xd8] sm:$0xf]
    %v1150 = vld [vmem:[#allocation11 + $0xdc] sm:$0xf]
    %v1151 = vld [vmem:[#allocation11 + $0xe0] sm:$0xf]
    %v1152 = vld [vmem:[#allocation11 + $0xe4] sm:$0xf]
    %v1153 = vld [vmem:[#allocation11 + $0xe8] sm:$0xf]
    %v1154 = vld [vmem:[#allocation11 + $0xec] sm:$0xf]
    %v1155 = vld [vmem:[#allocation11 + $0xf0] sm:$0xf]
    %v1156 = vld [vmem:[#allocation11 + $0xf4] sm:$0xf]
    %v1157 = vld [vmem:[#allocation11 + $0xf8] sm:$0xf]
    %v1158 = vld [vmem:[#allocation11 + $0xfc] sm:$0xf]
    %v1223 = vunpack.c.l.b16 %v1095
    %v1224 = vunpack.c.l.b16 %v1096
    %v1225 = vunpack.c.l.b16 %v1097
    %v1226 = vunpack.c.l.b16 %v1098
    %v1227 = vunpack.c.l.b16 %v1099
    %v1228 = vunpack.c.l.b16 %v1100
    %v1229 = vunpack.c.l.b16 %v1101
    %v1230 = vunpack.c.l.b16 %v1102
    %v1231 = vunpack.c.l.b16 %v1103
    %v1232 = vunpack.c.l.b16 %v1104
    %v1233 = vunpack.c.l.b16 %v1105
    %v1234 = vunpack.c.l.b16 %v1106
    %v1235 = vunpack.c.l.b16 %v1107
    %v1236 = vunpack.c.l.b16 %v1108
    %v1237 = vunpack.c.l.b16 %v1109
    %v1238 = vunpack.c.l.b16 %v1110
    %v1239 = vunpack.c.l.b16 %v1111
    %v1240 = vunpack.c.l.b16 %v1112
    %v1241 = vunpack.c.l.b16 %v1113
    %v1242 = vunpack.c.l.b16 %v1114
    %v1243 = vunpack.c.l.b16 %v1115
    %v1244 = vunpack.c.l.b16 %v1116
    %v1245 = vunpack.c.l.b16 %v1117
    %v1246 = vunpack.c.l.b16 %v1118
    %v1247 = vunpack.c.l.b16 %v1119
    %v1248 = vunpack.c.l.b16 %v1120
    %v1249 = vunpack.c.l.b16 %v1121
    %v1250 = vunpack.c.l.b16 %v1122
    %v1251 = vunpack.c.l.b16 %v1123
    %v1252 = vunpack.c.l.b16 %v1124
    %v1253 = vunpack.c.l.b16 %v1125
    %v1254 = vunpack.c.l.b16 %v1126
    %v1255 = vunpack.c.l.b16 %v1127
    %v1256 = vunpack.c.l.b16 %v1128
    %v1257 = vunpack.c.l.b16 %v1129
    %v1258 = vunpack.c.l.b16 %v1130
    %v1259 = vunpack.c.l.b16 %v1131
    %v1260 = vunpack.c.l.b16 %v1132
    %v1261 = vunpack.c.l.b16 %v1133
    %v1262 = vunpack.c.l.b16 %v1134
    %v1263 = vunpack.c.l.b16 %v1135
    %v1264 = vunpack.c.l.b16 %v1136
    %v1265 = vunpack.c.l.b16 %v1137
    %v1266 = vunpack.c.l.b16 %v1138
    %v1267 = vunpack.c.l.b16 %v1139
    %v1268 = vunpack.c.l.b16 %v1140
    %v1269 = vunpack.c.l.b16 %v1141
    %v1270 = vunpack.c.l.b16 %v1142
    %v1271 = vunpack.c.l.b16 %v1143
    %v1272 = vunpack.c.l.b16 %v1144
    %v1273 = vunpack.c.l.b16 %v1145
    %v1274 = vunpack.c.l.b16 %v1146
    %v1275 = vunpack.c.l.b16 %v1147
    %v1276 = vunpack.c.l.b16 %v1148
    %v1277 = vunpack.c.l.b16 %v1149
    %v1278 = vunpack.c.l.b16 %v1150
    %v1279 = vunpack.c.l.b16 %v1151
    %v1280 = vunpack.c.l.b16 %v1152
    %v1281 = vunpack.c.l.b16 %v1153
    %v1282 = vunpack.c.l.b16 %v1154
    %v1283 = vunpack.c.l.b16 %v1155
    %v1284 = vunpack.c.l.b16 %v1156
    %v1285 = vunpack.c.l.b16 %v1157
    %v1286 = vunpack.c.l.b16 %v1158
    %v1287 = vpack.c.b16 %v1224, %v1223
    %v1288 = vpack.c.b16 %v1226, %v1225
    %v1289 = vpack.c.b16 %v1228, %v1227
    %v1290 = vpack.c.b16 %v1230, %v1229
    %v1291 = vpack.c.b16 %v1232, %v1231
    %v1292 = vpack.c.b16 %v1234, %v1233
    %v1293 = vpack.c.b16 %v1236, %v1235
    %v1294 = vpack.c.b16 %v1238, %v1237
    %v1295 = vpack.c.b16 %v1240, %v1239
    %v1296 = vpack.c.b16 %v1242, %v1241
    %v1297 = vpack.c.b16 %v1244, %v1243
    %v1298 = vpack.c.b16 %v1246, %v1245
    %v1299 = vpack.c.b16 %v1248, %v1247
    %v1300 = vpack.c.b16 %v1250, %v1249
    %v1301 = vpack.c.b16 %v1252, %v1251
    %v1302 = vpack.c.b16 %v1254, %v1253
    %v1303 = vpack.c.b16 %v1256, %v1255
    %v1304 = vpack.c.b16 %v1258, %v1257
    %v1305 = vpack.c.b16 %v1260, %v1259
    %v1306 = vpack.c.b16 %v1262, %v1261
    %v1307 = vpack.c.b16 %v1264, %v1263
    %v1308 = vpack.c.b16 %v1266, %v1265
    %v1309 = vpack.c.b16 %v1268, %v1267
    %v1310 = vpack.c.b16 %v1270, %v1269
    %v1311 = vpack.c.b16 %v1272, %v1271
    %v1312 = vpack.c.b16 %v1274, %v1273
    %v1313 = vpack.c.b16 %v1276, %v1275
    %v1314 = vpack.c.b16 %v1278, %v1277
    %v1315 = vpack.c.b16 %v1280, %v1279
    %v1316 = vpack.c.b16 %v1282, %v1281
    %v1317 = vpack.c.b16 %v1284, %v1283
    %v1318 = vpack.c.b16 %v1286, %v1285
    %1351 = vmatprep.subr.bf16.mxu0 0
    %1352 = vmatpush1.bf16.msra.mxu0 %v1294
    %1353 = vmatprep.subr.bf16.mxu0 0
    %1354 = vmatpush1.bf16.msra.mxu0 %v1293
    %1355 = vmatprep.subr.bf16.mxu0 0
    %1356 = vmatpush1.bf16.msra.mxu0 %v1292
    %1357 = vmatprep.subr.bf16.mxu0 0
    %1358 = vmatpush1.bf16.msra.mxu0 %v1291
    %1359 = vmatprep.subr.bf16.mxu0 0
    %1360 = vmatpush1.bf16.msra.mxu0 %v1290
    %1361 = vmatprep.subr.bf16.mxu0 0
    %1362 = vmatpush1.bf16.msra.mxu0 %v1289
    %1363 = vmatprep.subr.bf16.mxu0 0
    %1364 = vmatpush1.bf16.msra.mxu0 %v1288
    %1365 = vmatprep.subr.bf16.mxu0 0
    %1366 = vmatpush1.bf16.msra.mxu0 %v1287
    %1367 = vmatprep.subr.bf16.mxu0 0
    %1368 = vmatpush2.bf16.msra.mxu0 %v1302
    %1369 = vmatprep.subr.bf16.mxu0 0
    %1370 = vmatpush2.bf16.msra.mxu0 %v1301
    %1371 = vmatprep.subr.bf16.mxu0 0
    %1372 = vmatpush2.bf16.msra.mxu0 %v1300
    %1373 = vmatprep.subr.bf16.mxu0 0
    %1374 = vmatpush2.bf16.msra.mxu0 %v1299
    %1375 = vmatprep.subr.bf16.mxu0 0
    %1376 = vmatpush2.bf16.msra.mxu0 %v1298
    %1377 = vmatprep.subr.bf16.mxu0 0
    %1378 = vmatpush2.bf16.msra.mxu0 %v1297
    %1379 = vmatprep.subr.bf16.mxu0 0
    %1380 = vmatpush2.bf16.msra.mxu0 %v1296
    %1381 = vmatprep.subr.bf16.mxu0 0
    %1382 = vmatpush2.bf16.msra.mxu0 %v1295
    %1383 = vmatprep.mubr.bf16.mxu0 %v1088
    %1384 = vmatmul.mubr.bf16.gmra.mxu0 %v1087
    %v1385 = vpop.f32.mrf.mxu0
    %v1386 = vadd.f32 0.0, %v1385
    %v1387 = vpop.f32.mrf.mxu0
    %v1388 = vpop.f32.mrf.mxu0
    %v1389 = vadd.f32 0.0, %v1388
    %v1390 = vpop.f32.mrf.mxu0
    %1391 = vmatprep.mubr.bf16.mxu0 %v1092
    %1392 = vmatmul.mubr.bf16.gmra.mxu0 %v1091
    %v1393 = vpop.f32.mrf.mxu0
    %v1394 = vadd.f32 0.0, %v1393
    %v1395 = vpop.f32.mrf.mxu0
    %v1396 = vpop.f32.mrf.mxu0
    %v1397 = vpop.f32.mrf.mxu0
    %1398 = vdwg.mxu0
    %1399 = vmatprep.subr.bf16.mxu0 0
    %1400 = vmatpush1.bf16.msra.mxu0 %v1310
    %1401 = vmatprep.subr.bf16.mxu0 0
    %1402 = vmatpush1.bf16.msra.mxu0 %v1309
    %1403 = vmatprep.subr.bf16.mxu0 0
    %1404 = vmatpush1.bf16.msra.mxu0 %v1308
    %1405 = vmatprep.subr.bf16.mxu0 0
    %1406 = vmatpush1.bf16.msra.mxu0 %v1307
    %1407 = vmatprep.subr.bf16.mxu0 0
    %1408 = vmatpush1.bf16.msra.mxu0 %v1306
    %1409 = vmatprep.subr.bf16.mxu0 0
    %1410 = vmatpush1.bf16.msra.mxu0 %v1305
    %1411 = vmatprep.subr.bf16.mxu0 0
    %1412 = vmatpush1.bf16.msra.mxu0 %v1304
    %1413 = vmatprep.subr.bf16.mxu0 0
    %1414 = vmatpush1.bf16.msra.mxu0 %v1303
    %1415 = vmatprep.subr.bf16.mxu0 0
    %1416 = vmatpush2.bf16.msra.mxu0 %v1318
    %1417 = vmatprep.subr.bf16.mxu0 0
    %1418 = vmatpush2.bf16.msra.mxu0 %v1317
    %1419 = vmatprep.subr.bf16.mxu0 0
    %1420 = vmatpush2.bf16.msra.mxu0 %v1316
    %1421 = vmatprep.subr.bf16.mxu0 0
    %1422 = vmatpush2.bf16.msra.mxu0 %v1315
    %1423 = vmatprep.subr.bf16.mxu0 0
    %1424 = vmatpush2.bf16.msra.mxu0 %v1314
    %1425 = vmatprep.subr.bf16.mxu0 0
    %1426 = vmatpush2.bf16.msra.mxu0 %v1313
    %1427 = vmatprep.subr.bf16.mxu0 0
    %1428 = vmatpush2.bf16.msra.mxu0 %v1312
    %1429 = vmatprep.subr.bf16.mxu0 0
    %1430 = vmatpush2.bf16.msra.mxu0 %v1311
    %1431 = vmatprep.mubr.bf16.mxu0 %v1090
    %1432 = vmatmul.mubr.bf16.gmra.mxu0 %v1089
    %v1433 = vpop.f32.mrf.mxu0
    %v1434 = vadd.f32 %v1386, %v1433
    %v1435 = vpop.f32.mrf.mxu0
    %v1436 = vpop.f32.mrf.mxu0
    %v1437 = vadd.f32 %v1389, %v1436
    %v1438 = vpop.f32.mrf.mxu0
    %1439 = vmatprep.mubr.bf16.mxu0 %v1094
    %1440 = vmatmul.mubr.bf16.gmra.mxu0 %v1093
    %v1441 = vpop.f32.mrf.mxu0
    %v1442 = vadd.f32 %v1394, %v1441
    %v1443 = vpop.f32.mrf.mxu0
    %v1444 = vpop.f32.mrf.mxu0
    %v1445 = vpop.f32.mrf.mxu0
    %1446 = vdwg.mxu0
    %v1447 = vadd.f32 %v1434, %v1437
    %vm1448 = vcmask 1041408
    %v1449 = vsel %vm1448, %v1442, 0.0
    %v1450 = vadd.f32 %v1447, %v1449
    %v1451 = vrot.slane %v1450, 4
    %v1452 = vadd.f32 %v1450, %v1451
    %v1453 = vrot.slane %v1452, 2
    %v1454 = vadd.f32 %v1452, %v1453
    %v1455 = vrot.slane %v1454, 1
    %v1456 = vadd.f32 %v1454, %v1455
    %v1457 = vrcp.pop 18.0
    %v1458 = vmul.f32 %v1456, %v1457
    %v1459 = vsub.f32 %v1434, %v1458
    %v1460 = vsub.f32 %v1437, %v1458
    %v1461 = vsub.f32 %v1442, %v1458
    %v1462 = vmul.f32 %v1459, %v1459
    %v1463 = vmul.f32 %v1460, %v1460
    %v1464 = vmul.f32 %v1461, %v1461
    %v1465 = vadd.f32 %v1462, %v1463
    %v1466 = vsel %vm1448, %v1464, 0.0
    %v1467 = vadd.f32 %v1465, %v1466
    %v1468 = vrot.slane %v1467, 4
    %v1469 = vadd.f32 %v1467, %v1468
    %v1470 = vrot.slane %v1469, 2
    %v1471 = vadd.f32 %v1469, %v1470
    %v1472 = vrot.slane %v1471, 1
    %v1473 = vadd.f32 %v1471, %v1472
    %v1474 = vmul.f32 %v1473, %v1457
    %v1475 = vadd.f32 %v1474, 1e-05
    %v1476 = vrsqrt.pop %v1475
    %v1477 = vmul.f32 %v1459, %v1476
    %v1478 = vmul.f32 %v1460, %v1476
    %v1479 = vmul.f32 %v1461, %v1476
    %v1480 = vld [vmem:[%s5] sm:$0x1]
    %v1482 = vlaneseq
    %v1483 = vshrl.u32 %v1482, 7
    %v1484 = vsub.s32 0, %v1483
    %v1485 = vrot.slane %v1480, %v1484
    %v1487 = vmul.f32 %v1477, %v1485
    %v1488 = vmul.f32 %v1478, %v1485
    %v1489 = vmul.f32 %v1479, %v1485
    %v1490 = vld [vmem:[%s6] sm:$0x1]
    %v1492 = vlaneseq
    %v1493 = vshrl.u32 %v1492, 7
    %v1494 = vsub.s32 0, %v1493
    %v1495 = vrot.slane %v1490, %v1494
    %v1497 = vadd.f32 %v1487, %v1495
    %v1498 = vadd.f32 %v1488, %v1495
    %v1499 = vadd.f32 %v1489, %v1495
    %v1500 = vmax.f32 %v1497, 0.0
    %v1501 = vmax.f32 %v1498, 0.0
    %v1502 = vmax.f32 %v1499, 0.0
    %v1506 = vcombine.high %v1500, %v1500
    %v1508 = vunpack.c.l.s4 1966171168
    %v1509 = vunpack.c.0.s8 %v1508
    %v1510 = vlaneseq
    %v1511 = vshrl.u32 %v1510, 7
    %v1512 = vsub.s32 %v1509, %v1511
    %v1513 = vrot.slane %v1500, %v1512
    %v1515 = vunpack.c.l.s4 1966171168
    %v1516 = vunpack.c.0.s8 %v1515
    %v1517 = vlaneseq
    %v1518 = vshrl.u32 %v1517, 7
    %v1519 = vsub.s32 %v1516, %v1518
    %v1520 = vrot.slane %v1506, %v1519
    %v1521 = vcombine.high %v1513, %v1513
    %v1522 = vcombine.high %v1520, %v1520
    %v1524 = vunpack.c.l.s4 1966171168
    %v1525 = vunpack.c.0.s8 %v1524
    %v1526 = vlaneseq
    %v1527 = vshrl.u32 %v1526, 7
    %v1528 = vsub.s32 %v1525, %v1527
    %v1529 = vrot.slane %v1513, %v1528
    %v1531 = vunpack.c.l.s4 1966171168
    %v1532 = vunpack.c.0.s8 %v1531
    %v1533 = vlaneseq
    %v1534 = vshrl.u32 %v1533, 7
    %v1535 = vsub.s32 %v1532, %v1534
    %v1536 = vrot.slane %v1520, %v1535
    %v1538 = vunpack.c.l.s4 1966171168
    %v1539 = vunpack.c.0.s8 %v1538
    %v1540 = vlaneseq
    %v1541 = vshrl.u32 %v1540, 7
    %v1542 = vsub.s32 %v1539, %v1541
    %v1543 = vrot.slane %v1521, %v1542
    %v1545 = vunpack.c.l.s4 1966171168
    %v1546 = vunpack.c.0.s8 %v1545
    %v1547 = vlaneseq
    %v1548 = vshrl.u32 %v1547, 7
    %v1549 = vsub.s32 %v1546, %v1548
    %v1550 = vrot.slane %v1522, %v1549
    %v1551 = vcombine.high %v1529, %v1529
    %v1552 = vcombine.high %v1536, %v1536
    %v1553 = vcombine.high %v1543, %v1543
    %v1554 = vcombine.high %v1550, %v1550
    %v1555 = vcombine.high %v1501, %v1501
    %v1557 = vunpack.c.l.s4 1966171168
    %v1558 = vunpack.c.0.s8 %v1557
    %v1559 = vlaneseq
    %v1560 = vshrl.u32 %v1559, 7
    %v1561 = vsub.s32 %v1558, %v1560
    %v1562 = vrot.slane %v1501, %v1561
    %v1564 = vunpack.c.l.s4 1966171168
    %v1565 = vunpack.c.0.s8 %v1564
    %v1566 = vlaneseq
    %v1567 = vshrl.u32 %v1566, 7
    %v1568 = vsub.s32 %v1565, %v1567
    %v1569 = vrot.slane %v1555, %v1568
    %v1570 = vcombine.high %v1562, %v1562
    %v1571 = vcombine.high %v1569, %v1569
    %v1573 = vunpack.c.l.s4 1966171168
    %v1574 = vunpack.c.0.s8 %v1573
    %v1575 = vlaneseq
    %v1576 = vshrl.u32 %v1575, 7
    %v1577 = vsub.s32 %v1574, %v1576
    %v1578 = vrot.slane %v1562, %v1577
    %v1580 = vunpack.c.l.s4 1966171168
    %v1581 = vunpack.c.0.s8 %v1580
    %v1582 = vlaneseq
    %v1583 = vshrl.u32 %v1582, 7
    %v1584 = vsub.s32 %v1581, %v1583
    %v1585 = vrot.slane %v1569, %v1584
    %v1587 = vunpack.c.l.s4 1966171168
    %v1588 = vunpack.c.0.s8 %v1587
    %v1589 = vlaneseq
    %v1590 = vshrl.u32 %v1589, 7
    %v1591 = vsub.s32 %v1588, %v1590
    %v1592 = vrot.slane %v1570, %v1591
    %v1594 = vunpack.c.l.s4 1966171168
    %v1595 = vunpack.c.0.s8 %v1594
    %v1596 = vlaneseq
    %v1597 = vshrl.u32 %v1596, 7
    %v1598 = vsub.s32 %v1595, %v1597
    %v1599 = vrot.slane %v1571, %v1598
    %v1600 = vcombine.high %v1578, %v1578
    %v1601 = vcombine.high %v1585, %v1585
    %v1602 = vcombine.high %v1592, %v1592
    %v1603 = vcombine.high %v1599, %v1599
    %v1605 = vunpack.c.l.s4 1966171168
    %v1606 = vunpack.c.0.s8 %v1605
    %v1607 = vlaneseq
    %v1608 = vshrl.u32 %v1607, 7
    %v1609 = vsub.s32 %v1606, %v1608
    %v1610 = vrot.slane %v1502, %v1609
    %v1611 = vcombine.high %v1610, %v1610
    %v1613 = vunpack.c.l.s4 1966171168
    %v1614 = vunpack.c.0.s8 %v1613
    %v1615 = vlaneseq
    %v1616 = vshrl.u32 %v1615, 7
    %v1617 = vsub.s32 %v1614, %v1616
    %v1618 = vrot.slane %v1610, %v1617
    %v1620 = vunpack.c.l.s4 1966171168
    %v1621 = vunpack.c.0.s8 %v1620
    %v1622 = vlaneseq
    %v1623 = vshrl.u32 %v1622, 7
    %v1624 = vsub.s32 %v1621, %v1623
    %v1625 = vrot.slane %v1611, %v1624
    %1626 = vst [vmem:[#allocation4] sm:$0x1f] 0.0
    %1627 = vst [vmem:[#allocation4 + $0x8] sm:$0x1f] 0.0
    %1628 = vst [vmem:[#allocation4 + $0x10] sm:$0x1f] 0.0
    %1629 = vst [vmem:[#allocation4 + $0x18] sm:$0x1f] 0.0
    %1630 = vst [vmem:[#allocation4 + $0x20] sm:$0x1f] 0.0
    %1631 = vst [vmem:[#allocation4 + $0x28] sm:$0x1f] 0.0
    %1632 = vst [vmem:[#allocation4 + $0x30] sm:$0x1f] 0.0
    %1633 = vst [vmem:[#allocation4 + $0x38] sm:$0x1f] 0.0
    %1634 = vst [vmem:[#allocation4 + $0x40] sm:$0x1f] 0.0
    %1635 = vst [vmem:[#allocation4 + $0x48] sm:$0x1f] 0.0
    %v1636 = vcombine.low %v1529, %v1543
    %v1638 = vunpack.c.l.s4 1966171168
    %v1639 = vunpack.c.0.s8 %v1638
    %v1640 = vlaneseq
    %v1641 = vshrl.u32 %v1640, 7
    %v1642 = vsub.s32 %v1639, %v1641
    %v1643 = vrot.slane %v1636, %v1642
    %v1645 = vunpack.c.l.s4 1966171168
    %v1646 = vunpack.c.0.s8 %v1645
    %v1647 = vlaneseq
    %v1648 = vshrl.u32 %v1647, 7
    %v1649 = vsub.s32 %v1646, %v1648
    %v1650 = vrot.slane %v1551, %v1649
    %v1651 = vcombine.low %v1643, %v1650
    %v1653 = vunpack.c.l.s4 1966171168
    %v1654 = vunpack.c.0.s8 %v1653
    %v1655 = vlaneseq
    %v1656 = vshrl.u32 %v1655, 7
    %v1657 = vsub.s32 %v1654, %v1656
    %v1658 = vrot.slane %v1651, %v1657
    %v1659 = vcombine.low %v1553, %v1536
    %v1661 = vunpack.c.l.s4 1966171168
    %v1662 = vunpack.c.0.s8 %v1661
    %v1663 = vlaneseq
    %v1664 = vshrl.u32 %v1663, 7
    %v1665 = vsub.s32 %v1662, %v1664
    %v1666 = vrot.slane %v1659, %v1665
    %v1668 = vunpack.c.l.s4 1966171168
    %v1669 = vunpack.c.0.s8 %v1668
    %v1670 = vlaneseq
    %v1671 = vshrl.u32 %v1670, 7
    %v1672 = vsub.s32 %v1669, %v1671
    %v1673 = vrot.slane %v1550, %v1672
    %v1674 = vcombine.low %v1666, %v1673
    %v1676 = vunpack.c.l.s4 1966171168
    %v1677 = vunpack.c.0.s8 %v1676
    %v1678 = vlaneseq
    %v1679 = vshrl.u32 %v1678, 7
    %v1680 = vsub.s32 %v1677, %v1679
    %v1681 = vrot.slane %v1674, %v1680
    %v1682 = vcombine.low %v1552, %v1554
    %v1684 = vunpack.c.l.s4 1966171168
    %v1685 = vunpack.c.0.s8 %v1684
    %v1686 = vlaneseq
    %v1687 = vshrl.u32 %v1686, 7
    %v1688 = vsub.s32 %v1685, %v1687
    %v1689 = vrot.slane %v1682, %v1688
    %v1691 = vunpack.c.l.s4 1966171168
    %v1692 = vunpack.c.0.s8 %v1691
    %v1693 = vlaneseq
    %v1694 = vshrl.u32 %v1693, 7
    %v1695 = vsub.s32 %v1692, %v1694
    %v1696 = vrot.slane %v1578, %v1695
    %v1697 = vcombine.low %v1689, %v1696
    %v1699 = vunpack.c.l.s4 1966171168
    %v1700 = vunpack.c.0.s8 %v1699
    %v1701 = vlaneseq
    %v1702 = vshrl.u32 %v1701, 7
    %v1703 = vsub.s32 %v1700, %v1702
    %v1704 = vrot.slane %v1697, %v1703
    %v1705 = vcombine.low %v1592, %v1600
    %v1707 = vunpack.c.l.s4 1966171168
    %v1708 = vunpack.c.0.s8 %v1707
    %v1709 = vlaneseq
    %v1710 = vshrl.u32 %v1709, 7
    %v1711 = vsub.s32 %v1708, %v1710
    %v1712 = vrot.slane %v1705, %v1711
    %v1714 = vunpack.c.l.s4 1966171168
    %v1715 = vunpack.c.0.s8 %v1714
    %v1716 = vlaneseq
    %v1717 = vshrl.u32 %v1716, 7
    %v1718 = vsub.s32 %v1715, %v1717
    %v1719 = vrot.slane %v1602, %v1718
    %v1720 = vcombine.low %v1712, %v1719
    %v1722 = vunpack.c.l.s4 1966171168
    %v1723 = vunpack.c.0.s8 %v1722
    %v1724 = vlaneseq
    %v1725 = vshrl.u32 %v1724, 7
    %v1726 = vsub.s32 %v1723, %v1725
    %v1727 = vrot.slane %v1720, %v1726
    %v1728 = vcombine.low %v1585, %v1599
    %v1730 = vunpack.c.l.s4 1966171168
    %v1731 = vunpack.c.0.s8 %v1730
    %v1732 = vlaneseq
    %v1733 = vshrl.u32 %v1732, 7
    %v1734 = vsub.s32 %v1731, %v1733
    %v1735 = vrot.slane %v1728, %v1734
    %v1737 = vunpack.c.l.s4 1966171168
    %v1738 = vunpack.c.0.s8 %v1737
    %v1739 = vlaneseq
    %v1740 = vshrl.u32 %v1739, 7
    %v1741 = vsub.s32 %v1738, %v1740
    %v1742 = vrot.slane %v1601, %v1741
    %v1743 = vcombine.low %v1735, %v1742
    %v1745 = vunpack.c.l.s4 1966171168
    %v1746 = vunpack.c.0.s8 %v1745
    %v1747 = vlaneseq
    %v1748 = vshrl.u32 %v1747, 7
    %v1749 = vsub.s32 %v1746, %v1748
    %v1750 = vrot.slane %v1743, %v1749
    %v1751 = vcombine.low %v1603, %v1618
    %v1753 = vunpack.c.l.s4 1966171168
    %v1754 = vunpack.c.0.s8 %v1753
    %v1755 = vlaneseq
    %v1756 = vshrl.u32 %v1755, 7
    %v1757 = vsub.s32 %v1754, %v1756
    %v1758 = vrot.slane %v1751, %v1757
    %v1760 = vunpack.c.l.s4 1966171168
    %v1761 = vunpack.c.0.s8 %v1760
    %v1762 = vlaneseq
    %v1763 = vshrl.u32 %v1762, 7
    %v1764 = vsub.s32 %v1761, %v1763
    %v1765 = vrot.slane %v1625, %v1764
    %v1766 = vcombine.low %v1758, %v1765
    %v1768 = vunpack.c.l.s4 1966171168
    %v1769 = vunpack.c.0.s8 %v1768
    %v1770 = vlaneseq
    %v1771 = vshrl.u32 %v1770, 7
    %v1772 = vsub.s32 %v1769, %v1771
    %v1773 = vrot.slane %v1766, %v1772
    %s1780 = scalar_lea.vmem [#allocation4], 8
    %1781 = vst [vmem:[%s1780 + $0x1] sm:$0x7] %v1658
    %1782 = vst [vmem:[%s1780 + $0x9] sm:$0x7] %v1681
    %1783 = vst [vmem:[%s1780 + $0x11] sm:$0x7] %v1704
    %1784 = vst [vmem:[%s1780 + $0x29] sm:$0x7] %v1727
    %1785 = vst [vmem:[%s1780 + $0x31] sm:$0x7] %v1750
    %1786 = vst [vmem:[%s1780 + $0x39] sm:$0x7] %v1773
    %v1787 = vld [vmem:[#allocation4] sm:$0x1f]
    %v1788 = vld [vmem:[#allocation4 + $0x8] sm:$0x1f]
    %v1789 = vld [vmem:[#allocation4 + $0x10] sm:$0x1f]
    %v1790 = vld [vmem:[#allocation4 + $0x18] sm:$0x1f]
    %v1791 = vld [vmem:[#allocation4 + $0x20] sm:$0x1f]
    %v1792 = vld [vmem:[#allocation4 + $0x28] sm:$0x1f]
    %v1793 = vld [vmem:[#allocation4 + $0x30] sm:$0x1f]
    %v1794 = vld [vmem:[#allocation4 + $0x38] sm:$0x1f]
    %v1795 = vld [vmem:[#allocation4 + $0x40] sm:$0x1f]
    %v1796 = vld [vmem:[#allocation4 + $0x48] sm:$0x1f]
    %v1805 = vrot.slane %v1787, 1
    %v1806 = vrot.slane %v1788, 1
    %v1807 = vrot.slane %v1789, 1
    %v1808 = vrot.slane %v1790, 1
    %v1809 = vrot.slane %v1792, 1
    %v1810 = vrot.slane %v1793, 1
    %v1811 = vrot.slane %v1794, 1
    %v1812 = vrot.slane %v1795, 1
    %v1815 = vrot.slane %v1791, 1
    %v1816 = vrot.slane %v1796, 1
    %v1817 = vcombine.low %v1787, %v1805
    %v1818 = vcombine.low %v1788, %v1806
    %v1819 = vcombine.low %v1789, %v1807
    %v1820 = vcombine.low %v1790, %v1808
    %v1821 = vcombine.low %v1791, %v1815
    %v1822 = vcombine.low %v1792, %v1809
    %v1823 = vcombine.low %v1793, %v1810
    %v1824 = vcombine.low %v1794, %v1811
    %v1825 = vcombine.low %v1795, %v1812
    %v1826 = vcombine.low %v1796, %v1816
    %v1827 = vcombine.low %v1817, %v1818
    %v1828 = vcombine.high %v1817, %v1818
    %v1829 = vcombine.low %v1818, %v1819
    %v1830 = vcombine.high %v1818, %v1819
    %v1831 = vcombine.low %v1819, %v1820
    %v1832 = vcombine.high %v1819, %v1820
    %v1833 = vcombine.low %v1820, %v1821
    %v1834 = vcombine.high %v1820, %v1821
    %v1835 = vcombine.low %v1822, %v1823
    %v1836 = vcombine.high %v1822, %v1823
    %v1837 = vcombine.low %v1823, %v1824
    %v1838 = vcombine.high %v1823, %v1824
    %v1839 = vcombine.low %v1824, %v1825
    %v1840 = vcombine.high %v1824, %v1825
    %v1841 = vcombine.low %v1825, %v1826
    %v1842 = vcombine.high %v1825, %v1826
    %v1859 = vpack.c.bf16 %v1831, %v1827
    %v1860 = vpack.c.bf16 %v1832, %v1828
    %v1861 = vpack.c.bf16 %v1833, %v1829
    %v1862 = vpack.c.bf16 %v1834, %v1830
    %v1863 = vpack.c.bf16 %v1839, %v1835
    %v1864 = vpack.c.bf16 %v1840, %v1836
    %v1865 = vpack.c.bf16 %v1841, %v1837
    %v1866 = vpack.c.bf16 %v1842, %v1838
    %v1867 = vld [vmem:[#allocation13] sm:$0xf]
    %v1868 = vld [vmem:[#allocation13 + $0x4] sm:$0xf]
    %v1869 = vld [vmem:[#allocation13 + $0x8] sm:$0xf]
    %v1870 = vld [vmem:[#allocation13 + $0xc] sm:$0xf]
    %v1871 = vld [vmem:[#allocation13 + $0x10] sm:$0xf]
    %v1872 = vld [vmem:[#allocation13 + $0x14] sm:$0xf]
    %v1873 = vld [vmem:[#allocation13 + $0x18] sm:$0xf]
    %v1874 = vld [vmem:[#allocation13 + $0x1c] sm:$0xf]
    %v1875 = vld [vmem:[#allocation13 + $0x20] sm:$0xf]
    %v1876 = vld [vmem:[#allocation13 + $0x24] sm:$0xf]
    %v1877 = vld [vmem:[#allocation13 + $0x28] sm:$0xf]
    %v1878 = vld [vmem:[#allocation13 + $0x2c] sm:$0xf]
    %v1879 = vld [vmem:[#allocation13 + $0x30] sm:$0xf]
    %v1880 = vld [vmem:[#allocation13 + $0x34] sm:$0xf]
    %v1881 = vld [vmem:[#allocation13 + $0x38] sm:$0xf]
    %v1882 = vld [vmem:[#allocation13 + $0x3c] sm:$0xf]
    %v1883 = vld [vmem:[#allocation13 + $0x40] sm:$0xf]
    %v1884 = vld [vmem:[#allocation13 + $0x44] sm:$0xf]
    %v1885 = vld [vmem:[#allocation13 + $0x48] sm:$0xf]
    %v1886 = vld [vmem:[#allocation13 + $0x4c] sm:$0xf]
    %v1887 = vld [vmem:[#allocation13 + $0x50] sm:$0xf]
    %v1888 = vld [vmem:[#allocation13 + $0x54] sm:$0xf]
    %v1889 = vld [vmem:[#allocation13 + $0x58] sm:$0xf]
    %v1890 = vld [vmem:[#allocation13 + $0x5c] sm:$0xf]
    %v1891 = vld [vmem:[#allocation13 + $0x60] sm:$0xf]
    %v1892 = vld [vmem:[#allocation13 + $0x64] sm:$0xf]
    %v1893 = vld [vmem:[#allocation13 + $0x68] sm:$0xf]
    %v1894 = vld [vmem:[#allocation13 + $0x6c] sm:$0xf]
    %v1895 = vld [vmem:[#allocation13 + $0x70] sm:$0xf]
    %v1896 = vld [vmem:[#allocation13 + $0x74] sm:$0xf]
    %v1897 = vld [vmem:[#allocation13 + $0x78] sm:$0xf]
    %v1898 = vld [vmem:[#allocation13 + $0x7c] sm:$0xf]
    %v1899 = vld [vmem:[#allocation13 + $0x80] sm:$0xf]
    %v1900 = vld [vmem:[#allocation13 + $0x84] sm:$0xf]
    %v1901 = vld [vmem:[#allocation13 + $0x88] sm:$0xf]
    %v1902 = vld [vmem:[#allocation13 + $0x8c] sm:$0xf]
    %v1903 = vld [vmem:[#allocation13 + $0x90] sm:$0xf]
    %v1904 = vld [vmem:[#allocation13 + $0x94] sm:$0xf]
    %v1905 = vld [vmem:[#allocation13 + $0x98] sm:$0xf]
    %v1906 = vld [vmem:[#allocation13 + $0x9c] sm:$0xf]
    %v1907 = vld [vmem:[#allocation13 + $0xa0] sm:$0xf]
    %v1908 = vld [vmem:[#allocation13 + $0xa4] sm:$0xf]
    %v1909 = vld [vmem:[#allocation13 + $0xa8] sm:$0xf]
    %v1910 = vld [vmem:[#allocation13 + $0xac] sm:$0xf]
    %v1911 = vld [vmem:[#allocation13 + $0xb0] sm:$0xf]
    %v1912 = vld [vmem:[#allocation13 + $0xb4] sm:$0xf]
    %v1913 = vld [vmem:[#allocation13 + $0xb8] sm:$0xf]
    %v1914 = vld [vmem:[#allocation13 + $0xbc] sm:$0xf]
    %v1915 = vld [vmem:[#allocation13 + $0xc0] sm:$0xf]
    %v1916 = vld [vmem:[#allocation13 + $0xc4] sm:$0xf]
    %v1917 = vld [vmem:[#allocation13 + $0xc8] sm:$0xf]
    %v1918 = vld [vmem:[#allocation13 + $0xcc] sm:$0xf]
    %v1919 = vld [vmem:[#allocation13 + $0xd0] sm:$0xf]
    %v1920 = vld [vmem:[#allocation13 + $0xd4] sm:$0xf]
    %v1921 = vld [vmem:[#allocation13 + $0xd8] sm:$0xf]
    %v1922 = vld [vmem:[#allocation13 + $0xdc] sm:$0xf]
    %v1923 = vld [vmem:[#allocation13 + $0xe0] sm:$0xf]
    %v1924 = vld [vmem:[#allocation13 + $0xe4] sm:$0xf]
    %v1925 = vld [vmem:[#allocation13 + $0xe8] sm:$0xf]
    %v1926 = vld [vmem:[#allocation13 + $0xec] sm:$0xf]
    %v1927 = vld [vmem:[#allocation13 + $0xf0] sm:$0xf]
    %v1928 = vld [vmem:[#allocation13 + $0xf4] sm:$0xf]
    %v1929 = vld [vmem:[#allocation13 + $0xf8] sm:$0xf]
    %v1930 = vld [vmem:[#allocation13 + $0xfc] sm:$0xf]
    %v1995 = vunpack.c.l.b16 %v1867
    %v1996 = vunpack.c.l.b16 %v1868
    %v1997 = vunpack.c.l.b16 %v1869
    %v1998 = vunpack.c.l.b16 %v1870
    %v1999 = vunpack.c.l.b16 %v1871
    %v2000 = vunpack.c.l.b16 %v1872
    %v2001 = vunpack.c.l.b16 %v1873
    %v2002 = vunpack.c.l.b16 %v1874
    %v2003 = vunpack.c.l.b16 %v1875
    %v2004 = vunpack.c.l.b16 %v1876
    %v2005 = vunpack.c.l.b16 %v1877
    %v2006 = vunpack.c.l.b16 %v1878
    %v2007 = vunpack.c.l.b16 %v1879
    %v2008 = vunpack.c.l.b16 %v1880
    %v2009 = vunpack.c.l.b16 %v1881
    %v2010 = vunpack.c.l.b16 %v1882
    %v2011 = vunpack.c.l.b16 %v1883
    %v2012 = vunpack.c.l.b16 %v1884
    %v2013 = vunpack.c.l.b16 %v1885
    %v2014 = vunpack.c.l.b16 %v1886
    %v2015 = vunpack.c.l.b16 %v1887
    %v2016 = vunpack.c.l.b16 %v1888
    %v2017 = vunpack.c.l.b16 %v1889
    %v2018 = vunpack.c.l.b16 %v1890
    %v2019 = vunpack.c.l.b16 %v1891
    %v2020 = vunpack.c.l.b16 %v1892
    %v2021 = vunpack.c.l.b16 %v1893
    %v2022 = vunpack.c.l.b16 %v1894
    %v2023 = vunpack.c.l.b16 %v1895
    %v2024 = vunpack.c.l.b16 %v1896
    %v2025 = vunpack.c.l.b16 %v1897
    %v2026 = vunpack.c.l.b16 %v1898
    %v2027 = vunpack.c.l.b16 %v1899
    %v2028 = vunpack.c.l.b16 %v1900
    %v2029 = vunpack.c.l.b16 %v1901
    %v2030 = vunpack.c.l.b16 %v1902
    %v2031 = vunpack.c.l.b16 %v1903
    %v2032 = vunpack.c.l.b16 %v1904
    %v2033 = vunpack.c.l.b16 %v1905
    %v2034 = vunpack.c.l.b16 %v1906
    %v2035 = vunpack.c.l.b16 %v1907
    %v2036 = vunpack.c.l.b16 %v1908
    %v2037 = vunpack.c.l.b16 %v1909
    %v2038 = vunpack.c.l.b16 %v1910
    %v2039 = vunpack.c.l.b16 %v1911
    %v2040 = vunpack.c.l.b16 %v1912
    %v2041 = vunpack.c.l.b16 %v1913
    %v2042 = vunpack.c.l.b16 %v1914
    %v2043 = vunpack.c.l.b16 %v1915
    %v2044 = vunpack.c.l.b16 %v1916
    %v2045 = vunpack.c.l.b16 %v1917
    %v2046 = vunpack.c.l.b16 %v1918
    %v2047 = vunpack.c.l.b16 %v1919
    %v2048 = vunpack.c.l.b16 %v1920
    %v2049 = vunpack.c.l.b16 %v1921
    %v2050 = vunpack.c.l.b16 %v1922
    %v2051 = vunpack.c.l.b16 %v1923
    %v2052 = vunpack.c.l.b16 %v1924
    %v2053 = vunpack.c.l.b16 %v1925
    %v2054 = vunpack.c.l.b16 %v1926
    %v2055 = vunpack.c.l.b16 %v1927
    %v2056 = vunpack.c.l.b16 %v1928
    %v2057 = vunpack.c.l.b16 %v1929
    %v2058 = vunpack.c.l.b16 %v1930
    %v2059 = vpack.c.b16 %v1996, %v1995
    %v2060 = vpack.c.b16 %v1998, %v1997
    %v2061 = vpack.c.b16 %v2000, %v1999
    %v2062 = vpack.c.b16 %v2002, %v2001
    %v2063 = vpack.c.b16 %v2004, %v2003
    %v2064 = vpack.c.b16 %v2006, %v2005
    %v2065 = vpack.c.b16 %v2008, %v2007
    %v2066 = vpack.c.b16 %v2010, %v2009
    %v2067 = vpack.c.b16 %v2012, %v2011
    %v2068 = vpack.c.b16 %v2014, %v2013
    %v2069 = vpack.c.b16 %v2016, %v2015
    %v2070 = vpack.c.b16 %v2018, %v2017
    %v2071 = vpack.c.b16 %v2020, %v2019
    %v2072 = vpack.c.b16 %v2022, %v2021
    %v2073 = vpack.c.b16 %v2024, %v2023
    %v2074 = vpack.c.b16 %v2026, %v2025
    %v2075 = vpack.c.b16 %v2028, %v2027
    %v2076 = vpack.c.b16 %v2030, %v2029
    %v2077 = vpack.c.b16 %v2032, %v2031
    %v2078 = vpack.c.b16 %v2034, %v2033
    %v2079 = vpack.c.b16 %v2036, %v2035
    %v2080 = vpack.c.b16 %v2038, %v2037
    %v2081 = vpack.c.b16 %v2040, %v2039
    %v2082 = vpack.c.b16 %v2042, %v2041
    %v2083 = vpack.c.b16 %v2044, %v2043
    %v2084 = vpack.c.b16 %v2046, %v2045
    %v2085 = vpack.c.b16 %v2048, %v2047
    %v2086 = vpack.c.b16 %v2050, %v2049
    %v2087 = vpack.c.b16 %v2052, %v2051
    %v2088 = vpack.c.b16 %v2054, %v2053
    %v2089 = vpack.c.b16 %v2056, %v2055
    %v2090 = vpack.c.b16 %v2058, %v2057
    %2123 = vmatprep.subr.bf16.mxu0 0
    %2124 = vmatpush1.bf16.msra.mxu0 %v2066
    %2125 = vmatprep.subr.bf16.mxu0 0
    %2126 = vmatpush1.bf16.msra.mxu0 %v2065
    %2127 = vmatprep.subr.bf16.mxu0 0
    %2128 = vmatpush1.bf16.msra.mxu0 %v2064
    %2129 = vmatprep.subr.bf16.mxu0 0
    %2130 = vmatpush1.bf16.msra.mxu0 %v2063
    %2131 = vmatprep.subr.bf16.mxu0 0
    %2132 = vmatpush1.bf16.msra.mxu0 %v2062
    %2133 = vmatprep.subr.bf16.mxu0 0
    %2134 = vmatpush1.bf16.msra.mxu0 %v2061
    %2135 = vmatprep.subr.bf16.mxu0 0
    %2136 = vmatpush1.bf16.msra.mxu0 %v2060
    %2137 = vmatprep.subr.bf16.mxu0 0
    %2138 = vmatpush1.bf16.msra.mxu0 %v2059
    %2139 = vmatprep.subr.bf16.mxu0 0
    %2140 = vmatpush2.bf16.msra.mxu0 %v2074
    %2141 = vmatprep.subr.bf16.mxu0 0
    %2142 = vmatpush2.bf16.msra.mxu0 %v2073
    %2143 = vmatprep.subr.bf16.mxu0 0
    %2144 = vmatpush2.bf16.msra.mxu0 %v2072
    %2145 = vmatprep.subr.bf16.mxu0 0
    %2146 = vmatpush2.bf16.msra.mxu0 %v2071
    %2147 = vmatprep.subr.bf16.mxu0 0
    %2148 = vmatpush2.bf16.msra.mxu0 %v2070
    %2149 = vmatprep.subr.bf16.mxu0 0
    %2150 = vmatpush2.bf16.msra.mxu0 %v2069
    %2151 = vmatprep.subr.bf16.mxu0 0
    %2152 = vmatpush2.bf16.msra.mxu0 %v2068
    %2153 = vmatprep.subr.bf16.mxu0 0
    %2154 = vmatpush2.bf16.msra.mxu0 %v2067
    %2155 = vmatprep.mubr.bf16.mxu0 %v1860
    %2156 = vmatmul.mubr.bf16.gmra.mxu0 %v1859
    %v2157 = vpop.f32.mrf.mxu0
    %v2158 = vadd.f32 0.0, %v2157
    %v2159 = vpop.f32.mrf.mxu0
    %v2160 = vpop.f32.mrf.mxu0
    %v2161 = vadd.f32 0.0, %v2160
    %v2162 = vpop.f32.mrf.mxu0
    %2163 = vmatprep.mubr.bf16.mxu0 %v1864
    %2164 = vmatmul.mubr.bf16.gmra.mxu0 %v1863
    %v2165 = vpop.f32.mrf.mxu0
    %v2166 = vadd.f32 0.0, %v2165
    %v2167 = vpop.f32.mrf.mxu0
    %v2168 = vpop.f32.mrf.mxu0
    %v2169 = vadd.f32 0.0, %v2168
    %v2170 = vpop.f32.mrf.mxu0
    %2171 = vdwg.mxu0
    %2172 = vmatprep.subr.bf16.mxu0 0
    %2173 = vmatpush1.bf16.msra.mxu0 %v2082
    %2174 = vmatprep.subr.bf16.mxu0 0
    %2175 = vmatpush1.bf16.msra.mxu0 %v2081
    %2176 = vmatprep.subr.bf16.mxu0 0
    %2177 = vmatpush1.bf16.msra.mxu0 %v2080
    %2178 = vmatprep.subr.bf16.mxu0 0
    %2179 = vmatpush1.bf16.msra.mxu0 %v2079
    %2180 = vmatprep.subr.bf16.mxu0 0
    %2181 = vmatpush1.bf16.msra.mxu0 %v2078
    %2182 = vmatprep.subr.bf16.mxu0 0
    %2183 = vmatpush1.bf16.msra.mxu0 %v2077
    %2184 = vmatprep.subr.bf16.mxu0 0
    %2185 = vmatpush1.bf16.msra.mxu0 %v2076
    %2186 = vmatprep.subr.bf16.mxu0 0
    %2187 = vmatpush1.bf16.msra.mxu0 %v2075
    %2188 = vmatprep.subr.bf16.mxu0 0
    %2189 = vmatpush2.bf16.msra.mxu0 %v2090
    %2190 = vmatprep.subr.bf16.mxu0 0
    %2191 = vmatpush2.bf16.msra.mxu0 %v2089
    %2192 = vmatprep.subr.bf16.mxu0 0
    %2193 = vmatpush2.bf16.msra.mxu0 %v2088
    %2194 = vmatprep.subr.bf16.mxu0 0
    %2195 = vmatpush2.bf16.msra.mxu0 %v2087
    %2196 = vmatprep.subr.bf16.mxu0 0
    %2197 = vmatpush2.bf16.msra.mxu0 %v2086
    %2198 = vmatprep.subr.bf16.mxu0 0
    %2199 = vmatpush2.bf16.msra.mxu0 %v2085
    %2200 = vmatprep.subr.bf16.mxu0 0
    %2201 = vmatpush2.bf16.msra.mxu0 %v2084
    %2202 = vmatprep.subr.bf16.mxu0 0
    %2203 = vmatpush2.bf16.msra.mxu0 %v2083
    %2204 = vmatprep.mubr.bf16.mxu0 %v1862
    %2205 = vmatmul.mubr.bf16.gmra.mxu0 %v1861
    %v2206 = vpop.f32.mrf.mxu0
    %v2207 = vadd.f32 %v2158, %v2206
    %v2208 = vpop.f32.mrf.mxu0
    %v2209 = vpop.f32.mrf.mxu0
    %v2210 = vadd.f32 %v2161, %v2209
    %v2211 = vpop.f32.mrf.mxu0
    %2212 = vmatprep.mubr.bf16.mxu0 %v1866
    %2213 = vmatmul.mubr.bf16.gmra.mxu0 %v1865
    %v2214 = vpop.f32.mrf.mxu0
    %v2215 = vadd.f32 %v2166, %v2214
    %v2216 = vpop.f32.mrf.mxu0
    %v2217 = vpop.f32.mrf.mxu0
    %v2218 = vadd.f32 %v2169, %v2217
    %v2219 = vpop.f32.mrf.mxu0
    %2220 = vdwg.mxu0
    %v2221 = vadd.f32 %v2207, %v2210
    %v2222 = vadd.f32 %v2221, %v2215
    %v2223 = vadd.f32 %v2222, %v2218
    %v2224 = vrot.slane %v2223, 4
    %v2225 = vadd.f32 %v2223, %v2224
    %v2226 = vrot.slane %v2225, 2
    %v2227 = vadd.f32 %v2225, %v2226
    %v2228 = vrot.slane %v2227, 1
    %v2229 = vadd.f32 %v2227, %v2228
    %v2230 = vrcp.pop 32.0
    %v2231 = vmul.f32 %v2229, %v2230
    %v2232 = vsub.f32 %v2207, %v2231
    %v2233 = vsub.f32 %v2210, %v2231
    %v2234 = vsub.f32 %v2215, %v2231
    %v2235 = vsub.f32 %v2218, %v2231
    %v2236 = vmul.f32 %v2232, %v2232
    %v2237 = vmul.f32 %v2233, %v2233
    %v2238 = vmul.f32 %v2234, %v2234
    %v2239 = vmul.f32 %v2235, %v2235
    %v2240 = vadd.f32 %v2236, %v2237
    %v2241 = vadd.f32 %v2240, %v2238
    %v2242 = vadd.f32 %v2241, %v2239
    %v2243 = vrot.slane %v2242, 4
    %v2244 = vadd.f32 %v2242, %v2243
    %v2245 = vrot.slane %v2244, 2
    %v2246 = vadd.f32 %v2244, %v2245
    %v2247 = vrot.slane %v2246, 1
    %v2248 = vadd.f32 %v2246, %v2247
    %v2249 = vmul.f32 %v2248, %v2230
    %v2250 = vadd.f32 %v2249, 1e-05
    %v2251 = vrsqrt.pop %v2250
    %v2252 = vmul.f32 %v2232, %v2251
    %v2253 = vmul.f32 %v2233, %v2251
    %v2254 = vmul.f32 %v2234, %v2251
    %v2255 = vmul.f32 %v2235, %v2251
    %v2256 = vld [vmem:[%s8] sm:$0x1]
    %v2258 = vlaneseq
    %v2259 = vshrl.u32 %v2258, 7
    %v2260 = vsub.s32 0, %v2259
    %v2261 = vrot.slane %v2256, %v2260
    %v2263 = vmul.f32 %v2252, %v2261
    %v2264 = vmul.f32 %v2253, %v2261
    %v2265 = vmul.f32 %v2254, %v2261
    %v2266 = vmul.f32 %v2255, %v2261
    %v2267 = vld [vmem:[%s9] sm:$0x1]
    %v2269 = vlaneseq
    %v2270 = vshrl.u32 %v2269, 7
    %v2271 = vsub.s32 0, %v2270
    %v2272 = vrot.slane %v2267, %v2271
    %v2274 = vadd.f32 %v2263, %v2272
    %v2275 = vadd.f32 %v2264, %v2272
    %v2276 = vadd.f32 %v2265, %v2272
    %v2277 = vadd.f32 %v2266, %v2272
    %v2278 = vmax.f32 %v2274, 0.0
    %v2279 = vmax.f32 %v2275, 0.0
    %v2280 = vmax.f32 %v2276, 0.0
    %v2281 = vmax.f32 %v2277, 0.0
    %v2286 = vcombine.high %v2278, %v2278
    %v2287 = vcombine.high %v2279, %v2279
    %v2288 = vcombine.high %v2280, %v2280
    %v2289 = vcombine.high %v2281, %v2281
    %2294 = vst [vmem:[#allocation5] sm:$0x3f] 0.0
    %2295 = vst [vmem:[#allocation5 + $0x8] sm:$0x3f] 0.0
    %2296 = vst [vmem:[#allocation5 + $0x10] sm:$0x3f] 0.0
    %2297 = vst [vmem:[#allocation5 + $0x18] sm:$0x3f] 0.0
    %2298 = vst [vmem:[#allocation5 + $0x20] sm:$0x3f] 0.0
    %2299 = vst [vmem:[#allocation5 + $0x28] sm:$0x3f] 0.0
    %2300 = vst [vmem:[#allocation5 + $0x30] sm:$0x3f] 0.0
    %2301 = vst [vmem:[#allocation5 + $0x38] sm:$0x3f] 0.0
    %2302 = vst [vmem:[#allocation5 + $0x40] sm:$0x3f] 0.0
    %2303 = vst [vmem:[#allocation5 + $0x48] sm:$0x3f] 0.0
    %2304 = vst [vmem:[#allocation5 + $0x50] sm:$0x3f] 0.0
    %2305 = vst [vmem:[#allocation5 + $0x58] sm:$0x3f] 0.0
    %s2306 = scalar_lea.vmem [#allocation5], 8
    %2307 = vst [vmem:[%s2306 + $0x1] sm:$0xf] %v2278
    %2308 = vst [vmem:[%s2306 + $0x9] sm:$0xf] %v2286
    %2309 = vst [vmem:[%s2306 + $0x11] sm:$0xf] %v2279
    %2310 = vst [vmem:[%s2306 + $0x19] sm:$0xf] %v2287
    %2311 = vst [vmem:[%s2306 + $0x31] sm:$0xf] %v2280
    %2312 = vst [vmem:[%s2306 + $0x39] sm:$0xf] %v2288
    %2313 = vst [vmem:[%s2306 + $0x41] sm:$0xf] %v2281
    %2314 = vst [vmem:[%s2306 + $0x49] sm:$0xf] %v2289
    %v2315 = vld [vmem:[#allocation5] sm:$0x3f]
    %v2316 = vld [vmem:[#allocation5 + $0x8] sm:$0x3f]
    %v2317 = vld [vmem:[#allocation5 + $0x10] sm:$0x3f]
    %v2318 = vld [vmem:[#allocation5 + $0x18] sm:$0x3f]
    %v2319 = vld [vmem:[#allocation5 + $0x20] sm:$0x3f]
    %v2320 = vld [vmem:[#allocation5 + $0x28] sm:$0x3f]
    %v2321 = vld [vmem:[#allocation5 + $0x30] sm:$0x3f]
    %v2322 = vld [vmem:[#allocation5 + $0x38] sm:$0x3f]
    %v2323 = vld [vmem:[#allocation5 + $0x40] sm:$0x3f]
    %v2324 = vld [vmem:[#allocation5 + $0x48] sm:$0x3f]
    %v2325 = vld [vmem:[#allocation5 + $0x50] sm:$0x3f]
    %v2326 = vld [vmem:[#allocation5 + $0x58] sm:$0x3f]
    %v2337 = vrot.slane %v2315, 1
    %v2338 = vrot.slane %v2316, 1
    %v2339 = vrot.slane %v2317, 1
    %v2340 = vrot.slane %v2318, 1
    %v2341 = vrot.slane %v2319, 1
    %v2342 = vrot.slane %v2321, 1
    %v2343 = vrot.slane %v2322, 1
    %v2344 = vrot.slane %v2323, 1
    %v2345 = vrot.slane %v2324, 1
    %v2346 = vrot.slane %v2325, 1
    %v2349 = vrot.slane %v2320, 1
    %v2350 = vrot.slane %v2326, 1
    %v2351 = vcombine.low %v2315, %v2337
    %v2352 = vcombine.high %v2315, %v2337
    %v2353 = vcombine.low %v2316, %v2338
    %v2354 = vcombine.high %v2316, %v2338
    %v2356 = vunpack.c.l.s4 1966171168
    %v2357 = vunpack.c.0.s8 %v2356
    %v2358 = vlaneseq
    %v2359 = vshrl.u32 %v2358, 7
    %v2360 = vsub.s32 %v2357, %v2359
    %v2361 = vrot.slane %v2351, %v2360
    %v2363 = vunpack.c.l.s4 1966171168
    %v2364 = vunpack.c.0.s8 %v2363
    %v2365 = vlaneseq
    %v2366 = vshrl.u32 %v2365, 7
    %v2367 = vsub.s32 %v2364, %v2366
    %v2368 = vrot.slane %v2352, %v2367
    %v2370 = vunpack.c.l.s4 1966171168
    %v2371 = vunpack.c.0.s8 %v2370
    %v2372 = vlaneseq
    %v2373 = vshrl.u32 %v2372, 7
    %v2374 = vsub.s32 %v2371, %v2373
    %v2375 = vrot.slane %v2353, %v2374
    %v2377 = vunpack.c.l.s4 1966171168
    %v2378 = vunpack.c.0.s8 %v2377
    %v2379 = vlaneseq
    %v2380 = vshrl.u32 %v2379, 7
    %v2381 = vsub.s32 %v2378, %v2380
    %v2382 = vrot.slane %v2354, %v2381
    %v2383 = vcombine.low %v2361, %v2375
    %v2384 = vcombine.high %v2361, %v2375
    %v2385 = vcombine.low %v2368, %v2382
    %v2387 = vunpack.c.l.s4 1966171168
    %v2388 = vunpack.c.0.s8 %v2387
    %v2389 = vlaneseq
    %v2390 = vshrl.u32 %v2389, 7
    %v2391 = vsub.s32 %v2388, %v2390
    %v2392 = vrot.slane %v2383, %v2391
    %v2394 = vunpack.c.l.s4 1966171168
    %v2395 = vunpack.c.0.s8 %v2394
    %v2396 = vlaneseq
    %v2397 = vshrl.u32 %v2396, 7
    %v2398 = vsub.s32 %v2395, %v2397
    %v2399 = vrot.slane %v2385, %v2398
    %v2401 = vunpack.c.l.s4 1966171168
    %v2402 = vunpack.c.0.s8 %v2401
    %v2403 = vlaneseq
    %v2404 = vshrl.u32 %v2403, 7
    %v2405 = vsub.s32 %v2402, %v2404
    %v2406 = vrot.slane %v2384, %v2405
    %v2407 = vcombine.high %v2392, %v2392
    %v2408 = vcombine.high %v2406, %v2406
    %v2409 = vcombine.low %v2317, %v2339
    %v2410 = vcombine.high %v2317, %v2339
    %v2412 = vunpack.c.l.s4 1966171168
    %v2413 = vunpack.c.0.s8 %v2412
    %v2414 = vlaneseq
    %v2415 = vshrl.u32 %v2414, 7
    %v2416 = vsub.s32 %v2413, %v2415
    %v2417 = vrot.slane %v2409, %v2416
    %v2419 = vunpack.c.l.s4 1966171168
    %v2420 = vunpack.c.0.s8 %v2419
    %v2421 = vlaneseq
    %v2422 = vshrl.u32 %v2421, 7
    %v2423 = vsub.s32 %v2420, %v2422
    %v2424 = vrot.slane %v2410, %v2423
    %v2425 = vcombine.low %v2375, %v2417
    %v2426 = vcombine.high %v2375, %v2417
    %v2427 = vcombine.low %v2382, %v2424
    %v2429 = vunpack.c.l.s4 1966171168
    %v2430 = vunpack.c.0.s8 %v2429
    %v2431 = vlaneseq
    %v2432 = vshrl.u32 %v2431, 7
    %v2433 = vsub.s32 %v2430, %v2432
    %v2434 = vrot.slane %v2425, %v2433
    %v2436 = vunpack.c.l.s4 1966171168
    %v2437 = vunpack.c.0.s8 %v2436
    %v2438 = vlaneseq
    %v2439 = vshrl.u32 %v2438, 7
    %v2440 = vsub.s32 %v2437, %v2439
    %v2441 = vrot.slane %v2427, %v2440
    %v2443 = vunpack.c.l.s4 1966171168
    %v2444 = vunpack.c.0.s8 %v2443
    %v2445 = vlaneseq
    %v2446 = vshrl.u32 %v2445, 7
    %v2447 = vsub.s32 %v2444, %v2446
    %v2448 = vrot.slane %v2426, %v2447
    %v2449 = vcombine.high %v2434, %v2434
    %v2450 = vcombine.high %v2448, %v2448
    %v2451 = vcombine.low %v2318, %v2340
    %v2452 = vcombine.high %v2318, %v2340
    %v2454 = vunpack.c.l.s4 1966171168
    %v2455 = vunpack.c.0.s8 %v2454
    %v2456 = vlaneseq
    %v2457 = vshrl.u32 %v2456, 7
    %v2458 = vsub.s32 %v2455, %v2457
    %v2459 = vrot.slane %v2451, %v2458
    %v2461 = vunpack.c.l.s4 1966171168
    %v2462 = vunpack.c.0.s8 %v2461
    %v2463 = vlaneseq
    %v2464 = vshrl.u32 %v2463, 7
    %v2465 = vsub.s32 %v2462, %v2464
    %v2466 = vrot.slane %v2452, %v2465
    %v2467 = vcombine.low %v2417, %v2459
    %v2468 = vcombine.high %v2417, %v2459
    %v2469 = vcombine.low %v2424, %v2466
    %v2471 = vunpack.c.l.s4 1966171168
    %v2472 = vunpack.c.0.s8 %v2471
    %v2473 = vlaneseq
    %v2474 = vshrl.u32 %v2473, 7
    %v2475 = vsub.s32 %v2472, %v2474
    %v2476 = vrot.slane %v2467, %v2475
    %v2478 = vunpack.c.l.s4 1966171168
    %v2479 = vunpack.c.0.s8 %v2478
    %v2480 = vlaneseq
    %v2481 = vshrl.u32 %v2480, 7
    %v2482 = vsub.s32 %v2479, %v2481
    %v2483 = vrot.slane %v2469, %v2482
    %v2485 = vunpack.c.l.s4 1966171168
    %v2486 = vunpack.c.0.s8 %v2485
    %v2487 = vlaneseq
    %v2488 = vshrl.u32 %v2487, 7
    %v2489 = vsub.s32 %v2486, %v2488
    %v2490 = vrot.slane %v2468, %v2489
    %v2491 = vcombine.high %v2476, %v2476
    %v2492 = vcombine.high %v2490, %v2490
    %v2493 = vcombine.low %v2319, %v2341
    %v2494 = vcombine.high %v2319, %v2341
    %v2496 = vunpack.c.l.s4 1966171168
    %v2497 = vunpack.c.0.s8 %v2496
    %v2498 = vlaneseq
    %v2499 = vshrl.u32 %v2498, 7
    %v2500 = vsub.s32 %v2497, %v2499
    %v2501 = vrot.slane %v2493, %v2500
    %v2503 = vunpack.c.l.s4 1966171168
    %v2504 = vunpack.c.0.s8 %v2503
    %v2505 = vlaneseq
    %v2506 = vshrl.u32 %v2505, 7
    %v2507 = vsub.s32 %v2504, %v2506
    %v2508 = vrot.slane %v2494, %v2507
    %v2509 = vcombine.low %v2459, %v2501
    %v2510 = vcombine.high %v2459, %v2501
    %v2511 = vcombine.low %v2466, %v2508
    %v2513 = vunpack.c.l.s4 1966171168
    %v2514 = vunpack.c.0.s8 %v2513
    %v2515 = vlaneseq
    %v2516 = vshrl.u32 %v2515, 7
    %v2517 = vsub.s32 %v2514, %v2516
    %v2518 = vrot.slane %v2509, %v2517
    %v2520 = vunpack.c.l.s4 1966171168
    %v2521 = vunpack.c.0.s8 %v2520
    %v2522 = vlaneseq
    %v2523 = vshrl.u32 %v2522, 7
    %v2524 = vsub.s32 %v2521, %v2523
    %v2525 = vrot.slane %v2511, %v2524
    %v2527 = vunpack.c.l.s4 1966171168
    %v2528 = vunpack.c.0.s8 %v2527
    %v2529 = vlaneseq
    %v2530 = vshrl.u32 %v2529, 7
    %v2531 = vsub.s32 %v2528, %v2530
    %v2532 = vrot.slane %v2510, %v2531
    %v2533 = vcombine.high %v2518, %v2518
    %v2534 = vcombine.high %v2532, %v2532
    %v2535 = vcombine.low %v2320, %v2349
    %v2536 = vcombine.high %v2320, %v2349
    %v2538 = vunpack.c.l.s4 1966171168
    %v2539 = vunpack.c.0.s8 %v2538
    %v2540 = vlaneseq
    %v2541 = vshrl.u32 %v2540, 7
    %v2542 = vsub.s32 %v2539, %v2541
    %v2543 = vrot.slane %v2535, %v2542
    %v2545 = vunpack.c.l.s4 1966171168
    %v2546 = vunpack.c.0.s8 %v2545
    %v2547 = vlaneseq
    %v2548 = vshrl.u32 %v2547, 7
    %v2549 = vsub.s32 %v2546, %v2548
    %v2550 = vrot.slane %v2536, %v2549
    %v2551 = vcombine.low %v2501, %v2543
    %v2552 = vcombine.high %v2501, %v2543
    %v2553 = vcombine.low %v2508, %v2550
    %v2555 = vunpack.c.l.s4 1966171168
    %v2556 = vunpack.c.0.s8 %v2555
    %v2557 = vlaneseq
    %v2558 = vshrl.u32 %v2557, 7
    %v2559 = vsub.s32 %v2556, %v2558
    %v2560 = vrot.slane %v2551, %v2559
    %v2562 = vunpack.c.l.s4 1966171168
    %v2563 = vunpack.c.0.s8 %v2562
    %v2564 = vlaneseq
    %v2565 = vshrl.u32 %v2564, 7
    %v2566 = vsub.s32 %v2563, %v2565
    %v2567 = vrot.slane %v2553, %v2566
    %v2569 = vunpack.c.l.s4 1966171168
    %v2570 = vunpack.c.0.s8 %v2569
    %v2571 = vlaneseq
    %v2572 = vshrl.u32 %v2571, 7
    %v2573 = vsub.s32 %v2570, %v2572
    %v2574 = vrot.slane %v2552, %v2573
    %v2575 = vcombine.high %v2560, %v2560
    %v2576 = vcombine.high %v2574, %v2574
    %v2577 = vcombine.low %v2321, %v2342
    %v2578 = vcombine.high %v2321, %v2342
    %v2579 = vcombine.low %v2322, %v2343
    %v2580 = vcombine.high %v2322, %v2343
    %v2582 = vunpack.c.l.s4 1966171168
    %v2583 = vunpack.c.0.s8 %v2582
    %v2584 = vlaneseq
    %v2585 = vshrl.u32 %v2584, 7
    %v2586 = vsub.s32 %v2583, %v2585
    %v2587 = vrot.slane %v2577, %v2586
    %v2589 = vunpack.c.l.s4 1966171168
    %v2590 = vunpack.c.0.s8 %v2589
    %v2591 = vlaneseq
    %v2592 = vshrl.u32 %v2591, 7
    %v2593 = vsub.s32 %v2590, %v2592
    %v2594 = vrot.slane %v2578, %v2593
    %v2596 = vunpack.c.l.s4 1966171168
    %v2597 = vunpack.c.0.s8 %v2596
    %v2598 = vlaneseq
    %v2599 = vshrl.u32 %v2598, 7
    %v2600 = vsub.s32 %v2597, %v2599
    %v2601 = vrot.slane %v2579, %v2600
    %v2603 = vunpack.c.l.s4 1966171168
    %v2604 = vunpack.c.0.s8 %v2603
    %v2605 = vlaneseq
    %v2606 = vshrl.u32 %v2605, 7
    %v2607 = vsub.s32 %v2604, %v2606
    %v2608 = vrot.slane %v2580, %v2607
    %v2609 = vcombine.low %v2587, %v2601
    %v2610 = vcombine.high %v2587, %v2601
    %v2611 = vcombine.low %v2594, %v2608
    %v2613 = vunpack.c.l.s4 1966171168
    %v2614 = vunpack.c.0.s8 %v2613
    %v2615 = vlaneseq
    %v2616 = vshrl.u32 %v2615, 7
    %v2617 = vsub.s32 %v2614, %v2616
    %v2618 = vrot.slane %v2609, %v2617
    %v2620 = vunpack.c.l.s4 1966171168
    %v2621 = vunpack.c.0.s8 %v2620
    %v2622 = vlaneseq
    %v2623 = vshrl.u32 %v2622, 7
    %v2624 = vsub.s32 %v2621, %v2623
    %v2625 = vrot.slane %v2611, %v2624
    %v2627 = vunpack.c.l.s4 1966171168
    %v2628 = vunpack.c.0.s8 %v2627
    %v2629 = vlaneseq
    %v2630 = vshrl.u32 %v2629, 7
    %v2631 = vsub.s32 %v2628, %v2630
    %v2632 = vrot.slane %v2610, %v2631
    %v2633 = vcombine.high %v2618, %v2618
    %v2634 = vcombine.high %v2632, %v2632
    %v2635 = vcombine.low %v2323, %v2344
    %v2636 = vcombine.high %v2323, %v2344
    %v2638 = vunpack.c.l.s4 1966171168
    %v2639 = vunpack.c.0.s8 %v2638
    %v2640 = vlaneseq
    %v2641 = vshrl.u32 %v2640, 7
    %v2642 = vsub.s32 %v2639, %v2641
    %v2643 = vrot.slane %v2635, %v2642
    %v2645 = vunpack.c.l.s4 1966171168
    %v2646 = vunpack.c.0.s8 %v2645
    %v2647 = vlaneseq
    %v2648 = vshrl.u32 %v2647, 7
    %v2649 = vsub.s32 %v2646, %v2648
    %v2650 = vrot.slane %v2636, %v2649
    %v2651 = vcombine.low %v2601, %v2643
    %v2652 = vcombine.high %v2601, %v2643
    %v2653 = vcombine.low %v2608, %v2650
    %v2655 = vunpack.c.l.s4 1966171168
    %v2656 = vunpack.c.0.s8 %v2655
    %v2657 = vlaneseq
    %v2658 = vshrl.u32 %v2657, 7
    %v2659 = vsub.s32 %v2656, %v2658
    %v2660 = vrot.slane %v2651, %v2659
    %v2662 = vunpack.c.l.s4 1966171168
    %v2663 = vunpack.c.0.s8 %v2662
    %v2664 = vlaneseq
    %v2665 = vshrl.u32 %v2664, 7
    %v2666 = vsub.s32 %v2663, %v2665
    %v2667 = vrot.slane %v2653, %v2666
    %v2669 = vunpack.c.l.s4 1966171168
    %v2670 = vunpack.c.0.s8 %v2669
    %v2671 = vlaneseq
    %v2672 = vshrl.u32 %v2671, 7
    %v2673 = vsub.s32 %v2670, %v2672
    %v2674 = vrot.slane %v2652, %v2673
    %v2675 = vcombine.high %v2660, %v2660
    %v2676 = vcombine.high %v2674, %v2674
    %v2677 = vcombine.low %v2324, %v2345
    %v2678 = vcombine.high %v2324, %v2345
    %v2680 = vunpack.c.l.s4 1966171168
    %v2681 = vunpack.c.0.s8 %v2680
    %v2682 = vlaneseq
    %v2683 = vshrl.u32 %v2682, 7
    %v2684 = vsub.s32 %v2681, %v2683
    %v2685 = vrot.slane %v2677, %v2684
    %v2687 = vunpack.c.l.s4 1966171168
    %v2688 = vunpack.c.0.s8 %v2687
    %v2689 = vlaneseq
    %v2690 = vshrl.u32 %v2689, 7
    %v2691 = vsub.s32 %v2688, %v2690
    %v2692 = vrot.slane %v2678, %v2691
    %v2693 = vcombine.low %v2643, %v2685
    %v2694 = vcombine.high %v2643, %v2685
    %v2695 = vcombine.low %v2650, %v2692
    %v2697 = vunpack.c.l.s4 1966171168
    %v2698 = vunpack.c.0.s8 %v2697
    %v2699 = vlaneseq
    %v2700 = vshrl.u32 %v2699, 7
    %v2701 = vsub.s32 %v2698, %v2700
    %v2702 = vrot.slane %v2693, %v2701
    %v2704 = vunpack.c.l.s4 1966171168
    %v2705 = vunpack.c.0.s8 %v2704
    %v2706 = vlaneseq
    %v2707 = vshrl.u32 %v2706, 7
    %v2708 = vsub.s32 %v2705, %v2707
    %v2709 = vrot.slane %v2695, %v2708
    %v2711 = vunpack.c.l.s4 1966171168
    %v2712 = vunpack.c.0.s8 %v2711
    %v2713 = vlaneseq
    %v2714 = vshrl.u32 %v2713, 7
    %v2715 = vsub.s32 %v2712, %v2714
    %v2716 = vrot.slane %v2694, %v2715
    %v2717 = vcombine.high %v2702, %v2702
    %v2718 = vcombine.high %v2716, %v2716
    %v2719 = vcombine.low %v2325, %v2346
    %v2720 = vcombine.high %v2325, %v2346
    %v2722 = vunpack.c.l.s4 1966171168
    %v2723 = vunpack.c.0.s8 %v2722
    %v2724 = vlaneseq
    %v2725 = vshrl.u32 %v2724, 7
    %v2726 = vsub.s32 %v2723, %v2725
    %v2727 = vrot.slane %v2719, %v2726
    %v2729 = vunpack.c.l.s4 1966171168
    %v2730 = vunpack.c.0.s8 %v2729
    %v2731 = vlaneseq
    %v2732 = vshrl.u32 %v2731, 7
    %v2733 = vsub.s32 %v2730, %v2732
    %v2734 = vrot.slane %v2720, %v2733
    %v2735 = vcombine.low %v2685, %v2727
    %v2736 = vcombine.high %v2685, %v2727
    %v2737 = vcombine.low %v2692, %v2734
    %v2739 = vunpack.c.l.s4 1966171168
    %v2740 = vunpack.c.0.s8 %v2739
    %v2741 = vlaneseq
    %v2742 = vshrl.u32 %v2741, 7
    %v2743 = vsub.s32 %v2740, %v2742
    %v2744 = vrot.slane %v2735, %v2743
    %v2746 = vunpack.c.l.s4 1966171168
    %v2747 = vunpack.c.0.s8 %v2746
    %v2748 = vlaneseq
    %v2749 = vshrl.u32 %v2748, 7
    %v2750 = vsub.s32 %v2747, %v2749
    %v2751 = vrot.slane %v2737, %v2750
    %v2753 = vunpack.c.l.s4 1966171168
    %v2754 = vunpack.c.0.s8 %v2753
    %v2755 = vlaneseq
    %v2756 = vshrl.u32 %v2755, 7
    %v2757 = vsub.s32 %v2754, %v2756
    %v2758 = vrot.slane %v2736, %v2757
    %v2759 = vcombine.high %v2744, %v2744
    %v2760 = vcombine.high %v2758, %v2758
    %v2761 = vcombine.low %v2326, %v2350
    %v2762 = vcombine.high %v2326, %v2350
    %v2764 = vunpack.c.l.s4 1966171168
    %v2765 = vunpack.c.0.s8 %v2764
    %v2766 = vlaneseq
    %v2767 = vshrl.u32 %v2766, 7
    %v2768 = vsub.s32 %v2765, %v2767
    %v2769 = vrot.slane %v2761, %v2768
    %v2771 = vunpack.c.l.s4 1966171168
    %v2772 = vunpack.c.0.s8 %v2771
    %v2773 = vlaneseq
    %v2774 = vshrl.u32 %v2773, 7
    %v2775 = vsub.s32 %v2772, %v2774
    %v2776 = vrot.slane %v2762, %v2775
    %v2777 = vcombine.low %v2727, %v2769
    %v2778 = vcombine.high %v2727, %v2769
    %v2779 = vcombine.low %v2734, %v2776
    %v2781 = vunpack.c.l.s4 1966171168
    %v2782 = vunpack.c.0.s8 %v2781
    %v2783 = vlaneseq
    %v2784 = vshrl.u32 %v2783, 7
    %v2785 = vsub.s32 %v2782, %v2784
    %v2786 = vrot.slane %v2777, %v2785
    %v2788 = vunpack.c.l.s4 1966171168
    %v2789 = vunpack.c.0.s8 %v2788
    %v2790 = vlaneseq
    %v2791 = vshrl.u32 %v2790, 7
    %v2792 = vsub.s32 %v2789, %v2791
    %v2793 = vrot.slane %v2779, %v2792
    %v2795 = vunpack.c.l.s4 1966171168
    %v2796 = vunpack.c.0.s8 %v2795
    %v2797 = vlaneseq
    %v2798 = vshrl.u32 %v2797, 7
    %v2799 = vsub.s32 %v2796, %v2798
    %v2800 = vrot.slane %v2778, %v2799
    %v2801 = vcombine.high %v2786, %v2786
    %v2802 = vcombine.high %v2800, %v2800
    %v2803 = vcombine.low %v2392, %v2406
    %v2804 = vcombine.low %v2407, %v2408
    %v2805 = vcombine.low %v2399, %v2434
    %v2806 = vcombine.low %v2448, %v2449
    %v2808 = vunpack.c.l.s4 1966171168
    %v2809 = vunpack.c.0.s8 %v2808
    %v2810 = vlaneseq
    %v2811 = vshrl.u32 %v2810, 7
    %v2812 = vsub.s32 %v2809, %v2811
    %v2813 = vrot.slane %v2803, %v2812
    %v2815 = vunpack.c.l.s4 1966171168
    %v2816 = vunpack.c.0.s8 %v2815
    %v2817 = vlaneseq
    %v2818 = vshrl.u32 %v2817, 7
    %v2819 = vsub.s32 %v2816, %v2818
    %v2820 = vrot.slane %v2804, %v2819
    %v2822 = vunpack.c.l.s4 1966171168
    %v2823 = vunpack.c.0.s8 %v2822
    %v2824 = vlaneseq
    %v2825 = vshrl.u32 %v2824, 7
    %v2826 = vsub.s32 %v2823, %v2825
    %v2827 = vrot.slane %v2805, %v2826
    %v2829 = vunpack.c.l.s4 1966171168
    %v2830 = vunpack.c.0.s8 %v2829
    %v2831 = vlaneseq
    %v2832 = vshrl.u32 %v2831, 7
    %v2833 = vsub.s32 %v2830, %v2832
    %v2834 = vrot.slane %v2806, %v2833
    %v2835 = vcombine.low %v2813, %v2820
    %v2836 = vcombine.high %v2813, %v2820
    %v2837 = vcombine.low %v2827, %v2834
    %v2838 = vcombine.high %v2827, %v2834
    %v2840 = vunpack.c.l.s4 1966171168
    %v2841 = vunpack.c.0.s8 %v2840
    %v2842 = vlaneseq
    %v2843 = vshrl.u32 %v2842, 7
    %v2844 = vsub.s32 %v2841, %v2843
    %v2845 = vrot.slane %v2835, %v2844
    %v2847 = vunpack.c.l.s4 1966171168
    %v2848 = vunpack.c.0.s8 %v2847
    %v2849 = vlaneseq
    %v2850 = vshrl.u32 %v2849, 7
    %v2851 = vsub.s32 %v2848, %v2850
    %v2852 = vrot.slane %v2836, %v2851
    %v2854 = vunpack.c.l.s4 1966171168
    %v2855 = vunpack.c.0.s8 %v2854
    %v2856 = vlaneseq
    %v2857 = vshrl.u32 %v2856, 7
    %v2858 = vsub.s32 %v2855, %v2857
    %v2859 = vrot.slane %v2837, %v2858
    %v2861 = vunpack.c.l.s4 1966171168
    %v2862 = vunpack.c.0.s8 %v2861
    %v2863 = vlaneseq
    %v2864 = vshrl.u32 %v2863, 7
    %v2865 = vsub.s32 %v2862, %v2864
    %v2866 = vrot.slane %v2838, %v2865
    %v2867 = vcombine.low %v2845, %v2859
    %v2868 = vcombine.high %v2845, %v2859
    %v2869 = vcombine.low %v2852, %v2866
    %v2870 = vcombine.high %v2852, %v2866
    %v2871 = vcombine.low %v2450, %v2441
    %v2872 = vcombine.low %v2476, %v2490
    %v2873 = vcombine.low %v2491, %v2492
    %v2874 = vcombine.low %v2483, %v2518
    %v2876 = vunpack.c.l.s4 1966171168
    %v2877 = vunpack.c.0.s8 %v2876
    %v2878 = vlaneseq
    %v2879 = vshrl.u32 %v2878, 7
    %v2880 = vsub.s32 %v2877, %v2879
    %v2881 = vrot.slane %v2871, %v2880
    %v2883 = vunpack.c.l.s4 1966171168
    %v2884 = vunpack.c.0.s8 %v2883
    %v2885 = vlaneseq
    %v2886 = vshrl.u32 %v2885, 7
    %v2887 = vsub.s32 %v2884, %v2886
    %v2888 = vrot.slane %v2872, %v2887
    %v2890 = vunpack.c.l.s4 1966171168
    %v2891 = vunpack.c.0.s8 %v2890
    %v2892 = vlaneseq
    %v2893 = vshrl.u32 %v2892, 7
    %v2894 = vsub.s32 %v2891, %v2893
    %v2895 = vrot.slane %v2873, %v2894
    %v2897 = vunpack.c.l.s4 1966171168
    %v2898 = vunpack.c.0.s8 %v2897
    %v2899 = vlaneseq
    %v2900 = vshrl.u32 %v2899, 7
    %v2901 = vsub.s32 %v2898, %v2900
    %v2902 = vrot.slane %v2874, %v2901
    %v2903 = vcombine.low %v2881, %v2888
    %v2904 = vcombine.high %v2881, %v2888
    %v2905 = vcombine.low %v2895, %v2902
    %v2906 = vcombine.high %v2895, %v2902
    %v2908 = vunpack.c.l.s4 1966171168
    %v2909 = vunpack.c.0.s8 %v2908
    %v2910 = vlaneseq
    %v2911 = vshrl.u32 %v2910, 7
    %v2912 = vsub.s32 %v2909, %v2911
    %v2913 = vrot.slane %v2903, %v2912
    %v2915 = vunpack.c.l.s4 1966171168
    %v2916 = vunpack.c.0.s8 %v2915
    %v2917 = vlaneseq
    %v2918 = vshrl.u32 %v2917, 7
    %v2919 = vsub.s32 %v2916, %v2918
    %v2920 = vrot.slane %v2904, %v2919
    %v2922 = vunpack.c.l.s4 1966171168
    %v2923 = vunpack.c.0.s8 %v2922
    %v2924 = vlaneseq
    %v2925 = vshrl.u32 %v2924, 7
    %v2926 = vsub.s32 %v2923, %v2925
    %v2927 = vrot.slane %v2905, %v2926
    %v2929 = vunpack.c.l.s4 1966171168
    %v2930 = vunpack.c.0.s8 %v2929
    %v2931 = vlaneseq
    %v2932 = vshrl.u32 %v2931, 7
    %v2933 = vsub.s32 %v2930, %v2932
    %v2934 = vrot.slane %v2906, %v2933
    %v2935 = vcombine.low %v2913, %v2927
    %v2936 = vcombine.high %v2913, %v2927
    %v2937 = vcombine.low %v2920, %v2934
    %v2938 = vcombine.high %v2920, %v2934
    %v2939 = vcombine.low %v2532, %v2533
    %v2940 = vcombine.low %v2534, %v2525
    %v2941 = vcombine.low %v2560, %v2574
    %v2942 = vcombine.low %v2575, %v2576
    %v2944 = vunpack.c.l.s4 1966171168
    %v2945 = vunpack.c.0.s8 %v2944
    %v2946 = vlaneseq
    %v2947 = vshrl.u32 %v2946, 7
    %v2948 = vsub.s32 %v2945, %v2947
    %v2949 = vrot.slane %v2939, %v2948
    %v2951 = vunpack.c.l.s4 1966171168
    %v2952 = vunpack.c.0.s8 %v2951
    %v2953 = vlaneseq
    %v2954 = vshrl.u32 %v2953, 7
    %v2955 = vsub.s32 %v2952, %v2954
    %v2956 = vrot.slane %v2940, %v2955
    %v2958 = vunpack.c.l.s4 1966171168
    %v2959 = vunpack.c.0.s8 %v2958
    %v2960 = vlaneseq
    %v2961 = vshrl.u32 %v2960, 7
    %v2962 = vsub.s32 %v2959, %v2961
    %v2963 = vrot.slane %v2941, %v2962
    %v2965 = vunpack.c.l.s4 1966171168
    %v2966 = vunpack.c.0.s8 %v2965
    %v2967 = vlaneseq
    %v2968 = vshrl.u32 %v2967, 7
    %v2969 = vsub.s32 %v2966, %v2968
    %v2970 = vrot.slane %v2942, %v2969
    %v2971 = vcombine.low %v2949, %v2956
    %v2972 = vcombine.high %v2949, %v2956
    %v2973 = vcombine.low %v2963, %v2970
    %v2974 = vcombine.high %v2963, %v2970
    %v2976 = vunpack.c.l.s4 1966171168
    %v2977 = vunpack.c.0.s8 %v2976
    %v2978 = vlaneseq
    %v2979 = vshrl.u32 %v2978, 7
    %v2980 = vsub.s32 %v2977, %v2979
    %v2981 = vrot.slane %v2971, %v2980
    %v2983 = vunpack.c.l.s4 1966171168
    %v2984 = vunpack.c.0.s8 %v2983
    %v2985 = vlaneseq
    %v2986 = vshrl.u32 %v2985, 7
    %v2987 = vsub.s32 %v2984, %v2986
    %v2988 = vrot.slane %v2972, %v2987
    %v2990 = vunpack.c.l.s4 1966171168
    %v2991 = vunpack.c.0.s8 %v2990
    %v2992 = vlaneseq
    %v2993 = vshrl.u32 %v2992, 7
    %v2994 = vsub.s32 %v2991, %v2993
    %v2995 = vrot.slane %v2973, %v2994
    %v2997 = vunpack.c.l.s4 1966171168
    %v2998 = vunpack.c.0.s8 %v2997
    %v2999 = vlaneseq
    %v3000 = vshrl.u32 %v2999, 7
    %v3001 = vsub.s32 %v2998, %v3000
    %v3002 = vrot.slane %v2974, %v3001
    %v3003 = vcombine.low %v2981, %v2995
    %v3004 = vcombine.high %v2981, %v2995
    %v3005 = vcombine.low %v2988, %v3002
    %v3006 = vcombine.high %v2988, %v3002
    %v3007 = vcombine.low %v2567, %v2618
    %v3008 = vcombine.low %v2632, %v2633
    %v3009 = vcombine.low %v2634, %v2625
    %v3010 = vcombine.low %v2660, %v2674
    %v3012 = vunpack.c.l.s4 1966171168
    %v3013 = vunpack.c.0.s8 %v3012
    %v3014 = vlaneseq
    %v3015 = vshrl.u32 %v3014, 7
    %v3016 = vsub.s32 %v3013, %v3015
    %v3017 = vrot.slane %v3007, %v3016
    %v3019 = vunpack.c.l.s4 1966171168
    %v3020 = vunpack.c.0.s8 %v3019
    %v3021 = vlaneseq
    %v3022 = vshrl.u32 %v3021, 7
    %v3023 = vsub.s32 %v3020, %v3022
    %v3024 = vrot.slane %v3008, %v3023
    %v3026 = vunpack.c.l.s4 1966171168
    %v3027 = vunpack.c.0.s8 %v3026
    %v3028 = vlaneseq
    %v3029 = vshrl.u32 %v3028, 7
    %v3030 = vsub.s32 %v3027, %v3029
    %v3031 = vrot.slane %v3009, %v3030
    %v3033 = vunpack.c.l.s4 1966171168
    %v3034 = vunpack.c.0.s8 %v3033
    %v3035 = vlaneseq
    %v3036 = vshrl.u32 %v3035, 7
    %v3037 = vsub.s32 %v3034, %v3036
    %v3038 = vrot.slane %v3010, %v3037
    %v3039 = vcombine.low %v3017, %v3024
    %v3040 = vcombine.high %v3017, %v3024
    %v3041 = vcombine.low %v3031, %v3038
    %v3042 = vcombine.high %v3031, %v3038
    %v3044 = vunpack.c.l.s4 1966171168
    %v3045 = vunpack.c.0.s8 %v3044
    %v3046 = vlaneseq
    %v3047 = vshrl.u32 %v3046, 7
    %v3048 = vsub.s32 %v3045, %v3047
    %v3049 = vrot.slane %v3039, %v3048
    %v3051 = vunpack.c.l.s4 1966171168
    %v3052 = vunpack.c.0.s8 %v3051
    %v3053 = vlaneseq
    %v3054 = vshrl.u32 %v3053, 7
    %v3055 = vsub.s32 %v3052, %v3054
    %v3056 = vrot.slane %v3040, %v3055
    %v3058 = vunpack.c.l.s4 1966171168
    %v3059 = vunpack.c.0.s8 %v3058
    %v3060 = vlaneseq
    %v3061 = vshrl.u32 %v3060, 7
    %v3062 = vsub.s32 %v3059, %v3061
    %v3063 = vrot.slane %v3041, %v3062
    %v3065 = vunpack.c.l.s4 1966171168
    %v3066 = vunpack.c.0.s8 %v3065
    %v3067 = vlaneseq
    %v3068 = vshrl.u32 %v3067, 7
    %v3069 = vsub.s32 %v3066, %v3068
    %v3070 = vrot.slane %v3042, %v3069
    %v3071 = vcombine.low %v3049, %v3063
    %v3072 = vcombine.high %v3049, %v3063
    %v3073 = vcombine.low %v3056, %v3070
    %v3074 = vcombine.high %v3056, %v3070
    %v3075 = vcombine.low %v2675, %v2676
    %v3076 = vcombine.low %v2667, %v2702
    %v3077 = vcombine.low %v2716, %v2717
    %v3078 = vcombine.low %v2718, %v2709
    %v3080 = vunpack.c.l.s4 1966171168
    %v3081 = vunpack.c.0.s8 %v3080
    %v3082 = vlaneseq
    %v3083 = vshrl.u32 %v3082, 7
    %v3084 = vsub.s32 %v3081, %v3083
    %v3085 = vrot.slane %v3075, %v3084
    %v3087 = vunpack.c.l.s4 1966171168
    %v3088 = vunpack.c.0.s8 %v3087
    %v3089 = vlaneseq
    %v3090 = vshrl.u32 %v3089, 7
    %v3091 = vsub.s32 %v3088, %v3090
    %v3092 = vrot.slane %v3076, %v3091
    %v3094 = vunpack.c.l.s4 1966171168
    %v3095 = vunpack.c.0.s8 %v3094
    %v3096 = vlaneseq
    %v3097 = vshrl.u32 %v3096, 7
    %v3098 = vsub.s32 %v3095, %v3097
    %v3099 = vrot.slane %v3077, %v3098
    %v3101 = vunpack.c.l.s4 1966171168
    %v3102 = vunpack.c.0.s8 %v3101
    %v3103 = vlaneseq
    %v3104 = vshrl.u32 %v3103, 7
    %v3105 = vsub.s32 %v3102, %v3104
    %v3106 = vrot.slane %v3078, %v3105
    %v3107 = vcombine.low %v3085, %v3092
    %v3108 = vcombine.high %v3085, %v3092
    %v3109 = vcombine.low %v3099, %v3106
    %v3110 = vcombine.high %v3099, %v3106
    %v3112 = vunpack.c.l.s4 1966171168
    %v3113 = vunpack.c.0.s8 %v3112
    %v3114 = vlaneseq
    %v3115 = vshrl.u32 %v3114, 7
    %v3116 = vsub.s32 %v3113, %v3115
    %v3117 = vrot.slane %v3107, %v3116
    %v3119 = vunpack.c.l.s4 1966171168
    %v3120 = vunpack.c.0.s8 %v3119
    %v3121 = vlaneseq
    %v3122 = vshrl.u32 %v3121, 7
    %v3123 = vsub.s32 %v3120, %v3122
    %v3124 = vrot.slane %v3108, %v3123
    %v3126 = vunpack.c.l.s4 1966171168
    %v3127 = vunpack.c.0.s8 %v3126
    %v3128 = vlaneseq
    %v3129 = vshrl.u32 %v3128, 7
    %v3130 = vsub.s32 %v3127, %v3129
    %v3131 = vrot.slane %v3109, %v3130
    %v3133 = vunpack.c.l.s4 1966171168
    %v3134 = vunpack.c.0.s8 %v3133
    %v3135 = vlaneseq
    %v3136 = vshrl.u32 %v3135, 7
    %v3137 = vsub.s32 %v3134, %v3136
    %v3138 = vrot.slane %v3110, %v3137
    %v3139 = vcombine.low %v3117, %v3131
    %v3140 = vcombine.high %v3117, %v3131
    %v3141 = vcombine.low %v3124, %v3138
    %v3142 = vcombine.high %v3124, %v3138
    %v3143 = vcombine.low %v2744, %v2758
    %v3144 = vcombine.low %v2759, %v2760
    %v3145 = vcombine.low %v2751, %v2786
    %v3146 = vcombine.low %v2800, %v2801
    %v3148 = vunpack.c.l.s4 1966171168
    %v3149 = vunpack.c.0.s8 %v3148
    %v3150 = vlaneseq
    %v3151 = vshrl.u32 %v3150, 7
    %v3152 = vsub.s32 %v3149, %v3151
    %v3153 = vrot.slane %v3143, %v3152
    %v3155 = vunpack.c.l.s4 1966171168
    %v3156 = vunpack.c.0.s8 %v3155
    %v3157 = vlaneseq
    %v3158 = vshrl.u32 %v3157, 7
    %v3159 = vsub.s32 %v3156, %v3158
    %v3160 = vrot.slane %v3144, %v3159
    %v3162 = vunpack.c.l.s4 1966171168
    %v3163 = vunpack.c.0.s8 %v3162
    %v3164 = vlaneseq
    %v3165 = vshrl.u32 %v3164, 7
    %v3166 = vsub.s32 %v3163, %v3165
    %v3167 = vrot.slane %v3145, %v3166
    %v3169 = vunpack.c.l.s4 1966171168
    %v3170 = vunpack.c.0.s8 %v3169
    %v3171 = vlaneseq
    %v3172 = vshrl.u32 %v3171, 7
    %v3173 = vsub.s32 %v3170, %v3172
    %v3174 = vrot.slane %v3146, %v3173
    %v3175 = vcombine.low %v3153, %v3160
    %v3176 = vcombine.high %v3153, %v3160
    %v3177 = vcombine.low %v3167, %v3174
    %v3178 = vcombine.high %v3167, %v3174
    %v3180 = vunpack.c.l.s4 1966171168
    %v3181 = vunpack.c.0.s8 %v3180
    %v3182 = vlaneseq
    %v3183 = vshrl.u32 %v3182, 7
    %v3184 = vsub.s32 %v3181, %v3183
    %v3185 = vrot.slane %v3175, %v3184
    %v3187 = vunpack.c.l.s4 1966171168
    %v3188 = vunpack.c.0.s8 %v3187
    %v3189 = vlaneseq
    %v3190 = vshrl.u32 %v3189, 7
    %v3191 = vsub.s32 %v3188, %v3190
    %v3192 = vrot.slane %v3176, %v3191
    %v3194 = vunpack.c.l.s4 1966171168
    %v3195 = vunpack.c.0.s8 %v3194
    %v3196 = vlaneseq
    %v3197 = vshrl.u32 %v3196, 7
    %v3198 = vsub.s32 %v3195, %v3197
    %v3199 = vrot.slane %v3177, %v3198
    %v3201 = vunpack.c.l.s4 1966171168
    %v3202 = vunpack.c.0.s8 %v3201
    %v3203 = vlaneseq
    %v3204 = vshrl.u32 %v3203, 7
    %v3205 = vsub.s32 %v3202, %v3204
    %v3206 = vrot.slane %v3178, %v3205
    %v3207 = vcombine.low %v3185, %v3199
    %v3208 = vcombine.high %v3185, %v3199
    %v3209 = vcombine.low %v3192, %v3206
    %v3210 = vcombine.high %v3192, %v3206
    %v3211 = vcombine.low %v2802, %v2793
    %v3213 = vunpack.c.l.s4 1966171168
    %v3214 = vunpack.c.0.s8 %v3213
    %v3215 = vlaneseq
    %v3216 = vshrl.u32 %v3215, 7
    %v3217 = vsub.s32 %v3214, %v3216
    %v3218 = vrot.slane %v3211, %v3217
    %v3219 = vcombine.high %v3218, %v3218
    %v3221 = vunpack.c.l.s4 1966171168
    %v3222 = vunpack.c.0.s8 %v3221
    %v3223 = vlaneseq
    %v3224 = vshrl.u32 %v3223, 7
    %v3225 = vsub.s32 %v3222, %v3224
    %v3226 = vrot.slane %v3218, %v3225
    %v3228 = vunpack.c.l.s4 1966171168
    %v3229 = vunpack.c.0.s8 %v3228
    %v3230 = vlaneseq
    %v3231 = vshrl.u32 %v3230, 7
    %v3232 = vsub.s32 %v3229, %v3231
    %v3233 = vrot.slane %v3219, %v3232
    %v3234 = vcombine.high %v3226, %v3226
    %v3235 = vcombine.high %v3233, %v3233
    %v3264 = vpack.c.bf16 %v2935, %v2867
    %v3265 = vpack.c.bf16 %v2937, %v2869
    %v3266 = vpack.c.bf16 %v2936, %v2868
    %v3267 = vpack.c.bf16 %v2938, %v2870
    %v3268 = vpack.c.bf16 %v3071, %v3003
    %v3269 = vpack.c.bf16 %v3073, %v3005
    %v3270 = vpack.c.bf16 %v3072, %v3004
    %v3271 = vpack.c.bf16 %v3074, %v3006
    %v3272 = vpack.c.bf16 %v3207, %v3139
    %v3273 = vpack.c.bf16 %v3209, %v3141
    %v3274 = vpack.c.bf16 %v3208, %v3140
    %v3275 = vpack.c.bf16 %v3210, %v3142
    %v3276 = vpack.c.bf16 %v3226, %v3226
    %v3277 = vpack.c.bf16 %v3233, %v3233
    %v3278 = vpack.c.bf16 %v3234, %v3234
    %v3279 = vpack.c.bf16 %v3235, %v3235
    %v3280 = vld [vmem:[#allocation14] sm:$0xf]
    %v3281 = vld [vmem:[#allocation14 + $0x4] sm:$0xf]
    %v3282 = vld [vmem:[#allocation14 + $0x8] sm:$0xf]
    %v3283 = vld [vmem:[#allocation14 + $0xc] sm:$0xf]
    %v3284 = vld [vmem:[#allocation14 + $0x10] sm:$0xf]
    %v3285 = vld [vmem:[#allocation14 + $0x14] sm:$0xf]
    %v3286 = vld [vmem:[#allocation14 + $0x18] sm:$0xf]
    %v3287 = vld [vmem:[#allocation14 + $0x1c] sm:$0xf]
    %v3288 = vld [vmem:[#allocation14 + $0x20] sm:$0xf]
    %v3289 = vld [vmem:[#allocation14 + $0x24] sm:$0xf]
    %v3290 = vld [vmem:[#allocation14 + $0x28] sm:$0xf]
    %v3291 = vld [vmem:[#allocation14 + $0x2c] sm:$0xf]
    %v3292 = vld [vmem:[#allocation14 + $0x30] sm:$0xf]
    %v3293 = vld [vmem:[#allocation14 + $0x34] sm:$0xf]
    %v3294 = vld [vmem:[#allocation14 + $0x38] sm:$0xf]
    %v3295 = vld [vmem:[#allocation14 + $0x3c] sm:$0xf]
    %v3296 = vld [vmem:[#allocation14 + $0x40] sm:$0xf]
    %v3297 = vld [vmem:[#allocation14 + $0x44] sm:$0xf]
    %v3298 = vld [vmem:[#allocation14 + $0x48] sm:$0xf]
    %v3299 = vld [vmem:[#allocation14 + $0x4c] sm:$0xf]
    %v3300 = vld [vmem:[#allocation14 + $0x50] sm:$0xf]
    %v3301 = vld [vmem:[#allocation14 + $0x54] sm:$0xf]
    %v3302 = vld [vmem:[#allocation14 + $0x58] sm:$0xf]
    %v3303 = vld [vmem:[#allocation14 + $0x5c] sm:$0xf]
    %v3304 = vld [vmem:[#allocation14 + $0x60] sm:$0xf]
    %v3305 = vld [vmem:[#allocation14 + $0x64] sm:$0xf]
    %v3306 = vld [vmem:[#allocation14 + $0x68] sm:$0xf]
    %v3307 = vld [vmem:[#allocation14 + $0x6c] sm:$0xf]
    %v3308 = vld [vmem:[#allocation14 + $0x70] sm:$0xf]
    %v3309 = vld [vmem:[#allocation14 + $0x74] sm:$0xf]
    %v3310 = vld [vmem:[#allocation14 + $0x78] sm:$0xf]
    %v3311 = vld [vmem:[#allocation14 + $0x7c] sm:$0xf]
    %v3312 = vld [vmem:[#allocation14 + $0x80] sm:$0xf]
    %v3313 = vld [vmem:[#allocation14 + $0x84] sm:$0xf]
    %v3314 = vld [vmem:[#allocation14 + $0x88] sm:$0xf]
    %v3315 = vld [vmem:[#allocation14 + $0x8c] sm:$0xf]
    %v3316 = vld [vmem:[#allocation14 + $0x90] sm:$0xf]
    %v3317 = vld [vmem:[#allocation14 + $0x94] sm:$0xf]
    %v3318 = vld [vmem:[#allocation14 + $0x98] sm:$0xf]
    %v3319 = vld [vmem:[#allocation14 + $0x9c] sm:$0xf]
    %v3320 = vld [vmem:[#allocation14 + $0xa0] sm:$0xf]
    %v3321 = vld [vmem:[#allocation14 + $0xa4] sm:$0xf]
    %v3322 = vld [vmem:[#allocation14 + $0xa8] sm:$0xf]
    %v3323 = vld [vmem:[#allocation14 + $0xac] sm:$0xf]
    %v3324 = vld [vmem:[#allocation14 + $0xb0] sm:$0xf]
    %v3325 = vld [vmem:[#allocation14 + $0xb4] sm:$0xf]
    %v3326 = vld [vmem:[#allocation14 + $0xb8] sm:$0xf]
    %v3327 = vld [vmem:[#allocation14 + $0xbc] sm:$0xf]
    %v3328 = vld [vmem:[#allocation14 + $0xc0] sm:$0xf]
    %v3329 = vld [vmem:[#allocation14 + $0xc4] sm:$0xf]
    %v3330 = vld [vmem:[#allocation14 + $0xc8] sm:$0xf]
    %v3331 = vld [vmem:[#allocation14 + $0xcc] sm:$0xf]
    %v3332 = vld [vmem:[#allocation14 + $0xd0] sm:$0xf]
    %v3333 = vld [vmem:[#allocation14 + $0xd4] sm:$0xf]
    %v3334 = vld [vmem:[#allocation14 + $0xd8] sm:$0xf]
    %v3335 = vld [vmem:[#allocation14 + $0xdc] sm:$0xf]
    %v3336 = vld [vmem:[#allocation14 + $0xe0] sm:$0xf]
    %v3337 = vld [vmem:[#allocation14 + $0xe4] sm:$0xf]
    %v3338 = vld [vmem:[#allocation14 + $0xe8] sm:$0xf]
    %v3339 = vld [vmem:[#allocation14 + $0xec] sm:$0xf]
    %v3340 = vld [vmem:[#allocation14 + $0xf0] sm:$0xf]
    %v3341 = vld [vmem:[#allocation14 + $0xf4] sm:$0xf]
    %v3342 = vld [vmem:[#allocation14 + $0xf8] sm:$0xf]
    %v3343 = vld [vmem:[#allocation14 + $0xfc] sm:$0xf]
    %v3408 = vunpack.c.l.b16 %v3280
    %v3409 = vunpack.c.l.b16 %v3281
    %v3410 = vunpack.c.l.b16 %v3282
    %v3411 = vunpack.c.l.b16 %v3283
    %v3412 = vunpack.c.l.b16 %v3284
    %v3413 = vunpack.c.l.b16 %v3285
    %v3414 = vunpack.c.l.b16 %v3286
    %v3415 = vunpack.c.l.b16 %v3287
    %v3416 = vunpack.c.l.b16 %v3288
    %v3417 = vunpack.c.l.b16 %v3289
    %v3418 = vunpack.c.l.b16 %v3290
    %v3419 = vunpack.c.l.b16 %v3291
    %v3420 = vunpack.c.l.b16 %v3292
    %v3421 = vunpack.c.l.b16 %v3293
    %v3422 = vunpack.c.l.b16 %v3294
    %v3423 = vunpack.c.l.b16 %v3295
    %v3424 = vunpack.c.l.b16 %v3296
    %v3425 = vunpack.c.l.b16 %v3297
    %v3426 = vunpack.c.l.b16 %v3298
    %v3427 = vunpack.c.l.b16 %v3299
    %v3428 = vunpack.c.l.b16 %v3300
    %v3429 = vunpack.c.l.b16 %v3301
    %v3430 = vunpack.c.l.b16 %v3302
    %v3431 = vunpack.c.l.b16 %v3303
    %v3432 = vunpack.c.l.b16 %v3304
    %v3433 = vunpack.c.l.b16 %v3305
    %v3434 = vunpack.c.l.b16 %v3306
    %v3435 = vunpack.c.l.b16 %v3307
    %v3436 = vunpack.c.l.b16 %v3308
    %v3437 = vunpack.c.l.b16 %v3309
    %v3438 = vunpack.c.l.b16 %v3310
    %v3439 = vunpack.c.l.b16 %v3311
    %v3440 = vunpack.c.l.b16 %v3312
    %v3441 = vunpack.c.l.b16 %v3313
    %v3442 = vunpack.c.l.b16 %v3314
    %v3443 = vunpack.c.l.b16 %v3315
    %v3444 = vunpack.c.l.b16 %v3316
    %v3445 = vunpack.c.l.b16 %v3317
    %v3446 = vunpack.c.l.b16 %v3318
    %v3447 = vunpack.c.l.b16 %v3319
    %v3448 = vunpack.c.l.b16 %v3320
    %v3449 = vunpack.c.l.b16 %v3321
    %v3450 = vunpack.c.l.b16 %v3322
    %v3451 = vunpack.c.l.b16 %v3323
    %v3452 = vunpack.c.l.b16 %v3324
    %v3453 = vunpack.c.l.b16 %v3325
    %v3454 = vunpack.c.l.b16 %v3326
    %v3455 = vunpack.c.l.b16 %v3327
    %v3456 = vunpack.c.l.b16 %v3328
    %v3457 = vunpack.c.l.b16 %v3329
    %v3458 = vunpack.c.l.b16 %v3330
    %v3459 = vunpack.c.l.b16 %v3331
    %v3460 = vunpack.c.l.b16 %v3332
    %v3461 = vunpack.c.l.b16 %v3333
    %v3462 = vunpack.c.l.b16 %v3334
    %v3463 = vunpack.c.l.b16 %v3335
    %v3464 = vunpack.c.l.b16 %v3336
    %v3465 = vunpack.c.l.b16 %v3337
    %v3466 = vunpack.c.l.b16 %v3338
    %v3467 = vunpack.c.l.b16 %v3339
    %v3468 = vunpack.c.l.b16 %v3340
    %v3469 = vunpack.c.l.b16 %v3341
    %v3470 = vunpack.c.l.b16 %v3342
    %v3471 = vunpack.c.l.b16 %v3343
    %v3472 = vpack.c.b16 %v3409, %v3408
    %v3473 = vpack.c.b16 %v3411, %v3410
    %v3474 = vpack.c.b16 %v3413, %v3412
    %v3475 = vpack.c.b16 %v3415, %v3414
    %v3476 = vpack.c.b16 %v3417, %v3416
    %v3477 = vpack.c.b16 %v3419, %v3418
    %v3478 = vpack.c.b16 %v3421, %v3420
    %v3479 = vpack.c.b16 %v3423, %v3422
    %v3480 = vpack.c.b16 %v3425, %v3424
    %v3481 = vpack.c.b16 %v3427, %v3426
    %v3482 = vpack.c.b16 %v3429, %v3428
    %v3483 = vpack.c.b16 %v3431, %v3430
    %v3484 = vpack.c.b16 %v3433, %v3432
    %v3485 = vpack.c.b16 %v3435, %v3434
    %v3486 = vpack.c.b16 %v3437, %v3436
    %v3487 = vpack.c.b16 %v3439, %v3438
    %v3488 = vpack.c.b16 %v3441, %v3440
    %v3489 = vpack.c.b16 %v3443, %v3442
    %v3490 = vpack.c.b16 %v3445, %v3444
    %v3491 = vpack.c.b16 %v3447, %v3446
    %v3492 = vpack.c.b16 %v3449, %v3448
    %v3493 = vpack.c.b16 %v3451, %v3450
    %v3494 = vpack.c.b16 %v3453, %v3452
    %v3495 = vpack.c.b16 %v3455, %v3454
    %v3496 = vpack.c.b16 %v3457, %v3456
    %v3497 = vpack.c.b16 %v3459, %v3458
    %v3498 = vpack.c.b16 %v3461, %v3460
    %v3499 = vpack.c.b16 %v3463, %v3462
    %v3500 = vpack.c.b16 %v3465, %v3464
    %v3501 = vpack.c.b16 %v3467, %v3466
    %v3502 = vpack.c.b16 %v3469, %v3468
    %v3503 = vpack.c.b16 %v3471, %v3470
    %3536 = vmatprep.subr.bf16.mxu0 0
    %3537 = vmatpush1.bf16.msra.mxu0 %v3479
    %3538 = vmatprep.subr.bf16.mxu0 0
    %3539 = vmatpush1.bf16.msra.mxu0 %v3478
    %3540 = vmatprep.subr.bf16.mxu0 0
    %3541 = vmatpush1.bf16.msra.mxu0 %v3477
    %3542 = vmatprep.subr.bf16.mxu0 0
    %3543 = vmatpush1.bf16.msra.mxu0 %v3476
    %3544 = vmatprep.subr.bf16.mxu0 0
    %3545 = vmatpush1.bf16.msra.mxu0 %v3475
    %3546 = vmatprep.subr.bf16.mxu0 0
    %3547 = vmatpush1.bf16.msra.mxu0 %v3474
    %3548 = vmatprep.subr.bf16.mxu0 0
    %3549 = vmatpush1.bf16.msra.mxu0 %v3473
    %3550 = vmatprep.subr.bf16.mxu0 0
    %3551 = vmatpush1.bf16.msra.mxu0 %v3472
    %3552 = vmatprep.subr.bf16.mxu0 0
    %3553 = vmatpush2.bf16.msra.mxu0 %v3487
    %3554 = vmatprep.subr.bf16.mxu0 0
    %3555 = vmatpush2.bf16.msra.mxu0 %v3486
    %3556 = vmatprep.subr.bf16.mxu0 0
    %3557 = vmatpush2.bf16.msra.mxu0 %v3485
    %3558 = vmatprep.subr.bf16.mxu0 0
    %3559 = vmatpush2.bf16.msra.mxu0 %v3484
    %3560 = vmatprep.subr.bf16.mxu0 0
    %3561 = vmatpush2.bf16.msra.mxu0 %v3483
    %3562 = vmatprep.subr.bf16.mxu0 0
    %3563 = vmatpush2.bf16.msra.mxu0 %v3482
    %3564 = vmatprep.subr.bf16.mxu0 0
    %3565 = vmatpush2.bf16.msra.mxu0 %v3481
    %3566 = vmatprep.subr.bf16.mxu0 0
    %3567 = vmatpush2.bf16.msra.mxu0 %v3480
    %3568 = vmatprep.mubr.bf16.mxu0 %v3265
    %3569 = vmatmul.mubr.bf16.gmra.mxu0 %v3264
    %v3570 = vpop.f32.mrf.mxu0
    %v3571 = vadd.f32 0.0, %v3570
    %v3572 = vpop.f32.mrf.mxu0
    %v3573 = vpop.f32.mrf.mxu0
    %v3574 = vadd.f32 0.0, %v3573
    %v3575 = vpop.f32.mrf.mxu0
    %3576 = vmatprep.mubr.bf16.mxu0 %v3269
    %3577 = vmatmul.mubr.bf16.gmra.mxu0 %v3268
    %v3578 = vpop.f32.mrf.mxu0
    %v3579 = vadd.f32 0.0, %v3578
    %v3580 = vpop.f32.mrf.mxu0
    %v3581 = vpop.f32.mrf.mxu0
    %v3582 = vadd.f32 0.0, %v3581
    %v3583 = vpop.f32.mrf.mxu0
    %3584 = vmatprep.mubr.bf16.mxu0 %v3273
    %3585 = vmatmul.mubr.bf16.gmra.mxu0 %v3272
    %v3586 = vpop.f32.mrf.mxu0
    %v3587 = vadd.f32 0.0, %v3586
    %v3588 = vpop.f32.mrf.mxu0
    %v3589 = vpop.f32.mrf.mxu0
    %v3590 = vadd.f32 0.0, %v3589
    %v3591 = vpop.f32.mrf.mxu0
    %3592 = vmatprep.mubr.bf16.mxu0 %v3277
    %3593 = vmatmul.mubr.bf16.gmra.mxu0 %v3276
    %v3594 = vpop.f32.mrf.mxu0
    %v3595 = vadd.f32 0.0, %v3594
    %v3596 = vpop.f32.mrf.mxu0
    %v3597 = vpop.f32.mrf.mxu0
    %v3598 = vpop.f32.mrf.mxu0
    %3599 = vdwg.mxu0
    %3600 = vmatprep.subr.bf16.mxu0 0
    %3601 = vmatpush1.bf16.msra.mxu0 %v3495
    %3602 = vmatprep.subr.bf16.mxu0 0
    %3603 = vmatpush1.bf16.msra.mxu0 %v3494
    %3604 = vmatprep.subr.bf16.mxu0 0
    %3605 = vmatpush1.bf16.msra.mxu0 %v3493
    %3606 = vmatprep.subr.bf16.mxu0 0
    %3607 = vmatpush1.bf16.msra.mxu0 %v3492
    %3608 = vmatprep.subr.bf16.mxu0 0
    %3609 = vmatpush1.bf16.msra.mxu0 %v3491
    %3610 = vmatprep.subr.bf16.mxu0 0
    %3611 = vmatpush1.bf16.msra.mxu0 %v3490
    %3612 = vmatprep.subr.bf16.mxu0 0
    %3613 = vmatpush1.bf16.msra.mxu0 %v3489
    %3614 = vmatprep.subr.bf16.mxu0 0
    %3615 = vmatpush1.bf16.msra.mxu0 %v3488
    %3616 = vmatprep.subr.bf16.mxu0 0
    %3617 = vmatpush2.bf16.msra.mxu0 %v3503
    %3618 = vmatprep.subr.bf16.mxu0 0
    %3619 = vmatpush2.bf16.msra.mxu0 %v3502
    %3620 = vmatprep.subr.bf16.mxu0 0
    %3621 = vmatpush2.bf16.msra.mxu0 %v3501
    %3622 = vmatprep.subr.bf16.mxu0 0
    %3623 = vmatpush2.bf16.msra.mxu0 %v3500
    %3624 = vmatprep.subr.bf16.mxu0 0
    %3625 = vmatpush2.bf16.msra.mxu0 %v3499
    %3626 = vmatprep.subr.bf16.mxu0 0
    %3627 = vmatpush2.bf16.msra.mxu0 %v3498
    %3628 = vmatprep.subr.bf16.mxu0 0
    %3629 = vmatpush2.bf16.msra.mxu0 %v3497
    %3630 = vmatprep.subr.bf16.mxu0 0
    %3631 = vmatpush2.bf16.msra.mxu0 %v3496
    %3632 = vmatprep.mubr.bf16.mxu0 %v3267
    %3633 = vmatmul.mubr.bf16.gmra.mxu0 %v3266
    %v3634 = vpop.f32.mrf.mxu0
    %v3635 = vadd.f32 %v3571, %v3634
    %v3636 = vpop.f32.mrf.mxu0
    %v3637 = vpop.f32.mrf.mxu0
    %v3638 = vadd.f32 %v3574, %v3637
    %v3639 = vpop.f32.mrf.mxu0
    %3640 = vmatprep.mubr.bf16.mxu0 %v3271
    %3641 = vmatmul.mubr.bf16.gmra.mxu0 %v3270
    %v3642 = vpop.f32.mrf.mxu0
    %v3643 = vadd.f32 %v3579, %v3642
    %v3644 = vpop.f32.mrf.mxu0
    %v3645 = vpop.f32.mrf.mxu0
    %v3646 = vadd.f32 %v3582, %v3645
    %v3647 = vpop.f32.mrf.mxu0
    %3648 = vmatprep.mubr.bf16.mxu0 %v3275
    %3649 = vmatmul.mubr.bf16.gmra.mxu0 %v3274
    %v3650 = vpop.f32.mrf.mxu0
    %v3651 = vadd.f32 %v3587, %v3650
    %v3652 = vpop.f32.mrf.mxu0
    %v3653 = vpop.f32.mrf.mxu0
    %v3654 = vadd.f32 %v3590, %v3653
    %v3655 = vpop.f32.mrf.mxu0
    %3656 = vmatprep.mubr.bf16.mxu0 %v3279
    %3657 = vmatmul.mubr.bf16.gmra.mxu0 %v3278
    %v3658 = vpop.f32.mrf.mxu0
    %v3659 = vadd.f32 %v3595, %v3658
    %v3660 = vpop.f32.mrf.mxu0
    %v3661 = vpop.f32.mrf.mxu0
    %v3662 = vpop.f32.mrf.mxu0
    %3663 = vdwg.mxu0
    %v3664 = vadd.f32 %v3635, %v3638
    %v3665 = vadd.f32 %v3664, %v3643
    %v3666 = vadd.f32 %v3665, %v3646
    %v3667 = vadd.f32 %v3666, %v3651
    %v3668 = vadd.f32 %v3667, %v3654
    %v3669 = vsel %vm1448, %v3659, 0.0
    %v3670 = vadd.f32 %v3668, %v3669
    %v3671 = vrot.slane %v3670, 4
    %v3672 = vadd.f32 %v3670, %v3671
    %v3673 = vrot.slane %v3672, 2
    %v3674 = vadd.f32 %v3672, %v3673
    %v3675 = vrot.slane %v3674, 1
    %v3676 = vadd.f32 %v3674, %v3675
    %v3677 = vrcp.pop 50.0
    %v3678 = vmul.f32 %v3676, %v3677
    %v3679 = vsub.f32 %v3635, %v3678
    %v3680 = vsub.f32 %v3638, %v3678
    %v3681 = vsub.f32 %v3643, %v3678
    %v3682 = vsub.f32 %v3646, %v3678
    %v3683 = vsub.f32 %v3651, %v3678
    %v3684 = vsub.f32 %v3654, %v3678
    %v3685 = vsub.f32 %v3659, %v3678
    %v3686 = vmul.f32 %v3679, %v3679
    %v3687 = vmul.f32 %v3680, %v3680
    %v3688 = vmul.f32 %v3681, %v3681
    %v3689 = vmul.f32 %v3682, %v3682
    %v3690 = vmul.f32 %v3683, %v3683
    %v3691 = vmul.f32 %v3684, %v3684
    %v3692 = vmul.f32 %v3685, %v3685
    %v3693 = vadd.f32 %v3686, %v3687
    %v3694 = vadd.f32 %v3693, %v3688
    %v3695 = vadd.f32 %v3694, %v3689
    %v3696 = vadd.f32 %v3695, %v3690
    %v3697 = vadd.f32 %v3696, %v3691
    %v3698 = vsel %vm1448, %v3692, 0.0
    %v3699 = vadd.f32 %v3697, %v3698
    %v3700 = vrot.slane %v3699, 4
    %v3701 = vadd.f32 %v3699, %v3700
    %v3702 = vrot.slane %v3701, 2
    %v3703 = vadd.f32 %v3701, %v3702
    %v3704 = vrot.slane %v3703, 1
    %v3705 = vadd.f32 %v3703, %v3704
    %v3706 = vmul.f32 %v3705, %v3677
    %v3707 = vadd.f32 %v3706, 1e-05
    %v3708 = vrsqrt.pop %v3707
    %v3709 = vmul.f32 %v3679, %v3708
    %v3710 = vmul.f32 %v3680, %v3708
    %v3711 = vmul.f32 %v3681, %v3708
    %v3712 = vmul.f32 %v3682, %v3708
    %v3713 = vmul.f32 %v3683, %v3708
    %v3714 = vmul.f32 %v3684, %v3708
    %v3715 = vmul.f32 %v3685, %v3708
    %v3716 = vld [vmem:[%s11] sm:$0x1]
    %v3718 = vlaneseq
    %v3719 = vshrl.u32 %v3718, 7
    %v3720 = vsub.s32 0, %v3719
    %v3721 = vrot.slane %v3716, %v3720
    %v3723 = vmul.f32 %v3709, %v3721
    %v3724 = vmul.f32 %v3710, %v3721
    %v3725 = vmul.f32 %v3711, %v3721
    %v3726 = vmul.f32 %v3712, %v3721
    %v3727 = vmul.f32 %v3713, %v3721
    %v3728 = vmul.f32 %v3714, %v3721
    %v3729 = vmul.f32 %v3715, %v3721
    %v3730 = vld [vmem:[%s12] sm:$0x1]
    %v3732 = vlaneseq
    %v3733 = vshrl.u32 %v3732, 7
    %v3734 = vsub.s32 0, %v3733
    %v3735 = vrot.slane %v3730, %v3734
    %v3737 = vadd.f32 %v3723, %v3735
    %v3738 = vadd.f32 %v3724, %v3735
    %v3739 = vadd.f32 %v3725, %v3735
    %v3740 = vadd.f32 %v3726, %v3735
    %v3741 = vadd.f32 %v3727, %v3735
    %v3742 = vadd.f32 %v3728, %v3735
    %v3743 = vadd.f32 %v3729, %v3735
    %v3744 = vmax.f32 %v3737, 0.0
    %v3745 = vmax.f32 %v3738, 0.0
    %v3746 = vmax.f32 %v3739, 0.0
    %v3747 = vmax.f32 %v3740, 0.0
    %v3748 = vmax.f32 %v3741, 0.0
    %v3749 = vmax.f32 %v3742, 0.0
    %v3750 = vmax.f32 %v3743, 0.0
    %v3758 = vcombine.high %v3744, %v3744
    %v3760 = vunpack.c.l.s4 1966171168
    %v3761 = vunpack.c.0.s8 %v3760
    %v3762 = vlaneseq
    %v3763 = vshrl.u32 %v3762, 7
    %v3764 = vsub.s32 %v3761, %v3763
    %v3765 = vrot.slane %v3744, %v3764
    %v3767 = vunpack.c.l.s4 1966171168
    %v3768 = vunpack.c.0.s8 %v3767
    %v3769 = vlaneseq
    %v3770 = vshrl.u32 %v3769, 7
    %v3771 = vsub.s32 %v3768, %v3770
    %v3772 = vrot.slane %v3758, %v3771
    %v3773 = vcombine.high %v3765, %v3765
    %v3774 = vcombine.high %v3772, %v3772
    %v3776 = vunpack.c.l.s4 1966171168
    %v3777 = vunpack.c.0.s8 %v3776
    %v3778 = vlaneseq
    %v3779 = vshrl.u32 %v3778, 7
    %v3780 = vsub.s32 %v3777, %v3779
    %v3781 = vrot.slane %v3765, %v3780
    %v3783 = vunpack.c.l.s4 1966171168
    %v3784 = vunpack.c.0.s8 %v3783
    %v3785 = vlaneseq
    %v3786 = vshrl.u32 %v3785, 7
    %v3787 = vsub.s32 %v3784, %v3786
    %v3788 = vrot.slane %v3772, %v3787
    %v3790 = vunpack.c.l.s4 1966171168
    %v3791 = vunpack.c.0.s8 %v3790
    %v3792 = vlaneseq
    %v3793 = vshrl.u32 %v3792, 7
    %v3794 = vsub.s32 %v3791, %v3793
    %v3795 = vrot.slane %v3773, %v3794
    %v3797 = vunpack.c.l.s4 1966171168
    %v3798 = vunpack.c.0.s8 %v3797
    %v3799 = vlaneseq
    %v3800 = vshrl.u32 %v3799, 7
    %v3801 = vsub.s32 %v3798, %v3800
    %v3802 = vrot.slane %v3774, %v3801
    %v3803 = vcombine.high %v3781, %v3781
    %v3804 = vcombine.high %v3788, %v3788
    %v3805 = vcombine.high %v3795, %v3795
    %v3806 = vcombine.high %v3802, %v3802
    %v3807 = vcombine.high %v3745, %v3745
    %v3809 = vunpack.c.l.s4 1966171168
    %v3810 = vunpack.c.0.s8 %v3809
    %v3811 = vlaneseq
    %v3812 = vshrl.u32 %v3811, 7
    %v3813 = vsub.s32 %v3810, %v3812
    %v3814 = vrot.slane %v3745, %v3813
    %v3816 = vunpack.c.l.s4 1966171168
    %v3817 = vunpack.c.0.s8 %v3816
    %v3818 = vlaneseq
    %v3819 = vshrl.u32 %v3818, 7
    %v3820 = vsub.s32 %v3817, %v3819
    %v3821 = vrot.slane %v3807, %v3820
    %v3822 = vcombine.high %v3814, %v3814
    %v3823 = vcombine.high %v3821, %v3821
    %v3825 = vunpack.c.l.s4 1966171168
    %v3826 = vunpack.c.0.s8 %v3825
    %v3827 = vlaneseq
    %v3828 = vshrl.u32 %v3827, 7
    %v3829 = vsub.s32 %v3826, %v3828
    %v3830 = vrot.slane %v3814, %v3829
    %v3832 = vunpack.c.l.s4 1966171168
    %v3833 = vunpack.c.0.s8 %v3832
    %v3834 = vlaneseq
    %v3835 = vshrl.u32 %v3834, 7
    %v3836 = vsub.s32 %v3833, %v3835
    %v3837 = vrot.slane %v3821, %v3836
    %v3839 = vunpack.c.l.s4 1966171168
    %v3840 = vunpack.c.0.s8 %v3839
    %v3841 = vlaneseq
    %v3842 = vshrl.u32 %v3841, 7
    %v3843 = vsub.s32 %v3840, %v3842
    %v3844 = vrot.slane %v3822, %v3843
    %v3846 = vunpack.c.l.s4 1966171168
    %v3847 = vunpack.c.0.s8 %v3846
    %v3848 = vlaneseq
    %v3849 = vshrl.u32 %v3848, 7
    %v3850 = vsub.s32 %v3847, %v3849
    %v3851 = vrot.slane %v3823, %v3850
    %v3852 = vcombine.high %v3830, %v3830
    %v3853 = vcombine.high %v3837, %v3837
    %v3854 = vcombine.high %v3844, %v3844
    %v3855 = vcombine.high %v3851, %v3851
    %v3856 = vcombine.high %v3746, %v3746
    %v3858 = vunpack.c.l.s4 1966171168
    %v3859 = vunpack.c.0.s8 %v3858
    %v3860 = vlaneseq
    %v3861 = vshrl.u32 %v3860, 7
    %v3862 = vsub.s32 %v3859, %v3861
    %v3863 = vrot.slane %v3746, %v3862
    %v3865 = vunpack.c.l.s4 1966171168
    %v3866 = vunpack.c.0.s8 %v3865
    %v3867 = vlaneseq
    %v3868 = vshrl.u32 %v3867, 7
    %v3869 = vsub.s32 %v3866, %v3868
    %v3870 = vrot.slane %v3856, %v3869
    %v3871 = vcombine.high %v3863, %v3863
    %v3872 = vcombine.high %v3870, %v3870
    %v3874 = vunpack.c.l.s4 1966171168
    %v3875 = vunpack.c.0.s8 %v3874
    %v3876 = vlaneseq
    %v3877 = vshrl.u32 %v3876, 7
    %v3878 = vsub.s32 %v3875, %v3877
    %v3879 = vrot.slane %v3863, %v3878
    %v3881 = vunpack.c.l.s4 1966171168
    %v3882 = vunpack.c.0.s8 %v3881
    %v3883 = vlaneseq
    %v3884 = vshrl.u32 %v3883, 7
    %v3885 = vsub.s32 %v3882, %v3884
    %v3886 = vrot.slane %v3870, %v3885
    %v3888 = vunpack.c.l.s4 1966171168
    %v3889 = vunpack.c.0.s8 %v3888
    %v3890 = vlaneseq
    %v3891 = vshrl.u32 %v3890, 7
    %v3892 = vsub.s32 %v3889, %v3891
    %v3893 = vrot.slane %v3871, %v3892
    %v3895 = vunpack.c.l.s4 1966171168
    %v3896 = vunpack.c.0.s8 %v3895
    %v3897 = vlaneseq
    %v3898 = vshrl.u32 %v3897, 7
    %v3899 = vsub.s32 %v3896, %v3898
    %v3900 = vrot.slane %v3872, %v3899
    %v3901 = vcombine.high %v3879, %v3879
    %v3902 = vcombine.high %v3886, %v3886
    %v3903 = vcombine.high %v3893, %v3893
    %v3904 = vcombine.high %v3900, %v3900
    %v3905 = vcombine.high %v3747, %v3747
    %v3907 = vunpack.c.l.s4 1966171168
    %v3908 = vunpack.c.0.s8 %v3907
    %v3909 = vlaneseq
    %v3910 = vshrl.u32 %v3909, 7
    %v3911 = vsub.s32 %v3908, %v3910
    %v3912 = vrot.slane %v3747, %v3911
    %v3914 = vunpack.c.l.s4 1966171168
    %v3915 = vunpack.c.0.s8 %v3914
    %v3916 = vlaneseq
    %v3917 = vshrl.u32 %v3916, 7
    %v3918 = vsub.s32 %v3915, %v3917
    %v3919 = vrot.slane %v3905, %v3918
    %v3920 = vcombine.high %v3912, %v3912
    %v3921 = vcombine.high %v3919, %v3919
    %v3923 = vunpack.c.l.s4 1966171168
    %v3924 = vunpack.c.0.s8 %v3923
    %v3925 = vlaneseq
    %v3926 = vshrl.u32 %v3925, 7
    %v3927 = vsub.s32 %v3924, %v3926
    %v3928 = vrot.slane %v3912, %v3927
    %v3930 = vunpack.c.l.s4 1966171168
    %v3931 = vunpack.c.0.s8 %v3930
    %v3932 = vlaneseq
    %v3933 = vshrl.u32 %v3932, 7
    %v3934 = vsub.s32 %v3931, %v3933
    %v3935 = vrot.slane %v3919, %v3934
    %v3937 = vunpack.c.l.s4 1966171168
    %v3938 = vunpack.c.0.s8 %v3937
    %v3939 = vlaneseq
    %v3940 = vshrl.u32 %v3939, 7
    %v3941 = vsub.s32 %v3938, %v3940
    %v3942 = vrot.slane %v3920, %v3941
    %v3944 = vunpack.c.l.s4 1966171168
    %v3945 = vunpack.c.0.s8 %v3944
    %v3946 = vlaneseq
    %v3947 = vshrl.u32 %v3946, 7
    %v3948 = vsub.s32 %v3945, %v3947
    %v3949 = vrot.slane %v3921, %v3948
    %v3950 = vcombine.high %v3928, %v3928
    %v3951 = vcombine.high %v3935, %v3935
    %v3952 = vcombine.high %v3942, %v3942
    %v3953 = vcombine.high %v3949, %v3949
    %v3954 = vcombine.high %v3748, %v3748
    %v3956 = vunpack.c.l.s4 1966171168
    %v3957 = vunpack.c.0.s8 %v3956
    %v3958 = vlaneseq
    %v3959 = vshrl.u32 %v3958, 7
    %v3960 = vsub.s32 %v3957, %v3959
    %v3961 = vrot.slane %v3748, %v3960
    %v3963 = vunpack.c.l.s4 1966171168
    %v3964 = vunpack.c.0.s8 %v3963
    %v3965 = vlaneseq
    %v3966 = vshrl.u32 %v3965, 7
    %v3967 = vsub.s32 %v3964, %v3966
    %v3968 = vrot.slane %v3954, %v3967
    %v3969 = vcombine.high %v3961, %v3961
    %v3970 = vcombine.high %v3968, %v3968
    %v3972 = vunpack.c.l.s4 1966171168
    %v3973 = vunpack.c.0.s8 %v3972
    %v3974 = vlaneseq
    %v3975 = vshrl.u32 %v3974, 7
    %v3976 = vsub.s32 %v3973, %v3975
    %v3977 = vrot.slane %v3961, %v3976
    %v3979 = vunpack.c.l.s4 1966171168
    %v3980 = vunpack.c.0.s8 %v3979
    %v3981 = vlaneseq
    %v3982 = vshrl.u32 %v3981, 7
    %v3983 = vsub.s32 %v3980, %v3982
    %v3984 = vrot.slane %v3968, %v3983
    %v3986 = vunpack.c.l.s4 1966171168
    %v3987 = vunpack.c.0.s8 %v3986
    %v3988 = vlaneseq
    %v3989 = vshrl.u32 %v3988, 7
    %v3990 = vsub.s32 %v3987, %v3989
    %v3991 = vrot.slane %v3969, %v3990
    %v3993 = vunpack.c.l.s4 1966171168
    %v3994 = vunpack.c.0.s8 %v3993
    %v3995 = vlaneseq
    %v3996 = vshrl.u32 %v3995, 7
    %v3997 = vsub.s32 %v3994, %v3996
    %v3998 = vrot.slane %v3970, %v3997
    %v3999 = vcombine.high %v3977, %v3977
    %v4000 = vcombine.high %v3984, %v3984
    %v4001 = vcombine.high %v3991, %v3991
    %v4002 = vcombine.high %v3998, %v3998
    %v4003 = vcombine.high %v3749, %v3749
    %v4005 = vunpack.c.l.s4 1966171168
    %v4006 = vunpack.c.0.s8 %v4005
    %v4007 = vlaneseq
    %v4008 = vshrl.u32 %v4007, 7
    %v4009 = vsub.s32 %v4006, %v4008
    %v4010 = vrot.slane %v3749, %v4009
    %v4012 = vunpack.c.l.s4 1966171168
    %v4013 = vunpack.c.0.s8 %v4012
    %v4014 = vlaneseq
    %v4015 = vshrl.u32 %v4014, 7
    %v4016 = vsub.s32 %v4013, %v4015
    %v4017 = vrot.slane %v4003, %v4016
    %v4018 = vcombine.high %v4010, %v4010
    %v4019 = vcombine.high %v4017, %v4017
    %v4021 = vunpack.c.l.s4 1966171168
    %v4022 = vunpack.c.0.s8 %v4021
    %v4023 = vlaneseq
    %v4024 = vshrl.u32 %v4023, 7
    %v4025 = vsub.s32 %v4022, %v4024
    %v4026 = vrot.slane %v4010, %v4025
    %v4028 = vunpack.c.l.s4 1966171168
    %v4029 = vunpack.c.0.s8 %v4028
    %v4030 = vlaneseq
    %v4031 = vshrl.u32 %v4030, 7
    %v4032 = vsub.s32 %v4029, %v4031
    %v4033 = vrot.slane %v4017, %v4032
    %v4035 = vunpack.c.l.s4 1966171168
    %v4036 = vunpack.c.0.s8 %v4035
    %v4037 = vlaneseq
    %v4038 = vshrl.u32 %v4037, 7
    %v4039 = vsub.s32 %v4036, %v4038
    %v4040 = vrot.slane %v4018, %v4039
    %v4042 = vunpack.c.l.s4 1966171168
    %v4043 = vunpack.c.0.s8 %v4042
    %v4044 = vlaneseq
    %v4045 = vshrl.u32 %v4044, 7
    %v4046 = vsub.s32 %v4043, %v4045
    %v4047 = vrot.slane %v4019, %v4046
    %v4048 = vcombine.high %v4026, %v4026
    %v4049 = vcombine.high %v4033, %v4033
    %v4050 = vcombine.high %v4040, %v4040
    %v4051 = vcombine.high %v4047, %v4047
    %v4053 = vunpack.c.l.s4 1966171168
    %v4054 = vunpack.c.0.s8 %v4053
    %v4055 = vlaneseq
    %v4056 = vshrl.u32 %v4055, 7
    %v4057 = vsub.s32 %v4054, %v4056
    %v4058 = vrot.slane %v3750, %v4057
    %v4059 = vcombine.high %v4058, %v4058
    %v4061 = vunpack.c.l.s4 1966171168
    %v4062 = vunpack.c.0.s8 %v4061
    %v4063 = vlaneseq
    %v4064 = vshrl.u32 %v4063, 7
    %v4065 = vsub.s32 %v4062, %v4064
    %v4066 = vrot.slane %v4058, %v4065
    %v4068 = vunpack.c.l.s4 1966171168
    %v4069 = vunpack.c.0.s8 %v4068
    %v4070 = vlaneseq
    %v4071 = vshrl.u32 %v4070, 7
    %v4072 = vsub.s32 %v4069, %v4071
    %v4073 = vrot.slane %v4059, %v4072
    %4074 = vst [vmem:[#allocation6] sm:$0x7f] 0.0
    %4075 = vst [vmem:[#allocation6 + $0x8] sm:$0x7f] 0.0
    %4076 = vst [vmem:[#allocation6 + $0x10] sm:$0x7f] 0.0
    %4077 = vst [vmem:[#allocation6 + $0x18] sm:$0x7f] 0.0
    %4078 = vst [vmem:[#allocation6 + $0x20] sm:$0x7f] 0.0
    %4079 = vst [vmem:[#allocation6 + $0x28] sm:$0x7f] 0.0
    %4080 = vst [vmem:[#allocation6 + $0x30] sm:$0x7f] 0.0
    %4081 = vst [vmem:[#allocation6 + $0x38] sm:$0x7f] 0.0
    %4082 = vst [vmem:[#allocation6 + $0x40] sm:$0x7f] 0.0
    %4083 = vst [vmem:[#allocation6 + $0x48] sm:$0x7f] 0.0
    %4084 = vst [vmem:[#allocation6 + $0x50] sm:$0x7f] 0.0
    %4085 = vst [vmem:[#allocation6 + $0x58] sm:$0x7f] 0.0
    %4086 = vst [vmem:[#allocation6 + $0x60] sm:$0x7f] 0.0
    %4087 = vst [vmem:[#allocation6 + $0x68] sm:$0x7f] 0.0
    %v4088 = vcombine.low %v3781, %v3795
    %v4089 = vcombine.low %v3803, %v3805
    %v4091 = vunpack.c.l.s4 1966171168
    %v4092 = vunpack.c.0.s8 %v4091
    %v4093 = vlaneseq
    %v4094 = vshrl.u32 %v4093, 7
    %v4095 = vsub.s32 %v4092, %v4094
    %v4096 = vrot.slane %v4088, %v4095
    %v4098 = vunpack.c.l.s4 1966171168
    %v4099 = vunpack.c.0.s8 %v4098
    %v4100 = vlaneseq
    %v4101 = vshrl.u32 %v4100, 7
    %v4102 = vsub.s32 %v4099, %v4101
    %v4103 = vrot.slane %v4089, %v4102
    %v4105 = vunpack.c.l.s4 1966171168
    %v4106 = vunpack.c.0.s8 %v4105
    %v4107 = vlaneseq
    %v4108 = vshrl.u32 %v4107, 7
    %v4109 = vsub.s32 %v4106, %v4108
    %v4110 = vrot.slane %v3788, %v4109
    %v4111 = vcombine.low %v4096, %v4103
    %v4113 = vunpack.c.l.s4 1966171168
    %v4114 = vunpack.c.0.s8 %v4113
    %v4115 = vlaneseq
    %v4116 = vshrl.u32 %v4115, 7
    %v4117 = vsub.s32 %v4114, %v4116
    %v4118 = vrot.slane %v4111, %v4117
    %v4120 = vunpack.c.l.s4 1966171168
    %v4121 = vunpack.c.0.s8 %v4120
    %v4122 = vlaneseq
    %v4123 = vshrl.u32 %v4122, 7
    %v4124 = vsub.s32 %v4121, %v4123
    %v4125 = vrot.slane %v4110, %v4124
    %v4126 = vcombine.low %v4118, %v4125
    %v4127 = vcombine.low %v3802, %v3804
    %v4128 = vcombine.low %v3806, %v3830
    %v4130 = vunpack.c.l.s4 1966171168
    %v4131 = vunpack.c.0.s8 %v4130
    %v4132 = vlaneseq
    %v4133 = vshrl.u32 %v4132, 7
    %v4134 = vsub.s32 %v4131, %v4133
    %v4135 = vrot.slane %v4127, %v4134
    %v4137 = vunpack.c.l.s4 1966171168
    %v4138 = vunpack.c.0.s8 %v4137
    %v4139 = vlaneseq
    %v4140 = vshrl.u32 %v4139, 7
    %v4141 = vsub.s32 %v4138, %v4140
    %v4142 = vrot.slane %v4128, %v4141
    %v4144 = vunpack.c.l.s4 1966171168
    %v4145 = vunpack.c.0.s8 %v4144
    %v4146 = vlaneseq
    %v4147 = vshrl.u32 %v4146, 7
    %v4148 = vsub.s32 %v4145, %v4147
    %v4149 = vrot.slane %v3844, %v4148
    %v4150 = vcombine.low %v4135, %v4142
    %v4152 = vunpack.c.l.s4 1966171168
    %v4153 = vunpack.c.0.s8 %v4152
    %v4154 = vlaneseq
    %v4155 = vshrl.u32 %v4154, 7
    %v4156 = vsub.s32 %v4153, %v4155
    %v4157 = vrot.slane %v4150, %v4156
    %v4159 = vunpack.c.l.s4 1966171168
    %v4160 = vunpack.c.0.s8 %v4159
    %v4161 = vlaneseq
    %v4162 = vshrl.u32 %v4161, 7
    %v4163 = vsub.s32 %v4160, %v4162
    %v4164 = vrot.slane %v4149, %v4163
    %v4165 = vcombine.low %v4157, %v4164
    %v4166 = vcombine.low %v3852, %v3854
    %v4167 = vcombine.low %v3837, %v3851
    %v4169 = vunpack.c.l.s4 1966171168
    %v4170 = vunpack.c.0.s8 %v4169
    %v4171 = vlaneseq
    %v4172 = vshrl.u32 %v4171, 7
    %v4173 = vsub.s32 %v4170, %v4172
    %v4174 = vrot.slane %v4166, %v4173
    %v4176 = vunpack.c.l.s4 1966171168
    %v4177 = vunpack.c.0.s8 %v4176
    %v4178 = vlaneseq
    %v4179 = vshrl.u32 %v4178, 7
    %v4180 = vsub.s32 %v4177, %v4179
    %v4181 = vrot.slane %v4167, %v4180
    %v4183 = vunpack.c.l.s4 1966171168
    %v4184 = vunpack.c.0.s8 %v4183
    %v4185 = vlaneseq
    %v4186 = vshrl.u32 %v4185, 7
    %v4187 = vsub.s32 %v4184, %v4186
    %v4188 = vrot.slane %v3853, %v4187
    %v4189 = vcombine.low %v4174, %v4181
    %v4191 = vunpack.c.l.s4 1966171168
    %v4192 = vunpack.c.0.s8 %v4191
    %v4193 = vlaneseq
    %v4194 = vshrl.u32 %v4193, 7
    %v4195 = vsub.s32 %v4192, %v4194
    %v4196 = vrot.slane %v4189, %v4195
    %v4198 = vunpack.c.l.s4 1966171168
    %v4199 = vunpack.c.0.s8 %v4198
    %v4200 = vlaneseq
    %v4201 = vshrl.u32 %v4200, 7
    %v4202 = vsub.s32 %v4199, %v4201
    %v4203 = vrot.slane %v4188, %v4202
    %v4204 = vcombine.low %v4196, %v4203
    %v4205 = vcombine.low %v3855, %v3879
    %v4206 = vcombine.low %v3893, %v3901
    %v4208 = vunpack.c.l.s4 1966171168
    %v4209 = vunpack.c.0.s8 %v4208
    %v4210 = vlaneseq
    %v4211 = vshrl.u32 %v4210, 7
    %v4212 = vsub.s32 %v4209, %v4211
    %v4213 = vrot.slane %v4205, %v4212
    %v4215 = vunpack.c.l.s4 1966171168
    %v4216 = vunpack.c.0.s8 %v4215
    %v4217 = vlaneseq
    %v4218 = vshrl.u32 %v4217, 7
    %v4219 = vsub.s32 %v4216, %v4218
    %v4220 = vrot.slane %v4206, %v4219
    %v4222 = vunpack.c.l.s4 1966171168
    %v4223 = vunpack.c.0.s8 %v4222
    %v4224 = vlaneseq
    %v4225 = vshrl.u32 %v4224, 7
    %v4226 = vsub.s32 %v4223, %v4225
    %v4227 = vrot.slane %v3903, %v4226
    %v4228 = vcombine.low %v4213, %v4220
    %v4230 = vunpack.c.l.s4 1966171168
    %v4231 = vunpack.c.0.s8 %v4230
    %v4232 = vlaneseq
    %v4233 = vshrl.u32 %v4232, 7
    %v4234 = vsub.s32 %v4231, %v4233
    %v4235 = vrot.slane %v4228, %v4234
    %v4237 = vunpack.c.l.s4 1966171168
    %v4238 = vunpack.c.0.s8 %v4237
    %v4239 = vlaneseq
    %v4240 = vshrl.u32 %v4239, 7
    %v4241 = vsub.s32 %v4238, %v4240
    %v4242 = vrot.slane %v4227, %v4241
    %v4243 = vcombine.low %v4235, %v4242
    %v4244 = vcombine.low %v3886, %v3900
    %v4245 = vcombine.low %v3902, %v3904
    %v4247 = vunpack.c.l.s4 1966171168
    %v4248 = vunpack.c.0.s8 %v4247
    %v4249 = vlaneseq
    %v4250 = vshrl.u32 %v4249, 7
    %v4251 = vsub.s32 %v4248, %v4250
    %v4252 = vrot.slane %v4244, %v4251
    %v4254 = vunpack.c.l.s4 1966171168
    %v4255 = vunpack.c.0.s8 %v4254
    %v4256 = vlaneseq
    %v4257 = vshrl.u32 %v4256, 7
    %v4258 = vsub.s32 %v4255, %v4257
    %v4259 = vrot.slane %v4245, %v4258
    %v4261 = vunpack.c.l.s4 1966171168
    %v4262 = vunpack.c.0.s8 %v4261
    %v4263 = vlaneseq
    %v4264 = vshrl.u32 %v4263, 7
    %v4265 = vsub.s32 %v4262, %v4264
    %v4266 = vrot.slane %v3928, %v4265
    %v4267 = vcombine.low %v4252, %v4259
    %v4269 = vunpack.c.l.s4 1966171168
    %v4270 = vunpack.c.0.s8 %v4269
    %v4271 = vlaneseq
    %v4272 = vshrl.u32 %v4271, 7
    %v4273 = vsub.s32 %v4270, %v4272
    %v4274 = vrot.slane %v4267, %v4273
    %v4276 = vunpack.c.l.s4 1966171168
    %v4277 = vunpack.c.0.s8 %v4276
    %v4278 = vlaneseq
    %v4279 = vshrl.u32 %v4278, 7
    %v4280 = vsub.s32 %v4277, %v4279
    %v4281 = vrot.slane %v4266, %v4280
    %v4282 = vcombine.low %v4274, %v4281
    %v4283 = vcombine.low %v3942, %v3950
    %v4284 = vcombine.low %v3952, %v3935
    %v4286 = vunpack.c.l.s4 1966171168
    %v4287 = vunpack.c.0.s8 %v4286
    %v4288 = vlaneseq
    %v4289 = vshrl.u32 %v4288, 7
    %v4290 = vsub.s32 %v4287, %v4289
    %v4291 = vrot.slane %v4283, %v4290
    %v4293 = vunpack.c.l.s4 1966171168
    %v4294 = vunpack.c.0.s8 %v4293
    %v4295 = vlaneseq
    %v4296 = vshrl.u32 %v4295, 7
    %v4297 = vsub.s32 %v4294, %v4296
    %v4298 = vrot.slane %v4284, %v4297
    %v4300 = vunpack.c.l.s4 1966171168
    %v4301 = vunpack.c.0.s8 %v4300
    %v4302 = vlaneseq
    %v4303 = vshrl.u32 %v4302, 7
    %v4304 = vsub.s32 %v4301, %v4303
    %v4305 = vrot.slane %v3949, %v4304
    %v4306 = vcombine.low %v4291, %v4298
    %v4308 = vunpack.c.l.s4 1966171168
    %v4309 = vunpack.c.0.s8 %v4308
    %v4310 = vlaneseq
    %v4311 = vshrl.u32 %v4310, 7
    %v4312 = vsub.s32 %v4309, %v4311
    %v4313 = vrot.slane %v4306, %v4312
    %v4315 = vunpack.c.l.s4 1966171168
    %v4316 = vunpack.c.0.s8 %v4315
    %v4317 = vlaneseq
    %v4318 = vshrl.u32 %v4317, 7
    %v4319 = vsub.s32 %v4316, %v4318
    %v4320 = vrot.slane %v4305, %v4319
    %v4321 = vcombine.low %v4313, %v4320
    %v4322 = vcombine.low %v3951, %v3953
    %v4323 = vcombine.low %v3977, %v3991
    %v4325 = vunpack.c.l.s4 1966171168
    %v4326 = vunpack.c.0.s8 %v4325
    %v4327 = vlaneseq
    %v4328 = vshrl.u32 %v4327, 7
    %v4329 = vsub.s32 %v4326, %v4328
    %v4330 = vrot.slane %v4322, %v4329
    %v4332 = vunpack.c.l.s4 1966171168
    %v4333 = vunpack.c.0.s8 %v4332
    %v4334 = vlaneseq
    %v4335 = vshrl.u32 %v4334, 7
    %v4336 = vsub.s32 %v4333, %v4335
    %v4337 = vrot.slane %v4323, %v4336
    %v4339 = vunpack.c.l.s4 1966171168
    %v4340 = vunpack.c.0.s8 %v4339
    %v4341 = vlaneseq
    %v4342 = vshrl.u32 %v4341, 7
    %v4343 = vsub.s32 %v4340, %v4342
    %v4344 = vrot.slane %v3999, %v4343
    %v4345 = vcombine.low %v4330, %v4337
    %v4347 = vunpack.c.l.s4 1966171168
    %v4348 = vunpack.c.0.s8 %v4347
    %v4349 = vlaneseq
    %v4350 = vshrl.u32 %v4349, 7
    %v4351 = vsub.s32 %v4348, %v4350
    %v4352 = vrot.slane %v4345, %v4351
    %v4354 = vunpack.c.l.s4 1966171168
    %v4355 = vunpack.c.0.s8 %v4354
    %v4356 = vlaneseq
    %v4357 = vshrl.u32 %v4356, 7
    %v4358 = vsub.s32 %v4355, %v4357
    %v4359 = vrot.slane %v4344, %v4358
    %v4360 = vcombine.low %v4352, %v4359
    %v4361 = vcombine.low %v4001, %v3984
    %v4362 = vcombine.low %v3998, %v4000
    %v4364 = vunpack.c.l.s4 1966171168
    %v4365 = vunpack.c.0.s8 %v4364
    %v4366 = vlaneseq
    %v4367 = vshrl.u32 %v4366, 7
    %v4368 = vsub.s32 %v4365, %v4367
    %v4369 = vrot.slane %v4361, %v4368
    %v4371 = vunpack.c.l.s4 1966171168
    %v4372 = vunpack.c.0.s8 %v4371
    %v4373 = vlaneseq
    %v4374 = vshrl.u32 %v4373, 7
    %v4375 = vsub.s32 %v4372, %v4374
    %v4376 = vrot.slane %v4362, %v4375
    %v4378 = vunpack.c.l.s4 1966171168
    %v4379 = vunpack.c.0.s8 %v4378
    %v4380 = vlaneseq
    %v4381 = vshrl.u32 %v4380, 7
    %v4382 = vsub.s32 %v4379, %v4381
    %v4383 = vrot.slane %v4002, %v4382
    %v4384 = vcombine.low %v4369, %v4376
    %v4386 = vunpack.c.l.s4 1966171168
    %v4387 = vunpack.c.0.s8 %v4386
    %v4388 = vlaneseq
    %v4389 = vshrl.u32 %v4388, 7
    %v4390 = vsub.s32 %v4387, %v4389
    %v4391 = vrot.slane %v4384, %v4390
    %v4393 = vunpack.c.l.s4 1966171168
    %v4394 = vunpack.c.0.s8 %v4393
    %v4395 = vlaneseq
    %v4396 = vshrl.u32 %v4395, 7
    %v4397 = vsub.s32 %v4394, %v4396
    %v4398 = vrot.slane %v4383, %v4397
    %v4399 = vcombine.low %v4391, %v4398
    %v4400 = vcombine.low %v4026, %v4040
    %v4401 = vcombine.low %v4048, %v4050
    %v4403 = vunpack.c.l.s4 1966171168
    %v4404 = vunpack.c.0.s8 %v4403
    %v4405 = vlaneseq
    %v4406 = vshrl.u32 %v4405, 7
    %v4407 = vsub.s32 %v4404, %v4406
    %v4408 = vrot.slane %v4400, %v4407
    %v4410 = vunpack.c.l.s4 1966171168
    %v4411 = vunpack.c.0.s8 %v4410
    %v4412 = vlaneseq
    %v4413 = vshrl.u32 %v4412, 7
    %v4414 = vsub.s32 %v4411, %v4413
    %v4415 = vrot.slane %v4401, %v4414
    %v4417 = vunpack.c.l.s4 1966171168
    %v4418 = vunpack.c.0.s8 %v4417
    %v4419 = vlaneseq
    %v4420 = vshrl.u32 %v4419, 7
    %v4421 = vsub.s32 %v4418, %v4420
    %v4422 = vrot.slane %v4033, %v4421
    %v4423 = vcombine.low %v4408, %v4415
    %v4425 = vunpack.c.l.s4 1966171168
    %v4426 = vunpack.c.0.s8 %v4425
    %v4427 = vlaneseq
    %v4428 = vshrl.u32 %v4427, 7
    %v4429 = vsub.s32 %v4426, %v4428
    %v4430 = vrot.slane %v4423, %v4429
    %v4432 = vunpack.c.l.s4 1966171168
    %v4433 = vunpack.c.0.s8 %v4432
    %v4434 = vlaneseq
    %v4435 = vshrl.u32 %v4434, 7
    %v4436 = vsub.s32 %v4433, %v4435
    %v4437 = vrot.slane %v4422, %v4436
    %v4438 = vcombine.low %v4430, %v4437
    %v4439 = vcombine.low %v4047, %v4049
    %v4440 = vcombine.low %v4051, %v4066
    %v4442 = vunpack.c.l.s4 1966171168
    %v4443 = vunpack.c.0.s8 %v4442
    %v4444 = vlaneseq
    %v4445 = vshrl.u32 %v4444, 7
    %v4446 = vsub.s32 %v4443, %v4445
    %v4447 = vrot.slane %v4439, %v4446
    %v4449 = vunpack.c.l.s4 1966171168
    %v4450 = vunpack.c.0.s8 %v4449
    %v4451 = vlaneseq
    %v4452 = vshrl.u32 %v4451, 7
    %v4453 = vsub.s32 %v4450, %v4452
    %v4454 = vrot.slane %v4440, %v4453
    %v4456 = vunpack.c.l.s4 1966171168
    %v4457 = vunpack.c.0.s8 %v4456
    %v4458 = vlaneseq
    %v4459 = vshrl.u32 %v4458, 7
    %v4460 = vsub.s32 %v4457, %v4459
    %v4461 = vrot.slane %v4073, %v4460
    %v4462 = vcombine.low %v4447, %v4454
    %v4464 = vunpack.c.l.s4 1966171168
    %v4465 = vunpack.c.0.s8 %v4464
    %v4466 = vlaneseq
    %v4467 = vshrl.u32 %v4466, 7
    %v4468 = vsub.s32 %v4465, %v4467
    %v4469 = vrot.slane %v4462, %v4468
    %v4471 = vunpack.c.l.s4 1966171168
    %v4472 = vunpack.c.0.s8 %v4471
    %v4473 = vlaneseq
    %v4474 = vshrl.u32 %v4473, 7
    %v4475 = vsub.s32 %v4472, %v4474
    %v4476 = vrot.slane %v4461, %v4475
    %v4477 = vcombine.low %v4469, %v4476
    %s4488 = scalar_lea.vmem [#allocation6], 8
    %4489 = vst [vmem:[%s4488 + $0x1] sm:$0x1f] %v4126
    %4490 = vst [vmem:[%s4488 + $0x9] sm:$0x1f] %v4165
    %4491 = vst [vmem:[%s4488 + $0x11] sm:$0x1f] %v4204
    %4492 = vst [vmem:[%s4488 + $0x19] sm:$0x1f] %v4243
    %4493 = vst [vmem:[%s4488 + $0x21] sm:$0x1f] %v4282
    %4494 = vst [vmem:[%s4488 + $0x39] sm:$0x1f] %v4321
    %4495 = vst [vmem:[%s4488 + $0x41] sm:$0x1f] %v4360
    %4496 = vst [vmem:[%s4488 + $0x49] sm:$0x1f] %v4399
    %4497 = vst [vmem:[%s4488 + $0x51] sm:$0x1f] %v4438
    %4498 = vst [vmem:[%s4488 + $0x59] sm:$0x1f] %v4477
    %v4499 = vld [vmem:[#allocation6] sm:$0x7f]
    %v4500 = vld [vmem:[#allocation6 + $0x8] sm:$0x7f]
    %v4501 = vld [vmem:[#allocation6 + $0x10] sm:$0x7f]
    %v4502 = vld [vmem:[#allocation6 + $0x18] sm:$0x7f]
    %v4503 = vld [vmem:[#allocation6 + $0x20] sm:$0x7f]
    %v4504 = vld [vmem:[#allocation6 + $0x28] sm:$0x7f]
    %v4505 = vld [vmem:[#allocation6 + $0x30] sm:$0x7f]
    %v4506 = vld [vmem:[#allocation6 + $0x38] sm:$0x7f]
    %v4507 = vld [vmem:[#allocation6 + $0x40] sm:$0x7f]
    %v4508 = vld [vmem:[#allocation6 + $0x48] sm:$0x7f]
    %v4509 = vld [vmem:[#allocation6 + $0x50] sm:$0x7f]
    %v4510 = vld [vmem:[#allocation6 + $0x58] sm:$0x7f]
    %v4511 = vld [vmem:[#allocation6 + $0x60] sm:$0x7f]
    %v4512 = vld [vmem:[#allocation6 + $0x68] sm:$0x7f]
    %v4525 = vrot.slane %v4499, 1
    %v4526 = vrot.slane %v4500, 1
    %v4527 = vrot.slane %v4501, 1
    %v4528 = vrot.slane %v4502, 1
    %v4529 = vrot.slane %v4503, 1
    %v4530 = vrot.slane %v4504, 1
    %v4531 = vrot.slane %v4506, 1
    %v4532 = vrot.slane %v4507, 1
    %v4533 = vrot.slane %v4508, 1
    %v4534 = vrot.slane %v4509, 1
    %v4535 = vrot.slane %v4510, 1
    %v4536 = vrot.slane %v4511, 1
    %v4539 = vrot.slane %v4505, 1
    %v4540 = vrot.slane %v4512, 1
    %v4541 = vcombine.low %v4499, %v4525
    %v4542 = vcombine.high %v4499, %v4525
    %v4543 = vcombine.low %v4500, %v4526
    %v4544 = vcombine.high %v4500, %v4526
    %v4546 = vunpack.c.l.s4 1983009808
    %v4547 = vunpack.c.0.s8 %v4546
    %v4548 = vlaneseq
    %v4549 = vshrl.u32 %v4548, 7
    %v4550 = vsub.s32 %v4547, %v4549
    %v4551 = vrot.slane %v4541, %v4550
    %v4553 = vunpack.c.l.s4 1983009808
    %v4554 = vunpack.c.0.s8 %v4553
    %v4555 = vlaneseq
    %v4556 = vshrl.u32 %v4555, 7
    %v4557 = vsub.s32 %v4554, %v4556
    %v4558 = vrot.slane %v4542, %v4557
    %v4560 = vunpack.c.l.s4 1983009808
    %v4561 = vunpack.c.0.s8 %v4560
    %v4562 = vlaneseq
    %v4563 = vshrl.u32 %v4562, 7
    %v4564 = vsub.s32 %v4561, %v4563
    %v4565 = vrot.slane %v4543, %v4564
    %v4567 = vunpack.c.l.s4 1983009808
    %v4568 = vunpack.c.0.s8 %v4567
    %v4569 = vlaneseq
    %v4570 = vshrl.u32 %v4569, 7
    %v4571 = vsub.s32 %v4568, %v4570
    %v4572 = vrot.slane %v4544, %v4571
    %v4573 = vcombine.low %v4551, %v4565
    %v4574 = vcombine.high %v4551, %v4565
    %v4575 = vcombine.low %v4558, %v4572
    %v4576 = vcombine.low %v4501, %v4527
    %v4577 = vcombine.high %v4501, %v4527
    %v4579 = vunpack.c.l.s4 1983009808
    %v4580 = vunpack.c.0.s8 %v4579
    %v4581 = vlaneseq
    %v4582 = vshrl.u32 %v4581, 7
    %v4583 = vsub.s32 %v4580, %v4582
    %v4584 = vrot.slane %v4576, %v4583
    %v4586 = vunpack.c.l.s4 1983009808
    %v4587 = vunpack.c.0.s8 %v4586
    %v4588 = vlaneseq
    %v4589 = vshrl.u32 %v4588, 7
    %v4590 = vsub.s32 %v4587, %v4589
    %v4591 = vrot.slane %v4577, %v4590
    %v4592 = vcombine.low %v4565, %v4584
    %v4593 = vcombine.high %v4565, %v4584
    %v4594 = vcombine.low %v4572, %v4591
    %v4595 = vcombine.low %v4502, %v4528
    %v4596 = vcombine.high %v4502, %v4528
    %v4598 = vunpack.c.l.s4 1983009808
    %v4599 = vunpack.c.0.s8 %v4598
    %v4600 = vlaneseq
    %v4601 = vshrl.u32 %v4600, 7
    %v4602 = vsub.s32 %v4599, %v4601
    %v4603 = vrot.slane %v4595, %v4602
    %v4605 = vunpack.c.l.s4 1983009808
    %v4606 = vunpack.c.0.s8 %v4605
    %v4607 = vlaneseq
    %v4608 = vshrl.u32 %v4607, 7
    %v4609 = vsub.s32 %v4606, %v4608
    %v4610 = vrot.slane %v4596, %v4609
    %v4611 = vcombine.low %v4584, %v4603
    %v4612 = vcombine.high %v4584, %v4603
    %v4613 = vcombine.low %v4591, %v4610
    %v4614 = vcombine.low %v4503, %v4529
    %v4615 = vcombine.high %v4503, %v4529
    %v4617 = vunpack.c.l.s4 1983009808
    %v4618 = vunpack.c.0.s8 %v4617
    %v4619 = vlaneseq
    %v4620 = vshrl.u32 %v4619, 7
    %v4621 = vsub.s32 %v4618, %v4620
    %v4622 = vrot.slane %v4614, %v4621
    %v4624 = vunpack.c.l.s4 1983009808
    %v4625 = vunpack.c.0.s8 %v4624
    %v4626 = vlaneseq
    %v4627 = vshrl.u32 %v4626, 7
    %v4628 = vsub.s32 %v4625, %v4627
    %v4629 = vrot.slane %v4615, %v4628
    %v4630 = vcombine.low %v4603, %v4622
    %v4631 = vcombine.high %v4603, %v4622
    %v4632 = vcombine.low %v4610, %v4629
    %v4633 = vcombine.low %v4504, %v4530
    %v4634 = vcombine.high %v4504, %v4530
    %v4636 = vunpack.c.l.s4 1983009808
    %v4637 = vunpack.c.0.s8 %v4636
    %v4638 = vlaneseq
    %v4639 = vshrl.u32 %v4638, 7
    %v4640 = vsub.s32 %v4637, %v4639
    %v4641 = vrot.slane %v4633, %v4640
    %v4643 = vunpack.c.l.s4 1983009808
    %v4644 = vunpack.c.0.s8 %v4643
    %v4645 = vlaneseq
    %v4646 = vshrl.u32 %v4645, 7
    %v4647 = vsub.s32 %v4644, %v4646
    %v4648 = vrot.slane %v4634, %v4647
    %v4649 = vcombine.low %v4622, %v4641
    %v4650 = vcombine.high %v4622, %v4641
    %v4651 = vcombine.low %v4629, %v4648
    %v4652 = vcombine.low %v4505, %v4539
    %v4653 = vcombine.high %v4505, %v4539
    %v4655 = vunpack.c.l.s4 1983009808
    %v4656 = vunpack.c.0.s8 %v4655
    %v4657 = vlaneseq
    %v4658 = vshrl.u32 %v4657, 7
    %v4659 = vsub.s32 %v4656, %v4658
    %v4660 = vrot.slane %v4652, %v4659
    %v4662 = vunpack.c.l.s4 1983009808
    %v4663 = vunpack.c.0.s8 %v4662
    %v4664 = vlaneseq
    %v4665 = vshrl.u32 %v4664, 7
    %v4666 = vsub.s32 %v4663, %v4665
    %v4667 = vrot.slane %v4653, %v4666
    %v4668 = vcombine.low %v4641, %v4660
    %v4669 = vcombine.high %v4641, %v4660
    %v4670 = vcombine.low %v4648, %v4667
    %v4671 = vcombine.low %v4506, %v4531
    %v4672 = vcombine.high %v4506, %v4531
    %v4673 = vcombine.low %v4507, %v4532
    %v4674 = vcombine.high %v4507, %v4532
    %v4676 = vunpack.c.l.s4 1983009808
    %v4677 = vunpack.c.0.s8 %v4676
    %v4678 = vlaneseq
    %v4679 = vshrl.u32 %v4678, 7
    %v4680 = vsub.s32 %v4677, %v4679
    %v4681 = vrot.slane %v4671, %v4680
    %v4683 = vunpack.c.l.s4 1983009808
    %v4684 = vunpack.c.0.s8 %v4683
    %v4685 = vlaneseq
    %v4686 = vshrl.u32 %v4685, 7
    %v4687 = vsub.s32 %v4684, %v4686
    %v4688 = vrot.slane %v4672, %v4687
    %v4690 = vunpack.c.l.s4 1983009808
    %v4691 = vunpack.c.0.s8 %v4690
    %v4692 = vlaneseq
    %v4693 = vshrl.u32 %v4692, 7
    %v4694 = vsub.s32 %v4691, %v4693
    %v4695 = vrot.slane %v4673, %v4694
    %v4697 = vunpack.c.l.s4 1983009808
    %v4698 = vunpack.c.0.s8 %v4697
    %v4699 = vlaneseq
    %v4700 = vshrl.u32 %v4699, 7
    %v4701 = vsub.s32 %v4698, %v4700
    %v4702 = vrot.slane %v4674, %v4701
    %v4703 = vcombine.low %v4681, %v4695
    %v4704 = vcombine.high %v4681, %v4695
    %v4705 = vcombine.low %v4688, %v4702
    %v4706 = vcombine.low %v4508, %v4533
    %v4707 = vcombine.high %v4508, %v4533
    %v4709 = vunpack.c.l.s4 1983009808
    %v4710 = vunpack.c.0.s8 %v4709
    %v4711 = vlaneseq
    %v4712 = vshrl.u32 %v4711, 7
    %v4713 = vsub.s32 %v4710, %v4712
    %v4714 = vrot.slane %v4706, %v4713
    %v4716 = vunpack.c.l.s4 1983009808
    %v4717 = vunpack.c.0.s8 %v4716
    %v4718 = vlaneseq
    %v4719 = vshrl.u32 %v4718, 7
    %v4720 = vsub.s32 %v4717, %v4719
    %v4721 = vrot.slane %v4707, %v4720
    %v4722 = vcombine.low %v4695, %v4714
    %v4723 = vcombine.high %v4695, %v4714
    %v4724 = vcombine.low %v4702, %v4721
    %v4725 = vcombine.low %v4509, %v4534
    %v4726 = vcombine.high %v4509, %v4534
    %v4728 = vunpack.c.l.s4 1983009808
    %v4729 = vunpack.c.0.s8 %v4728
    %v4730 = vlaneseq
    %v4731 = vshrl.u32 %v4730, 7
    %v4732 = vsub.s32 %v4729, %v4731
    %v4733 = vrot.slane %v4725, %v4732
    %v4735 = vunpack.c.l.s4 1983009808
    %v4736 = vunpack.c.0.s8 %v4735
    %v4737 = vlaneseq
    %v4738 = vshrl.u32 %v4737, 7
    %v4739 = vsub.s32 %v4736, %v4738
    %v4740 = vrot.slane %v4726, %v4739
    %v4741 = vcombine.low %v4714, %v4733
    %v4742 = vcombine.high %v4714, %v4733
    %v4743 = vcombine.low %v4721, %v4740
    %v4744 = vcombine.low %v4510, %v4535
    %v4745 = vcombine.high %v4510, %v4535
    %v4747 = vunpack.c.l.s4 1983009808
    %v4748 = vunpack.c.0.s8 %v4747
    %v4749 = vlaneseq
    %v4750 = vshrl.u32 %v4749, 7
    %v4751 = vsub.s32 %v4748, %v4750
    %v4752 = vrot.slane %v4744, %v4751
    %v4754 = vunpack.c.l.s4 1983009808
    %v4755 = vunpack.c.0.s8 %v4754
    %v4756 = vlaneseq
    %v4757 = vshrl.u32 %v4756, 7
    %v4758 = vsub.s32 %v4755, %v4757
    %v4759 = vrot.slane %v4745, %v4758
    %v4760 = vcombine.low %v4733, %v4752
    %v4761 = vcombine.high %v4733, %v4752
    %v4762 = vcombine.low %v4740, %v4759
    %v4763 = vcombine.low %v4511, %v4536
    %v4764 = vcombine.high %v4511, %v4536
    %v4766 = vunpack.c.l.s4 1983009808
    %v4767 = vunpack.c.0.s8 %v4766
    %v4768 = vlaneseq
    %v4769 = vshrl.u32 %v4768, 7
    %v4770 = vsub.s32 %v4767, %v4769
    %v4771 = vrot.slane %v4763, %v4770
    %v4773 = vunpack.c.l.s4 1983009808
    %v4774 = vunpack.c.0.s8 %v4773
    %v4775 = vlaneseq
    %v4776 = vshrl.u32 %v4775, 7
    %v4777 = vsub.s32 %v4774, %v4776
    %v4778 = vrot.slane %v4764, %v4777
    %v4779 = vcombine.low %v4752, %v4771
    %v4780 = vcombine.high %v4752, %v4771
    %v4781 = vcombine.low %v4759, %v4778
    %v4782 = vcombine.low %v4512, %v4540
    %v4783 = vcombine.high %v4512, %v4540
    %v4785 = vunpack.c.l.s4 1983009808
    %v4786 = vunpack.c.0.s8 %v4785
    %v4787 = vlaneseq
    %v4788 = vshrl.u32 %v4787, 7
    %v4789 = vsub.s32 %v4786, %v4788
    %v4790 = vrot.slane %v4782, %v4789
    %v4792 = vunpack.c.l.s4 1983009808
    %v4793 = vunpack.c.0.s8 %v4792
    %v4794 = vlaneseq
    %v4795 = vshrl.u32 %v4794, 7
    %v4796 = vsub.s32 %v4793, %v4795
    %v4797 = vrot.slane %v4783, %v4796
    %v4798 = vcombine.low %v4771, %v4790
    %v4799 = vcombine.high %v4771, %v4790
    %v4800 = vcombine.low %v4778, %v4797
    %v4801 = vcombine.low %v4573, %v4574
    %v4802 = vcombine.high %v4573, %v4574
    %v4803 = vcombine.low %v4575, %v4592
    %v4804 = vcombine.high %v4575, %v4592
    %v4806 = vunpack.c.l.s4 1983009808
    %v4807 = vunpack.c.0.s8 %v4806
    %v4808 = vlaneseq
    %v4809 = vshrl.u32 %v4808, 7
    %v4810 = vsub.s32 %v4807, %v4809
    %v4811 = vrot.slane %v4801, %v4810
    %v4813 = vunpack.c.l.s4 1983009808
    %v4814 = vunpack.c.0.s8 %v4813
    %v4815 = vlaneseq
    %v4816 = vshrl.u32 %v4815, 7
    %v4817 = vsub.s32 %v4814, %v4816
    %v4818 = vrot.slane %v4802, %v4817
    %v4820 = vunpack.c.l.s4 1983009808
    %v4821 = vunpack.c.0.s8 %v4820
    %v4822 = vlaneseq
    %v4823 = vshrl.u32 %v4822, 7
    %v4824 = vsub.s32 %v4821, %v4823
    %v4825 = vrot.slane %v4803, %v4824
    %v4827 = vunpack.c.l.s4 1983009808
    %v4828 = vunpack.c.0.s8 %v4827
    %v4829 = vlaneseq
    %v4830 = vshrl.u32 %v4829, 7
    %v4831 = vsub.s32 %v4828, %v4830
    %v4832 = vrot.slane %v4804, %v4831
    %v4833 = vcombine.low %v4811, %v4825
    %v4834 = vcombine.high %v4811, %v4825
    %v4835 = vcombine.low %v4818, %v4832
    %v4836 = vcombine.high %v4818, %v4832
    %v4837 = vcombine.low %v4593, %v4594
    %v4838 = vcombine.high %v4593, %v4594
    %v4839 = vcombine.low %v4611, %v4612
    %v4840 = vcombine.high %v4611, %v4612
    %v4842 = vunpack.c.l.s4 1983009808
    %v4843 = vunpack.c.0.s8 %v4842
    %v4844 = vlaneseq
    %v4845 = vshrl.u32 %v4844, 7
    %v4846 = vsub.s32 %v4843, %v4845
    %v4847 = vrot.slane %v4837, %v4846
    %v4849 = vunpack.c.l.s4 1983009808
    %v4850 = vunpack.c.0.s8 %v4849
    %v4851 = vlaneseq
    %v4852 = vshrl.u32 %v4851, 7
    %v4853 = vsub.s32 %v4850, %v4852
    %v4854 = vrot.slane %v4838, %v4853
    %v4856 = vunpack.c.l.s4 1983009808
    %v4857 = vunpack.c.0.s8 %v4856
    %v4858 = vlaneseq
    %v4859 = vshrl.u32 %v4858, 7
    %v4860 = vsub.s32 %v4857, %v4859
    %v4861 = vrot.slane %v4839, %v4860
    %v4863 = vunpack.c.l.s4 1983009808
    %v4864 = vunpack.c.0.s8 %v4863
    %v4865 = vlaneseq
    %v4866 = vshrl.u32 %v4865, 7
    %v4867 = vsub.s32 %v4864, %v4866
    %v4868 = vrot.slane %v4840, %v4867
    %v4869 = vcombine.low %v4847, %v4861
    %v4870 = vcombine.high %v4847, %v4861
    %v4871 = vcombine.low %v4854, %v4868
    %v4872 = vcombine.high %v4854, %v4868
    %v4873 = vcombine.low %v4613, %v4630
    %v4874 = vcombine.high %v4613, %v4630
    %v4875 = vcombine.low %v4631, %v4632
    %v4876 = vcombine.high %v4631, %v4632
    %v4878 = vunpack.c.l.s4 1983009808
    %v4879 = vunpack.c.0.s8 %v4878
    %v4880 = vlaneseq
    %v4881 = vshrl.u32 %v4880, 7
    %v4882 = vsub.s32 %v4879, %v4881
    %v4883 = vrot.slane %v4873, %v4882
    %v4885 = vunpack.c.l.s4 1983009808
    %v4886 = vunpack.c.0.s8 %v4885
    %v4887 = vlaneseq
    %v4888 = vshrl.u32 %v4887, 7
    %v4889 = vsub.s32 %v4886, %v4888
    %v4890 = vrot.slane %v4874, %v4889
    %v4892 = vunpack.c.l.s4 1983009808
    %v4893 = vunpack.c.0.s8 %v4892
    %v4894 = vlaneseq
    %v4895 = vshrl.u32 %v4894, 7
    %v4896 = vsub.s32 %v4893, %v4895
    %v4897 = vrot.slane %v4875, %v4896
    %v4899 = vunpack.c.l.s4 1983009808
    %v4900 = vunpack.c.0.s8 %v4899
    %v4901 = vlaneseq
    %v4902 = vshrl.u32 %v4901, 7
    %v4903 = vsub.s32 %v4900, %v4902
    %v4904 = vrot.slane %v4876, %v4903
    %v4905 = vcombine.low %v4883, %v4897
    %v4906 = vcombine.high %v4883, %v4897
    %v4907 = vcombine.low %v4890, %v4904
    %v4908 = vcombine.high %v4890, %v4904
    %v4909 = vcombine.low %v4649, %v4650
    %v4910 = vcombine.high %v4649, %v4650
    %v4911 = vcombine.low %v4651, %v4668
    %v4912 = vcombine.high %v4651, %v4668
    %v4914 = vunpack.c.l.s4 1983009808
    %v4915 = vunpack.c.0.s8 %v4914
    %v4916 = vlaneseq
    %v4917 = vshrl.u32 %v4916, 7
    %v4918 = vsub.s32 %v4915, %v4917
    %v4919 = vrot.slane %v4909, %v4918
    %v4921 = vunpack.c.l.s4 1983009808
    %v4922 = vunpack.c.0.s8 %v4921
    %v4923 = vlaneseq
    %v4924 = vshrl.u32 %v4923, 7
    %v4925 = vsub.s32 %v4922, %v4924
    %v4926 = vrot.slane %v4910, %v4925
    %v4928 = vunpack.c.l.s4 1983009808
    %v4929 = vunpack.c.0.s8 %v4928
    %v4930 = vlaneseq
    %v4931 = vshrl.u32 %v4930, 7
    %v4932 = vsub.s32 %v4929, %v4931
    %v4933 = vrot.slane %v4911, %v4932
    %v4935 = vunpack.c.l.s4 1983009808
    %v4936 = vunpack.c.0.s8 %v4935
    %v4937 = vlaneseq
    %v4938 = vshrl.u32 %v4937, 7
    %v4939 = vsub.s32 %v4936, %v4938
    %v4940 = vrot.slane %v4912, %v4939
    %v4941 = vcombine.low %v4919, %v4933
    %v4942 = vcombine.high %v4919, %v4933
    %v4943 = vcombine.low %v4926, %v4940
    %v4944 = vcombine.high %v4926, %v4940
    %v4945 = vcombine.low %v4669, %v4670
    %v4946 = vcombine.high %v4669, %v4670
    %v4947 = vcombine.low %v4703, %v4704
    %v4948 = vcombine.high %v4703, %v4704
    %v4950 = vunpack.c.l.s4 1983009808
    %v4951 = vunpack.c.0.s8 %v4950
    %v4952 = vlaneseq
    %v4953 = vshrl.u32 %v4952, 7
    %v4954 = vsub.s32 %v4951, %v4953
    %v4955 = vrot.slane %v4945, %v4954
    %v4957 = vunpack.c.l.s4 1983009808
    %v4958 = vunpack.c.0.s8 %v4957
    %v4959 = vlaneseq
    %v4960 = vshrl.u32 %v4959, 7
    %v4961 = vsub.s32 %v4958, %v4960
    %v4962 = vrot.slane %v4946, %v4961
    %v4964 = vunpack.c.l.s4 1983009808
    %v4965 = vunpack.c.0.s8 %v4964
    %v4966 = vlaneseq
    %v4967 = vshrl.u32 %v4966, 7
    %v4968 = vsub.s32 %v4965, %v4967
    %v4969 = vrot.slane %v4947, %v4968
    %v4971 = vunpack.c.l.s4 1983009808
    %v4972 = vunpack.c.0.s8 %v4971
    %v4973 = vlaneseq
    %v4974 = vshrl.u32 %v4973, 7
    %v4975 = vsub.s32 %v4972, %v4974
    %v4976 = vrot.slane %v4948, %v4975
    %v4977 = vcombine.low %v4955, %v4969
    %v4978 = vcombine.high %v4955, %v4969
    %v4979 = vcombine.low %v4962, %v4976
    %v4980 = vcombine.high %v4962, %v4976
    %v4981 = vcombine.low %v4705, %v4722
    %v4982 = vcombine.high %v4705, %v4722
    %v4983 = vcombine.low %v4723, %v4724
    %v4984 = vcombine.high %v4723, %v4724
    %v4986 = vunpack.c.l.s4 1983009808
    %v4987 = vunpack.c.0.s8 %v4986
    %v4988 = vlaneseq
    %v4989 = vshrl.u32 %v4988, 7
    %v4990 = vsub.s32 %v4987, %v4989
    %v4991 = vrot.slane %v4981, %v4990
    %v4993 = vunpack.c.l.s4 1983009808
    %v4994 = vunpack.c.0.s8 %v4993
    %v4995 = vlaneseq
    %v4996 = vshrl.u32 %v4995, 7
    %v4997 = vsub.s32 %v4994, %v4996
    %v4998 = vrot.slane %v4982, %v4997
    %v5000 = vunpack.c.l.s4 1983009808
    %v5001 = vunpack.c.0.s8 %v5000
    %v5002 = vlaneseq
    %v5003 = vshrl.u32 %v5002, 7
    %v5004 = vsub.s32 %v5001, %v5003
    %v5005 = vrot.slane %v4983, %v5004
    %v5007 = vunpack.c.l.s4 1983009808
    %v5008 = vunpack.c.0.s8 %v5007
    %v5009 = vlaneseq
    %v5010 = vshrl.u32 %v5009, 7
    %v5011 = vsub.s32 %v5008, %v5010
    %v5012 = vrot.slane %v4984, %v5011
    %v5013 = vcombine.low %v4991, %v5005
    %v5014 = vcombine.high %v4991, %v5005
    %v5015 = vcombine.low %v4998, %v5012
    %v5016 = vcombine.high %v4998, %v5012
    %v5017 = vcombine.low %v4741, %v4742
    %v5018 = vcombine.high %v4741, %v4742
    %v5019 = vcombine.low %v4743, %v4760
    %v5020 = vcombine.high %v4743, %v4760
    %v5022 = vunpack.c.l.s4 1983009808
    %v5023 = vunpack.c.0.s8 %v5022
    %v5024 = vlaneseq
    %v5025 = vshrl.u32 %v5024, 7
    %v5026 = vsub.s32 %v5023, %v5025
    %v5027 = vrot.slane %v5017, %v5026
    %v5029 = vunpack.c.l.s4 1983009808
    %v5030 = vunpack.c.0.s8 %v5029
    %v5031 = vlaneseq
    %v5032 = vshrl.u32 %v5031, 7
    %v5033 = vsub.s32 %v5030, %v5032
    %v5034 = vrot.slane %v5018, %v5033
    %v5036 = vunpack.c.l.s4 1983009808
    %v5037 = vunpack.c.0.s8 %v5036
    %v5038 = vlaneseq
    %v5039 = vshrl.u32 %v5038, 7
    %v5040 = vsub.s32 %v5037, %v5039
    %v5041 = vrot.slane %v5019, %v5040
    %v5043 = vunpack.c.l.s4 1983009808
    %v5044 = vunpack.c.0.s8 %v5043
    %v5045 = vlaneseq
    %v5046 = vshrl.u32 %v5045, 7
    %v5047 = vsub.s32 %v5044, %v5046
    %v5048 = vrot.slane %v5020, %v5047
    %v5049 = vcombine.low %v5027, %v5041
    %v5050 = vcombine.high %v5027, %v5041
    %v5051 = vcombine.low %v5034, %v5048
    %v5052 = vcombine.high %v5034, %v5048
    %v5053 = vcombine.low %v4761, %v4762
    %v5054 = vcombine.high %v4761, %v4762
    %v5055 = vcombine.low %v4779, %v4780
    %v5056 = vcombine.high %v4779, %v4780
    %v5058 = vunpack.c.l.s4 1983009808
    %v5059 = vunpack.c.0.s8 %v5058
    %v5060 = vlaneseq
    %v5061 = vshrl.u32 %v5060, 7
    %v5062 = vsub.s32 %v5059, %v5061
    %v5063 = vrot.slane %v5053, %v5062
    %v5065 = vunpack.c.l.s4 1983009808
    %v5066 = vunpack.c.0.s8 %v5065
    %v5067 = vlaneseq
    %v5068 = vshrl.u32 %v5067, 7
    %v5069 = vsub.s32 %v5066, %v5068
    %v5070 = vrot.slane %v5054, %v5069
    %v5072 = vunpack.c.l.s4 1983009808
    %v5073 = vunpack.c.0.s8 %v5072
    %v5074 = vlaneseq
    %v5075 = vshrl.u32 %v5074, 7
    %v5076 = vsub.s32 %v5073, %v5075
    %v5077 = vrot.slane %v5055, %v5076
    %v5079 = vunpack.c.l.s4 1983009808
    %v5080 = vunpack.c.0.s8 %v5079
    %v5081 = vlaneseq
    %v5082 = vshrl.u32 %v5081, 7
    %v5083 = vsub.s32 %v5080, %v5082
    %v5084 = vrot.slane %v5056, %v5083
    %v5085 = vcombine.low %v5063, %v5077
    %v5086 = vcombine.high %v5063, %v5077
    %v5087 = vcombine.low %v5070, %v5084
    %v5088 = vcombine.high %v5070, %v5084
    %v5089 = vcombine.low %v4781, %v4798
    %v5090 = vcombine.high %v4781, %v4798
    %v5091 = vcombine.low %v4799, %v4800
    %v5092 = vcombine.high %v4799, %v4800
    %v5094 = vunpack.c.l.s4 1983009808
    %v5095 = vunpack.c.0.s8 %v5094
    %v5096 = vlaneseq
    %v5097 = vshrl.u32 %v5096, 7
    %v5098 = vsub.s32 %v5095, %v5097
    %v5099 = vrot.slane %v5089, %v5098
    %v5101 = vunpack.c.l.s4 1983009808
    %v5102 = vunpack.c.0.s8 %v5101
    %v5103 = vlaneseq
    %v5104 = vshrl.u32 %v5103, 7
    %v5105 = vsub.s32 %v5102, %v5104
    %v5106 = vrot.slane %v5090, %v5105
    %v5108 = vunpack.c.l.s4 1983009808
    %v5109 = vunpack.c.0.s8 %v5108
    %v5110 = vlaneseq
    %v5111 = vshrl.u32 %v5110, 7
    %v5112 = vsub.s32 %v5109, %v5111
    %v5113 = vrot.slane %v5091, %v5112
    %v5115 = vunpack.c.l.s4 1983009808
    %v5116 = vunpack.c.0.s8 %v5115
    %v5117 = vlaneseq
    %v5118 = vshrl.u32 %v5117, 7
    %v5119 = vsub.s32 %v5116, %v5118
    %v5120 = vrot.slane %v5092, %v5119
    %v5121 = vcombine.low %v5099, %v5113
    %v5122 = vcombine.high %v5099, %v5113
    %v5123 = vcombine.low %v5106, %v5120
    %v5124 = vcombine.high %v5106, %v5120
    %v5161 = vpack.c.bf16 %v4869, %v4833
    %v5162 = vpack.c.bf16 %v4870, %v4834
    %v5163 = vpack.c.bf16 %v4871, %v4835
    %v5164 = vpack.c.bf16 %v4872, %v4836
    %v5165 = vpack.c.bf16 %v4941, %v4905
    %v5166 = vpack.c.bf16 %v4942, %v4906
    %v5167 = vpack.c.bf16 %v4943, %v4907
    %v5168 = vpack.c.bf16 %v4944, %v4908
    %v5169 = vpack.c.bf16 %v5013, %v4977
    %v5170 = vpack.c.bf16 %v5014, %v4978
    %v5171 = vpack.c.bf16 %v5015, %v4979
    %v5172 = vpack.c.bf16 %v5016, %v4980
    %v5173 = vpack.c.bf16 %v5085, %v5049
    %v5174 = vpack.c.bf16 %v5086, %v5050
    %v5175 = vpack.c.bf16 %v5087, %v5051
    %v5176 = vpack.c.bf16 %v5088, %v5052
    %v5177 = vpack.c.bf16 %v5121, %v5121
    %v5178 = vpack.c.bf16 %v5122, %v5122
    %v5179 = vpack.c.bf16 %v5123, %v5123
    %v5180 = vpack.c.bf16 %v5124, %v5124
    %v5181 = vld [vmem:[#allocation16] sm:$0xf]
    %v5182 = vld [vmem:[#allocation16 + $0x4] sm:$0xf]
    %v5183 = vld [vmem:[#allocation16 + $0x8] sm:$0xf]
    %v5184 = vld [vmem:[#allocation16 + $0xc] sm:$0xf]
    %v5185 = vld [vmem:[#allocation16 + $0x10] sm:$0xf]
    %v5186 = vld [vmem:[#allocation16 + $0x14] sm:$0xf]
    %v5187 = vld [vmem:[#allocation16 + $0x18] sm:$0xf]
    %v5188 = vld [vmem:[#allocation16 + $0x1c] sm:$0xf]
    %v5189 = vld [vmem:[#allocation16 + $0x20] sm:$0xf]
    %v5190 = vld [vmem:[#allocation16 + $0x24] sm:$0xf]
    %v5191 = vld [vmem:[#allocation16 + $0x28] sm:$0xf]
    %v5192 = vld [vmem:[#allocation16 + $0x2c] sm:$0xf]
    %v5193 = vld [vmem:[#allocation16 + $0x30] sm:$0xf]
    %v5194 = vld [vmem:[#allocation16 + $0x34] sm:$0xf]
    %v5195 = vld [vmem:[#allocation16 + $0x38] sm:$0xf]
    %v5196 = vld [vmem:[#allocation16 + $0x3c] sm:$0xf]
    %v5197 = vld [vmem:[#allocation16 + $0x40] sm:$0xf]
    %v5198 = vld [vmem:[#allocation16 + $0x44] sm:$0xf]
    %v5199 = vld [vmem:[#allocation16 + $0x48] sm:$0xf]
    %v5200 = vld [vmem:[#allocation16 + $0x4c] sm:$0xf]
    %v5201 = vld [vmem:[#allocation16 + $0x50] sm:$0xf]
    %v5202 = vld [vmem:[#allocation16 + $0x54] sm:$0xf]
    %v5203 = vld [vmem:[#allocation16 + $0x58] sm:$0xf]
    %v5204 = vld [vmem:[#allocation16 + $0x5c] sm:$0xf]
    %v5205 = vld [vmem:[#allocation16 + $0x60] sm:$0xf]
    %v5206 = vld [vmem:[#allocation16 + $0x64] sm:$0xf]
    %v5207 = vld [vmem:[#allocation16 + $0x68] sm:$0xf]
    %v5208 = vld [vmem:[#allocation16 + $0x6c] sm:$0xf]
    %v5209 = vld [vmem:[#allocation16 + $0x70] sm:$0xf]
    %v5210 = vld [vmem:[#allocation16 + $0x74] sm:$0xf]
    %v5211 = vld [vmem:[#allocation16 + $0x78] sm:$0xf]
    %v5212 = vld [vmem:[#allocation16 + $0x7c] sm:$0xf]
    %v5213 = vld [vmem:[#allocation16 + $0x80] sm:$0xf]
    %v5214 = vld [vmem:[#allocation16 + $0x84] sm:$0xf]
    %v5215 = vld [vmem:[#allocation16 + $0x88] sm:$0xf]
    %v5216 = vld [vmem:[#allocation16 + $0x8c] sm:$0xf]
    %v5217 = vld [vmem:[#allocation16 + $0x90] sm:$0xf]
    %v5218 = vld [vmem:[#allocation16 + $0x94] sm:$0xf]
    %v5219 = vld [vmem:[#allocation16 + $0x98] sm:$0xf]
    %v5220 = vld [vmem:[#allocation16 + $0x9c] sm:$0xf]
    %v5221 = vld [vmem:[#allocation16 + $0xa0] sm:$0xf]
    %v5222 = vld [vmem:[#allocation16 + $0xa4] sm:$0xf]
    %v5223 = vld [vmem:[#allocation16 + $0xa8] sm:$0xf]
    %v5224 = vld [vmem:[#allocation16 + $0xac] sm:$0xf]
    %v5225 = vld [vmem:[#allocation16 + $0xb0] sm:$0xf]
    %v5226 = vld [vmem:[#allocation16 + $0xb4] sm:$0xf]
    %v5227 = vld [vmem:[#allocation16 + $0xb8] sm:$0xf]
    %v5228 = vld [vmem:[#allocation16 + $0xbc] sm:$0xf]
    %v5229 = vld [vmem:[#allocation16 + $0xc0] sm:$0xf]
    %v5230 = vld [vmem:[#allocation16 + $0xc4] sm:$0xf]
    %v5231 = vld [vmem:[#allocation16 + $0xc8] sm:$0xf]
    %v5232 = vld [vmem:[#allocation16 + $0xcc] sm:$0xf]
    %v5233 = vld [vmem:[#allocation16 + $0xd0] sm:$0xf]
    %v5234 = vld [vmem:[#allocation16 + $0xd4] sm:$0xf]
    %v5235 = vld [vmem:[#allocation16 + $0xd8] sm:$0xf]
    %v5236 = vld [vmem:[#allocation16 + $0xdc] sm:$0xf]
    %v5237 = vld [vmem:[#allocation16 + $0xe0] sm:$0xf]
    %v5238 = vld [vmem:[#allocation16 + $0xe4] sm:$0xf]
    %v5239 = vld [vmem:[#allocation16 + $0xe8] sm:$0xf]
    %v5240 = vld [vmem:[#allocation16 + $0xec] sm:$0xf]
    %v5241 = vld [vmem:[#allocation16 + $0xf0] sm:$0xf]
    %v5242 = vld [vmem:[#allocation16 + $0xf4] sm:$0xf]
    %v5243 = vld [vmem:[#allocation16 + $0xf8] sm:$0xf]
    %v5244 = vld [vmem:[#allocation16 + $0xfc] sm:$0xf]
    %v5309 = vunpack.c.l.b16 %v5181
    %v5310 = vunpack.c.l.b16 %v5182
    %v5311 = vunpack.c.l.b16 %v5183
    %v5312 = vunpack.c.l.b16 %v5184
    %v5313 = vunpack.c.l.b16 %v5185
    %v5314 = vunpack.c.l.b16 %v5186
    %v5315 = vunpack.c.l.b16 %v5187
    %v5316 = vunpack.c.l.b16 %v5188
    %v5317 = vunpack.c.l.b16 %v5189
    %v5318 = vunpack.c.l.b16 %v5190
    %v5319 = vunpack.c.l.b16 %v5191
    %v5320 = vunpack.c.l.b16 %v5192
    %v5321 = vunpack.c.l.b16 %v5193
    %v5322 = vunpack.c.l.b16 %v5194
    %v5323 = vunpack.c.l.b16 %v5195
    %v5324 = vunpack.c.l.b16 %v5196
    %v5325 = vunpack.c.l.b16 %v5197
    %v5326 = vunpack.c.l.b16 %v5198
    %v5327 = vunpack.c.l.b16 %v5199
    %v5328 = vunpack.c.l.b16 %v5200
    %v5329 = vunpack.c.l.b16 %v5201
    %v5330 = vunpack.c.l.b16 %v5202
    %v5331 = vunpack.c.l.b16 %v5203
    %v5332 = vunpack.c.l.b16 %v5204
    %v5333 = vunpack.c.l.b16 %v5205
    %v5334 = vunpack.c.l.b16 %v5206
    %v5335 = vunpack.c.l.b16 %v5207
    %v5336 = vunpack.c.l.b16 %v5208
    %v5337 = vunpack.c.l.b16 %v5209
    %v5338 = vunpack.c.l.b16 %v5210
    %v5339 = vunpack.c.l.b16 %v5211
    %v5340 = vunpack.c.l.b16 %v5212
    %v5341 = vunpack.c.l.b16 %v5213
    %v5342 = vunpack.c.l.b16 %v5214
    %v5343 = vunpack.c.l.b16 %v5215
    %v5344 = vunpack.c.l.b16 %v5216
    %v5345 = vunpack.c.l.b16 %v5217
    %v5346 = vunpack.c.l.b16 %v5218
    %v5347 = vunpack.c.l.b16 %v5219
    %v5348 = vunpack.c.l.b16 %v5220
    %v5349 = vunpack.c.l.b16 %v5221
    %v5350 = vunpack.c.l.b16 %v5222
    %v5351 = vunpack.c.l.b16 %v5223
    %v5352 = vunpack.c.l.b16 %v5224
    %v5353 = vunpack.c.l.b16 %v5225
    %v5354 = vunpack.c.l.b16 %v5226
    %v5355 = vunpack.c.l.b16 %v5227
    %v5356 = vunpack.c.l.b16 %v5228
    %v5357 = vunpack.c.l.b16 %v5229
    %v5358 = vunpack.c.l.b16 %v5230
    %v5359 = vunpack.c.l.b16 %v5231
    %v5360 = vunpack.c.l.b16 %v5232
    %v5361 = vunpack.c.l.b16 %v5233
    %v5362 = vunpack.c.l.b16 %v5234
    %v5363 = vunpack.c.l.b16 %v5235
    %v5364 = vunpack.c.l.b16 %v5236
    %v5365 = vunpack.c.l.b16 %v5237
    %v5366 = vunpack.c.l.b16 %v5238
    %v5367 = vunpack.c.l.b16 %v5239
    %v5368 = vunpack.c.l.b16 %v5240
    %v5369 = vunpack.c.l.b16 %v5241
    %v5370 = vunpack.c.l.b16 %v5242
    %v5371 = vunpack.c.l.b16 %v5243
    %v5372 = vunpack.c.l.b16 %v5244
    %v5373 = vpack.c.b16 %v5310, %v5309
    %v5374 = vpack.c.b16 %v5312, %v5311
    %v5375 = vpack.c.b16 %v5314, %v5313
    %v5376 = vpack.c.b16 %v5316, %v5315
    %v5377 = vpack.c.b16 %v5318, %v5317
    %v5378 = vpack.c.b16 %v5320, %v5319
    %v5379 = vpack.c.b16 %v5322, %v5321
    %v5380 = vpack.c.b16 %v5324, %v5323
    %v5381 = vpack.c.b16 %v5326, %v5325
    %v5382 = vpack.c.b16 %v5328, %v5327
    %v5383 = vpack.c.b16 %v5330, %v5329
    %v5384 = vpack.c.b16 %v5332, %v5331
    %v5385 = vpack.c.b16 %v5334, %v5333
    %v5386 = vpack.c.b16 %v5336, %v5335
    %v5387 = vpack.c.b16 %v5338, %v5337
    %v5388 = vpack.c.b16 %v5340, %v5339
    %v5389 = vpack.c.b16 %v5342, %v5341
    %v5390 = vpack.c.b16 %v5344, %v5343
    %v5391 = vpack.c.b16 %v5346, %v5345
    %v5392 = vpack.c.b16 %v5348, %v5347
    %v5393 = vpack.c.b16 %v5350, %v5349
    %v5394 = vpack.c.b16 %v5352, %v5351
    %v5395 = vpack.c.b16 %v5354, %v5353
    %v5396 = vpack.c.b16 %v5356, %v5355
    %v5397 = vpack.c.b16 %v5358, %v5357
    %v5398 = vpack.c.b16 %v5360, %v5359
    %v5399 = vpack.c.b16 %v5362, %v5361
    %v5400 = vpack.c.b16 %v5364, %v5363
    %v5401 = vpack.c.b16 %v5366, %v5365
    %v5402 = vpack.c.b16 %v5368, %v5367
    %v5403 = vpack.c.b16 %v5370, %v5369
    %v5404 = vpack.c.b16 %v5372, %v5371
    %5437 = vmatprep.subr.bf16.mxu0 0
    %5438 = vmatpush1.bf16.msra.mxu0 %v5380
    %5439 = vmatprep.subr.bf16.mxu0 0
    %5440 = vmatpush1.bf16.msra.mxu0 %v5379
    %5441 = vmatprep.subr.bf16.mxu0 0
    %5442 = vmatpush1.bf16.msra.mxu0 %v5378
    %5443 = vmatprep.subr.bf16.mxu0 0
    %5444 = vmatpush1.bf16.msra.mxu0 %v5377
    %5445 = vmatprep.subr.bf16.mxu0 0
    %5446 = vmatpush1.bf16.msra.mxu0 %v5376
    %5447 = vmatprep.subr.bf16.mxu0 0
    %5448 = vmatpush1.bf16.msra.mxu0 %v5375
    %5449 = vmatprep.subr.bf16.mxu0 0
    %5450 = vmatpush1.bf16.msra.mxu0 %v5374
    %5451 = vmatprep.subr.bf16.mxu0 0
    %5452 = vmatpush1.bf16.msra.mxu0 %v5373
    %5453 = vmatprep.subr.bf16.mxu0 0
    %5454 = vmatpush2.bf16.msra.mxu0 %v5388
    %5455 = vmatprep.subr.bf16.mxu0 0
    %5456 = vmatpush2.bf16.msra.mxu0 %v5387
    %5457 = vmatprep.subr.bf16.mxu0 0
    %5458 = vmatpush2.bf16.msra.mxu0 %v5386
    %5459 = vmatprep.subr.bf16.mxu0 0
    %5460 = vmatpush2.bf16.msra.mxu0 %v5385
    %5461 = vmatprep.subr.bf16.mxu0 0
    %5462 = vmatpush2.bf16.msra.mxu0 %v5384
    %5463 = vmatprep.subr.bf16.mxu0 0
    %5464 = vmatpush2.bf16.msra.mxu0 %v5383
    %5465 = vmatprep.subr.bf16.mxu0 0
    %5466 = vmatpush2.bf16.msra.mxu0 %v5382
    %5467 = vmatprep.subr.bf16.mxu0 0
    %5468 = vmatpush2.bf16.msra.mxu0 %v5381
    %5469 = vmatprep.mubr.bf16.mxu0 %v5162
    %5470 = vmatmul.mubr.bf16.gmra.mxu0 %v5161
    %v5471 = vpop.f32.mrf.mxu0
    %v5472 = vadd.f32 0.0, %v5471
    %v5473 = vpop.f32.mrf.mxu0
    %v5474 = vpop.f32.mrf.mxu0
    %v5475 = vadd.f32 0.0, %v5474
    %v5476 = vpop.f32.mrf.mxu0
    %5477 = vmatprep.mubr.bf16.mxu0 %v5166
    %5478 = vmatmul.mubr.bf16.gmra.mxu0 %v5165
    %v5479 = vpop.f32.mrf.mxu0
    %v5480 = vadd.f32 0.0, %v5479
    %v5481 = vpop.f32.mrf.mxu0
    %v5482 = vpop.f32.mrf.mxu0
    %v5483 = vadd.f32 0.0, %v5482
    %v5484 = vpop.f32.mrf.mxu0
    %5485 = vmatprep.mubr.bf16.mxu0 %v5170
    %5486 = vmatmul.mubr.bf16.gmra.mxu0 %v5169
    %v5487 = vpop.f32.mrf.mxu0
    %v5488 = vadd.f32 0.0, %v5487
    %v5489 = vpop.f32.mrf.mxu0
    %v5490 = vpop.f32.mrf.mxu0
    %v5491 = vadd.f32 0.0, %v5490
    %v5492 = vpop.f32.mrf.mxu0
    %5493 = vmatprep.mubr.bf16.mxu0 %v5174
    %5494 = vmatmul.mubr.bf16.gmra.mxu0 %v5173
    %v5495 = vpop.f32.mrf.mxu0
    %v5496 = vadd.f32 0.0, %v5495
    %v5497 = vpop.f32.mrf.mxu0
    %v5498 = vpop.f32.mrf.mxu0
    %v5499 = vadd.f32 0.0, %v5498
    %v5500 = vpop.f32.mrf.mxu0
    %5501 = vmatprep.mubr.bf16.mxu0 %v5178
    %5502 = vmatmul.mubr.bf16.gmra.mxu0 %v5177
    %v5503 = vpop.f32.mrf.mxu0
    %v5504 = vadd.f32 0.0, %v5503
    %v5505 = vpop.f32.mrf.mxu0
    %v5506 = vpop.f32.mrf.mxu0
    %v5507 = vpop.f32.mrf.mxu0
    %5508 = vdwg.mxu0
    %5509 = vmatprep.subr.bf16.mxu0 0
    %5510 = vmatpush1.bf16.msra.mxu0 %v5396
    %5511 = vmatprep.subr.bf16.mxu0 0
    %5512 = vmatpush1.bf16.msra.mxu0 %v5395
    %5513 = vmatprep.subr.bf16.mxu0 0
    %5514 = vmatpush1.bf16.msra.mxu0 %v5394
    %5515 = vmatprep.subr.bf16.mxu0 0
    %5516 = vmatpush1.bf16.msra.mxu0 %v5393
    %5517 = vmatprep.subr.bf16.mxu0 0
    %5518 = vmatpush1.bf16.msra.mxu0 %v5392
    %5519 = vmatprep.subr.bf16.mxu0 0
    %5520 = vmatpush1.bf16.msra.mxu0 %v5391
    %5521 = vmatprep.subr.bf16.mxu0 0
    %5522 = vmatpush1.bf16.msra.mxu0 %v5390
    %5523 = vmatprep.subr.bf16.mxu0 0
    %5524 = vmatpush1.bf16.msra.mxu0 %v5389
    %5525 = vmatprep.subr.bf16.mxu0 0
    %5526 = vmatpush2.bf16.msra.mxu0 %v5404
    %5527 = vmatprep.subr.bf16.mxu0 0
    %5528 = vmatpush2.bf16.msra.mxu0 %v5403
    %5529 = vmatprep.subr.bf16.mxu0 0
    %5530 = vmatpush2.bf16.msra.mxu0 %v5402
    %5531 = vmatprep.subr.bf16.mxu0 0
    %5532 = vmatpush2.bf16.msra.mxu0 %v5401
    %5533 = vmatprep.subr.bf16.mxu0 0
    %5534 = vmatpush2.bf16.msra.mxu0 %v5400
    %5535 = vmatprep.subr.bf16.mxu0 0
    %5536 = vmatpush2.bf16.msra.mxu0 %v5399
    %5537 = vmatprep.subr.bf16.mxu0 0
    %5538 = vmatpush2.bf16.msra.mxu0 %v5398
    %5539 = vmatprep.subr.bf16.mxu0 0
    %5540 = vmatpush2.bf16.msra.mxu0 %v5397
    %5541 = vmatprep.mubr.bf16.mxu0 %v5164
    %5542 = vmatmul.mubr.bf16.gmra.mxu0 %v5163
    %v5543 = vpop.f32.mrf.mxu0
    %v5544 = vadd.f32 %v5472, %v5543
    %v5545 = vpop.f32.mrf.mxu0
    %v5546 = vpop.f32.mrf.mxu0
    %v5547 = vadd.f32 %v5475, %v5546
    %v5548 = vpop.f32.mrf.mxu0
    %5549 = vmatprep.mubr.bf16.mxu0 %v5168
    %5550 = vmatmul.mubr.bf16.gmra.mxu0 %v5167
    %v5551 = vpop.f32.mrf.mxu0
    %v5552 = vadd.f32 %v5480, %v5551
    %v5553 = vpop.f32.mrf.mxu0
    %v5554 = vpop.f32.mrf.mxu0
    %v5555 = vadd.f32 %v5483, %v5554
    %v5556 = vpop.f32.mrf.mxu0
    %5557 = vmatprep.mubr.bf16.mxu0 %v5172
    %5558 = vmatmul.mubr.bf16.gmra.mxu0 %v5171
    %v5559 = vpop.f32.mrf.mxu0
    %v5560 = vadd.f32 %v5488, %v5559
    %v5561 = vpop.f32.mrf.mxu0
    %v5562 = vpop.f32.mrf.mxu0
    %v5563 = vadd.f32 %v5491, %v5562
    %v5564 = vpop.f32.mrf.mxu0
    %5565 = vmatprep.mubr.bf16.mxu0 %v5176
    %5566 = vmatmul.mubr.bf16.gmra.mxu0 %v5175
    %v5567 = vpop.f32.mrf.mxu0
    %v5568 = vadd.f32 %v5496, %v5567
    %v5569 = vpop.f32.mrf.mxu0
    %v5570 = vpop.f32.mrf.mxu0
    %v5571 = vadd.f32 %v5499, %v5570
    %v5572 = vpop.f32.mrf.mxu0
    %5573 = vmatprep.mubr.bf16.mxu0 %v5180
    %5574 = vmatmul.mubr.bf16.gmra.mxu0 %v5179
    %v5575 = vpop.f32.mrf.mxu0
    %v5576 = vadd.f32 %v5504, %v5575
    %v5577 = vpop.f32.mrf.mxu0
    %v5578 = vpop.f32.mrf.mxu0
    %v5579 = vpop.f32.mrf.mxu0
    %5580 = vdwg.mxu0
    %v5581 = vadd.f32 %v5544, %v5547
    %v5582 = vadd.f32 %v5581, %v5552
    %v5583 = vadd.f32 %v5582, %v5555
    %v5584 = vadd.f32 %v5583, %v5560
    %v5585 = vadd.f32 %v5584, %v5563
    %v5586 = vadd.f32 %v5585, %v5568
    %v5587 = vadd.f32 %v5586, %v5571
    %v5588 = vadd.f32 %v5587, %v5576
    %v5589 = vrot.slane %v5588, 4
    %v5590 = vadd.f32 %v5588, %v5589
    %v5591 = vrot.slane %v5590, 2
    %v5592 = vadd.f32 %v5590, %v5591
    %v5593 = vrot.slane %v5592, 1
    %v5594 = vadd.f32 %v5592, %v5593
    %v5595 = vrcp.pop 72.0
    %v5596 = vmul.f32 %v5594, %v5595
    %v5597 = vsub.f32 %v5544, %v5596
    %v5598 = vsub.f32 %v5547, %v5596
    %v5599 = vsub.f32 %v5552, %v5596
    %v5600 = vsub.f32 %v5555, %v5596
    %v5601 = vsub.f32 %v5560, %v5596
    %v5602 = vsub.f32 %v5563, %v5596
    %v5603 = vsub.f32 %v5568, %v5596
    %v5604 = vsub.f32 %v5571, %v5596
    %v5605 = vsub.f32 %v5576, %v5596
    %v5606 = vmul.f32 %v5597, %v5597
    %v5607 = vmul.f32 %v5598, %v5598
    %v5608 = vmul.f32 %v5599, %v5599
    %v5609 = vmul.f32 %v5600, %v5600
    %v5610 = vmul.f32 %v5601, %v5601
    %v5611 = vmul.f32 %v5602, %v5602
    %v5612 = vmul.f32 %v5603, %v5603
    %v5613 = vmul.f32 %v5604, %v5604
    %v5614 = vmul.f32 %v5605, %v5605
    %v5615 = vadd.f32 %v5606, %v5607
    %v5616 = vadd.f32 %v5615, %v5608
    %v5617 = vadd.f32 %v5616, %v5609
    %v5618 = vadd.f32 %v5617, %v5610
    %v5619 = vadd.f32 %v5618, %v5611
    %v5620 = vadd.f32 %v5619, %v5612
    %v5621 = vadd.f32 %v5620, %v5613
    %v5622 = vadd.f32 %v5621, %v5614
    %v5623 = vrot.slane %v5622, 4
    %v5624 = vadd.f32 %v5622, %v5623
    %v5625 = vrot.slane %v5624, 2
    %v5626 = vadd.f32 %v5624, %v5625
    %v5627 = vrot.slane %v5626, 1
    %v5628 = vadd.f32 %v5626, %v5627
    %v5629 = vmul.f32 %v5628, %v5595
    %v5630 = vadd.f32 %v5629, 1e-05
    %v5631 = vrsqrt.pop %v5630
    %v5632 = vmul.f32 %v5597, %v5631
    %v5633 = vmul.f32 %v5598, %v5631
    %v5634 = vmul.f32 %v5599, %v5631
    %v5635 = vmul.f32 %v5600, %v5631
    %v5636 = vmul.f32 %v5601, %v5631
    %v5637 = vmul.f32 %v5602, %v5631
    %v5638 = vmul.f32 %v5603, %v5631
    %v5639 = vmul.f32 %v5604, %v5631
    %v5640 = vmul.f32 %v5605, %v5631
    %v5641 = vld [vmem:[%s14] sm:$0x1]
    %v5643 = vlaneseq
    %v5644 = vshrl.u32 %v5643, 7
    %v5645 = vsub.s32 0, %v5644
    %v5646 = vrot.slane %v5641, %v5645
    %v5648 = vmul.f32 %v5632, %v5646
    %v5649 = vmul.f32 %v5633, %v5646
    %v5650 = vmul.f32 %v5634, %v5646
    %v5651 = vmul.f32 %v5635, %v5646
    %v5652 = vmul.f32 %v5636, %v5646
    %v5653 = vmul.f32 %v5637, %v5646
    %v5654 = vmul.f32 %v5638, %v5646
    %v5655 = vmul.f32 %v5639, %v5646
    %v5656 = vmul.f32 %v5640, %v5646
    %v5657 = vld [vmem:[%s15] sm:$0x1]
    %v5659 = vlaneseq
    %v5660 = vshrl.u32 %v5659, 7
    %v5661 = vsub.s32 0, %v5660
    %v5662 = vrot.slane %v5657, %v5661
    %v5664 = vadd.f32 %v5648, %v5662
    %v5665 = vadd.f32 %v5649, %v5662
    %v5666 = vadd.f32 %v5650, %v5662
    %v5667 = vadd.f32 %v5651, %v5662
    %v5668 = vadd.f32 %v5652, %v5662
    %v5669 = vadd.f32 %v5653, %v5662
    %v5670 = vadd.f32 %v5654, %v5662
    %v5671 = vadd.f32 %v5655, %v5662
    %v5672 = vadd.f32 %v5656, %v5662
    %v5673 = vmax.f32 %v5664, 0.0
    %v5674 = vmax.f32 %v5665, 0.0
    %v5675 = vmax.f32 %v5666, 0.0
    %v5676 = vmax.f32 %v5667, 0.0
    %v5677 = vmax.f32 %v5668, 0.0
    %v5678 = vmax.f32 %v5669, 0.0
    %v5679 = vmax.f32 %v5670, 0.0
    %v5680 = vmax.f32 %v5671, 0.0
    %v5681 = vmax.f32 %v5672, 0.0
    %v5691 = vcombine.high %v5673, %v5673
    %v5693 = vunpack.c.l.s4 1983009808
    %v5694 = vunpack.c.0.s8 %v5693
    %v5695 = vlaneseq
    %v5696 = vshrl.u32 %v5695, 7
    %v5697 = vsub.s32 %v5694, %v5696
    %v5698 = vrot.slane %v5673, %v5697
    %v5700 = vunpack.c.l.s4 1983009808
    %v5701 = vunpack.c.0.s8 %v5700
    %v5702 = vlaneseq
    %v5703 = vshrl.u32 %v5702, 7
    %v5704 = vsub.s32 %v5701, %v5703
    %v5705 = vrot.slane %v5691, %v5704
    %v5706 = vcombine.high %v5698, %v5698
    %v5707 = vcombine.high %v5705, %v5705
    %v5708 = vcombine.high %v5674, %v5674
    %v5710 = vunpack.c.l.s4 1983009808
    %v5711 = vunpack.c.0.s8 %v5710
    %v5712 = vlaneseq
    %v5713 = vshrl.u32 %v5712, 7
    %v5714 = vsub.s32 %v5711, %v5713
    %v5715 = vrot.slane %v5674, %v5714
    %v5717 = vunpack.c.l.s4 1983009808
    %v5718 = vunpack.c.0.s8 %v5717
    %v5719 = vlaneseq
    %v5720 = vshrl.u32 %v5719, 7
    %v5721 = vsub.s32 %v5718, %v5720
    %v5722 = vrot.slane %v5708, %v5721
    %v5723 = vcombine.high %v5715, %v5715
    %v5724 = vcombine.high %v5722, %v5722
    %v5725 = vcombine.high %v5675, %v5675
    %v5727 = vunpack.c.l.s4 1983009808
    %v5728 = vunpack.c.0.s8 %v5727
    %v5729 = vlaneseq
    %v5730 = vshrl.u32 %v5729, 7
    %v5731 = vsub.s32 %v5728, %v5730
    %v5732 = vrot.slane %v5675, %v5731
    %v5734 = vunpack.c.l.s4 1983009808
    %v5735 = vunpack.c.0.s8 %v5734
    %v5736 = vlaneseq
    %v5737 = vshrl.u32 %v5736, 7
    %v5738 = vsub.s32 %v5735, %v5737
    %v5739 = vrot.slane %v5725, %v5738
    %v5740 = vcombine.high %v5732, %v5732
    %v5741 = vcombine.high %v5739, %v5739
    %v5742 = vcombine.high %v5676, %v5676
    %v5744 = vunpack.c.l.s4 1983009808
    %v5745 = vunpack.c.0.s8 %v5744
    %v5746 = vlaneseq
    %v5747 = vshrl.u32 %v5746, 7
    %v5748 = vsub.s32 %v5745, %v5747
    %v5749 = vrot.slane %v5676, %v5748
    %v5751 = vunpack.c.l.s4 1983009808
    %v5752 = vunpack.c.0.s8 %v5751
    %v5753 = vlaneseq
    %v5754 = vshrl.u32 %v5753, 7
    %v5755 = vsub.s32 %v5752, %v5754
    %v5756 = vrot.slane %v5742, %v5755
    %v5757 = vcombine.high %v5749, %v5749
    %v5758 = vcombine.high %v5756, %v5756
    %v5759 = vcombine.high %v5677, %v5677
    %v5761 = vunpack.c.l.s4 1983009808
    %v5762 = vunpack.c.0.s8 %v5761
    %v5763 = vlaneseq
    %v5764 = vshrl.u32 %v5763, 7
    %v5765 = vsub.s32 %v5762, %v5764
    %v5766 = vrot.slane %v5677, %v5765
    %v5768 = vunpack.c.l.s4 1983009808
    %v5769 = vunpack.c.0.s8 %v5768
    %v5770 = vlaneseq
    %v5771 = vshrl.u32 %v5770, 7
    %v5772 = vsub.s32 %v5769, %v5771
    %v5773 = vrot.slane %v5759, %v5772
    %v5774 = vcombine.high %v5766, %v5766
    %v5775 = vcombine.high %v5773, %v5773
    %v5776 = vcombine.high %v5678, %v5678
    %v5778 = vunpack.c.l.s4 1983009808
    %v5779 = vunpack.c.0.s8 %v5778
    %v5780 = vlaneseq
    %v5781 = vshrl.u32 %v5780, 7
    %v5782 = vsub.s32 %v5779, %v5781
    %v5783 = vrot.slane %v5678, %v5782
    %v5785 = vunpack.c.l.s4 1983009808
    %v5786 = vunpack.c.0.s8 %v5785
    %v5787 = vlaneseq
    %v5788 = vshrl.u32 %v5787, 7
    %v5789 = vsub.s32 %v5786, %v5788
    %v5790 = vrot.slane %v5776, %v5789
    %v5791 = vcombine.high %v5783, %v5783
    %v5792 = vcombine.high %v5790, %v5790
    %v5793 = vcombine.high %v5679, %v5679
    %v5795 = vunpack.c.l.s4 1983009808
    %v5796 = vunpack.c.0.s8 %v5795
    %v5797 = vlaneseq
    %v5798 = vshrl.u32 %v5797, 7
    %v5799 = vsub.s32 %v5796, %v5798
    %v5800 = vrot.slane %v5679, %v5799
    %v5802 = vunpack.c.l.s4 1983009808
    %v5803 = vunpack.c.0.s8 %v5802
    %v5804 = vlaneseq
    %v5805 = vshrl.u32 %v5804, 7
    %v5806 = vsub.s32 %v5803, %v5805
    %v5807 = vrot.slane %v5793, %v5806
    %v5808 = vcombine.high %v5800, %v5800
    %v5809 = vcombine.high %v5807, %v5807
    %v5810 = vcombine.high %v5680, %v5680
    %v5812 = vunpack.c.l.s4 1983009808
    %v5813 = vunpack.c.0.s8 %v5812
    %v5814 = vlaneseq
    %v5815 = vshrl.u32 %v5814, 7
    %v5816 = vsub.s32 %v5813, %v5815
    %v5817 = vrot.slane %v5680, %v5816
    %v5819 = vunpack.c.l.s4 1983009808
    %v5820 = vunpack.c.0.s8 %v5819
    %v5821 = vlaneseq
    %v5822 = vshrl.u32 %v5821, 7
    %v5823 = vsub.s32 %v5820, %v5822
    %v5824 = vrot.slane %v5810, %v5823
    %v5825 = vcombine.high %v5817, %v5817
    %v5826 = vcombine.high %v5824, %v5824
    %v5827 = vcombine.high %v5681, %v5681
    %v5829 = vunpack.c.l.s4 1983009808
    %v5830 = vunpack.c.0.s8 %v5829
    %v5831 = vlaneseq
    %v5832 = vshrl.u32 %v5831, 7
    %v5833 = vsub.s32 %v5830, %v5832
    %v5834 = vrot.slane %v5681, %v5833
    %v5836 = vunpack.c.l.s4 1983009808
    %v5837 = vunpack.c.0.s8 %v5836
    %v5838 = vlaneseq
    %v5839 = vshrl.u32 %v5838, 7
    %v5840 = vsub.s32 %v5837, %v5839
    %v5841 = vrot.slane %v5827, %v5840
    %v5842 = vcombine.high %v5834, %v5834
    %v5843 = vcombine.high %v5841, %v5841
    %5844 = vst [vmem:[#allocation7] sm:$0xff] 0.0
    %5845 = vst [vmem:[#allocation7 + $0x8] sm:$0xff] 0.0
    %5846 = vst [vmem:[#allocation7 + $0x10] sm:$0xff] 0.0
    %5847 = vst [vmem:[#allocation7 + $0x18] sm:$0xff] 0.0
    %5848 = vst [vmem:[#allocation7 + $0x20] sm:$0xff] 0.0
    %5849 = vst [vmem:[#allocation7 + $0x28] sm:$0xff] 0.0
    %5850 = vst [vmem:[#allocation7 + $0x30] sm:$0xff] 0.0
    %5851 = vst [vmem:[#allocation7 + $0x38] sm:$0xff] 0.0
    %5852 = vst [vmem:[#allocation7 + $0x40] sm:$0xff] 0.0
    %5853 = vst [vmem:[#allocation7 + $0x48] sm:$0xff] 0.0
    %5854 = vst [vmem:[#allocation7 + $0x50] sm:$0xff] 0.0
    %5855 = vst [vmem:[#allocation7 + $0x58] sm:$0xff] 0.0
    %5856 = vst [vmem:[#allocation7 + $0x60] sm:$0xff] 0.0
    %5857 = vst [vmem:[#allocation7 + $0x68] sm:$0xff] 0.0
    %5858 = vst [vmem:[#allocation7 + $0x70] sm:$0xff] 0.0
    %5859 = vst [vmem:[#allocation7 + $0x78] sm:$0xff] 0.0
    %v5860 = vcombine.low %v5698, %v5706
    %v5862 = vunpack.c.l.s4 1983009808
    %v5863 = vunpack.c.0.s8 %v5862
    %v5864 = vlaneseq
    %v5865 = vshrl.u32 %v5864, 7
    %v5866 = vsub.s32 %v5863, %v5865
    %v5867 = vrot.slane %v5860, %v5866
    %v5869 = vunpack.c.l.s4 1983009808
    %v5870 = vunpack.c.0.s8 %v5869
    %v5871 = vlaneseq
    %v5872 = vshrl.u32 %v5871, 7
    %v5873 = vsub.s32 %v5870, %v5872
    %v5874 = vrot.slane %v5705, %v5873
    %v5875 = vcombine.low %v5867, %v5874
    %v5876 = vcombine.low %v5707, %v5715
    %v5878 = vunpack.c.l.s4 1983009808
    %v5879 = vunpack.c.0.s8 %v5878
    %v5880 = vlaneseq
    %v5881 = vshrl.u32 %v5880, 7
    %v5882 = vsub.s32 %v5879, %v5881
    %v5883 = vrot.slane %v5876, %v5882
    %v5885 = vunpack.c.l.s4 1983009808
    %v5886 = vunpack.c.0.s8 %v5885
    %v5887 = vlaneseq
    %v5888 = vshrl.u32 %v5887, 7
    %v5889 = vsub.s32 %v5886, %v5888
    %v5890 = vrot.slane %v5723, %v5889
    %v5891 = vcombine.low %v5883, %v5890
    %v5892 = vcombine.low %v5722, %v5724
    %v5894 = vunpack.c.l.s4 1983009808
    %v5895 = vunpack.c.0.s8 %v5894
    %v5896 = vlaneseq
    %v5897 = vshrl.u32 %v5896, 7
    %v5898 = vsub.s32 %v5895, %v5897
    %v5899 = vrot.slane %v5892, %v5898
    %v5901 = vunpack.c.l.s4 1983009808
    %v5902 = vunpack.c.0.s8 %v5901
    %v5903 = vlaneseq
    %v5904 = vshrl.u32 %v5903, 7
    %v5905 = vsub.s32 %v5902, %v5904
    %v5906 = vrot.slane %v5732, %v5905
    %v5907 = vcombine.low %v5899, %v5906
    %v5908 = vcombine.low %v5740, %v5739
    %v5910 = vunpack.c.l.s4 1983009808
    %v5911 = vunpack.c.0.s8 %v5910
    %v5912 = vlaneseq
    %v5913 = vshrl.u32 %v5912, 7
    %v5914 = vsub.s32 %v5911, %v5913
    %v5915 = vrot.slane %v5908, %v5914
    %v5917 = vunpack.c.l.s4 1983009808
    %v5918 = vunpack.c.0.s8 %v5917
    %v5919 = vlaneseq
    %v5920 = vshrl.u32 %v5919, 7
    %v5921 = vsub.s32 %v5918, %v5920
    %v5922 = vrot.slane %v5741, %v5921
    %v5923 = vcombine.low %v5915, %v5922
    %v5924 = vcombine.low %v5749, %v5757
    %v5926 = vunpack.c.l.s4 1983009808
    %v5927 = vunpack.c.0.s8 %v5926
    %v5928 = vlaneseq
    %v5929 = vshrl.u32 %v5928, 7
    %v5930 = vsub.s32 %v5927, %v5929
    %v5931 = vrot.slane %v5924, %v5930
    %v5933 = vunpack.c.l.s4 1983009808
    %v5934 = vunpack.c.0.s8 %v5933
    %v5935 = vlaneseq
    %v5936 = vshrl.u32 %v5935, 7
    %v5937 = vsub.s32 %v5934, %v5936
    %v5938 = vrot.slane %v5756, %v5937
    %v5939 = vcombine.low %v5931, %v5938
    %v5940 = vcombine.low %v5758, %v5766
    %v5942 = vunpack.c.l.s4 1983009808
    %v5943 = vunpack.c.0.s8 %v5942
    %v5944 = vlaneseq
    %v5945 = vshrl.u32 %v5944, 7
    %v5946 = vsub.s32 %v5943, %v5945
    %v5947 = vrot.slane %v5940, %v5946
    %v5949 = vunpack.c.l.s4 1983009808
    %v5950 = vunpack.c.0.s8 %v5949
    %v5951 = vlaneseq
    %v5952 = vshrl.u32 %v5951, 7
    %v5953 = vsub.s32 %v5950, %v5952
    %v5954 = vrot.slane %v5774, %v5953
    %v5955 = vcombine.low %v5947, %v5954
    %v5956 = vcombine.low %v5773, %v5775
    %v5958 = vunpack.c.l.s4 1983009808
    %v5959 = vunpack.c.0.s8 %v5958
    %v5960 = vlaneseq
    %v5961 = vshrl.u32 %v5960, 7
    %v5962 = vsub.s32 %v5959, %v5961
    %v5963 = vrot.slane %v5956, %v5962
    %v5965 = vunpack.c.l.s4 1983009808
    %v5966 = vunpack.c.0.s8 %v5965
    %v5967 = vlaneseq
    %v5968 = vshrl.u32 %v5967, 7
    %v5969 = vsub.s32 %v5966, %v5968
    %v5970 = vrot.slane %v5783, %v5969
    %v5971 = vcombine.low %v5963, %v5970
    %v5972 = vcombine.low %v5791, %v5790
    %v5974 = vunpack.c.l.s4 1983009808
    %v5975 = vunpack.c.0.s8 %v5974
    %v5976 = vlaneseq
    %v5977 = vshrl.u32 %v5976, 7
    %v5978 = vsub.s32 %v5975, %v5977
    %v5979 = vrot.slane %v5972, %v5978
    %v5981 = vunpack.c.l.s4 1983009808
    %v5982 = vunpack.c.0.s8 %v5981
    %v5983 = vlaneseq
    %v5984 = vshrl.u32 %v5983, 7
    %v5985 = vsub.s32 %v5982, %v5984
    %v5986 = vrot.slane %v5792, %v5985
    %v5987 = vcombine.low %v5979, %v5986
    %v5988 = vcombine.low %v5800, %v5808
    %v5990 = vunpack.c.l.s4 1983009808
    %v5991 = vunpack.c.0.s8 %v5990
    %v5992 = vlaneseq
    %v5993 = vshrl.u32 %v5992, 7
    %v5994 = vsub.s32 %v5991, %v5993
    %v5995 = vrot.slane %v5988, %v5994
    %v5997 = vunpack.c.l.s4 1983009808
    %v5998 = vunpack.c.0.s8 %v5997
    %v5999 = vlaneseq
    %v6000 = vshrl.u32 %v5999, 7
    %v6001 = vsub.s32 %v5998, %v6000
    %v6002 = vrot.slane %v5807, %v6001
    %v6003 = vcombine.low %v5995, %v6002
    %v6004 = vcombine.low %v5809, %v5817
    %v6006 = vunpack.c.l.s4 1983009808
    %v6007 = vunpack.c.0.s8 %v6006
    %v6008 = vlaneseq
    %v6009 = vshrl.u32 %v6008, 7
    %v6010 = vsub.s32 %v6007, %v6009
    %v6011 = vrot.slane %v6004, %v6010
    %v6013 = vunpack.c.l.s4 1983009808
    %v6014 = vunpack.c.0.s8 %v6013
    %v6015 = vlaneseq
    %v6016 = vshrl.u32 %v6015, 7
    %v6017 = vsub.s32 %v6014, %v6016
    %v6018 = vrot.slane %v5825, %v6017
    %v6019 = vcombine.low %v6011, %v6018
    %v6020 = vcombine.low %v5824, %v5826
    %v6022 = vunpack.c.l.s4 1983009808
    %v6023 = vunpack.c.0.s8 %v6022
    %v6024 = vlaneseq
    %v6025 = vshrl.u32 %v6024, 7
    %v6026 = vsub.s32 %v6023, %v6025
    %v6027 = vrot.slane %v6020, %v6026
    %v6029 = vunpack.c.l.s4 1983009808
    %v6030 = vunpack.c.0.s8 %v6029
    %v6031 = vlaneseq
    %v6032 = vshrl.u32 %v6031, 7
    %v6033 = vsub.s32 %v6030, %v6032
    %v6034 = vrot.slane %v5834, %v6033
    %v6035 = vcombine.low %v6027, %v6034
    %v6036 = vcombine.low %v5842, %v5841
    %v6038 = vunpack.c.l.s4 1983009808
    %v6039 = vunpack.c.0.s8 %v6038
    %v6040 = vlaneseq
    %v6041 = vshrl.u32 %v6040, 7
    %v6042 = vsub.s32 %v6039, %v6041
    %v6043 = vrot.slane %v6036, %v6042
    %v6045 = vunpack.c.l.s4 1983009808
    %v6046 = vunpack.c.0.s8 %v6045
    %v6047 = vlaneseq
    %v6048 = vshrl.u32 %v6047, 7
    %v6049 = vsub.s32 %v6046, %v6048
    %v6050 = vrot.slane %v5843, %v6049
    %v6051 = vcombine.low %v6043, %v6050
    %s6064 = scalar_lea.vmem [#allocation7], 8
    %6065 = vst [vmem:[%s6064 + $0x1] sm:$0x3f] %v5875
    %6066 = vst [vmem:[%s6064 + $0x9] sm:$0x3f] %v5891
    %6067 = vst [vmem:[%s6064 + $0x11] sm:$0x3f] %v5907
    %6068 = vst [vmem:[%s6064 + $0x19] sm:$0x3f] %v5923
    %6069 = vst [vmem:[%s6064 + $0x21] sm:$0x3f] %v5939
    %6070 = vst [vmem:[%s6064 + $0x29] sm:$0x3f] %v5955
    %6071 = vst [vmem:[%s6064 + $0x41] sm:$0x3f] %v5971
    %6072 = vst [vmem:[%s6064 + $0x49] sm:$0x3f] %v5987
    %6073 = vst [vmem:[%s6064 + $0x51] sm:$0x3f] %v6003
    %6074 = vst [vmem:[%s6064 + $0x59] sm:$0x3f] %v6019
    %6075 = vst [vmem:[%s6064 + $0x61] sm:$0x3f] %v6035
    %6076 = vst [vmem:[%s6064 + $0x69] sm:$0x3f] %v6051
    %v6077 = vld [vmem:[#allocation7] sm:$0xff]
    %v6078 = vld [vmem:[#allocation7 + $0x8] sm:$0xff]
    %v6079 = vld [vmem:[#allocation7 + $0x10] sm:$0xff]
    %v6080 = vld [vmem:[#allocation7 + $0x18] sm:$0xff]
    %v6081 = vld [vmem:[#allocation7 + $0x20] sm:$0xff]
    %v6082 = vld [vmem:[#allocation7 + $0x28] sm:$0xff]
    %v6083 = vld [vmem:[#allocation7 + $0x30] sm:$0xff]
    %v6084 = vld [vmem:[#allocation7 + $0x38] sm:$0xff]
    %v6085 = vld [vmem:[#allocation7 + $0x40] sm:$0xff]
    %v6086 = vld [vmem:[#allocation7 + $0x48] sm:$0xff]
    %v6087 = vld [vmem:[#allocation7 + $0x50] sm:$0xff]
    %v6088 = vld [vmem:[#allocation7 + $0x58] sm:$0xff]
    %v6089 = vld [vmem:[#allocation7 + $0x60] sm:$0xff]
    %v6090 = vld [vmem:[#allocation7 + $0x68] sm:$0xff]
    %v6091 = vld [vmem:[#allocation7 + $0x70] sm:$0xff]
    %v6092 = vld [vmem:[#allocation7 + $0x78] sm:$0xff]
    %v6107 = vrot.slane %v6077, 1
    %v6108 = vrot.slane %v6078, 1
    %v6109 = vrot.slane %v6079, 1
    %v6110 = vrot.slane %v6080, 1
    %v6111 = vrot.slane %v6081, 1
    %v6112 = vrot.slane %v6082, 1
    %v6113 = vrot.slane %v6083, 1
    %v6114 = vrot.slane %v6085, 1
    %v6115 = vrot.slane %v6086, 1
    %v6116 = vrot.slane %v6087, 1
    %v6117 = vrot.slane %v6088, 1
    %v6118 = vrot.slane %v6089, 1
    %v6119 = vrot.slane %v6090, 1
    %v6120 = vrot.slane %v6091, 1
    %v6123 = vrot.slane %v6084, 1
    %v6124 = vrot.slane %v6092, 1
    %v6125 = vcombine.low %v6077, %v6107
    %v6126 = vcombine.high %v6077, %v6107
    %v6127 = vcombine.low %v6078, %v6108
    %v6128 = vcombine.high %v6078, %v6108
    %v6130 = vunpack.c.l.s4 1966171168
    %v6131 = vunpack.c.0.s8 %v6130
    %v6132 = vlaneseq
    %v6133 = vshrl.u32 %v6132, 7
    %v6134 = vsub.s32 %v6131, %v6133
    %v6135 = vrot.slane %v6125, %v6134
    %v6137 = vunpack.c.l.s4 1966171168
    %v6138 = vunpack.c.0.s8 %v6137
    %v6139 = vlaneseq
    %v6140 = vshrl.u32 %v6139, 7
    %v6141 = vsub.s32 %v6138, %v6140
    %v6142 = vrot.slane %v6126, %v6141
    %v6144 = vunpack.c.l.s4 1966171168
    %v6145 = vunpack.c.0.s8 %v6144
    %v6146 = vlaneseq
    %v6147 = vshrl.u32 %v6146, 7
    %v6148 = vsub.s32 %v6145, %v6147
    %v6149 = vrot.slane %v6127, %v6148
    %v6151 = vunpack.c.l.s4 1966171168
    %v6152 = vunpack.c.0.s8 %v6151
    %v6153 = vlaneseq
    %v6154 = vshrl.u32 %v6153, 7
    %v6155 = vsub.s32 %v6152, %v6154
    %v6156 = vrot.slane %v6128, %v6155
    %v6157 = vcombine.low %v6135, %v6149
    %v6158 = vcombine.high %v6135, %v6149
    %v6159 = vcombine.low %v6142, %v6156
    %v6160 = vcombine.high %v6142, %v6156
    %v6162 = vunpack.c.l.s4 1966171168
    %v6163 = vunpack.c.0.s8 %v6162
    %v6164 = vlaneseq
    %v6165 = vshrl.u32 %v6164, 7
    %v6166 = vsub.s32 %v6163, %v6165
    %v6167 = vrot.slane %v6157, %v6166
    %v6169 = vunpack.c.l.s4 1966171168
    %v6170 = vunpack.c.0.s8 %v6169
    %v6171 = vlaneseq
    %v6172 = vshrl.u32 %v6171, 7
    %v6173 = vsub.s32 %v6170, %v6172
    %v6174 = vrot.slane %v6159, %v6173
    %v6176 = vunpack.c.l.s4 1966171168
    %v6177 = vunpack.c.0.s8 %v6176
    %v6178 = vlaneseq
    %v6179 = vshrl.u32 %v6178, 7
    %v6180 = vsub.s32 %v6177, %v6179
    %v6181 = vrot.slane %v6158, %v6180
    %v6183 = vunpack.c.l.s4 1966171168
    %v6184 = vunpack.c.0.s8 %v6183
    %v6185 = vlaneseq
    %v6186 = vshrl.u32 %v6185, 7
    %v6187 = vsub.s32 %v6184, %v6186
    %v6188 = vrot.slane %v6160, %v6187
    %v6189 = vcombine.high %v6167, %v6167
    %v6190 = vcombine.high %v6174, %v6174
    %v6191 = vcombine.high %v6181, %v6181
    %v6192 = vcombine.low %v6079, %v6109
    %v6193 = vcombine.high %v6079, %v6109
    %v6195 = vunpack.c.l.s4 1966171168
    %v6196 = vunpack.c.0.s8 %v6195
    %v6197 = vlaneseq
    %v6198 = vshrl.u32 %v6197, 7
    %v6199 = vsub.s32 %v6196, %v6198
    %v6200 = vrot.slane %v6192, %v6199
    %v6202 = vunpack.c.l.s4 1966171168
    %v6203 = vunpack.c.0.s8 %v6202
    %v6204 = vlaneseq
    %v6205 = vshrl.u32 %v6204, 7
    %v6206 = vsub.s32 %v6203, %v6205
    %v6207 = vrot.slane %v6193, %v6206
    %v6208 = vcombine.low %v6149, %v6200
    %v6209 = vcombine.high %v6149, %v6200
    %v6210 = vcombine.low %v6156, %v6207
    %v6211 = vcombine.high %v6156, %v6207
    %v6213 = vunpack.c.l.s4 1966171168
    %v6214 = vunpack.c.0.s8 %v6213
    %v6215 = vlaneseq
    %v6216 = vshrl.u32 %v6215, 7
    %v6217 = vsub.s32 %v6214, %v6216
    %v6218 = vrot.slane %v6208, %v6217
    %v6220 = vunpack.c.l.s4 1966171168
    %v6221 = vunpack.c.0.s8 %v6220
    %v6222 = vlaneseq
    %v6223 = vshrl.u32 %v6222, 7
    %v6224 = vsub.s32 %v6221, %v6223
    %v6225 = vrot.slane %v6210, %v6224
    %v6227 = vunpack.c.l.s4 1966171168
    %v6228 = vunpack.c.0.s8 %v6227
    %v6229 = vlaneseq
    %v6230 = vshrl.u32 %v6229, 7
    %v6231 = vsub.s32 %v6228, %v6230
    %v6232 = vrot.slane %v6209, %v6231
    %v6234 = vunpack.c.l.s4 1966171168
    %v6235 = vunpack.c.0.s8 %v6234
    %v6236 = vlaneseq
    %v6237 = vshrl.u32 %v6236, 7
    %v6238 = vsub.s32 %v6235, %v6237
    %v6239 = vrot.slane %v6211, %v6238
    %v6240 = vcombine.high %v6218, %v6218
    %v6241 = vcombine.high %v6225, %v6225
    %v6242 = vcombine.high %v6232, %v6232
    %v6243 = vcombine.low %v6080, %v6110
    %v6244 = vcombine.high %v6080, %v6110
    %v6246 = vunpack.c.l.s4 1966171168
    %v6247 = vunpack.c.0.s8 %v6246
    %v6248 = vlaneseq
    %v6249 = vshrl.u32 %v6248, 7
    %v6250 = vsub.s32 %v6247, %v6249
    %v6251 = vrot.slane %v6243, %v6250
    %v6253 = vunpack.c.l.s4 1966171168
    %v6254 = vunpack.c.0.s8 %v6253
    %v6255 = vlaneseq
    %v6256 = vshrl.u32 %v6255, 7
    %v6257 = vsub.s32 %v6254, %v6256
    %v6258 = vrot.slane %v6244, %v6257
    %v6259 = vcombine.low %v6200, %v6251
    %v6260 = vcombine.high %v6200, %v6251
    %v6261 = vcombine.low %v6207, %v6258
    %v6262 = vcombine.high %v6207, %v6258
    %v6264 = vunpack.c.l.s4 1966171168
    %v6265 = vunpack.c.0.s8 %v6264
    %v6266 = vlaneseq
    %v6267 = vshrl.u32 %v6266, 7
    %v6268 = vsub.s32 %v6265, %v6267
    %v6269 = vrot.slane %v6259, %v6268
    %v6271 = vunpack.c.l.s4 1966171168
    %v6272 = vunpack.c.0.s8 %v6271
    %v6273 = vlaneseq
    %v6274 = vshrl.u32 %v6273, 7
    %v6275 = vsub.s32 %v6272, %v6274
    %v6276 = vrot.slane %v6261, %v6275
    %v6278 = vunpack.c.l.s4 1966171168
    %v6279 = vunpack.c.0.s8 %v6278
    %v6280 = vlaneseq
    %v6281 = vshrl.u32 %v6280, 7
    %v6282 = vsub.s32 %v6279, %v6281
    %v6283 = vrot.slane %v6260, %v6282
    %v6285 = vunpack.c.l.s4 1966171168
    %v6286 = vunpack.c.0.s8 %v6285
    %v6287 = vlaneseq
    %v6288 = vshrl.u32 %v6287, 7
    %v6289 = vsub.s32 %v6286, %v6288
    %v6290 = vrot.slane %v6262, %v6289
    %v6291 = vcombine.high %v6269, %v6269
    %v6292 = vcombine.high %v6276, %v6276
    %v6293 = vcombine.high %v6283, %v6283
    %v6294 = vcombine.low %v6081, %v6111
    %v6295 = vcombine.high %v6081, %v6111
    %v6297 = vunpack.c.l.s4 1966171168
    %v6298 = vunpack.c.0.s8 %v6297
    %v6299 = vlaneseq
    %v6300 = vshrl.u32 %v6299, 7
    %v6301 = vsub.s32 %v6298, %v6300
    %v6302 = vrot.slane %v6294, %v6301
    %v6304 = vunpack.c.l.s4 1966171168
    %v6305 = vunpack.c.0.s8 %v6304
    %v6306 = vlaneseq
    %v6307 = vshrl.u32 %v6306, 7
    %v6308 = vsub.s32 %v6305, %v6307
    %v6309 = vrot.slane %v6295, %v6308
    %v6310 = vcombine.low %v6251, %v6302
    %v6311 = vcombine.high %v6251, %v6302
    %v6312 = vcombine.low %v6258, %v6309
    %v6313 = vcombine.high %v6258, %v6309
    %v6315 = vunpack.c.l.s4 1966171168
    %v6316 = vunpack.c.0.s8 %v6315
    %v6317 = vlaneseq
    %v6318 = vshrl.u32 %v6317, 7
    %v6319 = vsub.s32 %v6316, %v6318
    %v6320 = vrot.slane %v6310, %v6319
    %v6322 = vunpack.c.l.s4 1966171168
    %v6323 = vunpack.c.0.s8 %v6322
    %v6324 = vlaneseq
    %v6325 = vshrl.u32 %v6324, 7
    %v6326 = vsub.s32 %v6323, %v6325
    %v6327 = vrot.slane %v6312, %v6326
    %v6329 = vunpack.c.l.s4 1966171168
    %v6330 = vunpack.c.0.s8 %v6329
    %v6331 = vlaneseq
    %v6332 = vshrl.u32 %v6331, 7
    %v6333 = vsub.s32 %v6330, %v6332
    %v6334 = vrot.slane %v6311, %v6333
    %v6336 = vunpack.c.l.s4 1966171168
    %v6337 = vunpack.c.0.s8 %v6336
    %v6338 = vlaneseq
    %v6339 = vshrl.u32 %v6338, 7
    %v6340 = vsub.s32 %v6337, %v6339
    %v6341 = vrot.slane %v6313, %v6340
    %v6342 = vcombine.high %v6320, %v6320
    %v6343 = vcombine.high %v6327, %v6327
    %v6344 = vcombine.high %v6334, %v6334
    %v6345 = vcombine.low %v6082, %v6112
    %v6346 = vcombine.high %v6082, %v6112
    %v6348 = vunpack.c.l.s4 1966171168
    %v6349 = vunpack.c.0.s8 %v6348
    %v6350 = vlaneseq
    %v6351 = vshrl.u32 %v6350, 7
    %v6352 = vsub.s32 %v6349, %v6351
    %v6353 = vrot.slane %v6345, %v6352
    %v6355 = vunpack.c.l.s4 1966171168
    %v6356 = vunpack.c.0.s8 %v6355
    %v6357 = vlaneseq
    %v6358 = vshrl.u32 %v6357, 7
    %v6359 = vsub.s32 %v6356, %v6358
    %v6360 = vrot.slane %v6346, %v6359
    %v6361 = vcombine.low %v6302, %v6353
    %v6362 = vcombine.high %v6302, %v6353
    %v6363 = vcombine.low %v6309, %v6360
    %v6364 = vcombine.high %v6309, %v6360
    %v6366 = vunpack.c.l.s4 1966171168
    %v6367 = vunpack.c.0.s8 %v6366
    %v6368 = vlaneseq
    %v6369 = vshrl.u32 %v6368, 7
    %v6370 = vsub.s32 %v6367, %v6369
    %v6371 = vrot.slane %v6361, %v6370
    %v6373 = vunpack.c.l.s4 1966171168
    %v6374 = vunpack.c.0.s8 %v6373
    %v6375 = vlaneseq
    %v6376 = vshrl.u32 %v6375, 7
    %v6377 = vsub.s32 %v6374, %v6376
    %v6378 = vrot.slane %v6363, %v6377
    %v6380 = vunpack.c.l.s4 1966171168
    %v6381 = vunpack.c.0.s8 %v6380
    %v6382 = vlaneseq
    %v6383 = vshrl.u32 %v6382, 7
    %v6384 = vsub.s32 %v6381, %v6383
    %v6385 = vrot.slane %v6362, %v6384
    %v6387 = vunpack.c.l.s4 1966171168
    %v6388 = vunpack.c.0.s8 %v6387
    %v6389 = vlaneseq
    %v6390 = vshrl.u32 %v6389, 7
    %v6391 = vsub.s32 %v6388, %v6390
    %v6392 = vrot.slane %v6364, %v6391
    %v6393 = vcombine.high %v6371, %v6371
    %v6394 = vcombine.high %v6378, %v6378
    %v6395 = vcombine.high %v6385, %v6385
    %v6396 = vcombine.low %v6083, %v6113
    %v6397 = vcombine.high %v6083, %v6113
    %v6399 = vunpack.c.l.s4 1966171168
    %v6400 = vunpack.c.0.s8 %v6399
    %v6401 = vlaneseq
    %v6402 = vshrl.u32 %v6401, 7
    %v6403 = vsub.s32 %v6400, %v6402
    %v6404 = vrot.slane %v6396, %v6403
    %v6406 = vunpack.c.l.s4 1966171168
    %v6407 = vunpack.c.0.s8 %v6406
    %v6408 = vlaneseq
    %v6409 = vshrl.u32 %v6408, 7
    %v6410 = vsub.s32 %v6407, %v6409
    %v6411 = vrot.slane %v6397, %v6410
    %v6412 = vcombine.low %v6353, %v6404
    %v6413 = vcombine.high %v6353, %v6404
    %v6414 = vcombine.low %v6360, %v6411
    %v6415 = vcombine.high %v6360, %v6411
    %v6417 = vunpack.c.l.s4 1966171168
    %v6418 = vunpack.c.0.s8 %v6417
    %v6419 = vlaneseq
    %v6420 = vshrl.u32 %v6419, 7
    %v6421 = vsub.s32 %v6418, %v6420
    %v6422 = vrot.slane %v6412, %v6421
    %v6424 = vunpack.c.l.s4 1966171168
    %v6425 = vunpack.c.0.s8 %v6424
    %v6426 = vlaneseq
    %v6427 = vshrl.u32 %v6426, 7
    %v6428 = vsub.s32 %v6425, %v6427
    %v6429 = vrot.slane %v6414, %v6428
    %v6431 = vunpack.c.l.s4 1966171168
    %v6432 = vunpack.c.0.s8 %v6431
    %v6433 = vlaneseq
    %v6434 = vshrl.u32 %v6433, 7
    %v6435 = vsub.s32 %v6432, %v6434
    %v6436 = vrot.slane %v6413, %v6435
    %v6438 = vunpack.c.l.s4 1966171168
    %v6439 = vunpack.c.0.s8 %v6438
    %v6440 = vlaneseq
    %v6441 = vshrl.u32 %v6440, 7
    %v6442 = vsub.s32 %v6439, %v6441
    %v6443 = vrot.slane %v6415, %v6442
    %v6444 = vcombine.high %v6422, %v6422
    %v6445 = vcombine.high %v6429, %v6429
    %v6446 = vcombine.high %v6436, %v6436
    %v6447 = vcombine.low %v6084, %v6123
    %v6448 = vcombine.high %v6084, %v6123
    %v6450 = vunpack.c.l.s4 1966171168
    %v6451 = vunpack.c.0.s8 %v6450
    %v6452 = vlaneseq
    %v6453 = vshrl.u32 %v6452, 7
    %v6454 = vsub.s32 %v6451, %v6453
    %v6455 = vrot.slane %v6447, %v6454
    %v6457 = vunpack.c.l.s4 1966171168
    %v6458 = vunpack.c.0.s8 %v6457
    %v6459 = vlaneseq
    %v6460 = vshrl.u32 %v6459, 7
    %v6461 = vsub.s32 %v6458, %v6460
    %v6462 = vrot.slane %v6448, %v6461
    %v6463 = vcombine.low %v6404, %v6455
    %v6464 = vcombine.high %v6404, %v6455
    %v6465 = vcombine.low %v6411, %v6462
    %v6466 = vcombine.high %v6411, %v6462
    %v6468 = vunpack.c.l.s4 1966171168
    %v6469 = vunpack.c.0.s8 %v6468
    %v6470 = vlaneseq
    %v6471 = vshrl.u32 %v6470, 7
    %v6472 = vsub.s32 %v6469, %v6471
    %v6473 = vrot.slane %v6463, %v6472
    %v6475 = vunpack.c.l.s4 1966171168
    %v6476 = vunpack.c.0.s8 %v6475
    %v6477 = vlaneseq
    %v6478 = vshrl.u32 %v6477, 7
    %v6479 = vsub.s32 %v6476, %v6478
    %v6480 = vrot.slane %v6465, %v6479
    %v6482 = vunpack.c.l.s4 1966171168
    %v6483 = vunpack.c.0.s8 %v6482
    %v6484 = vlaneseq
    %v6485 = vshrl.u32 %v6484, 7
    %v6486 = vsub.s32 %v6483, %v6485
    %v6487 = vrot.slane %v6464, %v6486
    %v6489 = vunpack.c.l.s4 1966171168
    %v6490 = vunpack.c.0.s8 %v6489
    %v6491 = vlaneseq
    %v6492 = vshrl.u32 %v6491, 7
    %v6493 = vsub.s32 %v6490, %v6492
    %v6494 = vrot.slane %v6466, %v6493
    %v6495 = vcombine.high %v6473, %v6473
    %v6496 = vcombine.high %v6480, %v6480
    %v6497 = vcombine.high %v6487, %v6487
    %v6498 = vcombine.low %v6085, %v6114
    %v6499 = vcombine.high %v6085, %v6114
    %v6500 = vcombine.low %v6086, %v6115
    %v6501 = vcombine.high %v6086, %v6115
    %v6503 = vunpack.c.l.s4 1966171168
    %v6504 = vunpack.c.0.s8 %v6503
    %v6505 = vlaneseq
    %v6506 = vshrl.u32 %v6505, 7
    %v6507 = vsub.s32 %v6504, %v6506
    %v6508 = vrot.slane %v6498, %v6507
    %v6510 = vunpack.c.l.s4 1966171168
    %v6511 = vunpack.c.0.s8 %v6510
    %v6512 = vlaneseq
    %v6513 = vshrl.u32 %v6512, 7
    %v6514 = vsub.s32 %v6511, %v6513
    %v6515 = vrot.slane %v6499, %v6514
    %v6517 = vunpack.c.l.s4 1966171168
    %v6518 = vunpack.c.0.s8 %v6517
    %v6519 = vlaneseq
    %v6520 = vshrl.u32 %v6519, 7
    %v6521 = vsub.s32 %v6518, %v6520
    %v6522 = vrot.slane %v6500, %v6521
    %v6524 = vunpack.c.l.s4 1966171168
    %v6525 = vunpack.c.0.s8 %v6524
    %v6526 = vlaneseq
    %v6527 = vshrl.u32 %v6526, 7
    %v6528 = vsub.s32 %v6525, %v6527
    %v6529 = vrot.slane %v6501, %v6528
    %v6530 = vcombine.low %v6508, %v6522
    %v6531 = vcombine.high %v6508, %v6522
    %v6532 = vcombine.low %v6515, %v6529
    %v6533 = vcombine.high %v6515, %v6529
    %v6535 = vunpack.c.l.s4 1966171168
    %v6536 = vunpack.c.0.s8 %v6535
    %v6537 = vlaneseq
    %v6538 = vshrl.u32 %v6537, 7
    %v6539 = vsub.s32 %v6536, %v6538
    %v6540 = vrot.slane %v6530, %v6539
    %v6542 = vunpack.c.l.s4 1966171168
    %v6543 = vunpack.c.0.s8 %v6542
    %v6544 = vlaneseq
    %v6545 = vshrl.u32 %v6544, 7
    %v6546 = vsub.s32 %v6543, %v6545
    %v6547 = vrot.slane %v6532, %v6546
    %v6549 = vunpack.c.l.s4 1966171168
    %v6550 = vunpack.c.0.s8 %v6549
    %v6551 = vlaneseq
    %v6552 = vshrl.u32 %v6551, 7
    %v6553 = vsub.s32 %v6550, %v6552
    %v6554 = vrot.slane %v6531, %v6553
    %v6556 = vunpack.c.l.s4 1966171168
    %v6557 = vunpack.c.0.s8 %v6556
    %v6558 = vlaneseq
    %v6559 = vshrl.u32 %v6558, 7
    %v6560 = vsub.s32 %v6557, %v6559
    %v6561 = vrot.slane %v6533, %v6560
    %v6562 = vcombine.high %v6540, %v6540
    %v6563 = vcombine.high %v6547, %v6547
    %v6564 = vcombine.high %v6554, %v6554
    %v6565 = vcombine.low %v6087, %v6116
    %v6566 = vcombine.high %v6087, %v6116
    %v6568 = vunpack.c.l.s4 1966171168
    %v6569 = vunpack.c.0.s8 %v6568
    %v6570 = vlaneseq
    %v6571 = vshrl.u32 %v6570, 7
    %v6572 = vsub.s32 %v6569, %v6571
    %v6573 = vrot.slane %v6565, %v6572
    %v6575 = vunpack.c.l.s4 1966171168
    %v6576 = vunpack.c.0.s8 %v6575
    %v6577 = vlaneseq
    %v6578 = vshrl.u32 %v6577, 7
    %v6579 = vsub.s32 %v6576, %v6578
    %v6580 = vrot.slane %v6566, %v6579
    %v6581 = vcombine.low %v6522, %v6573
    %v6582 = vcombine.high %v6522, %v6573
    %v6583 = vcombine.low %v6529, %v6580
    %v6584 = vcombine.high %v6529, %v6580
    %v6586 = vunpack.c.l.s4 1966171168
    %v6587 = vunpack.c.0.s8 %v6586
    %v6588 = vlaneseq
    %v6589 = vshrl.u32 %v6588, 7
    %v6590 = vsub.s32 %v6587, %v6589
    %v6591 = vrot.slane %v6581, %v6590
    %v6593 = vunpack.c.l.s4 1966171168
    %v6594 = vunpack.c.0.s8 %v6593
    %v6595 = vlaneseq
    %v6596 = vshrl.u32 %v6595, 7
    %v6597 = vsub.s32 %v6594, %v6596
    %v6598 = vrot.slane %v6583, %v6597
    %v6600 = vunpack.c.l.s4 1966171168
    %v6601 = vunpack.c.0.s8 %v6600
    %v6602 = vlaneseq
    %v6603 = vshrl.u32 %v6602, 7
    %v6604 = vsub.s32 %v6601, %v6603
    %v6605 = vrot.slane %v6582, %v6604
    %v6607 = vunpack.c.l.s4 1966171168
    %v6608 = vunpack.c.0.s8 %v6607
    %v6609 = vlaneseq
    %v6610 = vshrl.u32 %v6609, 7
    %v6611 = vsub.s32 %v6608, %v6610
    %v6612 = vrot.slane %v6584, %v6611
    %v6613 = vcombine.high %v6591, %v6591
    %v6614 = vcombine.high %v6598, %v6598
    %v6615 = vcombine.high %v6605, %v6605
    %v6616 = vcombine.low %v6088, %v6117
    %v6617 = vcombine.high %v6088, %v6117
    %v6619 = vunpack.c.l.s4 1966171168
    %v6620 = vunpack.c.0.s8 %v6619
    %v6621 = vlaneseq
    %v6622 = vshrl.u32 %v6621, 7
    %v6623 = vsub.s32 %v6620, %v6622
    %v6624 = vrot.slane %v6616, %v6623
    %v6626 = vunpack.c.l.s4 1966171168
    %v6627 = vunpack.c.0.s8 %v6626
    %v6628 = vlaneseq
    %v6629 = vshrl.u32 %v6628, 7
    %v6630 = vsub.s32 %v6627, %v6629
    %v6631 = vrot.slane %v6617, %v6630
    %v6632 = vcombine.low %v6573, %v6624
    %v6633 = vcombine.high %v6573, %v6624
    %v6634 = vcombine.low %v6580, %v6631
    %v6635 = vcombine.high %v6580, %v6631
    %v6637 = vunpack.c.l.s4 1966171168
    %v6638 = vunpack.c.0.s8 %v6637
    %v6639 = vlaneseq
    %v6640 = vshrl.u32 %v6639, 7
    %v6641 = vsub.s32 %v6638, %v6640
    %v6642 = vrot.slane %v6632, %v6641
    %v6644 = vunpack.c.l.s4 1966171168
    %v6645 = vunpack.c.0.s8 %v6644
    %v6646 = vlaneseq
    %v6647 = vshrl.u32 %v6646, 7
    %v6648 = vsub.s32 %v6645, %v6647
    %v6649 = vrot.slane %v6634, %v6648
    %v6651 = vunpack.c.l.s4 1966171168
    %v6652 = vunpack.c.0.s8 %v6651
    %v6653 = vlaneseq
    %v6654 = vshrl.u32 %v6653, 7
    %v6655 = vsub.s32 %v6652, %v6654
    %v6656 = vrot.slane %v6633, %v6655
    %v6658 = vunpack.c.l.s4 1966171168
    %v6659 = vunpack.c.0.s8 %v6658
    %v6660 = vlaneseq
    %v6661 = vshrl.u32 %v6660, 7
    %v6662 = vsub.s32 %v6659, %v6661
    %v6663 = vrot.slane %v6635, %v6662
    %v6664 = vcombine.high %v6642, %v6642
    %v6665 = vcombine.high %v6649, %v6649
    %v6666 = vcombine.high %v6656, %v6656
    %v6667 = vcombine.low %v6089, %v6118
    %v6668 = vcombine.high %v6089, %v6118
    %v6670 = vunpack.c.l.s4 1966171168
    %v6671 = vunpack.c.0.s8 %v6670
    %v6672 = vlaneseq
    %v6673 = vshrl.u32 %v6672, 7
    %v6674 = vsub.s32 %v6671, %v6673
    %v6675 = vrot.slane %v6667, %v6674
    %v6677 = vunpack.c.l.s4 1966171168
    %v6678 = vunpack.c.0.s8 %v6677
    %v6679 = vlaneseq
    %v6680 = vshrl.u32 %v6679, 7
    %v6681 = vsub.s32 %v6678, %v6680
    %v6682 = vrot.slane %v6668, %v6681
    %v6683 = vcombine.low %v6624, %v6675
    %v6684 = vcombine.high %v6624, %v6675
    %v6685 = vcombine.low %v6631, %v6682
    %v6686 = vcombine.high %v6631, %v6682
    %v6688 = vunpack.c.l.s4 1966171168
    %v6689 = vunpack.c.0.s8 %v6688
    %v6690 = vlaneseq
    %v6691 = vshrl.u32 %v6690, 7
    %v6692 = vsub.s32 %v6689, %v6691
    %v6693 = vrot.slane %v6683, %v6692
    %v6695 = vunpack.c.l.s4 1966171168
    %v6696 = vunpack.c.0.s8 %v6695
    %v6697 = vlaneseq
    %v6698 = vshrl.u32 %v6697, 7
    %v6699 = vsub.s32 %v6696, %v6698
    %v6700 = vrot.slane %v6685, %v6699
    %v6702 = vunpack.c.l.s4 1966171168
    %v6703 = vunpack.c.0.s8 %v6702
    %v6704 = vlaneseq
    %v6705 = vshrl.u32 %v6704, 7
    %v6706 = vsub.s32 %v6703, %v6705
    %v6707 = vrot.slane %v6684, %v6706
    %v6709 = vunpack.c.l.s4 1966171168
    %v6710 = vunpack.c.0.s8 %v6709
    %v6711 = vlaneseq
    %v6712 = vshrl.u32 %v6711, 7
    %v6713 = vsub.s32 %v6710, %v6712
    %v6714 = vrot.slane %v6686, %v6713
    %v6715 = vcombine.high %v6693, %v6693
    %v6716 = vcombine.high %v6700, %v6700
    %v6717 = vcombine.high %v6707, %v6707
    %v6718 = vcombine.low %v6090, %v6119
    %v6719 = vcombine.high %v6090, %v6119
    %v6721 = vunpack.c.l.s4 1966171168
    %v6722 = vunpack.c.0.s8 %v6721
    %v6723 = vlaneseq
    %v6724 = vshrl.u32 %v6723, 7
    %v6725 = vsub.s32 %v6722, %v6724
    %v6726 = vrot.slane %v6718, %v6725
    %v6728 = vunpack.c.l.s4 1966171168
    %v6729 = vunpack.c.0.s8 %v6728
    %v6730 = vlaneseq
    %v6731 = vshrl.u32 %v6730, 7
    %v6732 = vsub.s32 %v6729, %v6731
    %v6733 = vrot.slane %v6719, %v6732
    %v6734 = vcombine.low %v6675, %v6726
    %v6735 = vcombine.high %v6675, %v6726
    %v6736 = vcombine.low %v6682, %v6733
    %v6737 = vcombine.high %v6682, %v6733
    %v6739 = vunpack.c.l.s4 1966171168
    %v6740 = vunpack.c.0.s8 %v6739
    %v6741 = vlaneseq
    %v6742 = vshrl.u32 %v6741, 7
    %v6743 = vsub.s32 %v6740, %v6742
    %v6744 = vrot.slane %v6734, %v6743
    %v6746 = vunpack.c.l.s4 1966171168
    %v6747 = vunpack.c.0.s8 %v6746
    %v6748 = vlaneseq
    %v6749 = vshrl.u32 %v6748, 7
    %v6750 = vsub.s32 %v6747, %v6749
    %v6751 = vrot.slane %v6736, %v6750
    %v6753 = vunpack.c.l.s4 1966171168
    %v6754 = vunpack.c.0.s8 %v6753
    %v6755 = vlaneseq
    %v6756 = vshrl.u32 %v6755, 7
    %v6757 = vsub.s32 %v6754, %v6756
    %v6758 = vrot.slane %v6735, %v6757
    %v6760 = vunpack.c.l.s4 1966171168
    %v6761 = vunpack.c.0.s8 %v6760
    %v6762 = vlaneseq
    %v6763 = vshrl.u32 %v6762, 7
    %v6764 = vsub.s32 %v6761, %v6763
    %v6765 = vrot.slane %v6737, %v6764
    %v6766 = vcombine.high %v6744, %v6744
    %v6767 = vcombine.high %v6751, %v6751
    %v6768 = vcombine.high %v6758, %v6758
    %v6769 = vcombine.low %v6091, %v6120
    %v6770 = vcombine.high %v6091, %v6120
    %v6772 = vunpack.c.l.s4 1966171168
    %v6773 = vunpack.c.0.s8 %v6772
    %v6774 = vlaneseq
    %v6775 = vshrl.u32 %v6774, 7
    %v6776 = vsub.s32 %v6773, %v6775
    %v6777 = vrot.slane %v6769, %v6776
    %v6779 = vunpack.c.l.s4 1966171168
    %v6780 = vunpack.c.0.s8 %v6779
    %v6781 = vlaneseq
    %v6782 = vshrl.u32 %v6781, 7
    %v6783 = vsub.s32 %v6780, %v6782
    %v6784 = vrot.slane %v6770, %v6783
    %v6785 = vcombine.low %v6726, %v6777
    %v6786 = vcombine.high %v6726, %v6777
    %v6787 = vcombine.low %v6733, %v6784
    %v6788 = vcombine.high %v6733, %v6784
    %v6790 = vunpack.c.l.s4 1966171168
    %v6791 = vunpack.c.0.s8 %v6790
    %v6792 = vlaneseq
    %v6793 = vshrl.u32 %v6792, 7
    %v6794 = vsub.s32 %v6791, %v6793
    %v6795 = vrot.slane %v6785, %v6794
    %v6797 = vunpack.c.l.s4 1966171168
    %v6798 = vunpack.c.0.s8 %v6797
    %v6799 = vlaneseq
    %v6800 = vshrl.u32 %v6799, 7
    %v6801 = vsub.s32 %v6798, %v6800
    %v6802 = vrot.slane %v6787, %v6801
    %v6804 = vunpack.c.l.s4 1966171168
    %v6805 = vunpack.c.0.s8 %v6804
    %v6806 = vlaneseq
    %v6807 = vshrl.u32 %v6806, 7
    %v6808 = vsub.s32 %v6805, %v6807
    %v6809 = vrot.slane %v6786, %v6808
    %v6811 = vunpack.c.l.s4 1966171168
    %v6812 = vunpack.c.0.s8 %v6811
    %v6813 = vlaneseq
    %v6814 = vshrl.u32 %v6813, 7
    %v6815 = vsub.s32 %v6812, %v6814
    %v6816 = vrot.slane %v6788, %v6815
    %v6817 = vcombine.high %v6795, %v6795
    %v6818 = vcombine.high %v6802, %v6802
    %v6819 = vcombine.high %v6809, %v6809
    %v6820 = vcombine.low %v6092, %v6124
    %v6821 = vcombine.high %v6092, %v6124
    %v6823 = vunpack.c.l.s4 1966171168
    %v6824 = vunpack.c.0.s8 %v6823
    %v6825 = vlaneseq
    %v6826 = vshrl.u32 %v6825, 7
    %v6827 = vsub.s32 %v6824, %v6826
    %v6828 = vrot.slane %v6820, %v6827
    %v6830 = vunpack.c.l.s4 1966171168
    %v6831 = vunpack.c.0.s8 %v6830
    %v6832 = vlaneseq
    %v6833 = vshrl.u32 %v6832, 7
    %v6834 = vsub.s32 %v6831, %v6833
    %v6835 = vrot.slane %v6821, %v6834
    %v6836 = vcombine.low %v6777, %v6828
    %v6837 = vcombine.high %v6777, %v6828
    %v6838 = vcombine.low %v6784, %v6835
    %v6839 = vcombine.high %v6784, %v6835
    %v6841 = vunpack.c.l.s4 1966171168
    %v6842 = vunpack.c.0.s8 %v6841
    %v6843 = vlaneseq
    %v6844 = vshrl.u32 %v6843, 7
    %v6845 = vsub.s32 %v6842, %v6844
    %v6846 = vrot.slane %v6836, %v6845
    %v6848 = vunpack.c.l.s4 1966171168
    %v6849 = vunpack.c.0.s8 %v6848
    %v6850 = vlaneseq
    %v6851 = vshrl.u32 %v6850, 7
    %v6852 = vsub.s32 %v6849, %v6851
    %v6853 = vrot.slane %v6838, %v6852
    %v6855 = vunpack.c.l.s4 1966171168
    %v6856 = vunpack.c.0.s8 %v6855
    %v6857 = vlaneseq
    %v6858 = vshrl.u32 %v6857, 7
    %v6859 = vsub.s32 %v6856, %v6858
    %v6860 = vrot.slane %v6837, %v6859
    %v6862 = vunpack.c.l.s4 1966171168
    %v6863 = vunpack.c.0.s8 %v6862
    %v6864 = vlaneseq
    %v6865 = vshrl.u32 %v6864, 7
    %v6866 = vsub.s32 %v6863, %v6865
    %v6867 = vrot.slane %v6839, %v6866
    %v6868 = vcombine.high %v6846, %v6846
    %v6869 = vcombine.high %v6853, %v6853
    %v6870 = vcombine.high %v6860, %v6860
    %v6871 = vcombine.low %v6167, %v6181
    %v6872 = vcombine.low %v6189, %v6191
    %v6873 = vcombine.low %v6174, %v6188
    %v6874 = vcombine.low %v6190, %v6218
    %v6876 = vunpack.c.l.s4 1966171168
    %v6877 = vunpack.c.0.s8 %v6876
    %v6878 = vlaneseq
    %v6879 = vshrl.u32 %v6878, 7
    %v6880 = vsub.s32 %v6877, %v6879
    %v6881 = vrot.slane %v6871, %v6880
    %v6883 = vunpack.c.l.s4 1966171168
    %v6884 = vunpack.c.0.s8 %v6883
    %v6885 = vlaneseq
    %v6886 = vshrl.u32 %v6885, 7
    %v6887 = vsub.s32 %v6884, %v6886
    %v6888 = vrot.slane %v6872, %v6887
    %v6890 = vunpack.c.l.s4 1966171168
    %v6891 = vunpack.c.0.s8 %v6890
    %v6892 = vlaneseq
    %v6893 = vshrl.u32 %v6892, 7
    %v6894 = vsub.s32 %v6891, %v6893
    %v6895 = vrot.slane %v6873, %v6894
    %v6897 = vunpack.c.l.s4 1966171168
    %v6898 = vunpack.c.0.s8 %v6897
    %v6899 = vlaneseq
    %v6900 = vshrl.u32 %v6899, 7
    %v6901 = vsub.s32 %v6898, %v6900
    %v6902 = vrot.slane %v6874, %v6901
    %v6903 = vcombine.low %v6881, %v6888
    %v6904 = vcombine.high %v6881, %v6888
    %v6905 = vcombine.low %v6895, %v6902
    %v6906 = vcombine.high %v6895, %v6902
    %v6908 = vunpack.c.l.s4 1966171168
    %v6909 = vunpack.c.0.s8 %v6908
    %v6910 = vlaneseq
    %v6911 = vshrl.u32 %v6910, 7
    %v6912 = vsub.s32 %v6909, %v6911
    %v6913 = vrot.slane %v6903, %v6912
    %v6915 = vunpack.c.l.s4 1966171168
    %v6916 = vunpack.c.0.s8 %v6915
    %v6917 = vlaneseq
    %v6918 = vshrl.u32 %v6917, 7
    %v6919 = vsub.s32 %v6916, %v6918
    %v6920 = vrot.slane %v6904, %v6919
    %v6922 = vunpack.c.l.s4 1966171168
    %v6923 = vunpack.c.0.s8 %v6922
    %v6924 = vlaneseq
    %v6925 = vshrl.u32 %v6924, 7
    %v6926 = vsub.s32 %v6923, %v6925
    %v6927 = vrot.slane %v6905, %v6926
    %v6929 = vunpack.c.l.s4 1966171168
    %v6930 = vunpack.c.0.s8 %v6929
    %v6931 = vlaneseq
    %v6932 = vshrl.u32 %v6931, 7
    %v6933 = vsub.s32 %v6930, %v6932
    %v6934 = vrot.slane %v6906, %v6933
    %v6935 = vcombine.low %v6913, %v6927
    %v6936 = vcombine.high %v6913, %v6927
    %v6937 = vcombine.low %v6920, %v6934
    %v6938 = vcombine.high %v6920, %v6934
    %v6939 = vcombine.low %v6232, %v6240
    %v6940 = vcombine.low %v6242, %v6225
    %v6941 = vcombine.low %v6239, %v6241
    %v6942 = vcombine.low %v6269, %v6283
    %v6944 = vunpack.c.l.s4 1966171168
    %v6945 = vunpack.c.0.s8 %v6944
    %v6946 = vlaneseq
    %v6947 = vshrl.u32 %v6946, 7
    %v6948 = vsub.s32 %v6945, %v6947
    %v6949 = vrot.slane %v6939, %v6948
    %v6951 = vunpack.c.l.s4 1966171168
    %v6952 = vunpack.c.0.s8 %v6951
    %v6953 = vlaneseq
    %v6954 = vshrl.u32 %v6953, 7
    %v6955 = vsub.s32 %v6952, %v6954
    %v6956 = vrot.slane %v6940, %v6955
    %v6958 = vunpack.c.l.s4 1966171168
    %v6959 = vunpack.c.0.s8 %v6958
    %v6960 = vlaneseq
    %v6961 = vshrl.u32 %v6960, 7
    %v6962 = vsub.s32 %v6959, %v6961
    %v6963 = vrot.slane %v6941, %v6962
    %v6965 = vunpack.c.l.s4 1966171168
    %v6966 = vunpack.c.0.s8 %v6965
    %v6967 = vlaneseq
    %v6968 = vshrl.u32 %v6967, 7
    %v6969 = vsub.s32 %v6966, %v6968
    %v6970 = vrot.slane %v6942, %v6969
    %v6971 = vcombine.low %v6949, %v6956
    %v6972 = vcombine.high %v6949, %v6956
    %v6973 = vcombine.low %v6963, %v6970
    %v6974 = vcombine.high %v6963, %v6970
    %v6976 = vunpack.c.l.s4 1966171168
    %v6977 = vunpack.c.0.s8 %v6976
    %v6978 = vlaneseq
    %v6979 = vshrl.u32 %v6978, 7
    %v6980 = vsub.s32 %v6977, %v6979
    %v6981 = vrot.slane %v6971, %v6980
    %v6983 = vunpack.c.l.s4 1966171168
    %v6984 = vunpack.c.0.s8 %v6983
    %v6985 = vlaneseq
    %v6986 = vshrl.u32 %v6985, 7
    %v6987 = vsub.s32 %v6984, %v6986
    %v6988 = vrot.slane %v6972, %v6987
    %v6990 = vunpack.c.l.s4 1966171168
    %v6991 = vunpack.c.0.s8 %v6990
    %v6992 = vlaneseq
    %v6993 = vshrl.u32 %v6992, 7
    %v6994 = vsub.s32 %v6991, %v6993
    %v6995 = vrot.slane %v6973, %v6994
    %v6997 = vunpack.c.l.s4 1966171168
    %v6998 = vunpack.c.0.s8 %v6997
    %v6999 = vlaneseq
    %v7000 = vshrl.u32 %v6999, 7
    %v7001 = vsub.s32 %v6998, %v7000
    %v7002 = vrot.slane %v6974, %v7001
    %v7003 = vcombine.low %v6981, %v6995
    %v7004 = vcombine.high %v6981, %v6995
    %v7005 = vcombine.low %v6988, %v7002
    %v7006 = vcombine.high %v6988, %v7002
    %v7007 = vcombine.low %v6291, %v6293
    %v7008 = vcombine.low %v6276, %v6290
    %v7009 = vcombine.low %v6292, %v6320
    %v7010 = vcombine.low %v6334, %v6342
    %v7012 = vunpack.c.l.s4 1966171168
    %v7013 = vunpack.c.0.s8 %v7012
    %v7014 = vlaneseq
    %v7015 = vshrl.u32 %v7014, 7
    %v7016 = vsub.s32 %v7013, %v7015
    %v7017 = vrot.slane %v7007, %v7016
    %v7019 = vunpack.c.l.s4 1966171168
    %v7020 = vunpack.c.0.s8 %v7019
    %v7021 = vlaneseq
    %v7022 = vshrl.u32 %v7021, 7
    %v7023 = vsub.s32 %v7020, %v7022
    %v7024 = vrot.slane %v7008, %v7023
    %v7026 = vunpack.c.l.s4 1966171168
    %v7027 = vunpack.c.0.s8 %v7026
    %v7028 = vlaneseq
    %v7029 = vshrl.u32 %v7028, 7
    %v7030 = vsub.s32 %v7027, %v7029
    %v7031 = vrot.slane %v7009, %v7030
    %v7033 = vunpack.c.l.s4 1966171168
    %v7034 = vunpack.c.0.s8 %v7033
    %v7035 = vlaneseq
    %v7036 = vshrl.u32 %v7035, 7
    %v7037 = vsub.s32 %v7034, %v7036
    %v7038 = vrot.slane %v7010, %v7037
    %v7039 = vcombine.low %v7017, %v7024
    %v7040 = vcombine.high %v7017, %v7024
    %v7041 = vcombine.low %v7031, %v7038
    %v7042 = vcombine.high %v7031, %v7038
    %v7044 = vunpack.c.l.s4 1966171168
    %v7045 = vunpack.c.0.s8 %v7044
    %v7046 = vlaneseq
    %v7047 = vshrl.u32 %v7046, 7
    %v7048 = vsub.s32 %v7045, %v7047
    %v7049 = vrot.slane %v7039, %v7048
    %v7051 = vunpack.c.l.s4 1966171168
    %v7052 = vunpack.c.0.s8 %v7051
    %v7053 = vlaneseq
    %v7054 = vshrl.u32 %v7053, 7
    %v7055 = vsub.s32 %v7052, %v7054
    %v7056 = vrot.slane %v7040, %v7055
    %v7058 = vunpack.c.l.s4 1966171168
    %v7059 = vunpack.c.0.s8 %v7058
    %v7060 = vlaneseq
    %v7061 = vshrl.u32 %v7060, 7
    %v7062 = vsub.s32 %v7059, %v7061
    %v7063 = vrot.slane %v7041, %v7062
    %v7065 = vunpack.c.l.s4 1966171168
    %v7066 = vunpack.c.0.s8 %v7065
    %v7067 = vlaneseq
    %v7068 = vshrl.u32 %v7067, 7
    %v7069 = vsub.s32 %v7066, %v7068
    %v7070 = vrot.slane %v7042, %v7069
    %v7071 = vcombine.low %v7049, %v7063
    %v7072 = vcombine.high %v7049, %v7063
    %v7073 = vcombine.low %v7056, %v7070
    %v7074 = vcombine.high %v7056, %v7070
    %v7075 = vcombine.low %v6344, %v6327
    %v7076 = vcombine.low %v6341, %v6343
    %v7077 = vcombine.low %v6371, %v6385
    %v7078 = vcombine.low %v6393, %v6395
    %v7080 = vunpack.c.l.s4 1966171168
    %v7081 = vunpack.c.0.s8 %v7080
    %v7082 = vlaneseq
    %v7083 = vshrl.u32 %v7082, 7
    %v7084 = vsub.s32 %v7081, %v7083
    %v7085 = vrot.slane %v7075, %v7084
    %v7087 = vunpack.c.l.s4 1966171168
    %v7088 = vunpack.c.0.s8 %v7087
    %v7089 = vlaneseq
    %v7090 = vshrl.u32 %v7089, 7
    %v7091 = vsub.s32 %v7088, %v7090
    %v7092 = vrot.slane %v7076, %v7091
    %v7094 = vunpack.c.l.s4 1966171168
    %v7095 = vunpack.c.0.s8 %v7094
    %v7096 = vlaneseq
    %v7097 = vshrl.u32 %v7096, 7
    %v7098 = vsub.s32 %v7095, %v7097
    %v7099 = vrot.slane %v7077, %v7098
    %v7101 = vunpack.c.l.s4 1966171168
    %v7102 = vunpack.c.0.s8 %v7101
    %v7103 = vlaneseq
    %v7104 = vshrl.u32 %v7103, 7
    %v7105 = vsub.s32 %v7102, %v7104
    %v7106 = vrot.slane %v7078, %v7105
    %v7107 = vcombine.low %v7085, %v7092
    %v7108 = vcombine.high %v7085, %v7092
    %v7109 = vcombine.low %v7099, %v7106
    %v7110 = vcombine.high %v7099, %v7106
    %v7112 = vunpack.c.l.s4 1966171168
    %v7113 = vunpack.c.0.s8 %v7112
    %v7114 = vlaneseq
    %v7115 = vshrl.u32 %v7114, 7
    %v7116 = vsub.s32 %v7113, %v7115
    %v7117 = vrot.slane %v7107, %v7116
    %v7119 = vunpack.c.l.s4 1966171168
    %v7120 = vunpack.c.0.s8 %v7119
    %v7121 = vlaneseq
    %v7122 = vshrl.u32 %v7121, 7
    %v7123 = vsub.s32 %v7120, %v7122
    %v7124 = vrot.slane %v7108, %v7123
    %v7126 = vunpack.c.l.s4 1966171168
    %v7127 = vunpack.c.0.s8 %v7126
    %v7128 = vlaneseq
    %v7129 = vshrl.u32 %v7128, 7
    %v7130 = vsub.s32 %v7127, %v7129
    %v7131 = vrot.slane %v7109, %v7130
    %v7133 = vunpack.c.l.s4 1966171168
    %v7134 = vunpack.c.0.s8 %v7133
    %v7135 = vlaneseq
    %v7136 = vshrl.u32 %v7135, 7
    %v7137 = vsub.s32 %v7134, %v7136
    %v7138 = vrot.slane %v7110, %v7137
    %v7139 = vcombine.low %v7117, %v7131
    %v7140 = vcombine.high %v7117, %v7131
    %v7141 = vcombine.low %v7124, %v7138
    %v7142 = vcombine.high %v7124, %v7138
    %v7143 = vcombine.low %v6378, %v6392
    %v7144 = vcombine.low %v6394, %v6422
    %v7145 = vcombine.low %v6436, %v6444
    %v7146 = vcombine.low %v6446, %v6429
    %v7148 = vunpack.c.l.s4 1966171168
    %v7149 = vunpack.c.0.s8 %v7148
    %v7150 = vlaneseq
    %v7151 = vshrl.u32 %v7150, 7
    %v7152 = vsub.s32 %v7149, %v7151
    %v7153 = vrot.slane %v7143, %v7152
    %v7155 = vunpack.c.l.s4 1966171168
    %v7156 = vunpack.c.0.s8 %v7155
    %v7157 = vlaneseq
    %v7158 = vshrl.u32 %v7157, 7
    %v7159 = vsub.s32 %v7156, %v7158
    %v7160 = vrot.slane %v7144, %v7159
    %v7162 = vunpack.c.l.s4 1966171168
    %v7163 = vunpack.c.0.s8 %v7162
    %v7164 = vlaneseq
    %v7165 = vshrl.u32 %v7164, 7
    %v7166 = vsub.s32 %v7163, %v7165
    %v7167 = vrot.slane %v7145, %v7166
    %v7169 = vunpack.c.l.s4 1966171168
    %v7170 = vunpack.c.0.s8 %v7169
    %v7171 = vlaneseq
    %v7172 = vshrl.u32 %v7171, 7
    %v7173 = vsub.s32 %v7170, %v7172
    %v7174 = vrot.slane %v7146, %v7173
    %v7175 = vcombine.low %v7153, %v7160
    %v7176 = vcombine.high %v7153, %v7160
    %v7177 = vcombine.low %v7167, %v7174
    %v7178 = vcombine.high %v7167, %v7174
    %v7180 = vunpack.c.l.s4 1966171168
    %v7181 = vunpack.c.0.s8 %v7180
    %v7182 = vlaneseq
    %v7183 = vshrl.u32 %v7182, 7
    %v7184 = vsub.s32 %v7181, %v7183
    %v7185 = vrot.slane %v7175, %v7184
    %v7187 = vunpack.c.l.s4 1966171168
    %v7188 = vunpack.c.0.s8 %v7187
    %v7189 = vlaneseq
    %v7190 = vshrl.u32 %v7189, 7
    %v7191 = vsub.s32 %v7188, %v7190
    %v7192 = vrot.slane %v7176, %v7191
    %v7194 = vunpack.c.l.s4 1966171168
    %v7195 = vunpack.c.0.s8 %v7194
    %v7196 = vlaneseq
    %v7197 = vshrl.u32 %v7196, 7
    %v7198 = vsub.s32 %v7195, %v7197
    %v7199 = vrot.slane %v7177, %v7198
    %v7201 = vunpack.c.l.s4 1966171168
    %v7202 = vunpack.c.0.s8 %v7201
    %v7203 = vlaneseq
    %v7204 = vshrl.u32 %v7203, 7
    %v7205 = vsub.s32 %v7202, %v7204
    %v7206 = vrot.slane %v7178, %v7205
    %v7207 = vcombine.low %v7185, %v7199
    %v7208 = vcombine.high %v7185, %v7199
    %v7209 = vcombine.low %v7192, %v7206
    %v7210 = vcombine.high %v7192, %v7206
    %v7211 = vcombine.low %v6443, %v6445
    %v7212 = vcombine.low %v6473, %v6487
    %v7213 = vcombine.low %v6495, %v6497
    %v7214 = vcombine.low %v6480, %v6494
    %v7216 = vunpack.c.l.s4 1966171168
    %v7217 = vunpack.c.0.s8 %v7216
    %v7218 = vlaneseq
    %v7219 = vshrl.u32 %v7218, 7
    %v7220 = vsub.s32 %v7217, %v7219
    %v7221 = vrot.slane %v7211, %v7220
    %v7223 = vunpack.c.l.s4 1966171168
    %v7224 = vunpack.c.0.s8 %v7223
    %v7225 = vlaneseq
    %v7226 = vshrl.u32 %v7225, 7
    %v7227 = vsub.s32 %v7224, %v7226
    %v7228 = vrot.slane %v7212, %v7227
    %v7230 = vunpack.c.l.s4 1966171168
    %v7231 = vunpack.c.0.s8 %v7230
    %v7232 = vlaneseq
    %v7233 = vshrl.u32 %v7232, 7
    %v7234 = vsub.s32 %v7231, %v7233
    %v7235 = vrot.slane %v7213, %v7234
    %v7237 = vunpack.c.l.s4 1966171168
    %v7238 = vunpack.c.0.s8 %v7237
    %v7239 = vlaneseq
    %v7240 = vshrl.u32 %v7239, 7
    %v7241 = vsub.s32 %v7238, %v7240
    %v7242 = vrot.slane %v7214, %v7241
    %v7243 = vcombine.low %v7221, %v7228
    %v7244 = vcombine.high %v7221, %v7228
    %v7245 = vcombine.low %v7235, %v7242
    %v7246 = vcombine.high %v7235, %v7242
    %v7248 = vunpack.c.l.s4 1966171168
    %v7249 = vunpack.c.0.s8 %v7248
    %v7250 = vlaneseq
    %v7251 = vshrl.u32 %v7250, 7
    %v7252 = vsub.s32 %v7249, %v7251
    %v7253 = vrot.slane %v7243, %v7252
    %v7255 = vunpack.c.l.s4 1966171168
    %v7256 = vunpack.c.0.s8 %v7255
    %v7257 = vlaneseq
    %v7258 = vshrl.u32 %v7257, 7
    %v7259 = vsub.s32 %v7256, %v7258
    %v7260 = vrot.slane %v7244, %v7259
    %v7262 = vunpack.c.l.s4 1966171168
    %v7263 = vunpack.c.0.s8 %v7262
    %v7264 = vlaneseq
    %v7265 = vshrl.u32 %v7264, 7
    %v7266 = vsub.s32 %v7263, %v7265
    %v7267 = vrot.slane %v7245, %v7266
    %v7269 = vunpack.c.l.s4 1966171168
    %v7270 = vunpack.c.0.s8 %v7269
    %v7271 = vlaneseq
    %v7272 = vshrl.u32 %v7271, 7
    %v7273 = vsub.s32 %v7270, %v7272
    %v7274 = vrot.slane %v7246, %v7273
    %v7275 = vcombine.low %v7253, %v7267
    %v7276 = vcombine.high %v7253, %v7267
    %v7277 = vcombine.low %v7260, %v7274
    %v7278 = vcombine.high %v7260, %v7274
    %v7279 = vcombine.low %v6496, %v6540
    %v7280 = vcombine.low %v6554, %v6562
    %v7281 = vcombine.low %v6564, %v6547
    %v7282 = vcombine.low %v6561, %v6563
    %v7284 = vunpack.c.l.s4 1966171168
    %v7285 = vunpack.c.0.s8 %v7284
    %v7286 = vlaneseq
    %v7287 = vshrl.u32 %v7286, 7
    %v7288 = vsub.s32 %v7285, %v7287
    %v7289 = vrot.slane %v7279, %v7288
    %v7291 = vunpack.c.l.s4 1966171168
    %v7292 = vunpack.c.0.s8 %v7291
    %v7293 = vlaneseq
    %v7294 = vshrl.u32 %v7293, 7
    %v7295 = vsub.s32 %v7292, %v7294
    %v7296 = vrot.slane %v7280, %v7295
    %v7298 = vunpack.c.l.s4 1966171168
    %v7299 = vunpack.c.0.s8 %v7298
    %v7300 = vlaneseq
    %v7301 = vshrl.u32 %v7300, 7
    %v7302 = vsub.s32 %v7299, %v7301
    %v7303 = vrot.slane %v7281, %v7302
    %v7305 = vunpack.c.l.s4 1966171168
    %v7306 = vunpack.c.0.s8 %v7305
    %v7307 = vlaneseq
    %v7308 = vshrl.u32 %v7307, 7
    %v7309 = vsub.s32 %v7306, %v7308
    %v7310 = vrot.slane %v7282, %v7309
    %v7311 = vcombine.low %v7289, %v7296
    %v7312 = vcombine.high %v7289, %v7296
    %v7313 = vcombine.low %v7303, %v7310
    %v7314 = vcombine.high %v7303, %v7310
    %v7316 = vunpack.c.l.s4 1966171168
    %v7317 = vunpack.c.0.s8 %v7316
    %v7318 = vlaneseq
    %v7319 = vshrl.u32 %v7318, 7
    %v7320 = vsub.s32 %v7317, %v7319
    %v7321 = vrot.slane %v7311, %v7320
    %v7323 = vunpack.c.l.s4 1966171168
    %v7324 = vunpack.c.0.s8 %v7323
    %v7325 = vlaneseq
    %v7326 = vshrl.u32 %v7325, 7
    %v7327 = vsub.s32 %v7324, %v7326
    %v7328 = vrot.slane %v7312, %v7327
    %v7330 = vunpack.c.l.s4 1966171168
    %v7331 = vunpack.c.0.s8 %v7330
    %v7332 = vlaneseq
    %v7333 = vshrl.u32 %v7332, 7
    %v7334 = vsub.s32 %v7331, %v7333
    %v7335 = vrot.slane %v7313, %v7334
    %v7337 = vunpack.c.l.s4 1966171168
    %v7338 = vunpack.c.0.s8 %v7337
    %v7339 = vlaneseq
    %v7340 = vshrl.u32 %v7339, 7
    %v7341 = vsub.s32 %v7338, %v7340
    %v7342 = vrot.slane %v7314, %v7341
    %v7343 = vcombine.low %v7321, %v7335
    %v7344 = vcombine.high %v7321, %v7335
    %v7345 = vcombine.low %v7328, %v7342
    %v7346 = vcombine.high %v7328, %v7342
    %v7347 = vcombine.low %v6591, %v6605
    %v7348 = vcombine.low %v6613, %v6615
    %v7349 = vcombine.low %v6598, %v6612
    %v7350 = vcombine.low %v6614, %v6642
    %v7352 = vunpack.c.l.s4 1966171168
    %v7353 = vunpack.c.0.s8 %v7352
    %v7354 = vlaneseq
    %v7355 = vshrl.u32 %v7354, 7
    %v7356 = vsub.s32 %v7353, %v7355
    %v7357 = vrot.slane %v7347, %v7356
    %v7359 = vunpack.c.l.s4 1966171168
    %v7360 = vunpack.c.0.s8 %v7359
    %v7361 = vlaneseq
    %v7362 = vshrl.u32 %v7361, 7
    %v7363 = vsub.s32 %v7360, %v7362
    %v7364 = vrot.slane %v7348, %v7363
    %v7366 = vunpack.c.l.s4 1966171168
    %v7367 = vunpack.c.0.s8 %v7366
    %v7368 = vlaneseq
    %v7369 = vshrl.u32 %v7368, 7
    %v7370 = vsub.s32 %v7367, %v7369
    %v7371 = vrot.slane %v7349, %v7370
    %v7373 = vunpack.c.l.s4 1966171168
    %v7374 = vunpack.c.0.s8 %v7373
    %v7375 = vlaneseq
    %v7376 = vshrl.u32 %v7375, 7
    %v7377 = vsub.s32 %v7374, %v7376
    %v7378 = vrot.slane %v7350, %v7377
    %v7379 = vcombine.low %v7357, %v7364
    %v7380 = vcombine.high %v7357, %v7364
    %v7381 = vcombine.low %v7371, %v7378
    %v7382 = vcombine.high %v7371, %v7378
    %v7384 = vunpack.c.l.s4 1966171168
    %v7385 = vunpack.c.0.s8 %v7384
    %v7386 = vlaneseq
    %v7387 = vshrl.u32 %v7386, 7
    %v7388 = vsub.s32 %v7385, %v7387
    %v7389 = vrot.slane %v7379, %v7388
    %v7391 = vunpack.c.l.s4 1966171168
    %v7392 = vunpack.c.0.s8 %v7391
    %v7393 = vlaneseq
    %v7394 = vshrl.u32 %v7393, 7
    %v7395 = vsub.s32 %v7392, %v7394
    %v7396 = vrot.slane %v7380, %v7395
    %v7398 = vunpack.c.l.s4 1966171168
    %v7399 = vunpack.c.0.s8 %v7398
    %v7400 = vlaneseq
    %v7401 = vshrl.u32 %v7400, 7
    %v7402 = vsub.s32 %v7399, %v7401
    %v7403 = vrot.slane %v7381, %v7402
    %v7405 = vunpack.c.l.s4 1966171168
    %v7406 = vunpack.c.0.s8 %v7405
    %v7407 = vlaneseq
    %v7408 = vshrl.u32 %v7407, 7
    %v7409 = vsub.s32 %v7406, %v7408
    %v7410 = vrot.slane %v7382, %v7409
    %v7411 = vcombine.low %v7389, %v7403
    %v7412 = vcombine.high %v7389, %v7403
    %v7413 = vcombine.low %v7396, %v7410
    %v7414 = vcombine.high %v7396, %v7410
    %v7415 = vcombine.low %v6656, %v6664
    %v7416 = vcombine.low %v6666, %v6649
    %v7417 = vcombine.low %v6663, %v6665
    %v7418 = vcombine.low %v6693, %v6707
    %v7420 = vunpack.c.l.s4 1966171168
    %v7421 = vunpack.c.0.s8 %v7420
    %v7422 = vlaneseq
    %v7423 = vshrl.u32 %v7422, 7
    %v7424 = vsub.s32 %v7421, %v7423
    %v7425 = vrot.slane %v7415, %v7424
    %v7427 = vunpack.c.l.s4 1966171168
    %v7428 = vunpack.c.0.s8 %v7427
    %v7429 = vlaneseq
    %v7430 = vshrl.u32 %v7429, 7
    %v7431 = vsub.s32 %v7428, %v7430
    %v7432 = vrot.slane %v7416, %v7431
    %v7434 = vunpack.c.l.s4 1966171168
    %v7435 = vunpack.c.0.s8 %v7434
    %v7436 = vlaneseq
    %v7437 = vshrl.u32 %v7436, 7
    %v7438 = vsub.s32 %v7435, %v7437
    %v7439 = vrot.slane %v7417, %v7438
    %v7441 = vunpack.c.l.s4 1966171168
    %v7442 = vunpack.c.0.s8 %v7441
    %v7443 = vlaneseq
    %v7444 = vshrl.u32 %v7443, 7
    %v7445 = vsub.s32 %v7442, %v7444
    %v7446 = vrot.slane %v7418, %v7445
    %v7447 = vcombine.low %v7425, %v7432
    %v7448 = vcombine.high %v7425, %v7432
    %v7449 = vcombine.low %v7439, %v7446
    %v7450 = vcombine.high %v7439, %v7446
    %v7452 = vunpack.c.l.s4 1966171168
    %v7453 = vunpack.c.0.s8 %v7452
    %v7454 = vlaneseq
    %v7455 = vshrl.u32 %v7454, 7
    %v7456 = vsub.s32 %v7453, %v7455
    %v7457 = vrot.slane %v7447, %v7456
    %v7459 = vunpack.c.l.s4 1966171168
    %v7460 = vunpack.c.0.s8 %v7459
    %v7461 = vlaneseq
    %v7462 = vshrl.u32 %v7461, 7
    %v7463 = vsub.s32 %v7460, %v7462
    %v7464 = vrot.slane %v7448, %v7463
    %v7466 = vunpack.c.l.s4 1966171168
    %v7467 = vunpack.c.0.s8 %v7466
    %v7468 = vlaneseq
    %v7469 = vshrl.u32 %v7468, 7
    %v7470 = vsub.s32 %v7467, %v7469
    %v7471 = vrot.slane %v7449, %v7470
    %v7473 = vunpack.c.l.s4 1966171168
    %v7474 = vunpack.c.0.s8 %v7473
    %v7475 = vlaneseq
    %v7476 = vshrl.u32 %v7475, 7
    %v7477 = vsub.s32 %v7474, %v7476
    %v7478 = vrot.slane %v7450, %v7477
    %v7479 = vcombine.low %v7457, %v7471
    %v7480 = vcombine.high %v7457, %v7471
    %v7481 = vcombine.low %v7464, %v7478
    %v7482 = vcombine.high %v7464, %v7478
    %v7483 = vcombine.low %v6715, %v6717
    %v7484 = vcombine.low %v6700, %v6714
    %v7485 = vcombine.low %v6716, %v6744
    %v7486 = vcombine.low %v6758, %v6766
    %v7488 = vunpack.c.l.s4 1966171168
    %v7489 = vunpack.c.0.s8 %v7488
    %v7490 = vlaneseq
    %v7491 = vshrl.u32 %v7490, 7
    %v7492 = vsub.s32 %v7489, %v7491
    %v7493 = vrot.slane %v7483, %v7492
    %v7495 = vunpack.c.l.s4 1966171168
    %v7496 = vunpack.c.0.s8 %v7495
    %v7497 = vlaneseq
    %v7498 = vshrl.u32 %v7497, 7
    %v7499 = vsub.s32 %v7496, %v7498
    %v7500 = vrot.slane %v7484, %v7499
    %v7502 = vunpack.c.l.s4 1966171168
    %v7503 = vunpack.c.0.s8 %v7502
    %v7504 = vlaneseq
    %v7505 = vshrl.u32 %v7504, 7
    %v7506 = vsub.s32 %v7503, %v7505
    %v7507 = vrot.slane %v7485, %v7506
    %v7509 = vunpack.c.l.s4 1966171168
    %v7510 = vunpack.c.0.s8 %v7509
    %v7511 = vlaneseq
    %v7512 = vshrl.u32 %v7511, 7
    %v7513 = vsub.s32 %v7510, %v7512
    %v7514 = vrot.slane %v7486, %v7513
    %v7515 = vcombine.low %v7493, %v7500
    %v7516 = vcombine.high %v7493, %v7500
    %v7517 = vcombine.low %v7507, %v7514
    %v7518 = vcombine.high %v7507, %v7514
    %v7520 = vunpack.c.l.s4 1966171168
    %v7521 = vunpack.c.0.s8 %v7520
    %v7522 = vlaneseq
    %v7523 = vshrl.u32 %v7522, 7
    %v7524 = vsub.s32 %v7521, %v7523
    %v7525 = vrot.slane %v7515, %v7524
    %v7527 = vunpack.c.l.s4 1966171168
    %v7528 = vunpack.c.0.s8 %v7527
    %v7529 = vlaneseq
    %v7530 = vshrl.u32 %v7529, 7
    %v7531 = vsub.s32 %v7528, %v7530
    %v7532 = vrot.slane %v7516, %v7531
    %v7534 = vunpack.c.l.s4 1966171168
    %v7535 = vunpack.c.0.s8 %v7534
    %v7536 = vlaneseq
    %v7537 = vshrl.u32 %v7536, 7
    %v7538 = vsub.s32 %v7535, %v7537
    %v7539 = vrot.slane %v7517, %v7538
    %v7541 = vunpack.c.l.s4 1966171168
    %v7542 = vunpack.c.0.s8 %v7541
    %v7543 = vlaneseq
    %v7544 = vshrl.u32 %v7543, 7
    %v7545 = vsub.s32 %v7542, %v7544
    %v7546 = vrot.slane %v7518, %v7545
    %v7547 = vcombine.low %v7525, %v7539
    %v7548 = vcombine.high %v7525, %v7539
    %v7549 = vcombine.low %v7532, %v7546
    %v7550 = vcombine.high %v7532, %v7546
    %v7551 = vcombine.low %v6768, %v6751
    %v7552 = vcombine.low %v6765, %v6767
    %v7553 = vcombine.low %v6795, %v6809
    %v7554 = vcombine.low %v6817, %v6819
    %v7556 = vunpack.c.l.s4 1966171168
    %v7557 = vunpack.c.0.s8 %v7556
    %v7558 = vlaneseq
    %v7559 = vshrl.u32 %v7558, 7
    %v7560 = vsub.s32 %v7557, %v7559
    %v7561 = vrot.slane %v7551, %v7560
    %v7563 = vunpack.c.l.s4 1966171168
    %v7564 = vunpack.c.0.s8 %v7563
    %v7565 = vlaneseq
    %v7566 = vshrl.u32 %v7565, 7
    %v7567 = vsub.s32 %v7564, %v7566
    %v7568 = vrot.slane %v7552, %v7567
    %v7570 = vunpack.c.l.s4 1966171168
    %v7571 = vunpack.c.0.s8 %v7570
    %v7572 = vlaneseq
    %v7573 = vshrl.u32 %v7572, 7
    %v7574 = vsub.s32 %v7571, %v7573
    %v7575 = vrot.slane %v7553, %v7574
    %v7577 = vunpack.c.l.s4 1966171168
    %v7578 = vunpack.c.0.s8 %v7577
    %v7579 = vlaneseq
    %v7580 = vshrl.u32 %v7579, 7
    %v7581 = vsub.s32 %v7578, %v7580
    %v7582 = vrot.slane %v7554, %v7581
    %v7583 = vcombine.low %v7561, %v7568
    %v7584 = vcombine.high %v7561, %v7568
    %v7585 = vcombine.low %v7575, %v7582
    %v7586 = vcombine.high %v7575, %v7582
    %v7588 = vunpack.c.l.s4 1966171168
    %v7589 = vunpack.c.0.s8 %v7588
    %v7590 = vlaneseq
    %v7591 = vshrl.u32 %v7590, 7
    %v7592 = vsub.s32 %v7589, %v7591
    %v7593 = vrot.slane %v7583, %v7592
    %v7595 = vunpack.c.l.s4 1966171168
    %v7596 = vunpack.c.0.s8 %v7595
    %v7597 = vlaneseq
    %v7598 = vshrl.u32 %v7597, 7
    %v7599 = vsub.s32 %v7596, %v7598
    %v7600 = vrot.slane %v7584, %v7599
    %v7602 = vunpack.c.l.s4 1966171168
    %v7603 = vunpack.c.0.s8 %v7602
    %v7604 = vlaneseq
    %v7605 = vshrl.u32 %v7604, 7
    %v7606 = vsub.s32 %v7603, %v7605
    %v7607 = vrot.slane %v7585, %v7606
    %v7609 = vunpack.c.l.s4 1966171168
    %v7610 = vunpack.c.0.s8 %v7609
    %v7611 = vlaneseq
    %v7612 = vshrl.u32 %v7611, 7
    %v7613 = vsub.s32 %v7610, %v7612
    %v7614 = vrot.slane %v7586, %v7613
    %v7615 = vcombine.low %v7593, %v7607
    %v7616 = vcombine.high %v7593, %v7607
    %v7617 = vcombine.low %v7600, %v7614
    %v7618 = vcombine.high %v7600, %v7614
    %v7619 = vcombine.low %v6802, %v6816
    %v7620 = vcombine.low %v6818, %v6846
    %v7621 = vcombine.low %v6860, %v6868
    %v7622 = vcombine.low %v6870, %v6853
    %v7624 = vunpack.c.l.s4 1966171168
    %v7625 = vunpack.c.0.s8 %v7624
    %v7626 = vlaneseq
    %v7627 = vshrl.u32 %v7626, 7
    %v7628 = vsub.s32 %v7625, %v7627
    %v7629 = vrot.slane %v7619, %v7628
    %v7631 = vunpack.c.l.s4 1966171168
    %v7632 = vunpack.c.0.s8 %v7631
    %v7633 = vlaneseq
    %v7634 = vshrl.u32 %v7633, 7
    %v7635 = vsub.s32 %v7632, %v7634
    %v7636 = vrot.slane %v7620, %v7635
    %v7638 = vunpack.c.l.s4 1966171168
    %v7639 = vunpack.c.0.s8 %v7638
    %v7640 = vlaneseq
    %v7641 = vshrl.u32 %v7640, 7
    %v7642 = vsub.s32 %v7639, %v7641
    %v7643 = vrot.slane %v7621, %v7642
    %v7645 = vunpack.c.l.s4 1966171168
    %v7646 = vunpack.c.0.s8 %v7645
    %v7647 = vlaneseq
    %v7648 = vshrl.u32 %v7647, 7
    %v7649 = vsub.s32 %v7646, %v7648
    %v7650 = vrot.slane %v7622, %v7649
    %v7651 = vcombine.low %v7629, %v7636
    %v7652 = vcombine.high %v7629, %v7636
    %v7653 = vcombine.low %v7643, %v7650
    %v7654 = vcombine.high %v7643, %v7650
    %v7656 = vunpack.c.l.s4 1966171168
    %v7657 = vunpack.c.0.s8 %v7656
    %v7658 = vlaneseq
    %v7659 = vshrl.u32 %v7658, 7
    %v7660 = vsub.s32 %v7657, %v7659
    %v7661 = vrot.slane %v7651, %v7660
    %v7663 = vunpack.c.l.s4 1966171168
    %v7664 = vunpack.c.0.s8 %v7663
    %v7665 = vlaneseq
    %v7666 = vshrl.u32 %v7665, 7
    %v7667 = vsub.s32 %v7664, %v7666
    %v7668 = vrot.slane %v7652, %v7667
    %v7670 = vunpack.c.l.s4 1966171168
    %v7671 = vunpack.c.0.s8 %v7670
    %v7672 = vlaneseq
    %v7673 = vshrl.u32 %v7672, 7
    %v7674 = vsub.s32 %v7671, %v7673
    %v7675 = vrot.slane %v7653, %v7674
    %v7677 = vunpack.c.l.s4 1966171168
    %v7678 = vunpack.c.0.s8 %v7677
    %v7679 = vlaneseq
    %v7680 = vshrl.u32 %v7679, 7
    %v7681 = vsub.s32 %v7678, %v7680
    %v7682 = vrot.slane %v7654, %v7681
    %v7683 = vcombine.low %v7661, %v7675
    %v7684 = vcombine.high %v7661, %v7675
    %v7685 = vcombine.low %v7668, %v7682
    %v7686 = vcombine.high %v7668, %v7682
    %v7687 = vcombine.low %v6867, %v6869
    %v7689 = vunpack.c.l.s4 1966171168
    %v7690 = vunpack.c.0.s8 %v7689
    %v7691 = vlaneseq
    %v7692 = vshrl.u32 %v7691, 7
    %v7693 = vsub.s32 %v7690, %v7692
    %v7694 = vrot.slane %v7687, %v7693
    %v7695 = vcombine.high %v7694, %v7694
    %v7697 = vunpack.c.l.s4 1966171168
    %v7698 = vunpack.c.0.s8 %v7697
    %v7699 = vlaneseq
    %v7700 = vshrl.u32 %v7699, 7
    %v7701 = vsub.s32 %v7698, %v7700
    %v7702 = vrot.slane %v7694, %v7701
    %v7704 = vunpack.c.l.s4 1966171168
    %v7705 = vunpack.c.0.s8 %v7704
    %v7706 = vlaneseq
    %v7707 = vshrl.u32 %v7706, 7
    %v7708 = vsub.s32 %v7705, %v7707
    %v7709 = vrot.slane %v7695, %v7708
    %v7710 = vcombine.high %v7702, %v7702
    %v7711 = vcombine.high %v7709, %v7709
    %v7764 = vpack.c.bf16 %v7003, %v6935
    %v7765 = vpack.c.bf16 %v7005, %v6937
    %v7766 = vpack.c.bf16 %v7004, %v6936
    %v7767 = vpack.c.bf16 %v7006, %v6938
    %v7768 = vpack.c.bf16 %v7139, %v7071
    %v7769 = vpack.c.bf16 %v7141, %v7073
    %v7770 = vpack.c.bf16 %v7140, %v7072
    %v7771 = vpack.c.bf16 %v7142, %v7074
    %v7772 = vpack.c.bf16 %v7275, %v7207
    %v7773 = vpack.c.bf16 %v7277, %v7209
    %v7774 = vpack.c.bf16 %v7276, %v7208
    %v7775 = vpack.c.bf16 %v7278, %v7210
    %v7776 = vpack.c.bf16 %v7411, %v7343
    %v7777 = vpack.c.bf16 %v7413, %v7345
    %v7778 = vpack.c.bf16 %v7412, %v7344
    %v7779 = vpack.c.bf16 %v7414, %v7346
    %v7780 = vpack.c.bf16 %v7547, %v7479
    %v7781 = vpack.c.bf16 %v7549, %v7481
    %v7782 = vpack.c.bf16 %v7548, %v7480
    %v7783 = vpack.c.bf16 %v7550, %v7482
    %v7784 = vpack.c.bf16 %v7683, %v7615
    %v7785 = vpack.c.bf16 %v7685, %v7617
    %v7786 = vpack.c.bf16 %v7684, %v7616
    %v7787 = vpack.c.bf16 %v7686, %v7618
    %v7788 = vpack.c.bf16 %v7702, %v7702
    %v7789 = vpack.c.bf16 %v7709, %v7709
    %v7790 = vpack.c.bf16 %v7710, %v7710
    %v7791 = vpack.c.bf16 %v7711, %v7711
    %v7792 = vld [vmem:[#allocation17] sm:$0xf]
    %v7793 = vld [vmem:[#allocation17 + $0x4] sm:$0xf]
    %v7794 = vld [vmem:[#allocation17 + $0x8] sm:$0xf]
    %v7795 = vld [vmem:[#allocation17 + $0xc] sm:$0xf]
    %v7796 = vld [vmem:[#allocation17 + $0x10] sm:$0xf]
    %v7797 = vld [vmem:[#allocation17 + $0x14] sm:$0xf]
    %v7798 = vld [vmem:[#allocation17 + $0x18] sm:$0xf]
    %v7799 = vld [vmem:[#allocation17 + $0x1c] sm:$0xf]
    %v7800 = vld [vmem:[#allocation17 + $0x20] sm:$0xf]
    %v7801 = vld [vmem:[#allocation17 + $0x24] sm:$0xf]
    %v7802 = vld [vmem:[#allocation17 + $0x28] sm:$0xf]
    %v7803 = vld [vmem:[#allocation17 + $0x2c] sm:$0xf]
    %v7804 = vld [vmem:[#allocation17 + $0x30] sm:$0xf]
    %v7805 = vld [vmem:[#allocation17 + $0x34] sm:$0xf]
    %v7806 = vld [vmem:[#allocation17 + $0x38] sm:$0xf]
    %v7807 = vld [vmem:[#allocation17 + $0x3c] sm:$0xf]
    %v7808 = vld [vmem:[#allocation17 + $0x40] sm:$0xf]
    %v7809 = vld [vmem:[#allocation17 + $0x44] sm:$0xf]
    %v7810 = vld [vmem:[#allocation17 + $0x48] sm:$0xf]
    %v7811 = vld [vmem:[#allocation17 + $0x4c] sm:$0xf]
    %v7812 = vld [vmem:[#allocation17 + $0x50] sm:$0xf]
    %v7813 = vld [vmem:[#allocation17 + $0x54] sm:$0xf]
    %v7814 = vld [vmem:[#allocation17 + $0x58] sm:$0xf]
    %v7815 = vld [vmem:[#allocation17 + $0x5c] sm:$0xf]
    %v7816 = vld [vmem:[#allocation17 + $0x60] sm:$0xf]
    %v7817 = vld [vmem:[#allocation17 + $0x64] sm:$0xf]
    %v7818 = vld [vmem:[#allocation17 + $0x68] sm:$0xf]
    %v7819 = vld [vmem:[#allocation17 + $0x6c] sm:$0xf]
    %v7820 = vld [vmem:[#allocation17 + $0x70] sm:$0xf]
    %v7821 = vld [vmem:[#allocation17 + $0x74] sm:$0xf]
    %v7822 = vld [vmem:[#allocation17 + $0x78] sm:$0xf]
    %v7823 = vld [vmem:[#allocation17 + $0x7c] sm:$0xf]
    %v7824 = vld [vmem:[#allocation17 + $0x80] sm:$0xf]
    %v7825 = vld [vmem:[#allocation17 + $0x84] sm:$0xf]
    %v7826 = vld [vmem:[#allocation17 + $0x88] sm:$0xf]
    %v7827 = vld [vmem:[#allocation17 + $0x8c] sm:$0xf]
    %v7828 = vld [vmem:[#allocation17 + $0x90] sm:$0xf]
    %v7829 = vld [vmem:[#allocation17 + $0x94] sm:$0xf]
    %v7830 = vld [vmem:[#allocation17 + $0x98] sm:$0xf]
    %v7831 = vld [vmem:[#allocation17 + $0x9c] sm:$0xf]
    %v7832 = vld [vmem:[#allocation17 + $0xa0] sm:$0xf]
    %v7833 = vld [vmem:[#allocation17 + $0xa4] sm:$0xf]
    %v7834 = vld [vmem:[#allocation17 + $0xa8] sm:$0xf]
    %v7835 = vld [vmem:[#allocation17 + $0xac] sm:$0xf]
    %v7836 = vld [vmem:[#allocation17 + $0xb0] sm:$0xf]
    %v7837 = vld [vmem:[#allocation17 + $0xb4] sm:$0xf]
    %v7838 = vld [vmem:[#allocation17 + $0xb8] sm:$0xf]
    %v7839 = vld [vmem:[#allocation17 + $0xbc] sm:$0xf]
    %v7840 = vld [vmem:[#allocation17 + $0xc0] sm:$0xf]
    %v7841 = vld [vmem:[#allocation17 + $0xc4] sm:$0xf]
    %v7842 = vld [vmem:[#allocation17 + $0xc8] sm:$0xf]
    %v7843 = vld [vmem:[#allocation17 + $0xcc] sm:$0xf]
    %v7844 = vld [vmem:[#allocation17 + $0xd0] sm:$0xf]
    %v7845 = vld [vmem:[#allocation17 + $0xd4] sm:$0xf]
    %v7846 = vld [vmem:[#allocation17 + $0xd8] sm:$0xf]
    %v7847 = vld [vmem:[#allocation17 + $0xdc] sm:$0xf]
    %v7848 = vld [vmem:[#allocation17 + $0xe0] sm:$0xf]
    %v7849 = vld [vmem:[#allocation17 + $0xe4] sm:$0xf]
    %v7850 = vld [vmem:[#allocation17 + $0xe8] sm:$0xf]
    %v7851 = vld [vmem:[#allocation17 + $0xec] sm:$0xf]
    %v7852 = vld [vmem:[#allocation17 + $0xf0] sm:$0xf]
    %v7853 = vld [vmem:[#allocation17 + $0xf4] sm:$0xf]
    %v7854 = vld [vmem:[#allocation17 + $0xf8] sm:$0xf]
    %v7855 = vld [vmem:[#allocation17 + $0xfc] sm:$0xf]
    %v7920 = vunpack.c.l.b16 %v7792
    %v7921 = vunpack.c.l.b16 %v7793
    %v7922 = vunpack.c.l.b16 %v7794
    %v7923 = vunpack.c.l.b16 %v7795
    %v7924 = vunpack.c.l.b16 %v7796
    %v7925 = vunpack.c.l.b16 %v7797
    %v7926 = vunpack.c.l.b16 %v7798
    %v7927 = vunpack.c.l.b16 %v7799
    %v7928 = vunpack.c.l.b16 %v7800
    %v7929 = vunpack.c.l.b16 %v7801
    %v7930 = vunpack.c.l.b16 %v7802
    %v7931 = vunpack.c.l.b16 %v7803
    %v7932 = vunpack.c.l.b16 %v7804
    %v7933 = vunpack.c.l.b16 %v7805
    %v7934 = vunpack.c.l.b16 %v7806
    %v7935 = vunpack.c.l.b16 %v7807
    %v7936 = vunpack.c.l.b16 %v7808
    %v7937 = vunpack.c.l.b16 %v7809
    %v7938 = vunpack.c.l.b16 %v7810
    %v7939 = vunpack.c.l.b16 %v7811
    %v7940 = vunpack.c.l.b16 %v7812
    %v7941 = vunpack.c.l.b16 %v7813
    %v7942 = vunpack.c.l.b16 %v7814
    %v7943 = vunpack.c.l.b16 %v7815
    %v7944 = vunpack.c.l.b16 %v7816
    %v7945 = vunpack.c.l.b16 %v7817
    %v7946 = vunpack.c.l.b16 %v7818
    %v7947 = vunpack.c.l.b16 %v7819
    %v7948 = vunpack.c.l.b16 %v7820
    %v7949 = vunpack.c.l.b16 %v7821
    %v7950 = vunpack.c.l.b16 %v7822
    %v7951 = vunpack.c.l.b16 %v7823
    %v7952 = vunpack.c.l.b16 %v7824
    %v7953 = vunpack.c.l.b16 %v7825
    %v7954 = vunpack.c.l.b16 %v7826
    %v7955 = vunpack.c.l.b16 %v7827
    %v7956 = vunpack.c.l.b16 %v7828
    %v7957 = vunpack.c.l.b16 %v7829
    %v7958 = vunpack.c.l.b16 %v7830
    %v7959 = vunpack.c.l.b16 %v7831
    %v7960 = vunpack.c.l.b16 %v7832
    %v7961 = vunpack.c.l.b16 %v7833
    %v7962 = vunpack.c.l.b16 %v7834
    %v7963 = vunpack.c.l.b16 %v7835
    %v7964 = vunpack.c.l.b16 %v7836
    %v7965 = vunpack.c.l.b16 %v7837
    %v7966 = vunpack.c.l.b16 %v7838
    %v7967 = vunpack.c.l.b16 %v7839
    %v7968 = vunpack.c.l.b16 %v7840
    %v7969 = vunpack.c.l.b16 %v7841
    %v7970 = vunpack.c.l.b16 %v7842
    %v7971 = vunpack.c.l.b16 %v7843
    %v7972 = vunpack.c.l.b16 %v7844
    %v7973 = vunpack.c.l.b16 %v7845
    %v7974 = vunpack.c.l.b16 %v7846
    %v7975 = vunpack.c.l.b16 %v7847
    %v7976 = vunpack.c.l.b16 %v7848
    %v7977 = vunpack.c.l.b16 %v7849
    %v7978 = vunpack.c.l.b16 %v7850
    %v7979 = vunpack.c.l.b16 %v7851
    %v7980 = vunpack.c.l.b16 %v7852
    %v7981 = vunpack.c.l.b16 %v7853
    %v7982 = vunpack.c.l.b16 %v7854
    %v7983 = vunpack.c.l.b16 %v7855
    %v7984 = vpack.c.b16 %v7921, %v7920
    %v7985 = vpack.c.b16 %v7923, %v7922
    %v7986 = vpack.c.b16 %v7925, %v7924
    %v7987 = vpack.c.b16 %v7927, %v7926
    %v7988 = vpack.c.b16 %v7929, %v7928
    %v7989 = vpack.c.b16 %v7931, %v7930
    %v7990 = vpack.c.b16 %v7933, %v7932
    %v7991 = vpack.c.b16 %v7935, %v7934
    %v7992 = vpack.c.b16 %v7937, %v7936
    %v7993 = vpack.c.b16 %v7939, %v7938
    %v7994 = vpack.c.b16 %v7941, %v7940
    %v7995 = vpack.c.b16 %v7943, %v7942
    %v7996 = vpack.c.b16 %v7945, %v7944
    %v7997 = vpack.c.b16 %v7947, %v7946
    %v7998 = vpack.c.b16 %v7949, %v7948
    %v7999 = vpack.c.b16 %v7951, %v7950
    %v8000 = vpack.c.b16 %v7953, %v7952
    %v8001 = vpack.c.b16 %v7955, %v7954
    %v8002 = vpack.c.b16 %v7957, %v7956
    %v8003 = vpack.c.b16 %v7959, %v7958
    %v8004 = vpack.c.b16 %v7961, %v7960
    %v8005 = vpack.c.b16 %v7963, %v7962
    %v8006 = vpack.c.b16 %v7965, %v7964
    %v8007 = vpack.c.b16 %v7967, %v7966
    %v8008 = vpack.c.b16 %v7969, %v7968
    %v8009 = vpack.c.b16 %v7971, %v7970
    %v8010 = vpack.c.b16 %v7973, %v7972
    %v8011 = vpack.c.b16 %v7975, %v7974
    %v8012 = vpack.c.b16 %v7977, %v7976
    %v8013 = vpack.c.b16 %v7979, %v7978
    %v8014 = vpack.c.b16 %v7981, %v7980
    %v8015 = vpack.c.b16 %v7983, %v7982
    %8048 = vmatprep.subr.bf16.mxu0 0
    %8049 = vmatpush1.bf16.msra.mxu0 %v7991
    %8050 = vmatprep.subr.bf16.mxu0 0
    %8051 = vmatpush1.bf16.msra.mxu0 %v7990
    %8052 = vmatprep.subr.bf16.mxu0 0
    %8053 = vmatpush1.bf16.msra.mxu0 %v7989
    %8054 = vmatprep.subr.bf16.mxu0 0
    %8055 = vmatpush1.bf16.msra.mxu0 %v7988
    %8056 = vmatprep.subr.bf16.mxu0 0
    %8057 = vmatpush1.bf16.msra.mxu0 %v7987
    %8058 = vmatprep.subr.bf16.mxu0 0
    %8059 = vmatpush1.bf16.msra.mxu0 %v7986
    %8060 = vmatprep.subr.bf16.mxu0 0
    %8061 = vmatpush1.bf16.msra.mxu0 %v7985
    %8062 = vmatprep.subr.bf16.mxu0 0
    %8063 = vmatpush1.bf16.msra.mxu0 %v7984
    %8064 = vmatprep.subr.bf16.mxu0 0
    %8065 = vmatpush2.bf16.msra.mxu0 %v7999
    %8066 = vmatprep.subr.bf16.mxu0 0
    %8067 = vmatpush2.bf16.msra.mxu0 %v7998
    %8068 = vmatprep.subr.bf16.mxu0 0
    %8069 = vmatpush2.bf16.msra.mxu0 %v7997
    %8070 = vmatprep.subr.bf16.mxu0 0
    %8071 = vmatpush2.bf16.msra.mxu0 %v7996
    %8072 = vmatprep.subr.bf16.mxu0 0
    %8073 = vmatpush2.bf16.msra.mxu0 %v7995
    %8074 = vmatprep.subr.bf16.mxu0 0
    %8075 = vmatpush2.bf16.msra.mxu0 %v7994
    %8076 = vmatprep.subr.bf16.mxu0 0
    %8077 = vmatpush2.bf16.msra.mxu0 %v7993
    %8078 = vmatprep.subr.bf16.mxu0 0
    %8079 = vmatpush2.bf16.msra.mxu0 %v7992
    %8080 = vmatprep.mubr.bf16.mxu0 %v7765
    %8081 = vmatmul.mubr.bf16.gmra.mxu0 %v7764
    %v8082 = vpop.f32.mrf.mxu0
    %v8083 = vadd.f32 0.0, %v8082
    %v8084 = vpop.f32.mrf.mxu0
    %v8085 = vpop.f32.mrf.mxu0
    %v8086 = vadd.f32 0.0, %v8085
    %v8087 = vpop.f32.mrf.mxu0
    %8088 = vmatprep.mubr.bf16.mxu0 %v7769
    %8089 = vmatmul.mubr.bf16.gmra.mxu0 %v7768
    %v8090 = vpop.f32.mrf.mxu0
    %v8091 = vadd.f32 0.0, %v8090
    %v8092 = vpop.f32.mrf.mxu0
    %v8093 = vpop.f32.mrf.mxu0
    %v8094 = vadd.f32 0.0, %v8093
    %v8095 = vpop.f32.mrf.mxu0
    %8096 = vmatprep.mubr.bf16.mxu0 %v7773
    %8097 = vmatmul.mubr.bf16.gmra.mxu0 %v7772
    %v8098 = vpop.f32.mrf.mxu0
    %v8099 = vadd.f32 0.0, %v8098
    %v8100 = vpop.f32.mrf.mxu0
    %v8101 = vpop.f32.mrf.mxu0
    %v8102 = vadd.f32 0.0, %v8101
    %v8103 = vpop.f32.mrf.mxu0
    %8104 = vmatprep.mubr.bf16.mxu0 %v7777
    %8105 = vmatmul.mubr.bf16.gmra.mxu0 %v7776
    %v8106 = vpop.f32.mrf.mxu0
    %v8107 = vadd.f32 0.0, %v8106
    %v8108 = vpop.f32.mrf.mxu0
    %v8109 = vpop.f32.mrf.mxu0
    %v8110 = vadd.f32 0.0, %v8109
    %v8111 = vpop.f32.mrf.mxu0
    %8112 = vmatprep.mubr.bf16.mxu0 %v7781
    %8113 = vmatmul.mubr.bf16.gmra.mxu0 %v7780
    %v8114 = vpop.f32.mrf.mxu0
    %v8115 = vadd.f32 0.0, %v8114
    %v8116 = vpop.f32.mrf.mxu0
    %v8117 = vpop.f32.mrf.mxu0
    %v8118 = vadd.f32 0.0, %v8117
    %v8119 = vpop.f32.mrf.mxu0
    %8120 = vmatprep.mubr.bf16.mxu0 %v7785
    %8121 = vmatmul.mubr.bf16.gmra.mxu0 %v7784
    %v8122 = vpop.f32.mrf.mxu0
    %v8123 = vadd.f32 0.0, %v8122
    %v8124 = vpop.f32.mrf.mxu0
    %v8125 = vpop.f32.mrf.mxu0
    %v8126 = vadd.f32 0.0, %v8125
    %v8127 = vpop.f32.mrf.mxu0
    %8128 = vmatprep.mubr.bf16.mxu0 %v7789
    %8129 = vmatmul.mubr.bf16.gmra.mxu0 %v7788
    %v8130 = vpop.f32.mrf.mxu0
    %v8131 = vadd.f32 0.0, %v8130
    %v8132 = vpop.f32.mrf.mxu0
    %v8133 = vpop.f32.mrf.mxu0
    %v8134 = vpop.f32.mrf.mxu0
    %8135 = vdwg.mxu0
    %8136 = vmatprep.subr.bf16.mxu0 0
    %8137 = vmatpush1.bf16.msra.mxu0 %v8007
    %8138 = vmatprep.subr.bf16.mxu0 0
    %8139 = vmatpush1.bf16.msra.mxu0 %v8006
    %8140 = vmatprep.subr.bf16.mxu0 0
    %8141 = vmatpush1.bf16.msra.mxu0 %v8005
    %8142 = vmatprep.subr.bf16.mxu0 0
    %8143 = vmatpush1.bf16.msra.mxu0 %v8004
    %8144 = vmatprep.subr.bf16.mxu0 0
    %8145 = vmatpush1.bf16.msra.mxu0 %v8003
    %8146 = vmatprep.subr.bf16.mxu0 0
    %8147 = vmatpush1.bf16.msra.mxu0 %v8002
    %8148 = vmatprep.subr.bf16.mxu0 0
    %8149 = vmatpush1.bf16.msra.mxu0 %v8001
    %8150 = vmatprep.subr.bf16.mxu0 0
    %8151 = vmatpush1.bf16.msra.mxu0 %v8000
    %8152 = vmatprep.subr.bf16.mxu0 0
    %8153 = vmatpush2.bf16.msra.mxu0 %v8015
    %8154 = vmatprep.subr.bf16.mxu0 0
    %8155 = vmatpush2.bf16.msra.mxu0 %v8014
    %8156 = vmatprep.subr.bf16.mxu0 0
    %8157 = vmatpush2.bf16.msra.mxu0 %v8013
    %8158 = vmatprep.subr.bf16.mxu0 0
    %8159 = vmatpush2.bf16.msra.mxu0 %v8012
    %8160 = vmatprep.subr.bf16.mxu0 0
    %8161 = vmatpush2.bf16.msra.mxu0 %v8011
    %8162 = vmatprep.subr.bf16.mxu0 0
    %8163 = vmatpush2.bf16.msra.mxu0 %v8010
    %8164 = vmatprep.subr.bf16.mxu0 0
    %8165 = vmatpush2.bf16.msra.mxu0 %v8009
    %8166 = vmatprep.subr.bf16.mxu0 0
    %8167 = vmatpush2.bf16.msra.mxu0 %v8008
    %8168 = vmatprep.mubr.bf16.mxu0 %v7767
    %8169 = vmatmul.mubr.bf16.gmra.mxu0 %v7766
    %v8170 = vpop.f32.mrf.mxu0
    %v8171 = vadd.f32 %v8083, %v8170
    %v8172 = vpop.f32.mrf.mxu0
    %v8173 = vpop.f32.mrf.mxu0
    %v8174 = vadd.f32 %v8086, %v8173
    %v8175 = vpop.f32.mrf.mxu0
    %8176 = vmatprep.mubr.bf16.mxu0 %v7771
    %8177 = vmatmul.mubr.bf16.gmra.mxu0 %v7770
    %v8178 = vpop.f32.mrf.mxu0
    %v8179 = vadd.f32 %v8091, %v8178
    %v8180 = vpop.f32.mrf.mxu0
    %v8181 = vpop.f32.mrf.mxu0
    %v8182 = vadd.f32 %v8094, %v8181
    %v8183 = vpop.f32.mrf.mxu0
    %8184 = vmatprep.mubr.bf16.mxu0 %v7775
    %8185 = vmatmul.mubr.bf16.gmra.mxu0 %v7774
    %v8186 = vpop.f32.mrf.mxu0
    %v8187 = vadd.f32 %v8099, %v8186
    %v8188 = vpop.f32.mrf.mxu0
    %v8189 = vpop.f32.mrf.mxu0
    %v8190 = vadd.f32 %v8102, %v8189
    %v8191 = vpop.f32.mrf.mxu0
    %8192 = vmatprep.mubr.bf16.mxu0 %v7779
    %8193 = vmatmul.mubr.bf16.gmra.mxu0 %v7778
    %v8194 = vpop.f32.mrf.mxu0
    %v8195 = vadd.f32 %v8107, %v8194
    %v8196 = vpop.f32.mrf.mxu0
    %v8197 = vpop.f32.mrf.mxu0
    %v8198 = vadd.f32 %v8110, %v8197
    %v8199 = vpop.f32.mrf.mxu0
    %8200 = vmatprep.mubr.bf16.mxu0 %v7783
    %8201 = vmatmul.mubr.bf16.gmra.mxu0 %v7782
    %v8202 = vpop.f32.mrf.mxu0
    %v8203 = vadd.f32 %v8115, %v8202
    %v8204 = vpop.f32.mrf.mxu0
    %v8205 = vpop.f32.mrf.mxu0
    %v8206 = vadd.f32 %v8118, %v8205
    %v8207 = vpop.f32.mrf.mxu0
    %8208 = vmatprep.mubr.bf16.mxu0 %v7787
    %8209 = vmatmul.mubr.bf16.gmra.mxu0 %v7786
    %v8210 = vpop.f32.mrf.mxu0
    %v8211 = vadd.f32 %v8123, %v8210
    %v8212 = vpop.f32.mrf.mxu0
    %v8213 = vpop.f32.mrf.mxu0
    %v8214 = vadd.f32 %v8126, %v8213
    %v8215 = vpop.f32.mrf.mxu0
    %8216 = vmatprep.mubr.bf16.mxu0 %v7791
    %8217 = vmatmul.mubr.bf16.gmra.mxu0 %v7790
    %v8218 = vpop.f32.mrf.mxu0
    %v8219 = vadd.f32 %v8131, %v8218
    %v8220 = vpop.f32.mrf.mxu0
    %v8221 = vpop.f32.mrf.mxu0
    %v8222 = vpop.f32.mrf.mxu0
    %8223 = vdwg.mxu0
    %v8224 = vadd.f32 %v8171, %v8174
    %v8225 = vadd.f32 %v8224, %v8179
    %v8226 = vadd.f32 %v8225, %v8182
    %v8227 = vadd.f32 %v8226, %v8187
    %v8228 = vadd.f32 %v8227, %v8190
    %v8229 = vadd.f32 %v8228, %v8195
    %v8230 = vadd.f32 %v8229, %v8198
    %v8231 = vadd.f32 %v8230, %v8203
    %v8232 = vadd.f32 %v8231, %v8206
    %v8233 = vadd.f32 %v8232, %v8211
    %v8234 = vadd.f32 %v8233, %v8214
    %v8235 = vsel %vm1448, %v8219, 0.0
    %v8236 = vadd.f32 %v8234, %v8235
    %v8237 = vrot.slane %v8236, 4
    %v8238 = vadd.f32 %v8236, %v8237
    %v8239 = vrot.slane %v8238, 2
    %v8240 = vadd.f32 %v8238, %v8239
    %v8241 = vrot.slane %v8240, 1
    %v8242 = vadd.f32 %v8240, %v8241
    %v8243 = vrcp.pop 98.0
    %v8244 = vmul.f32 %v8242, %v8243
    %v8245 = vsub.f32 %v8171, %v8244
    %v8246 = vsub.f32 %v8174, %v8244
    %v8247 = vsub.f32 %v8179, %v8244
    %v8248 = vsub.f32 %v8182, %v8244
    %v8249 = vsub.f32 %v8187, %v8244
    %v8250 = vsub.f32 %v8190, %v8244
    %v8251 = vsub.f32 %v8195, %v8244
    %v8252 = vsub.f32 %v8198, %v8244
    %v8253 = vsub.f32 %v8203, %v8244
    %v8254 = vsub.f32 %v8206, %v8244
    %v8255 = vsub.f32 %v8211, %v8244
    %v8256 = vsub.f32 %v8214, %v8244
    %v8257 = vsub.f32 %v8219, %v8244
    %v8258 = vmul.f32 %v8245, %v8245
    %v8259 = vmul.f32 %v8246, %v8246
    %v8260 = vmul.f32 %v8247, %v8247
    %v8261 = vmul.f32 %v8248, %v8248
    %v8262 = vmul.f32 %v8249, %v8249
    %v8263 = vmul.f32 %v8250, %v8250
    %v8264 = vmul.f32 %v8251, %v8251
    %v8265 = vmul.f32 %v8252, %v8252
    %v8266 = vmul.f32 %v8253, %v8253
    %v8267 = vmul.f32 %v8254, %v8254
    %v8268 = vmul.f32 %v8255, %v8255
    %v8269 = vmul.f32 %v8256, %v8256
    %v8270 = vmul.f32 %v8257, %v8257
    %v8271 = vadd.f32 %v8258, %v8259
    %v8272 = vadd.f32 %v8271, %v8260
    %v8273 = vadd.f32 %v8272, %v8261
    %v8274 = vadd.f32 %v8273, %v8262
    %v8275 = vadd.f32 %v8274, %v8263
    %v8276 = vadd.f32 %v8275, %v8264
    %v8277 = vadd.f32 %v8276, %v8265
    %v8278 = vadd.f32 %v8277, %v8266
    %v8279 = vadd.f32 %v8278, %v8267
    %v8280 = vadd.f32 %v8279, %v8268
    %v8281 = vadd.f32 %v8280, %v8269
    %v8282 = vsel %vm1448, %v8270, 0.0
    %v8283 = vadd.f32 %v8281, %v8282
    %v8284 = vrot.slane %v8283, 4
    %v8285 = vadd.f32 %v8283, %v8284
    %v8286 = vrot.slane %v8285, 2
    %v8287 = vadd.f32 %v8285, %v8286
    %v8288 = vrot.slane %v8287, 1
    %v8289 = vadd.f32 %v8287, %v8288
    %v8290 = vmul.f32 %v8289, %v8243
    %v8291 = vadd.f32 %v8290, 1e-05
    %v8292 = vrsqrt.pop %v8291
    %v8293 = vmul.f32 %v8245, %v8292
    %v8294 = vmul.f32 %v8246, %v8292
    %v8295 = vmul.f32 %v8247, %v8292
    %v8296 = vmul.f32 %v8248, %v8292
    %v8297 = vmul.f32 %v8249, %v8292
    %v8298 = vmul.f32 %v8250, %v8292
    %v8299 = vmul.f32 %v8251, %v8292
    %v8300 = vmul.f32 %v8252, %v8292
    %v8301 = vmul.f32 %v8253, %v8292
    %v8302 = vmul.f32 %v8254, %v8292
    %v8303 = vmul.f32 %v8255, %v8292
    %v8304 = vmul.f32 %v8256, %v8292
    %v8305 = vmul.f32 %v8257, %v8292
    %v8306 = vld [vmem:[%s17] sm:$0x1]
    %v8308 = vlaneseq
    %v8309 = vshrl.u32 %v8308, 7
    %v8310 = vsub.s32 0, %v8309
    %v8311 = vrot.slane %v8306, %v8310
    %v8313 = vmul.f32 %v8293, %v8311
    %v8314 = vmul.f32 %v8294, %v8311
    %v8315 = vmul.f32 %v8295, %v8311
    %v8316 = vmul.f32 %v8296, %v8311
    %v8317 = vmul.f32 %v8297, %v8311
    %v8318 = vmul.f32 %v8298, %v8311
    %v8319 = vmul.f32 %v8299, %v8311
    %v8320 = vmul.f32 %v8300, %v8311
    %v8321 = vmul.f32 %v8301, %v8311
    %v8322 = vmul.f32 %v8302, %v8311
    %v8323 = vmul.f32 %v8303, %v8311
    %v8324 = vmul.f32 %v8304, %v8311
    %v8325 = vmul.f32 %v8305, %v8311
    %v8326 = vld [vmem:[%s18] sm:$0x1]
    %v8328 = vlaneseq
    %v8329 = vshrl.u32 %v8328, 7
    %v8330 = vsub.s32 0, %v8329
    %v8331 = vrot.slane %v8326, %v8330
    %v8333 = vadd.f32 %v8313, %v8331
    %v8334 = vadd.f32 %v8314, %v8331
    %v8335 = vadd.f32 %v8315, %v8331
    %v8336 = vadd.f32 %v8316, %v8331
    %v8337 = vadd.f32 %v8317, %v8331
    %v8338 = vadd.f32 %v8318, %v8331
    %v8339 = vadd.f32 %v8319, %v8331
    %v8340 = vadd.f32 %v8320, %v8331
    %v8341 = vadd.f32 %v8321, %v8331
    %v8342 = vadd.f32 %v8322, %v8331
    %v8343 = vadd.f32 %v8323, %v8331
    %v8344 = vadd.f32 %v8324, %v8331
    %v8345 = vadd.f32 %v8325, %v8331
    %v8346 = vmax.f32 %v8333, 0.0
    %v8347 = vmax.f32 %v8334, 0.0
    %v8348 = vmax.f32 %v8335, 0.0
    %v8349 = vmax.f32 %v8336, 0.0
    %v8350 = vmax.f32 %v8337, 0.0
    %v8351 = vmax.f32 %v8338, 0.0
    %v8352 = vmax.f32 %v8339, 0.0
    %v8353 = vmax.f32 %v8340, 0.0
    %v8354 = vmax.f32 %v8341, 0.0
    %v8355 = vmax.f32 %v8342, 0.0
    %v8356 = vmax.f32 %v8343, 0.0
    %v8357 = vmax.f32 %v8344, 0.0
    %v8358 = vmax.f32 %v8345, 0.0
    %v8372 = vcombine.high %v8346, %v8346
    %v8374 = vunpack.c.l.s4 1966171168
    %v8375 = vunpack.c.0.s8 %v8374
    %v8376 = vlaneseq
    %v8377 = vshrl.u32 %v8376, 7
    %v8378 = vsub.s32 %v8375, %v8377
    %v8379 = vrot.slane %v8346, %v8378
    %v8381 = vunpack.c.l.s4 1966171168
    %v8382 = vunpack.c.0.s8 %v8381
    %v8383 = vlaneseq
    %v8384 = vshrl.u32 %v8383, 7
    %v8385 = vsub.s32 %v8382, %v8384
    %v8386 = vrot.slane %v8372, %v8385
    %v8387 = vcombine.high %v8379, %v8379
    %v8388 = vcombine.high %v8386, %v8386
    %v8390 = vunpack.c.l.s4 1966171168
    %v8391 = vunpack.c.0.s8 %v8390
    %v8392 = vlaneseq
    %v8393 = vshrl.u32 %v8392, 7
    %v8394 = vsub.s32 %v8391, %v8393
    %v8395 = vrot.slane %v8379, %v8394
    %v8397 = vunpack.c.l.s4 1966171168
    %v8398 = vunpack.c.0.s8 %v8397
    %v8399 = vlaneseq
    %v8400 = vshrl.u32 %v8399, 7
    %v8401 = vsub.s32 %v8398, %v8400
    %v8402 = vrot.slane %v8386, %v8401
    %v8404 = vunpack.c.l.s4 1966171168
    %v8405 = vunpack.c.0.s8 %v8404
    %v8406 = vlaneseq
    %v8407 = vshrl.u32 %v8406, 7
    %v8408 = vsub.s32 %v8405, %v8407
    %v8409 = vrot.slane %v8387, %v8408
    %v8411 = vunpack.c.l.s4 1966171168
    %v8412 = vunpack.c.0.s8 %v8411
    %v8413 = vlaneseq
    %v8414 = vshrl.u32 %v8413, 7
    %v8415 = vsub.s32 %v8412, %v8414
    %v8416 = vrot.slane %v8388, %v8415
    %v8417 = vcombine.high %v8395, %v8395
    %v8418 = vcombine.high %v8402, %v8402
    %v8419 = vcombine.high %v8409, %v8409
    %v8420 = vcombine.high %v8416, %v8416
    %v8421 = vcombine.high %v8347, %v8347
    %v8423 = vunpack.c.l.s4 1966171168
    %v8424 = vunpack.c.0.s8 %v8423
    %v8425 = vlaneseq
    %v8426 = vshrl.u32 %v8425, 7
    %v8427 = vsub.s32 %v8424, %v8426
    %v8428 = vrot.slane %v8347, %v8427
    %v8430 = vunpack.c.l.s4 1966171168
    %v8431 = vunpack.c.0.s8 %v8430
    %v8432 = vlaneseq
    %v8433 = vshrl.u32 %v8432, 7
    %v8434 = vsub.s32 %v8431, %v8433
    %v8435 = vrot.slane %v8421, %v8434
    %v8436 = vcombine.high %v8428, %v8428
    %v8437 = vcombine.high %v8435, %v8435
    %v8439 = vunpack.c.l.s4 1966171168
    %v8440 = vunpack.c.0.s8 %v8439
    %v8441 = vlaneseq
    %v8442 = vshrl.u32 %v8441, 7
    %v8443 = vsub.s32 %v8440, %v8442
    %v8444 = vrot.slane %v8428, %v8443
    %v8446 = vunpack.c.l.s4 1966171168
    %v8447 = vunpack.c.0.s8 %v8446
    %v8448 = vlaneseq
    %v8449 = vshrl.u32 %v8448, 7
    %v8450 = vsub.s32 %v8447, %v8449
    %v8451 = vrot.slane %v8435, %v8450
    %v8453 = vunpack.c.l.s4 1966171168
    %v8454 = vunpack.c.0.s8 %v8453
    %v8455 = vlaneseq
    %v8456 = vshrl.u32 %v8455, 7
    %v8457 = vsub.s32 %v8454, %v8456
    %v8458 = vrot.slane %v8436, %v8457
    %v8460 = vunpack.c.l.s4 1966171168
    %v8461 = vunpack.c.0.s8 %v8460
    %v8462 = vlaneseq
    %v8463 = vshrl.u32 %v8462, 7
    %v8464 = vsub.s32 %v8461, %v8463
    %v8465 = vrot.slane %v8437, %v8464
    %v8466 = vcombine.high %v8444, %v8444
    %v8467 = vcombine.high %v8451, %v8451
    %v8468 = vcombine.high %v8458, %v8458
    %v8469 = vcombine.high %v8465, %v8465
    %v8470 = vcombine.high %v8348, %v8348
    %v8472 = vunpack.c.l.s4 1966171168
    %v8473 = vunpack.c.0.s8 %v8472
    %v8474 = vlaneseq
    %v8475 = vshrl.u32 %v8474, 7
    %v8476 = vsub.s32 %v8473, %v8475
    %v8477 = vrot.slane %v8348, %v8476
    %v8479 = vunpack.c.l.s4 1966171168
    %v8480 = vunpack.c.0.s8 %v8479
    %v8481 = vlaneseq
    %v8482 = vshrl.u32 %v8481, 7
    %v8483 = vsub.s32 %v8480, %v8482
    %v8484 = vrot.slane %v8470, %v8483
    %v8485 = vcombine.high %v8477, %v8477
    %v8486 = vcombine.high %v8484, %v8484
    %v8488 = vunpack.c.l.s4 1966171168
    %v8489 = vunpack.c.0.s8 %v8488
    %v8490 = vlaneseq
    %v8491 = vshrl.u32 %v8490, 7
    %v8492 = vsub.s32 %v8489, %v8491
    %v8493 = vrot.slane %v8477, %v8492
    %v8495 = vunpack.c.l.s4 1966171168
    %v8496 = vunpack.c.0.s8 %v8495
    %v8497 = vlaneseq
    %v8498 = vshrl.u32 %v8497, 7
    %v8499 = vsub.s32 %v8496, %v8498
    %v8500 = vrot.slane %v8484, %v8499
    %v8502 = vunpack.c.l.s4 1966171168
    %v8503 = vunpack.c.0.s8 %v8502
    %v8504 = vlaneseq
    %v8505 = vshrl.u32 %v8504, 7
    %v8506 = vsub.s32 %v8503, %v8505
    %v8507 = vrot.slane %v8485, %v8506
    %v8509 = vunpack.c.l.s4 1966171168
    %v8510 = vunpack.c.0.s8 %v8509
    %v8511 = vlaneseq
    %v8512 = vshrl.u32 %v8511, 7
    %v8513 = vsub.s32 %v8510, %v8512
    %v8514 = vrot.slane %v8486, %v8513
    %v8515 = vcombine.high %v8493, %v8493
    %v8516 = vcombine.high %v8500, %v8500
    %v8517 = vcombine.high %v8507, %v8507
    %v8518 = vcombine.high %v8514, %v8514
    %v8519 = vcombine.high %v8349, %v8349
    %v8521 = vunpack.c.l.s4 1966171168
    %v8522 = vunpack.c.0.s8 %v8521
    %v8523 = vlaneseq
    %v8524 = vshrl.u32 %v8523, 7
    %v8525 = vsub.s32 %v8522, %v8524
    %v8526 = vrot.slane %v8349, %v8525
    %v8528 = vunpack.c.l.s4 1966171168
    %v8529 = vunpack.c.0.s8 %v8528
    %v8530 = vlaneseq
    %v8531 = vshrl.u32 %v8530, 7
    %v8532 = vsub.s32 %v8529, %v8531
    %v8533 = vrot.slane %v8519, %v8532
    %v8534 = vcombine.high %v8526, %v8526
    %v8535 = vcombine.high %v8533, %v8533
    %v8537 = vunpack.c.l.s4 1966171168
    %v8538 = vunpack.c.0.s8 %v8537
    %v8539 = vlaneseq
    %v8540 = vshrl.u32 %v8539, 7
    %v8541 = vsub.s32 %v8538, %v8540
    %v8542 = vrot.slane %v8526, %v8541
    %v8544 = vunpack.c.l.s4 1966171168
    %v8545 = vunpack.c.0.s8 %v8544
    %v8546 = vlaneseq
    %v8547 = vshrl.u32 %v8546, 7
    %v8548 = vsub.s32 %v8545, %v8547
    %v8549 = vrot.slane %v8533, %v8548
    %v8551 = vunpack.c.l.s4 1966171168
    %v8552 = vunpack.c.0.s8 %v8551
    %v8553 = vlaneseq
    %v8554 = vshrl.u32 %v8553, 7
    %v8555 = vsub.s32 %v8552, %v8554
    %v8556 = vrot.slane %v8534, %v8555
    %v8558 = vunpack.c.l.s4 1966171168
    %v8559 = vunpack.c.0.s8 %v8558
    %v8560 = vlaneseq
    %v8561 = vshrl.u32 %v8560, 7
    %v8562 = vsub.s32 %v8559, %v8561
    %v8563 = vrot.slane %v8535, %v8562
    %v8564 = vcombine.high %v8542, %v8542
    %v8565 = vcombine.high %v8549, %v8549
    %v8566 = vcombine.high %v8556, %v8556
    %v8567 = vcombine.high %v8563, %v8563
    %v8568 = vcombine.high %v8350, %v8350
    %v8570 = vunpack.c.l.s4 1966171168
    %v8571 = vunpack.c.0.s8 %v8570
    %v8572 = vlaneseq
    %v8573 = vshrl.u32 %v8572, 7
    %v8574 = vsub.s32 %v8571, %v8573
    %v8575 = vrot.slane %v8350, %v8574
    %v8577 = vunpack.c.l.s4 1966171168
    %v8578 = vunpack.c.0.s8 %v8577
    %v8579 = vlaneseq
    %v8580 = vshrl.u32 %v8579, 7
    %v8581 = vsub.s32 %v8578, %v8580
    %v8582 = vrot.slane %v8568, %v8581
    %v8583 = vcombine.high %v8575, %v8575
    %v8584 = vcombine.high %v8582, %v8582
    %v8586 = vunpack.c.l.s4 1966171168
    %v8587 = vunpack.c.0.s8 %v8586
    %v8588 = vlaneseq
    %v8589 = vshrl.u32 %v8588, 7
    %v8590 = vsub.s32 %v8587, %v8589
    %v8591 = vrot.slane %v8575, %v8590
    %v8593 = vunpack.c.l.s4 1966171168
    %v8594 = vunpack.c.0.s8 %v8593
    %v8595 = vlaneseq
    %v8596 = vshrl.u32 %v8595, 7
    %v8597 = vsub.s32 %v8594, %v8596
    %v8598 = vrot.slane %v8582, %v8597
    %v8600 = vunpack.c.l.s4 1966171168
    %v8601 = vunpack.c.0.s8 %v8600
    %v8602 = vlaneseq
    %v8603 = vshrl.u32 %v8602, 7
    %v8604 = vsub.s32 %v8601, %v8603
    %v8605 = vrot.slane %v8583, %v8604
    %v8607 = vunpack.c.l.s4 1966171168
    %v8608 = vunpack.c.0.s8 %v8607
    %v8609 = vlaneseq
    %v8610 = vshrl.u32 %v8609, 7
    %v8611 = vsub.s32 %v8608, %v8610
    %v8612 = vrot.slane %v8584, %v8611
    %v8613 = vcombine.high %v8591, %v8591
    %v8614 = vcombine.high %v8598, %v8598
    %v8615 = vcombine.high %v8605, %v8605
    %v8616 = vcombine.high %v8612, %v8612
    %v8617 = vcombine.high %v8351, %v8351
    %v8619 = vunpack.c.l.s4 1966171168
    %v8620 = vunpack.c.0.s8 %v8619
    %v8621 = vlaneseq
    %v8622 = vshrl.u32 %v8621, 7
    %v8623 = vsub.s32 %v8620, %v8622
    %v8624 = vrot.slane %v8351, %v8623
    %v8626 = vunpack.c.l.s4 1966171168
    %v8627 = vunpack.c.0.s8 %v8626
    %v8628 = vlaneseq
    %v8629 = vshrl.u32 %v8628, 7
    %v8630 = vsub.s32 %v8627, %v8629
    %v8631 = vrot.slane %v8617, %v8630
    %v8632 = vcombine.high %v8624, %v8624
    %v8633 = vcombine.high %v8631, %v8631
    %v8635 = vunpack.c.l.s4 1966171168
    %v8636 = vunpack.c.0.s8 %v8635
    %v8637 = vlaneseq
    %v8638 = vshrl.u32 %v8637, 7
    %v8639 = vsub.s32 %v8636, %v8638
    %v8640 = vrot.slane %v8624, %v8639
    %v8642 = vunpack.c.l.s4 1966171168
    %v8643 = vunpack.c.0.s8 %v8642
    %v8644 = vlaneseq
    %v8645 = vshrl.u32 %v8644, 7
    %v8646 = vsub.s32 %v8643, %v8645
    %v8647 = vrot.slane %v8631, %v8646
    %v8649 = vunpack.c.l.s4 1966171168
    %v8650 = vunpack.c.0.s8 %v8649
    %v8651 = vlaneseq
    %v8652 = vshrl.u32 %v8651, 7
    %v8653 = vsub.s32 %v8650, %v8652
    %v8654 = vrot.slane %v8632, %v8653
    %v8656 = vunpack.c.l.s4 1966171168
    %v8657 = vunpack.c.0.s8 %v8656
    %v8658 = vlaneseq
    %v8659 = vshrl.u32 %v8658, 7
    %v8660 = vsub.s32 %v8657, %v8659
    %v8661 = vrot.slane %v8633, %v8660
    %v8662 = vcombine.high %v8640, %v8640
    %v8663 = vcombine.high %v8647, %v8647
    %v8664 = vcombine.high %v8654, %v8654
    %v8665 = vcombine.high %v8661, %v8661
    %v8666 = vcombine.high %v8352, %v8352
    %v8668 = vunpack.c.l.s4 1966171168
    %v8669 = vunpack.c.0.s8 %v8668
    %v8670 = vlaneseq
    %v8671 = vshrl.u32 %v8670, 7
    %v8672 = vsub.s32 %v8669, %v8671
    %v8673 = vrot.slane %v8352, %v8672
    %v8675 = vunpack.c.l.s4 1966171168
    %v8676 = vunpack.c.0.s8 %v8675
    %v8677 = vlaneseq
    %v8678 = vshrl.u32 %v8677, 7
    %v8679 = vsub.s32 %v8676, %v8678
    %v8680 = vrot.slane %v8666, %v8679
    %v8681 = vcombine.high %v8673, %v8673
    %v8682 = vcombine.high %v8680, %v8680
    %v8684 = vunpack.c.l.s4 1966171168
    %v8685 = vunpack.c.0.s8 %v8684
    %v8686 = vlaneseq
    %v8687 = vshrl.u32 %v8686, 7
    %v8688 = vsub.s32 %v8685, %v8687
    %v8689 = vrot.slane %v8673, %v8688
    %v8691 = vunpack.c.l.s4 1966171168
    %v8692 = vunpack.c.0.s8 %v8691
    %v8693 = vlaneseq
    %v8694 = vshrl.u32 %v8693, 7
    %v8695 = vsub.s32 %v8692, %v8694
    %v8696 = vrot.slane %v8680, %v8695
    %v8698 = vunpack.c.l.s4 1966171168
    %v8699 = vunpack.c.0.s8 %v8698
    %v8700 = vlaneseq
    %v8701 = vshrl.u32 %v8700, 7
    %v8702 = vsub.s32 %v8699, %v8701
    %v8703 = vrot.slane %v8681, %v8702
    %v8705 = vunpack.c.l.s4 1966171168
    %v8706 = vunpack.c.0.s8 %v8705
    %v8707 = vlaneseq
    %v8708 = vshrl.u32 %v8707, 7
    %v8709 = vsub.s32 %v8706, %v8708
    %v8710 = vrot.slane %v8682, %v8709
    %v8711 = vcombine.high %v8689, %v8689
    %v8712 = vcombine.high %v8696, %v8696
    %v8713 = vcombine.high %v8703, %v8703
    %v8714 = vcombine.high %v8710, %v8710
    %v8715 = vcombine.high %v8353, %v8353
    %v8717 = vunpack.c.l.s4 1966171168
    %v8718 = vunpack.c.0.s8 %v8717
    %v8719 = vlaneseq
    %v8720 = vshrl.u32 %v8719, 7
    %v8721 = vsub.s32 %v8718, %v8720
    %v8722 = vrot.slane %v8353, %v8721
    %v8724 = vunpack.c.l.s4 1966171168
    %v8725 = vunpack.c.0.s8 %v8724
    %v8726 = vlaneseq
    %v8727 = vshrl.u32 %v8726, 7
    %v8728 = vsub.s32 %v8725, %v8727
    %v8729 = vrot.slane %v8715, %v8728
    %v8730 = vcombine.high %v8722, %v8722
    %v8731 = vcombine.high %v8729, %v8729
    %v8733 = vunpack.c.l.s4 1966171168
    %v8734 = vunpack.c.0.s8 %v8733
    %v8735 = vlaneseq
    %v8736 = vshrl.u32 %v8735, 7
    %v8737 = vsub.s32 %v8734, %v8736
    %v8738 = vrot.slane %v8722, %v8737
    %v8740 = vunpack.c.l.s4 1966171168
    %v8741 = vunpack.c.0.s8 %v8740
    %v8742 = vlaneseq
    %v8743 = vshrl.u32 %v8742, 7
    %v8744 = vsub.s32 %v8741, %v8743
    %v8745 = vrot.slane %v8729, %v8744
    %v8747 = vunpack.c.l.s4 1966171168
    %v8748 = vunpack.c.0.s8 %v8747
    %v8749 = vlaneseq
    %v8750 = vshrl.u32 %v8749, 7
    %v8751 = vsub.s32 %v8748, %v8750
    %v8752 = vrot.slane %v8730, %v8751
    %v8754 = vunpack.c.l.s4 1966171168
    %v8755 = vunpack.c.0.s8 %v8754
    %v8756 = vlaneseq
    %v8757 = vshrl.u32 %v8756, 7
    %v8758 = vsub.s32 %v8755, %v8757
    %v8759 = vrot.slane %v8731, %v8758
    %v8760 = vcombine.high %v8738, %v8738
    %v8761 = vcombine.high %v8745, %v8745
    %v8762 = vcombine.high %v8752, %v8752
    %v8763 = vcombine.high %v8759, %v8759
    %v8764 = vcombine.high %v8354, %v8354
    %v8766 = vunpack.c.l.s4 1966171168
    %v8767 = vunpack.c.0.s8 %v8766
    %v8768 = vlaneseq
    %v8769 = vshrl.u32 %v8768, 7
    %v8770 = vsub.s32 %v8767, %v8769
    %v8771 = vrot.slane %v8354, %v8770
    %v8773 = vunpack.c.l.s4 1966171168
    %v8774 = vunpack.c.0.s8 %v8773
    %v8775 = vlaneseq
    %v8776 = vshrl.u32 %v8775, 7
    %v8777 = vsub.s32 %v8774, %v8776
    %v8778 = vrot.slane %v8764, %v8777
    %v8779 = vcombine.high %v8771, %v8771
    %v8780 = vcombine.high %v8778, %v8778
    %v8782 = vunpack.c.l.s4 1966171168
    %v8783 = vunpack.c.0.s8 %v8782
    %v8784 = vlaneseq
    %v8785 = vshrl.u32 %v8784, 7
    %v8786 = vsub.s32 %v8783, %v8785
    %v8787 = vrot.slane %v8771, %v8786
    %v8789 = vunpack.c.l.s4 1966171168
    %v8790 = vunpack.c.0.s8 %v8789
    %v8791 = vlaneseq
    %v8792 = vshrl.u32 %v8791, 7
    %v8793 = vsub.s32 %v8790, %v8792
    %v8794 = vrot.slane %v8778, %v8793
    %v8796 = vunpack.c.l.s4 1966171168
    %v8797 = vunpack.c.0.s8 %v8796
    %v8798 = vlaneseq
    %v8799 = vshrl.u32 %v8798, 7
    %v8800 = vsub.s32 %v8797, %v8799
    %v8801 = vrot.slane %v8779, %v8800
    %v8803 = vunpack.c.l.s4 1966171168
    %v8804 = vunpack.c.0.s8 %v8803
    %v8805 = vlaneseq
    %v8806 = vshrl.u32 %v8805, 7
    %v8807 = vsub.s32 %v8804, %v8806
    %v8808 = vrot.slane %v8780, %v8807
    %v8809 = vcombine.high %v8787, %v8787
    %v8810 = vcombine.high %v8794, %v8794
    %v8811 = vcombine.high %v8801, %v8801
    %v8812 = vcombine.high %v8808, %v8808
    %v8813 = vcombine.high %v8355, %v8355
    %v8815 = vunpack.c.l.s4 1966171168
    %v8816 = vunpack.c.0.s8 %v8815
    %v8817 = vlaneseq
    %v8818 = vshrl.u32 %v8817, 7
    %v8819 = vsub.s32 %v8816, %v8818
    %v8820 = vrot.slane %v8355, %v8819
    %v8822 = vunpack.c.l.s4 1966171168
    %v8823 = vunpack.c.0.s8 %v8822
    %v8824 = vlaneseq
    %v8825 = vshrl.u32 %v8824, 7
    %v8826 = vsub.s32 %v8823, %v8825
    %v8827 = vrot.slane %v8813, %v8826
    %v8828 = vcombine.high %v8820, %v8820
    %v8829 = vcombine.high %v8827, %v8827
    %v8831 = vunpack.c.l.s4 1966171168
    %v8832 = vunpack.c.0.s8 %v8831
    %v8833 = vlaneseq
    %v8834 = vshrl.u32 %v8833, 7
    %v8835 = vsub.s32 %v8832, %v8834
    %v8836 = vrot.slane %v8820, %v8835
    %v8838 = vunpack.c.l.s4 1966171168
    %v8839 = vunpack.c.0.s8 %v8838
    %v8840 = vlaneseq
    %v8841 = vshrl.u32 %v8840, 7
    %v8842 = vsub.s32 %v8839, %v8841
    %v8843 = vrot.slane %v8827, %v8842
    %v8845 = vunpack.c.l.s4 1966171168
    %v8846 = vunpack.c.0.s8 %v8845
    %v8847 = vlaneseq
    %v8848 = vshrl.u32 %v8847, 7
    %v8849 = vsub.s32 %v8846, %v8848
    %v8850 = vrot.slane %v8828, %v8849
    %v8852 = vunpack.c.l.s4 1966171168
    %v8853 = vunpack.c.0.s8 %v8852
    %v8854 = vlaneseq
    %v8855 = vshrl.u32 %v8854, 7
    %v8856 = vsub.s32 %v8853, %v8855
    %v8857 = vrot.slane %v8829, %v8856
    %v8858 = vcombine.high %v8836, %v8836
    %v8859 = vcombine.high %v8843, %v8843
    %v8860 = vcombine.high %v8850, %v8850
    %v8861 = vcombine.high %v8857, %v8857
    %v8862 = vcombine.high %v8356, %v8356
    %v8864 = vunpack.c.l.s4 1966171168
    %v8865 = vunpack.c.0.s8 %v8864
    %v8866 = vlaneseq
    %v8867 = vshrl.u32 %v8866, 7
    %v8868 = vsub.s32 %v8865, %v8867
    %v8869 = vrot.slane %v8356, %v8868
    %v8871 = vunpack.c.l.s4 1966171168
    %v8872 = vunpack.c.0.s8 %v8871
    %v8873 = vlaneseq
    %v8874 = vshrl.u32 %v8873, 7
    %v8875 = vsub.s32 %v8872, %v8874
    %v8876 = vrot.slane %v8862, %v8875
    %v8877 = vcombine.high %v8869, %v8869
    %v8878 = vcombine.high %v8876, %v8876
    %v8880 = vunpack.c.l.s4 1966171168
    %v8881 = vunpack.c.0.s8 %v8880
    %v8882 = vlaneseq
    %v8883 = vshrl.u32 %v8882, 7
    %v8884 = vsub.s32 %v8881, %v8883
    %v8885 = vrot.slane %v8869, %v8884
    %v8887 = vunpack.c.l.s4 1966171168
    %v8888 = vunpack.c.0.s8 %v8887
    %v8889 = vlaneseq
    %v8890 = vshrl.u32 %v8889, 7
    %v8891 = vsub.s32 %v8888, %v8890
    %v8892 = vrot.slane %v8876, %v8891
    %v8894 = vunpack.c.l.s4 1966171168
    %v8895 = vunpack.c.0.s8 %v8894
    %v8896 = vlaneseq
    %v8897 = vshrl.u32 %v8896, 7
    %v8898 = vsub.s32 %v8895, %v8897
    %v8899 = vrot.slane %v8877, %v8898
    %v8901 = vunpack.c.l.s4 1966171168
    %v8902 = vunpack.c.0.s8 %v8901
    %v8903 = vlaneseq
    %v8904 = vshrl.u32 %v8903, 7
    %v8905 = vsub.s32 %v8902, %v8904
    %v8906 = vrot.slane %v8878, %v8905
    %v8907 = vcombine.high %v8885, %v8885
    %v8908 = vcombine.high %v8892, %v8892
    %v8909 = vcombine.high %v8899, %v8899
    %v8910 = vcombine.high %v8906, %v8906
    %v8911 = vcombine.high %v8357, %v8357
    %v8913 = vunpack.c.l.s4 1966171168
    %v8914 = vunpack.c.0.s8 %v8913
    %v8915 = vlaneseq
    %v8916 = vshrl.u32 %v8915, 7
    %v8917 = vsub.s32 %v8914, %v8916
    %v8918 = vrot.slane %v8357, %v8917
    %v8920 = vunpack.c.l.s4 1966171168
    %v8921 = vunpack.c.0.s8 %v8920
    %v8922 = vlaneseq
    %v8923 = vshrl.u32 %v8922, 7
    %v8924 = vsub.s32 %v8921, %v8923
    %v8925 = vrot.slane %v8911, %v8924
    %v8926 = vcombine.high %v8918, %v8918
    %v8927 = vcombine.high %v8925, %v8925
    %v8929 = vunpack.c.l.s4 1966171168
    %v8930 = vunpack.c.0.s8 %v8929
    %v8931 = vlaneseq
    %v8932 = vshrl.u32 %v8931, 7
    %v8933 = vsub.s32 %v8930, %v8932
    %v8934 = vrot.slane %v8918, %v8933
    %v8936 = vunpack.c.l.s4 1966171168
    %v8937 = vunpack.c.0.s8 %v8936
    %v8938 = vlaneseq
    %v8939 = vshrl.u32 %v8938, 7
    %v8940 = vsub.s32 %v8937, %v8939
    %v8941 = vrot.slane %v8925, %v8940
    %v8943 = vunpack.c.l.s4 1966171168
    %v8944 = vunpack.c.0.s8 %v8943
    %v8945 = vlaneseq
    %v8946 = vshrl.u32 %v8945, 7
    %v8947 = vsub.s32 %v8944, %v8946
    %v8948 = vrot.slane %v8926, %v8947
    %v8950 = vunpack.c.l.s4 1966171168
    %v8951 = vunpack.c.0.s8 %v8950
    %v8952 = vlaneseq
    %v8953 = vshrl.u32 %v8952, 7
    %v8954 = vsub.s32 %v8951, %v8953
    %v8955 = vrot.slane %v8927, %v8954
    %v8956 = vcombine.high %v8934, %v8934
    %v8957 = vcombine.high %v8941, %v8941
    %v8958 = vcombine.high %v8948, %v8948
    %v8959 = vcombine.high %v8955, %v8955
    %v8961 = vunpack.c.l.s4 1966171168
    %v8962 = vunpack.c.0.s8 %v8961
    %v8963 = vlaneseq
    %v8964 = vshrl.u32 %v8963, 7
    %v8965 = vsub.s32 %v8962, %v8964
    %v8966 = vrot.slane %v8358, %v8965
    %v8967 = vcombine.high %v8966, %v8966
    %v8969 = vunpack.c.l.s4 1966171168
    %v8970 = vunpack.c.0.s8 %v8969
    %v8971 = vlaneseq
    %v8972 = vshrl.u32 %v8971, 7
    %v8973 = vsub.s32 %v8970, %v8972
    %v8974 = vrot.slane %v8966, %v8973
    %v8976 = vunpack.c.l.s4 1966171168
    %v8977 = vunpack.c.0.s8 %v8976
    %v8978 = vlaneseq
    %v8979 = vshrl.u32 %v8978, 7
    %v8980 = vsub.s32 %v8977, %v8979
    %v8981 = vrot.slane %v8967, %v8980
    %8982 = vst [vmem:[#allocation8] sm:$0xff] 0.0
    %8983 = vst [vmem:[#allocation8 + $0x8] sm:$0x1] 0.0
    %8984 = vst [vmem:[#allocation8 + $0x10] sm:$0xff] 0.0
    %8985 = vst [vmem:[#allocation8 + $0x18] sm:$0x1] 0.0
    %8986 = vst [vmem:[#allocation8 + $0x20] sm:$0xff] 0.0
    %8987 = vst [vmem:[#allocation8 + $0x28] sm:$0x1] 0.0
    %8988 = vst [vmem:[#allocation8 + $0x30] sm:$0xff] 0.0
    %8989 = vst [vmem:[#allocation8 + $0x38] sm:$0x1] 0.0
    %8990 = vst [vmem:[#allocation8 + $0x40] sm:$0xff] 0.0
    %8991 = vst [vmem:[#allocation8 + $0x48] sm:$0x1] 0.0
    %8992 = vst [vmem:[#allocation8 + $0x50] sm:$0xff] 0.0
    %8993 = vst [vmem:[#allocation8 + $0x58] sm:$0x1] 0.0
    %8994 = vst [vmem:[#allocation8 + $0x60] sm:$0xff] 0.0
    %8995 = vst [vmem:[#allocation8 + $0x68] sm:$0x1] 0.0
    %8996 = vst [vmem:[#allocation8 + $0x70] sm:$0xff] 0.0
    %8997 = vst [vmem:[#allocation8 + $0x78] sm:$0x1] 0.0
    %8998 = vst [vmem:[#allocation8 + $0x80] sm:$0xff] 0.0
    %8999 = vst [vmem:[#allocation8 + $0x88] sm:$0x1] 0.0
    %9000 = vst [vmem:[#allocation8 + $0x90] sm:$0xff] 0.0
    %9001 = vst [vmem:[#allocation8 + $0x98] sm:$0x1] 0.0
    %9002 = vst [vmem:[#allocation8 + $0xa0] sm:$0xff] 0.0
    %9003 = vst [vmem:[#allocation8 + $0xa8] sm:$0x1] 0.0
    %9004 = vst [vmem:[#allocation8 + $0xb0] sm:$0xff] 0.0
    %9005 = vst [vmem:[#allocation8 + $0xb8] sm:$0x1] 0.0
    %9006 = vst [vmem:[#allocation8 + $0xc0] sm:$0xff] 0.0
    %9007 = vst [vmem:[#allocation8 + $0xc8] sm:$0x1] 0.0
    %9008 = vst [vmem:[#allocation8 + $0xd0] sm:$0xff] 0.0
    %9009 = vst [vmem:[#allocation8 + $0xd8] sm:$0x1] 0.0
    %9010 = vst [vmem:[#allocation8 + $0xe0] sm:$0xff] 0.0
    %9011 = vst [vmem:[#allocation8 + $0xe8] sm:$0x1] 0.0
    %9012 = vst [vmem:[#allocation8 + $0xf0] sm:$0xff] 0.0
    %9013 = vst [vmem:[#allocation8 + $0xf8] sm:$0x1] 0.0
    %9014 = vst [vmem:[#allocation8 + $0x100] sm:$0xff] 0.0
    %9015 = vst [vmem:[#allocation8 + $0x108] sm:$0x1] 0.0
    %9016 = vst [vmem:[#allocation8 + $0x110] sm:$0xff] 0.0
    %9017 = vst [vmem:[#allocation8 + $0x118] sm:$0x1] 0.0
    %v9018 = vcombine.low %v8395, %v8409
    %v9019 = vcombine.low %v8417, %v8419
    %v9020 = vcombine.low %v8402, %v8416
    %v9022 = vunpack.c.l.s4 1966171168
    %v9023 = vunpack.c.0.s8 %v9022
    %v9024 = vlaneseq
    %v9025 = vshrl.u32 %v9024, 7
    %v9026 = vsub.s32 %v9023, %v9025
    %v9027 = vrot.slane %v9018, %v9026
    %v9029 = vunpack.c.l.s4 1966171168
    %v9030 = vunpack.c.0.s8 %v9029
    %v9031 = vlaneseq
    %v9032 = vshrl.u32 %v9031, 7
    %v9033 = vsub.s32 %v9030, %v9032
    %v9034 = vrot.slane %v9019, %v9033
    %v9036 = vunpack.c.l.s4 1966171168
    %v9037 = vunpack.c.0.s8 %v9036
    %v9038 = vlaneseq
    %v9039 = vshrl.u32 %v9038, 7
    %v9040 = vsub.s32 %v9037, %v9039
    %v9041 = vrot.slane %v9020, %v9040
    %v9043 = vunpack.c.l.s4 1966171168
    %v9044 = vunpack.c.0.s8 %v9043
    %v9045 = vlaneseq
    %v9046 = vshrl.u32 %v9045, 7
    %v9047 = vsub.s32 %v9044, %v9046
    %v9048 = vrot.slane %v8418, %v9047
    %v9049 = vcombine.low %v9027, %v9034
    %v9050 = vcombine.low %v9041, %v9048
    %v9052 = vunpack.c.l.s4 1966171168
    %v9053 = vunpack.c.0.s8 %v9052
    %v9054 = vlaneseq
    %v9055 = vshrl.u32 %v9054, 7
    %v9056 = vsub.s32 %v9053, %v9055
    %v9057 = vrot.slane %v9049, %v9056
    %v9059 = vunpack.c.l.s4 1966171168
    %v9060 = vunpack.c.0.s8 %v9059
    %v9061 = vlaneseq
    %v9062 = vshrl.u32 %v9061, 7
    %v9063 = vsub.s32 %v9060, %v9062
    %v9064 = vrot.slane %v9050, %v9063
    %v9065 = vcombine.low %v9057, %v9064
    %v9066 = vcombine.low %v8420, %v8444
    %v9067 = vcombine.low %v8458, %v8466
    %v9068 = vcombine.low %v8468, %v8451
    %v9070 = vunpack.c.l.s4 1966171168
    %v9071 = vunpack.c.0.s8 %v9070
    %v9072 = vlaneseq
    %v9073 = vshrl.u32 %v9072, 7
    %v9074 = vsub.s32 %v9071, %v9073
    %v9075 = vrot.slane %v9066, %v9074
    %v9077 = vunpack.c.l.s4 1966171168
    %v9078 = vunpack.c.0.s8 %v9077
    %v9079 = vlaneseq
    %v9080 = vshrl.u32 %v9079, 7
    %v9081 = vsub.s32 %v9078, %v9080
    %v9082 = vrot.slane %v9067, %v9081
    %v9084 = vunpack.c.l.s4 1966171168
    %v9085 = vunpack.c.0.s8 %v9084
    %v9086 = vlaneseq
    %v9087 = vshrl.u32 %v9086, 7
    %v9088 = vsub.s32 %v9085, %v9087
    %v9089 = vrot.slane %v9068, %v9088
    %v9091 = vunpack.c.l.s4 1966171168
    %v9092 = vunpack.c.0.s8 %v9091
    %v9093 = vlaneseq
    %v9094 = vshrl.u32 %v9093, 7
    %v9095 = vsub.s32 %v9092, %v9094
    %v9096 = vrot.slane %v8465, %v9095
    %v9097 = vcombine.low %v9075, %v9082
    %v9098 = vcombine.low %v9089, %v9096
    %v9100 = vunpack.c.l.s4 1966171168
    %v9101 = vunpack.c.0.s8 %v9100
    %v9102 = vlaneseq
    %v9103 = vshrl.u32 %v9102, 7
    %v9104 = vsub.s32 %v9101, %v9103
    %v9105 = vrot.slane %v9097, %v9104
    %v9107 = vunpack.c.l.s4 1966171168
    %v9108 = vunpack.c.0.s8 %v9107
    %v9109 = vlaneseq
    %v9110 = vshrl.u32 %v9109, 7
    %v9111 = vsub.s32 %v9108, %v9110
    %v9112 = vrot.slane %v9098, %v9111
    %v9113 = vcombine.low %v9105, %v9112
    %v9114 = vcombine.low %v8467, %v8469
    %v9115 = vcombine.low %v8493, %v8507
    %v9116 = vcombine.low %v8515, %v8517
    %v9118 = vunpack.c.l.s4 1966171168
    %v9119 = vunpack.c.0.s8 %v9118
    %v9120 = vlaneseq
    %v9121 = vshrl.u32 %v9120, 7
    %v9122 = vsub.s32 %v9119, %v9121
    %v9123 = vrot.slane %v9114, %v9122
    %v9125 = vunpack.c.l.s4 1966171168
    %v9126 = vunpack.c.0.s8 %v9125
    %v9127 = vlaneseq
    %v9128 = vshrl.u32 %v9127, 7
    %v9129 = vsub.s32 %v9126, %v9128
    %v9130 = vrot.slane %v9115, %v9129
    %v9132 = vunpack.c.l.s4 1966171168
    %v9133 = vunpack.c.0.s8 %v9132
    %v9134 = vlaneseq
    %v9135 = vshrl.u32 %v9134, 7
    %v9136 = vsub.s32 %v9133, %v9135
    %v9137 = vrot.slane %v9116, %v9136
    %v9139 = vunpack.c.l.s4 1966171168
    %v9140 = vunpack.c.0.s8 %v9139
    %v9141 = vlaneseq
    %v9142 = vshrl.u32 %v9141, 7
    %v9143 = vsub.s32 %v9140, %v9142
    %v9144 = vrot.slane %v8500, %v9143
    %v9145 = vcombine.low %v9123, %v9130
    %v9146 = vcombine.low %v9137, %v9144
    %v9148 = vunpack.c.l.s4 1966171168
    %v9149 = vunpack.c.0.s8 %v9148
    %v9150 = vlaneseq
    %v9151 = vshrl.u32 %v9150, 7
    %v9152 = vsub.s32 %v9149, %v9151
    %v9153 = vrot.slane %v9145, %v9152
    %v9155 = vunpack.c.l.s4 1966171168
    %v9156 = vunpack.c.0.s8 %v9155
    %v9157 = vlaneseq
    %v9158 = vshrl.u32 %v9157, 7
    %v9159 = vsub.s32 %v9156, %v9158
    %v9160 = vrot.slane %v9146, %v9159
    %v9161 = vcombine.low %v9153, %v9160
    %v9162 = vcombine.low %v8514, %v8516
    %v9163 = vcombine.low %v8518, %v8542
    %v9164 = vcombine.low %v8556, %v8564
    %v9166 = vunpack.c.l.s4 1966171168
    %v9167 = vunpack.c.0.s8 %v9166
    %v9168 = vlaneseq
    %v9169 = vshrl.u32 %v9168, 7
    %v9170 = vsub.s32 %v9167, %v9169
    %v9171 = vrot.slane %v9162, %v9170
    %v9173 = vunpack.c.l.s4 1966171168
    %v9174 = vunpack.c.0.s8 %v9173
    %v9175 = vlaneseq
    %v9176 = vshrl.u32 %v9175, 7
    %v9177 = vsub.s32 %v9174, %v9176
    %v9178 = vrot.slane %v9163, %v9177
    %v9180 = vunpack.c.l.s4 1966171168
    %v9181 = vunpack.c.0.s8 %v9180
    %v9182 = vlaneseq
    %v9183 = vshrl.u32 %v9182, 7
    %v9184 = vsub.s32 %v9181, %v9183
    %v9185 = vrot.slane %v9164, %v9184
    %v9187 = vunpack.c.l.s4 1966171168
    %v9188 = vunpack.c.0.s8 %v9187
    %v9189 = vlaneseq
    %v9190 = vshrl.u32 %v9189, 7
    %v9191 = vsub.s32 %v9188, %v9190
    %v9192 = vrot.slane %v8566, %v9191
    %v9193 = vcombine.low %v9171, %v9178
    %v9194 = vcombine.low %v9185, %v9192
    %v9196 = vunpack.c.l.s4 1966171168
    %v9197 = vunpack.c.0.s8 %v9196
    %v9198 = vlaneseq
    %v9199 = vshrl.u32 %v9198, 7
    %v9200 = vsub.s32 %v9197, %v9199
    %v9201 = vrot.slane %v9193, %v9200
    %v9203 = vunpack.c.l.s4 1966171168
    %v9204 = vunpack.c.0.s8 %v9203
    %v9205 = vlaneseq
    %v9206 = vshrl.u32 %v9205, 7
    %v9207 = vsub.s32 %v9204, %v9206
    %v9208 = vrot.slane %v9194, %v9207
    %v9209 = vcombine.low %v9201, %v9208
    %v9210 = vcombine.low %v8549, %v8563
    %v9211 = vcombine.low %v8565, %v8567
    %v9212 = vcombine.low %v8591, %v8605
    %v9214 = vunpack.c.l.s4 1966171168
    %v9215 = vunpack.c.0.s8 %v9214
    %v9216 = vlaneseq
    %v9217 = vshrl.u32 %v9216, 7
    %v9218 = vsub.s32 %v9215, %v9217
    %v9219 = vrot.slane %v9210, %v9218
    %v9221 = vunpack.c.l.s4 1966171168
    %v9222 = vunpack.c.0.s8 %v9221
    %v9223 = vlaneseq
    %v9224 = vshrl.u32 %v9223, 7
    %v9225 = vsub.s32 %v9222, %v9224
    %v9226 = vrot.slane %v9211, %v9225
    %v9228 = vunpack.c.l.s4 1966171168
    %v9229 = vunpack.c.0.s8 %v9228
    %v9230 = vlaneseq
    %v9231 = vshrl.u32 %v9230, 7
    %v9232 = vsub.s32 %v9229, %v9231
    %v9233 = vrot.slane %v9212, %v9232
    %v9235 = vunpack.c.l.s4 1966171168
    %v9236 = vunpack.c.0.s8 %v9235
    %v9237 = vlaneseq
    %v9238 = vshrl.u32 %v9237, 7
    %v9239 = vsub.s32 %v9236, %v9238
    %v9240 = vrot.slane %v8613, %v9239
    %v9241 = vcombine.low %v9219, %v9226
    %v9242 = vcombine.low %v9233, %v9240
    %v9244 = vunpack.c.l.s4 1966171168
    %v9245 = vunpack.c.0.s8 %v9244
    %v9246 = vlaneseq
    %v9247 = vshrl.u32 %v9246, 7
    %v9248 = vsub.s32 %v9245, %v9247
    %v9249 = vrot.slane %v9241, %v9248
    %v9251 = vunpack.c.l.s4 1966171168
    %v9252 = vunpack.c.0.s8 %v9251
    %v9253 = vlaneseq
    %v9254 = vshrl.u32 %v9253, 7
    %v9255 = vsub.s32 %v9252, %v9254
    %v9256 = vrot.slane %v9242, %v9255
    %v9257 = vcombine.low %v9249, %v9256
    %v9258 = vcombine.low %v8615, %v8598
    %v9259 = vcombine.low %v8612, %v8614
    %v9260 = vcombine.low %v8616, %v8640
    %v9262 = vunpack.c.l.s4 1966171168
    %v9263 = vunpack.c.0.s8 %v9262
    %v9264 = vlaneseq
    %v9265 = vshrl.u32 %v9264, 7
    %v9266 = vsub.s32 %v9263, %v9265
    %v9267 = vrot.slane %v9258, %v9266
    %v9269 = vunpack.c.l.s4 1966171168
    %v9270 = vunpack.c.0.s8 %v9269
    %v9271 = vlaneseq
    %v9272 = vshrl.u32 %v9271, 7
    %v9273 = vsub.s32 %v9270, %v9272
    %v9274 = vrot.slane %v9259, %v9273
    %v9276 = vunpack.c.l.s4 1966171168
    %v9277 = vunpack.c.0.s8 %v9276
    %v9278 = vlaneseq
    %v9279 = vshrl.u32 %v9278, 7
    %v9280 = vsub.s32 %v9277, %v9279
    %v9281 = vrot.slane %v9260, %v9280
    %v9283 = vunpack.c.l.s4 1966171168
    %v9284 = vunpack.c.0.s8 %v9283
    %v9285 = vlaneseq
    %v9286 = vshrl.u32 %v9285, 7
    %v9287 = vsub.s32 %v9284, %v9286
    %v9288 = vrot.slane %v8654, %v9287
    %v9289 = vcombine.low %v9267, %v9274
    %v9290 = vcombine.low %v9281, %v9288
    %v9292 = vunpack.c.l.s4 1966171168
    %v9293 = vunpack.c.0.s8 %v9292
    %v9294 = vlaneseq
    %v9295 = vshrl.u32 %v9294, 7
    %v9296 = vsub.s32 %v9293, %v9295
    %v9297 = vrot.slane %v9289, %v9296
    %v9299 = vunpack.c.l.s4 1966171168
    %v9300 = vunpack.c.0.s8 %v9299
    %v9301 = vlaneseq
    %v9302 = vshrl.u32 %v9301, 7
    %v9303 = vsub.s32 %v9300, %v9302
    %v9304 = vrot.slane %v9290, %v9303
    %v9305 = vcombine.low %v9297, %v9304
    %v9306 = vcombine.low %v8662, %v8664
    %v9307 = vcombine.low %v8647, %v8661
    %v9308 = vcombine.low %v8663, %v8665
    %v9310 = vunpack.c.l.s4 1966171168
    %v9311 = vunpack.c.0.s8 %v9310
    %v9312 = vlaneseq
    %v9313 = vshrl.u32 %v9312, 7
    %v9314 = vsub.s32 %v9311, %v9313
    %v9315 = vrot.slane %v9306, %v9314
    %v9317 = vunpack.c.l.s4 1966171168
    %v9318 = vunpack.c.0.s8 %v9317
    %v9319 = vlaneseq
    %v9320 = vshrl.u32 %v9319, 7
    %v9321 = vsub.s32 %v9318, %v9320
    %v9322 = vrot.slane %v9307, %v9321
    %v9324 = vunpack.c.l.s4 1966171168
    %v9325 = vunpack.c.0.s8 %v9324
    %v9326 = vlaneseq
    %v9327 = vshrl.u32 %v9326, 7
    %v9328 = vsub.s32 %v9325, %v9327
    %v9329 = vrot.slane %v9308, %v9328
    %v9331 = vunpack.c.l.s4 1966171168
    %v9332 = vunpack.c.0.s8 %v9331
    %v9333 = vlaneseq
    %v9334 = vshrl.u32 %v9333, 7
    %v9335 = vsub.s32 %v9332, %v9334
    %v9336 = vrot.slane %v8689, %v9335
    %v9337 = vcombine.low %v9315, %v9322
    %v9338 = vcombine.low %v9329, %v9336
    %v9340 = vunpack.c.l.s4 1966171168
    %v9341 = vunpack.c.0.s8 %v9340
    %v9342 = vlaneseq
    %v9343 = vshrl.u32 %v9342, 7
    %v9344 = vsub.s32 %v9341, %v9343
    %v9345 = vrot.slane %v9337, %v9344
    %v9347 = vunpack.c.l.s4 1966171168
    %v9348 = vunpack.c.0.s8 %v9347
    %v9349 = vlaneseq
    %v9350 = vshrl.u32 %v9349, 7
    %v9351 = vsub.s32 %v9348, %v9350
    %v9352 = vrot.slane %v9338, %v9351
    %v9353 = vcombine.low %v9345, %v9352
    %v9354 = vcombine.low %v8703, %v8711
    %v9355 = vcombine.low %v8713, %v8696
    %v9356 = vcombine.low %v8710, %v8712
    %v9358 = vunpack.c.l.s4 1966171168
    %v9359 = vunpack.c.0.s8 %v9358
    %v9360 = vlaneseq
    %v9361 = vshrl.u32 %v9360, 7
    %v9362 = vsub.s32 %v9359, %v9361
    %v9363 = vrot.slane %v9354, %v9362
    %v9365 = vunpack.c.l.s4 1966171168
    %v9366 = vunpack.c.0.s8 %v9365
    %v9367 = vlaneseq
    %v9368 = vshrl.u32 %v9367, 7
    %v9369 = vsub.s32 %v9366, %v9368
    %v9370 = vrot.slane %v9355, %v9369
    %v9372 = vunpack.c.l.s4 1966171168
    %v9373 = vunpack.c.0.s8 %v9372
    %v9374 = vlaneseq
    %v9375 = vshrl.u32 %v9374, 7
    %v9376 = vsub.s32 %v9373, %v9375
    %v9377 = vrot.slane %v9356, %v9376
    %v9379 = vunpack.c.l.s4 1966171168
    %v9380 = vunpack.c.0.s8 %v9379
    %v9381 = vlaneseq
    %v9382 = vshrl.u32 %v9381, 7
    %v9383 = vsub.s32 %v9380, %v9382
    %v9384 = vrot.slane %v8714, %v9383
    %v9385 = vcombine.low %v9363, %v9370
    %v9386 = vcombine.low %v9377, %v9384
    %v9388 = vunpack.c.l.s4 1966171168
    %v9389 = vunpack.c.0.s8 %v9388
    %v9390 = vlaneseq
    %v9391 = vshrl.u32 %v9390, 7
    %v9392 = vsub.s32 %v9389, %v9391
    %v9393 = vrot.slane %v9385, %v9392
    %v9395 = vunpack.c.l.s4 1966171168
    %v9396 = vunpack.c.0.s8 %v9395
    %v9397 = vlaneseq
    %v9398 = vshrl.u32 %v9397, 7
    %v9399 = vsub.s32 %v9396, %v9398
    %v9400 = vrot.slane %v9386, %v9399
    %v9401 = vcombine.low %v9393, %v9400
    %v9402 = vcombine.low %v8738, %v8752
    %v9403 = vcombine.low %v8760, %v8762
    %v9404 = vcombine.low %v8745, %v8759
    %v9406 = vunpack.c.l.s4 1966171168
    %v9407 = vunpack.c.0.s8 %v9406
    %v9408 = vlaneseq
    %v9409 = vshrl.u32 %v9408, 7
    %v9410 = vsub.s32 %v9407, %v9409
    %v9411 = vrot.slane %v9402, %v9410
    %v9413 = vunpack.c.l.s4 1966171168
    %v9414 = vunpack.c.0.s8 %v9413
    %v9415 = vlaneseq
    %v9416 = vshrl.u32 %v9415, 7
    %v9417 = vsub.s32 %v9414, %v9416
    %v9418 = vrot.slane %v9403, %v9417
    %v9420 = vunpack.c.l.s4 1966171168
    %v9421 = vunpack.c.0.s8 %v9420
    %v9422 = vlaneseq
    %v9423 = vshrl.u32 %v9422, 7
    %v9424 = vsub.s32 %v9421, %v9423
    %v9425 = vrot.slane %v9404, %v9424
    %v9427 = vunpack.c.l.s4 1966171168
    %v9428 = vunpack.c.0.s8 %v9427
    %v9429 = vlaneseq
    %v9430 = vshrl.u32 %v9429, 7
    %v9431 = vsub.s32 %v9428, %v9430
    %v9432 = vrot.slane %v8761, %v9431
    %v9433 = vcombine.low %v9411, %v9418
    %v9434 = vcombine.low %v9425, %v9432
    %v9436 = vunpack.c.l.s4 1966171168
    %v9437 = vunpack.c.0.s8 %v9436
    %v9438 = vlaneseq
    %v9439 = vshrl.u32 %v9438, 7
    %v9440 = vsub.s32 %v9437, %v9439
    %v9441 = vrot.slane %v9433, %v9440
    %v9443 = vunpack.c.l.s4 1966171168
    %v9444 = vunpack.c.0.s8 %v9443
    %v9445 = vlaneseq
    %v9446 = vshrl.u32 %v9445, 7
    %v9447 = vsub.s32 %v9444, %v9446
    %v9448 = vrot.slane %v9434, %v9447
    %v9449 = vcombine.low %v9441, %v9448
    %v9450 = vcombine.low %v8763, %v8787
    %v9451 = vcombine.low %v8801, %v8809
    %v9452 = vcombine.low %v8811, %v8794
    %v9454 = vunpack.c.l.s4 1966171168
    %v9455 = vunpack.c.0.s8 %v9454
    %v9456 = vlaneseq
    %v9457 = vshrl.u32 %v9456, 7
    %v9458 = vsub.s32 %v9455, %v9457
    %v9459 = vrot.slane %v9450, %v9458
    %v9461 = vunpack.c.l.s4 1966171168
    %v9462 = vunpack.c.0.s8 %v9461
    %v9463 = vlaneseq
    %v9464 = vshrl.u32 %v9463, 7
    %v9465 = vsub.s32 %v9462, %v9464
    %v9466 = vrot.slane %v9451, %v9465
    %v9468 = vunpack.c.l.s4 1966171168
    %v9469 = vunpack.c.0.s8 %v9468
    %v9470 = vlaneseq
    %v9471 = vshrl.u32 %v9470, 7
    %v9472 = vsub.s32 %v9469, %v9471
    %v9473 = vrot.slane %v9452, %v9472
    %v9475 = vunpack.c.l.s4 1966171168
    %v9476 = vunpack.c.0.s8 %v9475
    %v9477 = vlaneseq
    %v9478 = vshrl.u32 %v9477, 7
    %v9479 = vsub.s32 %v9476, %v9478
    %v9480 = vrot.slane %v8808, %v9479
    %v9481 = vcombine.low %v9459, %v9466
    %v9482 = vcombine.low %v9473, %v9480
    %v9484 = vunpack.c.l.s4 1966171168
    %v9485 = vunpack.c.0.s8 %v9484
    %v9486 = vlaneseq
    %v9487 = vshrl.u32 %v9486, 7
    %v9488 = vsub.s32 %v9485, %v9487
    %v9489 = vrot.slane %v9481, %v9488
    %v9491 = vunpack.c.l.s4 1966171168
    %v9492 = vunpack.c.0.s8 %v9491
    %v9493 = vlaneseq
    %v9494 = vshrl.u32 %v9493, 7
    %v9495 = vsub.s32 %v9492, %v9494
    %v9496 = vrot.slane %v9482, %v9495
    %v9497 = vcombine.low %v9489, %v9496
    %v9498 = vcombine.low %v8810, %v8812
    %v9499 = vcombine.low %v8836, %v8850
    %v9500 = vcombine.low %v8858, %v8860
    %v9502 = vunpack.c.l.s4 1966171168
    %v9503 = vunpack.c.0.s8 %v9502
    %v9504 = vlaneseq
    %v9505 = vshrl.u32 %v9504, 7
    %v9506 = vsub.s32 %v9503, %v9505
    %v9507 = vrot.slane %v9498, %v9506
    %v9509 = vunpack.c.l.s4 1966171168
    %v9510 = vunpack.c.0.s8 %v9509
    %v9511 = vlaneseq
    %v9512 = vshrl.u32 %v9511, 7
    %v9513 = vsub.s32 %v9510, %v9512
    %v9514 = vrot.slane %v9499, %v9513
    %v9516 = vunpack.c.l.s4 1966171168
    %v9517 = vunpack.c.0.s8 %v9516
    %v9518 = vlaneseq
    %v9519 = vshrl.u32 %v9518, 7
    %v9520 = vsub.s32 %v9517, %v9519
    %v9521 = vrot.slane %v9500, %v9520
    %v9523 = vunpack.c.l.s4 1966171168
    %v9524 = vunpack.c.0.s8 %v9523
    %v9525 = vlaneseq
    %v9526 = vshrl.u32 %v9525, 7
    %v9527 = vsub.s32 %v9524, %v9526
    %v9528 = vrot.slane %v8843, %v9527
    %v9529 = vcombine.low %v9507, %v9514
    %v9530 = vcombine.low %v9521, %v9528
    %v9532 = vunpack.c.l.s4 1966171168
    %v9533 = vunpack.c.0.s8 %v9532
    %v9534 = vlaneseq
    %v9535 = vshrl.u32 %v9534, 7
    %v9536 = vsub.s32 %v9533, %v9535
    %v9537 = vrot.slane %v9529, %v9536
    %v9539 = vunpack.c.l.s4 1966171168
    %v9540 = vunpack.c.0.s8 %v9539
    %v9541 = vlaneseq
    %v9542 = vshrl.u32 %v9541, 7
    %v9543 = vsub.s32 %v9540, %v9542
    %v9544 = vrot.slane %v9530, %v9543
    %v9545 = vcombine.low %v9537, %v9544
    %v9546 = vcombine.low %v8857, %v8859
    %v9547 = vcombine.low %v8861, %v8885
    %v9548 = vcombine.low %v8899, %v8907
    %v9550 = vunpack.c.l.s4 1966171168
    %v9551 = vunpack.c.0.s8 %v9550
    %v9552 = vlaneseq
    %v9553 = vshrl.u32 %v9552, 7
    %v9554 = vsub.s32 %v9551, %v9553
    %v9555 = vrot.slane %v9546, %v9554
    %v9557 = vunpack.c.l.s4 1966171168
    %v9558 = vunpack.c.0.s8 %v9557
    %v9559 = vlaneseq
    %v9560 = vshrl.u32 %v9559, 7
    %v9561 = vsub.s32 %v9558, %v9560
    %v9562 = vrot.slane %v9547, %v9561
    %v9564 = vunpack.c.l.s4 1966171168
    %v9565 = vunpack.c.0.s8 %v9564
    %v9566 = vlaneseq
    %v9567 = vshrl.u32 %v9566, 7
    %v9568 = vsub.s32 %v9565, %v9567
    %v9569 = vrot.slane %v9548, %v9568
    %v9571 = vunpack.c.l.s4 1966171168
    %v9572 = vunpack.c.0.s8 %v9571
    %v9573 = vlaneseq
    %v9574 = vshrl.u32 %v9573, 7
    %v9575 = vsub.s32 %v9572, %v9574
    %v9576 = vrot.slane %v8909, %v9575
    %v9577 = vcombine.low %v9555, %v9562
    %v9578 = vcombine.low %v9569, %v9576
    %v9580 = vunpack.c.l.s4 1966171168
    %v9581 = vunpack.c.0.s8 %v9580
    %v9582 = vlaneseq
    %v9583 = vshrl.u32 %v9582, 7
    %v9584 = vsub.s32 %v9581, %v9583
    %v9585 = vrot.slane %v9577, %v9584
    %v9587 = vunpack.c.l.s4 1966171168
    %v9588 = vunpack.c.0.s8 %v9587
    %v9589 = vlaneseq
    %v9590 = vshrl.u32 %v9589, 7
    %v9591 = vsub.s32 %v9588, %v9590
    %v9592 = vrot.slane %v9578, %v9591
    %v9593 = vcombine.low %v9585, %v9592
    %v9594 = vcombine.low %v8892, %v8906
    %v9595 = vcombine.low %v8908, %v8910
    %v9596 = vcombine.low %v8934, %v8948
    %v9598 = vunpack.c.l.s4 1966171168
    %v9599 = vunpack.c.0.s8 %v9598
    %v9600 = vlaneseq
    %v9601 = vshrl.u32 %v9600, 7
    %v9602 = vsub.s32 %v9599, %v9601
    %v9603 = vrot.slane %v9594, %v9602
    %v9605 = vunpack.c.l.s4 1966171168
    %v9606 = vunpack.c.0.s8 %v9605
    %v9607 = vlaneseq
    %v9608 = vshrl.u32 %v9607, 7
    %v9609 = vsub.s32 %v9606, %v9608
    %v9610 = vrot.slane %v9595, %v9609
    %v9612 = vunpack.c.l.s4 1966171168
    %v9613 = vunpack.c.0.s8 %v9612
    %v9614 = vlaneseq
    %v9615 = vshrl.u32 %v9614, 7
    %v9616 = vsub.s32 %v9613, %v9615
    %v9617 = vrot.slane %v9596, %v9616
    %v9619 = vunpack.c.l.s4 1966171168
    %v9620 = vunpack.c.0.s8 %v9619
    %v9621 = vlaneseq
    %v9622 = vshrl.u32 %v9621, 7
    %v9623 = vsub.s32 %v9620, %v9622
    %v9624 = vrot.slane %v8956, %v9623
    %v9625 = vcombine.low %v9603, %v9610
    %v9626 = vcombine.low %v9617, %v9624
    %v9628 = vunpack.c.l.s4 1966171168
    %v9629 = vunpack.c.0.s8 %v9628
    %v9630 = vlaneseq
    %v9631 = vshrl.u32 %v9630, 7
    %v9632 = vsub.s32 %v9629, %v9631
    %v9633 = vrot.slane %v9625, %v9632
    %v9635 = vunpack.c.l.s4 1966171168
    %v9636 = vunpack.c.0.s8 %v9635
    %v9637 = vlaneseq
    %v9638 = vshrl.u32 %v9637, 7
    %v9639 = vsub.s32 %v9636, %v9638
    %v9640 = vrot.slane %v9626, %v9639
    %v9641 = vcombine.low %v9633, %v9640
    %v9642 = vcombine.low %v8958, %v8941
    %v9643 = vcombine.low %v8955, %v8957
    %v9644 = vcombine.low %v8959, %v8974
    %v9646 = vunpack.c.l.s4 1966171168
    %v9647 = vunpack.c.0.s8 %v9646
    %v9648 = vlaneseq
    %v9649 = vshrl.u32 %v9648, 7
    %v9650 = vsub.s32 %v9647, %v9649
    %v9651 = vrot.slane %v9642, %v9650
    %v9653 = vunpack.c.l.s4 1966171168
    %v9654 = vunpack.c.0.s8 %v9653
    %v9655 = vlaneseq
    %v9656 = vshrl.u32 %v9655, 7
    %v9657 = vsub.s32 %v9654, %v9656
    %v9658 = vrot.slane %v9643, %v9657
    %v9660 = vunpack.c.l.s4 1966171168
    %v9661 = vunpack.c.0.s8 %v9660
    %v9662 = vlaneseq
    %v9663 = vshrl.u32 %v9662, 7
    %v9664 = vsub.s32 %v9661, %v9663
    %v9665 = vrot.slane %v9644, %v9664
    %v9667 = vunpack.c.l.s4 1966171168
    %v9668 = vunpack.c.0.s8 %v9667
    %v9669 = vlaneseq
    %v9670 = vshrl.u32 %v9669, 7
    %v9671 = vsub.s32 %v9668, %v9670
    %v9672 = vrot.slane %v8981, %v9671
    %v9673 = vcombine.low %v9651, %v9658
    %v9674 = vcombine.low %v9665, %v9672
    %v9676 = vunpack.c.l.s4 1966171168
    %v9677 = vunpack.c.0.s8 %v9676
    %v9678 = vlaneseq
    %v9679 = vshrl.u32 %v9678, 7
    %v9680 = vsub.s32 %v9677, %v9679
    %v9681 = vrot.slane %v9673, %v9680
    %v9683 = vunpack.c.l.s4 1966171168
    %v9684 = vunpack.c.0.s8 %v9683
    %v9685 = vlaneseq
    %v9686 = vshrl.u32 %v9685, 7
    %v9687 = vsub.s32 %v9684, %v9686
    %v9688 = vrot.slane %v9674, %v9687
    %v9689 = vcombine.low %v9681, %v9688
    %s9704 = scalar_lea.vmem [#allocation8], 16
    %9705 = vst [vmem:[%s9704 + $0x1] sm:$0x7f] %v9065
    %9706 = vst [vmem:[%s9704 + $0x11] sm:$0x7f] %v9113
    %9707 = vst [vmem:[%s9704 + $0x21] sm:$0x7f] %v9161
    %9708 = vst [vmem:[%s9704 + $0x31] sm:$0x7f] %v9209
    %9709 = vst [vmem:[%s9704 + $0x41] sm:$0x7f] %v9257
    %9710 = vst [vmem:[%s9704 + $0x51] sm:$0x7f] %v9305
    %9711 = vst [vmem:[%s9704 + $0x61] sm:$0x7f] %v9353
    %9712 = vst [vmem:[%s9704 + $0x91] sm:$0x7f] %v9401
    %9713 = vst [vmem:[%s9704 + $0xa1] sm:$0x7f] %v9449
    %9714 = vst [vmem:[%s9704 + $0xb1] sm:$0x7f] %v9497
    %9715 = vst [vmem:[%s9704 + $0xc1] sm:$0x7f] %v9545
    %9716 = vst [vmem:[%s9704 + $0xd1] sm:$0x7f] %v9593
    %9717 = vst [vmem:[%s9704 + $0xe1] sm:$0x7f] %v9641
    %9718 = vst [vmem:[%s9704 + $0xf1] sm:$0x7f] %v9689
    %v9719 = vld [vmem:[#allocation8] sm:$0xff]
    %v9720 = vld [vmem:[#allocation8 + $0x8] sm:$0x1]
    %v9721 = vld [vmem:[#allocation8 + $0x10] sm:$0xff]
    %v9722 = vld [vmem:[#allocation8 + $0x18] sm:$0x1]
    %v9723 = vld [vmem:[#allocation8 + $0x20] sm:$0xff]
    %v9724 = vld [vmem:[#allocation8 + $0x28] sm:$0x1]
    %v9725 = vld [vmem:[#allocation8 + $0x30] sm:$0xff]
    %v9726 = vld [vmem:[#allocation8 + $0x38] sm:$0x1]
    %v9727 = vld [vmem:[#allocation8 + $0x40] sm:$0xff]
    %v9728 = vld [vmem:[#allocation8 + $0x48] sm:$0x1]
    %v9729 = vld [vmem:[#allocation8 + $0x50] sm:$0xff]
    %v9730 = vld [vmem:[#allocation8 + $0x58] sm:$0x1]
    %v9731 = vld [vmem:[#allocation8 + $0x60] sm:$0xff]
    %v9732 = vld [vmem:[#allocation8 + $0x68] sm:$0x1]
    %v9733 = vld [vmem:[#allocation8 + $0x70] sm:$0xff]
    %v9734 = vld [vmem:[#allocation8 + $0x78] sm:$0x1]
    %v9735 = vld [vmem:[#allocation8 + $0x80] sm:$0xff]
    %v9736 = vld [vmem:[#allocation8 + $0x88] sm:$0x1]
    %v9737 = vld [vmem:[#allocation8 + $0x90] sm:$0xff]
    %v9738 = vld [vmem:[#allocation8 + $0x98] sm:$0x1]
    %v9739 = vld [vmem:[#allocation8 + $0xa0] sm:$0xff]
    %v9740 = vld [vmem:[#allocation8 + $0xa8] sm:$0x1]
    %v9741 = vld [vmem:[#allocation8 + $0xb0] sm:$0xff]
    %v9742 = vld [vmem:[#allocation8 + $0xb8] sm:$0x1]
    %v9743 = vld [vmem:[#allocation8 + $0xc0] sm:$0xff]
    %v9744 = vld [vmem:[#allocation8 + $0xc8] sm:$0x1]
    %v9745 = vld [vmem:[#allocation8 + $0xd0] sm:$0xff]
    %v9746 = vld [vmem:[#allocation8 + $0xd8] sm:$0x1]
    %v9747 = vld [vmem:[#allocation8 + $0xe0] sm:$0xff]
    %v9748 = vld [vmem:[#allocation8 + $0xe8] sm:$0x1]
    %v9749 = vld [vmem:[#allocation8 + $0xf0] sm:$0xff]
    %v9750 = vld [vmem:[#allocation8 + $0xf8] sm:$0x1]
    %v9751 = vld [vmem:[#allocation8 + $0x100] sm:$0xff]
    %v9752 = vld [vmem:[#allocation8 + $0x108] sm:$0x1]
    %v9753 = vld [vmem:[#allocation8 + $0x110] sm:$0xff]
    %v9754 = vld [vmem:[#allocation8 + $0x118] sm:$0x1]
    %vm9787 = vcmask 1046528
    %v9788 = vrot.slane %v9719, 1
    %v9789 = vrot.slane %v9720, 1
    %v9790 = vsel %vm9787, %v9788, %v9789
    %v9791 = vrot.slane %v9721, 1
    %v9792 = vrot.slane %v9722, 1
    %v9793 = vsel %vm9787, %v9791, %v9792
    %v9794 = vrot.slane %v9723, 1
    %v9795 = vrot.slane %v9724, 1
    %v9796 = vsel %vm9787, %v9794, %v9795
    %v9797 = vrot.slane %v9725, 1
    %v9798 = vrot.slane %v9726, 1
    %v9799 = vsel %vm9787, %v9797, %v9798
    %v9800 = vrot.slane %v9727, 1
    %v9801 = vrot.slane %v9728, 1
    %v9802 = vsel %vm9787, %v9800, %v9801
    %v9803 = vrot.slane %v9729, 1
    %v9804 = vrot.slane %v9730, 1
    %v9805 = vsel %vm9787, %v9803, %v9804
    %v9806 = vrot.slane %v9731, 1
    %v9807 = vrot.slane %v9732, 1
    %v9808 = vsel %vm9787, %v9806, %v9807
    %v9809 = vrot.slane %v9733, 1
    %v9810 = vrot.slane %v9734, 1
    %v9811 = vsel %vm9787, %v9809, %v9810
    %v9812 = vrot.slane %v9737, 1
    %v9813 = vrot.slane %v9738, 1
    %v9814 = vsel %vm9787, %v9812, %v9813
    %v9815 = vrot.slane %v9739, 1
    %v9816 = vrot.slane %v9740, 1
    %v9817 = vsel %vm9787, %v9815, %v9816
    %v9818 = vrot.slane %v9741, 1
    %v9819 = vrot.slane %v9742, 1
    %v9820 = vsel %vm9787, %v9818, %v9819
    %v9821 = vrot.slane %v9743, 1
    %v9822 = vrot.slane %v9744, 1
    %v9823 = vsel %vm9787, %v9821, %v9822
    %v9824 = vrot.slane %v9745, 1
    %v9825 = vrot.slane %v9746, 1
    %v9826 = vsel %vm9787, %v9824, %v9825
    %v9827 = vrot.slane %v9747, 1
    %v9828 = vrot.slane %v9748, 1
    %v9829 = vsel %vm9787, %v9827, %v9828
    %v9830 = vrot.slane %v9749, 1
    %v9831 = vrot.slane %v9750, 1
    %v9832 = vsel %vm9787, %v9830, %v9831
    %v9833 = vrot.slane %v9751, 1
    %v9834 = vrot.slane %v9752, 1
    %v9835 = vsel %vm9787, %v9833, %v9834
    %v9856 = vrot.slane %v9735, 1
    %v9857 = vrot.slane %v9736, 1
    %v9858 = vsel %vm9787, %v9856, %v9857
    %v9859 = vrot.slane %v9753, 1
    %v9860 = vrot.slane %v9754, 1
    %v9861 = vsel %vm9787, %v9859, %v9860
    %v9864 = vpack.c.bf16 %v9721, %v9719
    %v9865 = vpack.c.bf16 %v9793, %v9790
    %v9866 = vpack.c.bf16 %v9723, %v9721
    %v9867 = vpack.c.bf16 %v9796, %v9793
    %v9868 = vpack.c.bf16 %v9725, %v9723
    %v9869 = vpack.c.bf16 %v9799, %v9796
    %v9870 = vpack.c.bf16 %v9727, %v9725
    %v9871 = vpack.c.bf16 %v9802, %v9799
    %v9872 = vpack.c.bf16 %v9729, %v9727
    %v9873 = vpack.c.bf16 %v9805, %v9802
    %v9874 = vpack.c.bf16 %v9731, %v9729
    %v9875 = vpack.c.bf16 %v9808, %v9805
    %v9876 = vpack.c.bf16 %v9733, %v9731
    %v9877 = vpack.c.bf16 %v9811, %v9808
    %v9878 = vpack.c.bf16 %v9735, %v9733
    %v9879 = vpack.c.bf16 %v9858, %v9811
    %v9880 = vpack.c.bf16 %v9739, %v9737
    %v9881 = vpack.c.bf16 %v9817, %v9814
    %v9882 = vpack.c.bf16 %v9741, %v9739
    %v9883 = vpack.c.bf16 %v9820, %v9817
    %v9884 = vpack.c.bf16 %v9743, %v9741
    %v9885 = vpack.c.bf16 %v9823, %v9820
    %v9886 = vpack.c.bf16 %v9745, %v9743
    %v9887 = vpack.c.bf16 %v9826, %v9823
    %v9888 = vpack.c.bf16 %v9747, %v9745
    %v9889 = vpack.c.bf16 %v9829, %v9826
    %v9890 = vpack.c.bf16 %v9749, %v9747
    %v9891 = vpack.c.bf16 %v9832, %v9829
    %v9892 = vpack.c.bf16 %v9751, %v9749
    %v9893 = vpack.c.bf16 %v9835, %v9832
    %v9894 = vpack.c.bf16 %v9753, %v9751
    %v9895 = vpack.c.bf16 %v9861, %v9835
    %v9896 = vld [vmem:[#allocation19] sm:$0xf]
    %v9897 = vld [vmem:[#allocation19 + $0x4] sm:$0xf]
    %v9898 = vld [vmem:[#allocation19 + $0x8] sm:$0xf]
    %v9899 = vld [vmem:[#allocation19 + $0xc] sm:$0xf]
    %v9900 = vld [vmem:[#allocation19 + $0x10] sm:$0xf]
    %v9901 = vld [vmem:[#allocation19 + $0x14] sm:$0xf]
    %v9902 = vld [vmem:[#allocation19 + $0x18] sm:$0xf]
    %v9903 = vld [vmem:[#allocation19 + $0x1c] sm:$0xf]
    %v9904 = vld [vmem:[#allocation19 + $0x20] sm:$0xf]
    %v9905 = vld [vmem:[#allocation19 + $0x24] sm:$0xf]
    %v9906 = vld [vmem:[#allocation19 + $0x28] sm:$0xf]
    %v9907 = vld [vmem:[#allocation19 + $0x2c] sm:$0xf]
    %v9908 = vld [vmem:[#allocation19 + $0x30] sm:$0xf]
    %v9909 = vld [vmem:[#allocation19 + $0x34] sm:$0xf]
    %v9910 = vld [vmem:[#allocation19 + $0x38] sm:$0xf]
    %v9911 = vld [vmem:[#allocation19 + $0x3c] sm:$0xf]
    %v9912 = vld [vmem:[#allocation19 + $0x40] sm:$0xf]
    %v9913 = vld [vmem:[#allocation19 + $0x44] sm:$0xf]
    %v9914 = vld [vmem:[#allocation19 + $0x48] sm:$0xf]
    %v9915 = vld [vmem:[#allocation19 + $0x4c] sm:$0xf]
    %v9916 = vld [vmem:[#allocation19 + $0x50] sm:$0xf]
    %v9917 = vld [vmem:[#allocation19 + $0x54] sm:$0xf]
    %v9918 = vld [vmem:[#allocation19 + $0x58] sm:$0xf]
    %v9919 = vld [vmem:[#allocation19 + $0x5c] sm:$0xf]
    %v9920 = vld [vmem:[#allocation19 + $0x60] sm:$0xf]
    %v9921 = vld [vmem:[#allocation19 + $0x64] sm:$0xf]
    %v9922 = vld [vmem:[#allocation19 + $0x68] sm:$0xf]
    %v9923 = vld [vmem:[#allocation19 + $0x6c] sm:$0xf]
    %v9924 = vld [vmem:[#allocation19 + $0x70] sm:$0xf]
    %v9925 = vld [vmem:[#allocation19 + $0x74] sm:$0xf]
    %v9926 = vld [vmem:[#allocation19 + $0x78] sm:$0xf]
    %v9927 = vld [vmem:[#allocation19 + $0x7c] sm:$0xf]
    %v9928 = vld [vmem:[#allocation19 + $0x80] sm:$0xf]
    %v9929 = vld [vmem:[#allocation19 + $0x84] sm:$0xf]
    %v9930 = vld [vmem:[#allocation19 + $0x88] sm:$0xf]
    %v9931 = vld [vmem:[#allocation19 + $0x8c] sm:$0xf]
    %v9932 = vld [vmem:[#allocation19 + $0x90] sm:$0xf]
    %v9933 = vld [vmem:[#allocation19 + $0x94] sm:$0xf]
    %v9934 = vld [vmem:[#allocation19 + $0x98] sm:$0xf]
    %v9935 = vld [vmem:[#allocation19 + $0x9c] sm:$0xf]
    %v9936 = vld [vmem:[#allocation19 + $0xa0] sm:$0xf]
    %v9937 = vld [vmem:[#allocation19 + $0xa4] sm:$0xf]
    %v9938 = vld [vmem:[#allocation19 + $0xa8] sm:$0xf]
    %v9939 = vld [vmem:[#allocation19 + $0xac] sm:$0xf]
    %v9940 = vld [vmem:[#allocation19 + $0xb0] sm:$0xf]
    %v9941 = vld [vmem:[#allocation19 + $0xb4] sm:$0xf]
    %v9942 = vld [vmem:[#allocation19 + $0xb8] sm:$0xf]
    %v9943 = vld [vmem:[#allocation19 + $0xbc] sm:$0xf]
    %v9944 = vld [vmem:[#allocation19 + $0xc0] sm:$0xf]
    %v9945 = vld [vmem:[#allocation19 + $0xc4] sm:$0xf]
    %v9946 = vld [vmem:[#allocation19 + $0xc8] sm:$0xf]
    %v9947 = vld [vmem:[#allocation19 + $0xcc] sm:$0xf]
    %v9948 = vld [vmem:[#allocation19 + $0xd0] sm:$0xf]
    %v9949 = vld [vmem:[#allocation19 + $0xd4] sm:$0xf]
    %v9950 = vld [vmem:[#allocation19 + $0xd8] sm:$0xf]
    %v9951 = vld [vmem:[#allocation19 + $0xdc] sm:$0xf]
    %v9952 = vld [vmem:[#allocation19 + $0xe0] sm:$0xf]
    %v9953 = vld [vmem:[#allocation19 + $0xe4] sm:$0xf]
    %v9954 = vld [vmem:[#allocation19 + $0xe8] sm:$0xf]
    %v9955 = vld [vmem:[#allocation19 + $0xec] sm:$0xf]
    %v9956 = vld [vmem:[#allocation19 + $0xf0] sm:$0xf]
    %v9957 = vld [vmem:[#allocation19 + $0xf4] sm:$0xf]
    %v9958 = vld [vmem:[#allocation19 + $0xf8] sm:$0xf]
    %v9959 = vld [vmem:[#allocation19 + $0xfc] sm:$0xf]
    %v10024 = vunpack.c.l.b16 %v9896
    %v10025 = vunpack.c.l.b16 %v9897
    %v10026 = vunpack.c.l.b16 %v9898
    %v10027 = vunpack.c.l.b16 %v9899
    %v10028 = vunpack.c.l.b16 %v9900
    %v10029 = vunpack.c.l.b16 %v9901
    %v10030 = vunpack.c.l.b16 %v9902
    %v10031 = vunpack.c.l.b16 %v9903
    %v10032 = vunpack.c.l.b16 %v9904
    %v10033 = vunpack.c.l.b16 %v9905
    %v10034 = vunpack.c.l.b16 %v9906
    %v10035 = vunpack.c.l.b16 %v9907
    %v10036 = vunpack.c.l.b16 %v9908
    %v10037 = vunpack.c.l.b16 %v9909
    %v10038 = vunpack.c.l.b16 %v9910
    %v10039 = vunpack.c.l.b16 %v9911
    %v10040 = vunpack.c.l.b16 %v9912
    %v10041 = vunpack.c.l.b16 %v9913
    %v10042 = vunpack.c.l.b16 %v9914
    %v10043 = vunpack.c.l.b16 %v9915
    %v10044 = vunpack.c.l.b16 %v9916
    %v10045 = vunpack.c.l.b16 %v9917
    %v10046 = vunpack.c.l.b16 %v9918
    %v10047 = vunpack.c.l.b16 %v9919
    %v10048 = vunpack.c.l.b16 %v9920
    %v10049 = vunpack.c.l.b16 %v9921
    %v10050 = vunpack.c.l.b16 %v9922
    %v10051 = vunpack.c.l.b16 %v9923
    %v10052 = vunpack.c.l.b16 %v9924
    %v10053 = vunpack.c.l.b16 %v9925
    %v10054 = vunpack.c.l.b16 %v9926
    %v10055 = vunpack.c.l.b16 %v9927
    %v10056 = vunpack.c.l.b16 %v9928
    %v10057 = vunpack.c.l.b16 %v9929
    %v10058 = vunpack.c.l.b16 %v9930
    %v10059 = vunpack.c.l.b16 %v9931
    %v10060 = vunpack.c.l.b16 %v9932
    %v10061 = vunpack.c.l.b16 %v9933
    %v10062 = vunpack.c.l.b16 %v9934
    %v10063 = vunpack.c.l.b16 %v9935
    %v10064 = vunpack.c.l.b16 %v9936
    %v10065 = vunpack.c.l.b16 %v9937
    %v10066 = vunpack.c.l.b16 %v9938
    %v10067 = vunpack.c.l.b16 %v9939
    %v10068 = vunpack.c.l.b16 %v9940
    %v10069 = vunpack.c.l.b16 %v9941
    %v10070 = vunpack.c.l.b16 %v9942
    %v10071 = vunpack.c.l.b16 %v9943
    %v10072 = vunpack.c.l.b16 %v9944
    %v10073 = vunpack.c.l.b16 %v9945
    %v10074 = vunpack.c.l.b16 %v9946
    %v10075 = vunpack.c.l.b16 %v9947
    %v10076 = vunpack.c.l.b16 %v9948
    %v10077 = vunpack.c.l.b16 %v9949
    %v10078 = vunpack.c.l.b16 %v9950
    %v10079 = vunpack.c.l.b16 %v9951
    %v10080 = vunpack.c.l.b16 %v9952
    %v10081 = vunpack.c.l.b16 %v9953
    %v10082 = vunpack.c.l.b16 %v9954
    %v10083 = vunpack.c.l.b16 %v9955
    %v10084 = vunpack.c.l.b16 %v9956
    %v10085 = vunpack.c.l.b16 %v9957
    %v10086 = vunpack.c.l.b16 %v9958
    %v10087 = vunpack.c.l.b16 %v9959
    %v10088 = vpack.c.b16 %v10025, %v10024
    %v10089 = vpack.c.b16 %v10027, %v10026
    %v10090 = vpack.c.b16 %v10029, %v10028
    %v10091 = vpack.c.b16 %v10031, %v10030
    %v10092 = vpack.c.b16 %v10033, %v10032
    %v10093 = vpack.c.b16 %v10035, %v10034
    %v10094 = vpack.c.b16 %v10037, %v10036
    %v10095 = vpack.c.b16 %v10039, %v10038
    %v10096 = vpack.c.b16 %v10041, %v10040
    %v10097 = vpack.c.b16 %v10043, %v10042
    %v10098 = vpack.c.b16 %v10045, %v10044
    %v10099 = vpack.c.b16 %v10047, %v10046
    %v10100 = vpack.c.b16 %v10049, %v10048
    %v10101 = vpack.c.b16 %v10051, %v10050
    %v10102 = vpack.c.b16 %v10053, %v10052
    %v10103 = vpack.c.b16 %v10055, %v10054
    %v10104 = vpack.c.b16 %v10057, %v10056
    %v10105 = vpack.c.b16 %v10059, %v10058
    %v10106 = vpack.c.b16 %v10061, %v10060
    %v10107 = vpack.c.b16 %v10063, %v10062
    %v10108 = vpack.c.b16 %v10065, %v10064
    %v10109 = vpack.c.b16 %v10067, %v10066
    %v10110 = vpack.c.b16 %v10069, %v10068
    %v10111 = vpack.c.b16 %v10071, %v10070
    %v10112 = vpack.c.b16 %v10073, %v10072
    %v10113 = vpack.c.b16 %v10075, %v10074
    %v10114 = vpack.c.b16 %v10077, %v10076
    %v10115 = vpack.c.b16 %v10079, %v10078
    %v10116 = vpack.c.b16 %v10081, %v10080
    %v10117 = vpack.c.b16 %v10083, %v10082
    %v10118 = vpack.c.b16 %v10085, %v10084
    %v10119 = vpack.c.b16 %v10087, %v10086
    %10152 = vmatprep.subr.bf16.mxu0 0
    %10153 = vmatpush1.bf16.msra.mxu0 %v10095
    %10154 = vmatprep.subr.bf16.mxu0 0
    %10155 = vmatpush1.bf16.msra.mxu0 %v10094
    %10156 = vmatprep.subr.bf16.mxu0 0
    %10157 = vmatpush1.bf16.msra.mxu0 %v10093
    %10158 = vmatprep.subr.bf16.mxu0 0
    %10159 = vmatpush1.bf16.msra.mxu0 %v10092
    %10160 = vmatprep.subr.bf16.mxu0 0
    %10161 = vmatpush1.bf16.msra.mxu0 %v10091
    %10162 = vmatprep.subr.bf16.mxu0 0
    %10163 = vmatpush1.bf16.msra.mxu0 %v10090
    %10164 = vmatprep.subr.bf16.mxu0 0
    %10165 = vmatpush1.bf16.msra.mxu0 %v10089
    %10166 = vmatprep.subr.bf16.mxu0 0
    %10167 = vmatpush1.bf16.msra.mxu0 %v10088
    %10168 = vmatprep.subr.bf16.mxu0 0
    %10169 = vmatpush2.bf16.msra.mxu0 %v10103
    %10170 = vmatprep.subr.bf16.mxu0 0
    %10171 = vmatpush2.bf16.msra.mxu0 %v10102
    %10172 = vmatprep.subr.bf16.mxu0 0
    %10173 = vmatpush2.bf16.msra.mxu0 %v10101
    %10174 = vmatprep.subr.bf16.mxu0 0
    %10175 = vmatpush2.bf16.msra.mxu0 %v10100
    %10176 = vmatprep.subr.bf16.mxu0 0
    %10177 = vmatpush2.bf16.msra.mxu0 %v10099
    %10178 = vmatprep.subr.bf16.mxu0 0
    %10179 = vmatpush2.bf16.msra.mxu0 %v10098
    %10180 = vmatprep.subr.bf16.mxu0 0
    %10181 = vmatpush2.bf16.msra.mxu0 %v10097
    %10182 = vmatprep.subr.bf16.mxu0 0
    %10183 = vmatpush2.bf16.msra.mxu0 %v10096
    %10184 = vmatprep.mubr.bf16.mxu0 %v9865
    %10185 = vmatmul.mubr.bf16.gmra.mxu0 %v9864
    %v10186 = vpop.f32.mrf.mxu0
    %v10187 = vadd.f32 0.0, %v10186
    %v10188 = vpop.f32.mrf.mxu0
    %v10189 = vpop.f32.mrf.mxu0
    %v10190 = vadd.f32 0.0, %v10189
    %v10191 = vpop.f32.mrf.mxu0
    %10192 = vmatprep.mubr.bf16.mxu0 %v9869
    %10193 = vmatmul.mubr.bf16.gmra.mxu0 %v9868
    %v10194 = vpop.f32.mrf.mxu0
    %v10195 = vadd.f32 0.0, %v10194
    %v10196 = vpop.f32.mrf.mxu0
    %v10197 = vpop.f32.mrf.mxu0
    %v10198 = vadd.f32 0.0, %v10197
    %v10199 = vpop.f32.mrf.mxu0
    %10200 = vmatprep.mubr.bf16.mxu0 %v9873
    %10201 = vmatmul.mubr.bf16.gmra.mxu0 %v9872
    %v10202 = vpop.f32.mrf.mxu0
    %v10203 = vadd.f32 0.0, %v10202
    %v10204 = vpop.f32.mrf.mxu0
    %v10205 = vpop.f32.mrf.mxu0
    %v10206 = vadd.f32 0.0, %v10205
    %v10207 = vpop.f32.mrf.mxu0
    %10208 = vmatprep.mubr.bf16.mxu0 %v9877
    %10209 = vmatmul.mubr.bf16.gmra.mxu0 %v9876
    %v10210 = vpop.f32.mrf.mxu0
    %v10211 = vadd.f32 0.0, %v10210
    %v10212 = vpop.f32.mrf.mxu0
    %v10213 = vpop.f32.mrf.mxu0
    %v10214 = vadd.f32 0.0, %v10213
    %v10215 = vpop.f32.mrf.mxu0
    %10216 = vmatprep.mubr.bf16.mxu0 %v9881
    %10217 = vmatmul.mubr.bf16.gmra.mxu0 %v9880
    %v10218 = vpop.f32.mrf.mxu0
    %v10219 = vadd.f32 0.0, %v10218
    %v10220 = vpop.f32.mrf.mxu0
    %v10221 = vpop.f32.mrf.mxu0
    %v10222 = vadd.f32 0.0, %v10221
    %v10223 = vpop.f32.mrf.mxu0
    %10224 = vmatprep.mubr.bf16.mxu0 %v9885
    %10225 = vmatmul.mubr.bf16.gmra.mxu0 %v9884
    %v10226 = vpop.f32.mrf.mxu0
    %v10227 = vadd.f32 0.0, %v10226
    %v10228 = vpop.f32.mrf.mxu0
    %v10229 = vpop.f32.mrf.mxu0
    %v10230 = vadd.f32 0.0, %v10229
    %v10231 = vpop.f32.mrf.mxu0
    %10232 = vmatprep.mubr.bf16.mxu0 %v9889
    %10233 = vmatmul.mubr.bf16.gmra.mxu0 %v9888
    %v10234 = vpop.f32.mrf.mxu0
    %v10235 = vadd.f32 0.0, %v10234
    %v10236 = vpop.f32.mrf.mxu0
    %v10237 = vpop.f32.mrf.mxu0
    %v10238 = vadd.f32 0.0, %v10237
    %v10239 = vpop.f32.mrf.mxu0
    %10240 = vmatprep.mubr.bf16.mxu0 %v9893
    %10241 = vmatmul.mubr.bf16.gmra.mxu0 %v9892
    %v10242 = vpop.f32.mrf.mxu0
    %v10243 = vadd.f32 0.0, %v10242
    %v10244 = vpop.f32.mrf.mxu0
    %v10245 = vpop.f32.mrf.mxu0
    %v10246 = vadd.f32 0.0, %v10245
    %v10247 = vpop.f32.mrf.mxu0
    %10248 = vdwg.mxu0
    %10249 = vmatprep.subr.bf16.mxu0 0
    %10250 = vmatpush1.bf16.msra.mxu0 %v10111
    %10251 = vmatprep.subr.bf16.mxu0 0
    %10252 = vmatpush1.bf16.msra.mxu0 %v10110
    %10253 = vmatprep.subr.bf16.mxu0 0
    %10254 = vmatpush1.bf16.msra.mxu0 %v10109
    %10255 = vmatprep.subr.bf16.mxu0 0
    %10256 = vmatpush1.bf16.msra.mxu0 %v10108
    %10257 = vmatprep.subr.bf16.mxu0 0
    %10258 = vmatpush1.bf16.msra.mxu0 %v10107
    %10259 = vmatprep.subr.bf16.mxu0 0
    %10260 = vmatpush1.bf16.msra.mxu0 %v10106
    %10261 = vmatprep.subr.bf16.mxu0 0
    %10262 = vmatpush1.bf16.msra.mxu0 %v10105
    %10263 = vmatprep.subr.bf16.mxu0 0
    %10264 = vmatpush1.bf16.msra.mxu0 %v10104
    %10265 = vmatprep.subr.bf16.mxu0 0
    %10266 = vmatpush2.bf16.msra.mxu0 %v10119
    %10267 = vmatprep.subr.bf16.mxu0 0
    %10268 = vmatpush2.bf16.msra.mxu0 %v10118
    %10269 = vmatprep.subr.bf16.mxu0 0
    %10270 = vmatpush2.bf16.msra.mxu0 %v10117
    %10271 = vmatprep.subr.bf16.mxu0 0
    %10272 = vmatpush2.bf16.msra.mxu0 %v10116
    %10273 = vmatprep.subr.bf16.mxu0 0
    %10274 = vmatpush2.bf16.msra.mxu0 %v10115
    %10275 = vmatprep.subr.bf16.mxu0 0
    %10276 = vmatpush2.bf16.msra.mxu0 %v10114
    %10277 = vmatprep.subr.bf16.mxu0 0
    %10278 = vmatpush2.bf16.msra.mxu0 %v10113
    %10279 = vmatprep.subr.bf16.mxu0 0
    %10280 = vmatpush2.bf16.msra.mxu0 %v10112
    %10281 = vmatprep.mubr.bf16.mxu0 %v9867
    %10282 = vmatmul.mubr.bf16.gmra.mxu0 %v9866
    %v10283 = vpop.f32.mrf.mxu0
    %v10284 = vadd.f32 %v10187, %v10283
    %v10285 = vpop.f32.mrf.mxu0
    %v10286 = vpop.f32.mrf.mxu0
    %v10287 = vadd.f32 %v10190, %v10286
    %v10288 = vpop.f32.mrf.mxu0
    %10289 = vmatprep.mubr.bf16.mxu0 %v9871
    %10290 = vmatmul.mubr.bf16.gmra.mxu0 %v9870
    %v10291 = vpop.f32.mrf.mxu0
    %v10292 = vadd.f32 %v10195, %v10291
    %v10293 = vpop.f32.mrf.mxu0
    %v10294 = vpop.f32.mrf.mxu0
    %v10295 = vadd.f32 %v10198, %v10294
    %v10296 = vpop.f32.mrf.mxu0
    %10297 = vmatprep.mubr.bf16.mxu0 %v9875
    %10298 = vmatmul.mubr.bf16.gmra.mxu0 %v9874
    %v10299 = vpop.f32.mrf.mxu0
    %v10300 = vadd.f32 %v10203, %v10299
    %v10301 = vpop.f32.mrf.mxu0
    %v10302 = vpop.f32.mrf.mxu0
    %v10303 = vadd.f32 %v10206, %v10302
    %v10304 = vpop.f32.mrf.mxu0
    %10305 = vmatprep.mubr.bf16.mxu0 %v9879
    %10306 = vmatmul.mubr.bf16.gmra.mxu0 %v9878
    %v10307 = vpop.f32.mrf.mxu0
    %v10308 = vadd.f32 %v10211, %v10307
    %v10309 = vpop.f32.mrf.mxu0
    %v10310 = vpop.f32.mrf.mxu0
    %v10311 = vadd.f32 %v10214, %v10310
    %v10312 = vpop.f32.mrf.mxu0
    %10313 = vmatprep.mubr.bf16.mxu0 %v9883
    %10314 = vmatmul.mubr.bf16.gmra.mxu0 %v9882
    %v10315 = vpop.f32.mrf.mxu0
    %v10316 = vadd.f32 %v10219, %v10315
    %v10317 = vpop.f32.mrf.mxu0
    %v10318 = vpop.f32.mrf.mxu0
    %v10319 = vadd.f32 %v10222, %v10318
    %v10320 = vpop.f32.mrf.mxu0
    %10321 = vmatprep.mubr.bf16.mxu0 %v9887
    %10322 = vmatmul.mubr.bf16.gmra.mxu0 %v9886
    %v10323 = vpop.f32.mrf.mxu0
    %v10324 = vadd.f32 %v10227, %v10323
    %v10325 = vpop.f32.mrf.mxu0
    %v10326 = vpop.f32.mrf.mxu0
    %v10327 = vadd.f32 %v10230, %v10326
    %v10328 = vpop.f32.mrf.mxu0
    %10329 = vmatprep.mubr.bf16.mxu0 %v9891
    %10330 = vmatmul.mubr.bf16.gmra.mxu0 %v9890
    %v10331 = vpop.f32.mrf.mxu0
    %v10332 = vadd.f32 %v10235, %v10331
    %v10333 = vpop.f32.mrf.mxu0
    %v10334 = vpop.f32.mrf.mxu0
    %v10335 = vadd.f32 %v10238, %v10334
    %v10336 = vpop.f32.mrf.mxu0
    %10337 = vmatprep.mubr.bf16.mxu0 %v9895
    %10338 = vmatmul.mubr.bf16.gmra.mxu0 %v9894
    %v10339 = vpop.f32.mrf.mxu0
    %v10340 = vadd.f32 %v10243, %v10339
    %v10341 = vpop.f32.mrf.mxu0
    %v10342 = vpop.f32.mrf.mxu0
    %v10343 = vadd.f32 %v10246, %v10342
    %v10344 = vpop.f32.mrf.mxu0
    %10345 = vdwg.mxu0
    %v10346 = vadd.f32 %v10284, %v10287
    %v10347 = vadd.f32 %v10346, %v10292
    %v10348 = vadd.f32 %v10347, %v10295
    %v10349 = vadd.f32 %v10348, %v10300
    %v10350 = vadd.f32 %v10349, %v10303
    %v10351 = vadd.f32 %v10350, %v10308
    %v10352 = vadd.f32 %v10351, %v10311
    %v10353 = vadd.f32 %v10352, %v10316
    %v10354 = vadd.f32 %v10353, %v10319
    %v10355 = vadd.f32 %v10354, %v10324
    %v10356 = vadd.f32 %v10355, %v10327
    %v10357 = vadd.f32 %v10356, %v10332
    %v10358 = vadd.f32 %v10357, %v10335
    %v10359 = vadd.f32 %v10358, %v10340
    %v10360 = vadd.f32 %v10359, %v10343
    %v10361 = vrot.slane %v10360, 4
    %v10362 = vadd.f32 %v10360, %v10361
    %v10363 = vrot.slane %v10362, 2
    %v10364 = vadd.f32 %v10362, %v10363
    %v10365 = vrot.slane %v10364, 1
    %v10366 = vadd.f32 %v10364, %v10365
    %v10367 = vrcp.pop 128.0
    %v10368 = vmul.f32 %v10366, %v10367
    %v10369 = vsub.f32 %v10284, %v10368
    %v10370 = vsub.f32 %v10287, %v10368
    %v10371 = vsub.f32 %v10292, %v10368
    %v10372 = vsub.f32 %v10295, %v10368
    %v10373 = vsub.f32 %v10300, %v10368
    %v10374 = vsub.f32 %v10303, %v10368
    %v10375 = vsub.f32 %v10308, %v10368
    %v10376 = vsub.f32 %v10311, %v10368
    %v10377 = vsub.f32 %v10316, %v10368
    %v10378 = vsub.f32 %v10319, %v10368
    %v10379 = vsub.f32 %v10324, %v10368
    %v10380 = vsub.f32 %v10327, %v10368
    %v10381 = vsub.f32 %v10332, %v10368
    %v10382 = vsub.f32 %v10335, %v10368
    %v10383 = vsub.f32 %v10340, %v10368
    %v10384 = vsub.f32 %v10343, %v10368
    %v10385 = vmul.f32 %v10369, %v10369
    %v10386 = vmul.f32 %v10370, %v10370
    %v10387 = vmul.f32 %v10371, %v10371
    %v10388 = vmul.f32 %v10372, %v10372
    %v10389 = vmul.f32 %v10373, %v10373
    %v10390 = vmul.f32 %v10374, %v10374
    %v10391 = vmul.f32 %v10375, %v10375
    %v10392 = vmul.f32 %v10376, %v10376
    %v10393 = vmul.f32 %v10377, %v10377
    %v10394 = vmul.f32 %v10378, %v10378
    %v10395 = vmul.f32 %v10379, %v10379
    %v10396 = vmul.f32 %v10380, %v10380
    %v10397 = vmul.f32 %v10381, %v10381
    %v10398 = vmul.f32 %v10382, %v10382
    %v10399 = vmul.f32 %v10383, %v10383
    %v10400 = vmul.f32 %v10384, %v10384
    %v10401 = vadd.f32 %v10385, %v10386
    %v10402 = vadd.f32 %v10401, %v10387
    %v10403 = vadd.f32 %v10402, %v10388
    %v10404 = vadd.f32 %v10403, %v10389
    %v10405 = vadd.f32 %v10404, %v10390
    %v10406 = vadd.f32 %v10405, %v10391
    %v10407 = vadd.f32 %v10406, %v10392
    %v10408 = vadd.f32 %v10407, %v10393
    %v10409 = vadd.f32 %v10408, %v10394
    %v10410 = vadd.f32 %v10409, %v10395
    %v10411 = vadd.f32 %v10410, %v10396
    %v10412 = vadd.f32 %v10411, %v10397
    %v10413 = vadd.f32 %v10412, %v10398
    %v10414 = vadd.f32 %v10413, %v10399
    %v10415 = vadd.f32 %v10414, %v10400
    %v10416 = vrot.slane %v10415, 4
    %v10417 = vadd.f32 %v10415, %v10416
    %v10418 = vrot.slane %v10417, 2
    %v10419 = vadd.f32 %v10417, %v10418
    %v10420 = vrot.slane %v10419, 1
    %v10421 = vadd.f32 %v10419, %v10420
    %v10422 = vmul.f32 %v10421, %v10367
    %v10423 = vadd.f32 %v10422, 1e-05
    %v10424 = vrsqrt.pop %v10423
    %v10425 = vmul.f32 %v10369, %v10424
    %v10426 = vmul.f32 %v10370, %v10424
    %v10427 = vmul.f32 %v10371, %v10424
    %v10428 = vmul.f32 %v10372, %v10424
    %v10429 = vmul.f32 %v10373, %v10424
    %v10430 = vmul.f32 %v10374, %v10424
    %v10431 = vmul.f32 %v10375, %v10424
    %v10432 = vmul.f32 %v10376, %v10424
    %v10433 = vmul.f32 %v10377, %v10424
    %v10434 = vmul.f32 %v10378, %v10424
    %v10435 = vmul.f32 %v10379, %v10424
    %v10436 = vmul.f32 %v10380, %v10424
    %v10437 = vmul.f32 %v10381, %v10424
    %v10438 = vmul.f32 %v10382, %v10424
    %v10439 = vmul.f32 %v10383, %v10424
    %v10440 = vmul.f32 %v10384, %v10424
    %v10441 = vld [vmem:[%s20] sm:$0x1]
    %v10443 = vlaneseq
    %v10444 = vshrl.u32 %v10443, 7
    %v10445 = vsub.s32 0, %v10444
    %v10446 = vrot.slane %v10441, %v10445
    %v10448 = vmul.f32 %v10425, %v10446
    %v10449 = vmul.f32 %v10426, %v10446
    %v10450 = vmul.f32 %v10427, %v10446
    %v10451 = vmul.f32 %v10428, %v10446
    %v10452 = vmul.f32 %v10429, %v10446
    %v10453 = vmul.f32 %v10430, %v10446
    %v10454 = vmul.f32 %v10431, %v10446
    %v10455 = vmul.f32 %v10432, %v10446
    %v10456 = vmul.f32 %v10433, %v10446
    %v10457 = vmul.f32 %v10434, %v10446
    %v10458 = vmul.f32 %v10435, %v10446
    %v10459 = vmul.f32 %v10436, %v10446
    %v10460 = vmul.f32 %v10437, %v10446
    %v10461 = vmul.f32 %v10438, %v10446
    %v10462 = vmul.f32 %v10439, %v10446
    %v10463 = vmul.f32 %v10440, %v10446
    %v10464 = vld [vmem:[%s21] sm:$0x1]
    %v10466 = vlaneseq
    %v10467 = vshrl.u32 %v10466, 7
    %v10468 = vsub.s32 0, %v10467
    %v10469 = vrot.slane %v10464, %v10468
    %v10471 = vadd.f32 %v10448, %v10469
    %v10472 = vadd.f32 %v10449, %v10469
    %v10473 = vadd.f32 %v10450, %v10469
    %v10474 = vadd.f32 %v10451, %v10469
    %v10475 = vadd.f32 %v10452, %v10469
    %v10476 = vadd.f32 %v10453, %v10469
    %v10477 = vadd.f32 %v10454, %v10469
    %v10478 = vadd.f32 %v10455, %v10469
    %v10479 = vadd.f32 %v10456, %v10469
    %v10480 = vadd.f32 %v10457, %v10469
    %v10481 = vadd.f32 %v10458, %v10469
    %v10482 = vadd.f32 %v10459, %v10469
    %v10483 = vadd.f32 %v10460, %v10469
    %v10484 = vadd.f32 %v10461, %v10469
    %v10485 = vadd.f32 %v10462, %v10469
    %v10486 = vadd.f32 %v10463, %v10469
    %v10487 = vtanh.pop %v10471
    %v10488 = vtanh.pop %v10472
    %v10489 = vtanh.pop %v10473
    %v10490 = vtanh.pop %v10474
    %v10491 = vtanh.pop %v10475
    %v10492 = vtanh.pop %v10476
    %v10493 = vtanh.pop %v10477
    %v10494 = vtanh.pop %v10478
    %v10495 = vtanh.pop %v10479
    %v10496 = vtanh.pop %v10480
    %v10497 = vtanh.pop %v10481
    %v10498 = vtanh.pop %v10482
    %v10499 = vtanh.pop %v10483
    %v10500 = vtanh.pop %v10484
    %v10501 = vtanh.pop %v10485
    %v10502 = vtanh.pop %v10486
    %10503 = vst [vmem:[%s22] sm:$0xff] %v10487
    %10504 = vst [vmem:[%s22 + $0x8] sm:$0xff] %v10488
    %10505 = vst [vmem:[%s22 + $0x10] sm:$0xff] %v10489
    %10506 = vst [vmem:[%s22 + $0x18] sm:$0xff] %v10490
    %10507 = vst [vmem:[%s22 + $0x20] sm:$0xff] %v10491
    %10508 = vst [vmem:[%s22 + $0x28] sm:$0xff] %v10492
    %10509 = vst [vmem:[%s22 + $0x30] sm:$0xff] %v10493
    %10510 = vst [vmem:[%s22 + $0x38] sm:$0xff] %v10494
    %10511 = vst [vmem:[%s22 + $0x40] sm:$0xff] %v10495
    %10512 = vst [vmem:[%s22 + $0x48] sm:$0xff] %v10496
    %10513 = vst [vmem:[%s22 + $0x50] sm:$0xff] %v10497
    %10514 = vst [vmem:[%s22 + $0x58] sm:$0xff] %v10498
    %10515 = vst [vmem:[%s22 + $0x60] sm:$0xff] %v10499
    %10516 = vst [vmem:[%s22 + $0x68] sm:$0xff] %v10500
    %10517 = vst [vmem:[%s22 + $0x70] sm:$0xff] %v10501
    %10518 = vst [vmem:[%s22 + $0x78] sm:$0xff] %v10502
    // Predicated region
    $region118: #{_generator_forward.1} parent=1 // pred_check
      _
    $region119: #{_generator_forward.1} parent=1 // pred_check_branch
      %10520 = sbr.rel (0) target = $region121
    $region120: #{_generator_forward.1} parent=1 // pred_region
      _
    $region121: #{_generator_forward.1} parent=1 // pred_fallthru
      _
    // Predicated region
    $region122: #{_generator_forward.1} parent=1 // pred_check
      _
    $region123: #{_generator_forward.1} parent=1 // pred_check_branch
      %10522 = sbr.rel (0) target = $region125
    $region124: #{_generator_forward.1} parent=1 // pred_region
      _
    $region125: #{_generator_forward.1} parent=1 // pred_fallthru
      _
    %10523 = vsyncpa [#allocation10], 1
    %10524 = vsyncpa [#allocation12], 1
    %10525 = vsyncpa [#allocation15], 1
    %10526 = vsyncpa [#allocation18], 1

</llo_original>
